<compile_context>
chip_gen: v6e
topology: v6e:2x2x1
jax: 0.10.0
libtpu: 0.0.40
codegen_flags: <defaults>
</compile_context>

<pallas_src>
import functools

import jax
import jax.numpy as jnp
from jax.experimental import pallas as pl
from jax.experimental.pallas import tpu as pltpu


# ---------------------------------------------------------------------------
# Tile choosers (tiles must divide the dim; last-two-dims must be (8,128)
# aligned or equal the full array dim).
# ---------------------------------------------------------------------------
def _pick(total, candidates):
    for c in candidates:
        if total % c == 0:
            return c
    return total  # fall back to full extent (always legal)


def _pick_tm(m):
    return _pick(m, (512, 256, 128, 64, 32, 16, 8))


def _pick_tn(n):
    return _pick(n, (256, 128))


def _pick_tk(k):
    return _pick(k, (512, 256, 128))


# ---------------------------------------------------------------------------
# Pallas kernels
# ---------------------------------------------------------------------------
def _mm_bias_act_kernel(a_ref, w_ref, b_ref, o_ref, acc_ref, *, apply_lrelu, alpha):
    """Tiled (M,N,K) matmul: bf16 operands, f32 acc, bias + optional LeakyReLU."""
    k = pl.program_id(2)

    @pl.when(k == 0)
    def _():
        acc_ref[...] = jnp.zeros_like(acc_ref)

    acc_ref[...] += jnp.dot(a_ref[...], w_ref[...],
                            preferred_element_type=jnp.float32)

    @pl.when(k == pl.num_programs(2) - 1)
    def _():
        y = acc_ref[...] + b_ref[...]
        if apply_lrelu:
            y = jnp.where(y > 0, y, alpha * y)
        o_ref[...] = y.astype(o_ref.dtype)


def _mm_bias_in_lrelu_kernel(a_ref, w_ref, b_ref, o_ref, acc_ref, *, eps, alpha):
    """Matmul + bias + InstanceNorm + LeakyReLU fused.

    The M block holds exactly the Ho*Wo rows of ONE batch element, so the
    per-column (per-channel) mean/var over axis 0 of the f32 accumulator is the
    full instance-norm statistic.  Epilogue math all in f32.
    """
    k = pl.program_id(2)

    @pl.when(k == 0)
    def _():
        acc_ref[...] = jnp.zeros_like(acc_ref)

    acc_ref[...] += jnp.dot(a_ref[...], w_ref[...],
                            preferred_element_type=jnp.float32)

    @pl.when(k == pl.num_programs(2) - 1)
    def _():
        y = acc_ref[...] + b_ref[...]
        mean = jnp.mean(y, axis=0, keepdims=True)
        var = jnp.mean((y - mean) ** 2, axis=0, keepdims=True)   # biased (torch)
        y = (y - mean) * jax.lax.rsqrt(var + eps)
        o_ref[...] = jnp.where(y > 0, y, alpha * y).astype(o_ref.dtype)


def _inorm_lrelu_kernel(x_ref, o_ref, *, eps, alpha):
    """Standalone InstanceNorm + LeakyReLU (fallback when Ho*Wo % 8 != 0)."""
    x = x_ref[...].astype(jnp.float32)
    mean = jnp.mean(x, axis=1, keepdims=True)
    var = jnp.mean((x - mean) ** 2, axis=1, keepdims=True)
    y = (x - mean) * jax.lax.rsqrt(var + eps)
    o_ref[...] = jnp.where(y > 0, y, alpha * y).astype(o_ref.dtype)


def _final_conv_gap_kernel(a_ref, w_ref, b_ref, o_ref):
    """Final Conv2d(C_in, 1, 4, p=1) fused with global average pool.

    a: (B, P, K) im2col patches (P = final Ho*Wo), w: (1, K), b: (1, 1).
    VPU multiply-reduce (avoids an N=1 MXU matmul + 1-lane masked stores).
    """
    a = a_ref[...].astype(jnp.float32)             # (B, P, K)
    w = w_ref[...].astype(jnp.float32)             # (1, K)
    per_pos = jnp.sum(a * w[None, :, :], axis=-1)  # (B, P)  per-position conv
    s = jnp.mean(per_pos, axis=-1, keepdims=True)  # (B, 1)  global avg pool
    o_ref[...] = (s + b_ref[...]).astype(o_ref.dtype)


# ---------------------------------------------------------------------------
# Pallas wrappers
# ---------------------------------------------------------------------------
def matmul_bias_act(a, w, b, *, lrelu, alpha=0.2, out_dtype=jnp.bfloat16):
    """a: (M, K) bf16, w: (K, N) bf16, b: (1, N) f32 -> (M, N) out_dtype."""
    M, K = a.shape
    _, N = w.shape
    tm, tn, tk = _pick_tm(M), _pick_tn(N), _pick_tk(K)
    grid = (M // tm, N // tn, K // tk)
    kernel = functools.partial(_mm_bias_act_kernel, apply_lrelu=lrelu, alpha=alpha)
    cost = pl.CostEstimate(
        flops=2 * M * N * K, transcendentals=0,
        bytes_accessed=int(a.size * a.dtype.itemsize + w.size * w.dtype.itemsize
                           + b.size * b.dtype.itemsize
                           + M * N * jnp.dtype(out_dtype).itemsize))
    return pl.pallas_call(
        kernel,
        out_shape=jax.ShapeDtypeStruct((M, N), out_dtype),
        grid_spec=pltpu.PrefetchScalarGridSpec(
            num_scalar_prefetch=0,
            grid=grid,
            in_specs=[
                pl.BlockSpec((tm, tk), lambda m, n, k: (m, k)),
                pl.BlockSpec((tk, tn), lambda m, n, k: (k, n)),
                pl.BlockSpec((1, tn), lambda m, n, k: (0, n)),
            ],
            out_specs=pl.BlockSpec((tm, tn), lambda m, n, k: (m, n)),
            scratch_shapes=[pltpu.VMEM((tm, tn), jnp.float32)],
        ),
        compiler_params=pltpu.CompilerParams(
            dimension_semantics=("parallel", "parallel", "arbitrary")),
        cost_estimate=cost,
    )(a, w, b)


def matmul_bias_in_lrelu(a, w, b, *, batch, eps=1e-5, alpha=0.2,
                         out_dtype=jnp.bfloat16):
    """Conv-as-matmul with fused InstanceNorm + LeakyReLU epilogue.

    a: (B*HoWo, K) bf16 (consecutive HoWo rows = one batch element),
    w: (K, N) bf16, b: (1, N) f32 -> (B*HoWo, N) out_dtype.
    """
    M, K = a.shape
    _, N = w.shape
    hw = M // batch                       # rows per batch element = Ho*Wo
    tn, tk = _pick_tn(N), _pick_tk(K)
    grid = (batch, N // tn, K // tk)
    kernel = functools.partial(_mm_bias_in_lrelu_kernel, eps=eps, alpha=alpha)
    cost = pl.CostEstimate(
        flops=2 * M * N * K, transcendentals=0,
        bytes_accessed=int(a.size * a.dtype.itemsize + w.size * w.dtype.itemsize
                           + b.size * b.dtype.itemsize
                           + M * N * jnp.dtype(out_dtype).itemsize))
    return pl.pallas_call(
        kernel,
        out_shape=jax.ShapeDtypeStruct((M, N), out_dtype),
        grid_spec=pltpu.PrefetchScalarGridSpec(
            num_scalar_prefetch=0,
            grid=grid,
            in_specs=[
                pl.BlockSpec((hw, tk), lambda bb, n, k: (bb, k)),
                pl.BlockSpec((tk, tn), lambda bb, n, k: (k, n)),
                pl.BlockSpec((1, tn), lambda bb, n, k: (0, n)),
            ],
            out_specs=pl.BlockSpec((hw, tn), lambda bb, n, k: (bb, n)),
            scratch_shapes=[pltpu.VMEM((hw, tn), jnp.float32)],
        ),
        compiler_params=pltpu.CompilerParams(
            dimension_semantics=("parallel", "parallel", "arbitrary")),
        cost_estimate=cost,
    )(a, w, b)


# ---------------------------------------------------------------------------
# im2col glue (plain JAX, bf16) + conv layer wrappers
# ---------------------------------------------------------------------------
def _extract_patches(xp, k, stride):
    """xp: padded NHWC. Returns (B, Ho, Wo, k*k*C) im2col patches."""
    B, Hp, Wp, C = xp.shape
    Ho = (Hp - k) // stride + 1
    Wo = (Wp - k) // stride + 1
    cols = []
    for kh in range(k):
        for kw in range(k):
            cols.append(xp[:, kh:kh + stride * Ho:stride,
                           kw:kw + stride * Wo:stride, :])
    p = jnp.stack(cols, axis=3)                      # (B, Ho, Wo, k*k, C)
    return p.reshape(B, Ho, Wo, k * k * C), Ho, Wo


def _conv_operands(x, w, *, stride, pad, dtype=jnp.bfloat16):
    """Build bf16 matmul operands: A (B*Ho*Wo, K), Wm (K, Cout)."""
    Cout, Cin, KH, KW = w.shape
    B = x.shape[0]
    xp = jnp.pad(x.astype(dtype), ((0, 0), (pad, pad), (pad, pad), (0, 0)))
    patches, Ho, Wo = _extract_patches(xp, KH, stride)
    a = patches.reshape(B * Ho * Wo, KH * KW * Cin)
    wm = jnp.transpose(w, (2, 3, 1, 0)).reshape(KH * KW * Cin, Cout).astype(dtype)
    return a, wm, Ho, Wo


def conv2d_lrelu(x, w, b, *, stride, pad, alpha=0.2):
    """Conv + fused LeakyReLU. x: (B,H,W,Cin) NHWC, w: torch (Cout,Cin,KH,KW)."""
    Cout = w.shape[0]
    B = x.shape[0]
    a, wm, Ho, Wo = _conv_operands(x, w, stride=stride, pad=pad)
    bias = b.reshape(1, Cout).astype(jnp.float32)
    y = matmul_bias_act(a, wm, bias, lrelu=True, alpha=alpha)
    return y.reshape(B, Ho, Wo, Cout)


def conv2d_in_lrelu(x, w, b, *, stride, pad, eps=1e-5, alpha=0.2):
    """Conv + fused InstanceNorm + LeakyReLU (single Pallas kernel)."""
    Cout = w.shape[0]
    B = x.shape[0]
    a, wm, Ho, Wo = _conv_operands(x, w, stride=stride, pad=pad)
    bias = b.reshape(1, Cout).astype(jnp.float32)
    if (Ho * Wo) % 8 == 0:
        y = matmul_bias_in_lrelu(a, wm, bias, batch=B, eps=eps, alpha=alpha)
        return y.reshape(B, Ho, Wo, Cout)
    # Fallback (only if the per-batch M block isn't sublane-aligned).
    y = matmul_bias_act(a, wm, bias, lrelu=False)
    y = y.reshape(B, Ho * Wo, Cout)
    y = pl.pallas_call(
        functools.partial(_inorm_lrelu_kernel, eps=eps, alpha=alpha),
        out_shape=jax.ShapeDtypeStruct(y.shape, y.dtype),
        grid_spec=pltpu.PrefetchScalarGridSpec(
            num_scalar_prefetch=0,
            grid=(B,),
            in_specs=[pl.BlockSpec((1, Ho * Wo, Cout), lambda bb: (bb, 0, 0))],
            out_specs=pl.BlockSpec((1, Ho * Wo, Cout), lambda bb: (bb, 0, 0)),
        ),
        compiler_params=pltpu.CompilerParams(dimension_semantics=("parallel",)),
    )(y)
    return y.reshape(B, Ho, Wo, Cout)


def conv2d_final_gap(x, w, b, *, pad=1):
    """Final Conv2d(Cin, 1, 4, stride=1, padding=1) + global avg pool -> (B,1)."""
    B = x.shape[0]
    a, wm, Ho, Wo = _conv_operands(x, w, stride=1, pad=pad)   # wm: (K, 1)
    P = Ho * Wo
    K = wm.shape[0]
    a3 = a.reshape(B, P, K)
    wrow = wm.reshape(1, K)
    bias = b.reshape(1, 1).astype(jnp.float32)
    cost = pl.CostEstimate(
        flops=2 * B * P * K, transcendentals=0,
        bytes_accessed=int(a3.size * a3.dtype.itemsize + K * 2 + B * 4))
    return pl.pallas_call(
        _final_conv_gap_kernel,
        out_shape=jax.ShapeDtypeStruct((B, 1), jnp.float32),
        cost_estimate=cost,
    )(a3, wrow, bias)


# ---------------------------------------------------------------------------
# Discriminator (forward only)
# ---------------------------------------------------------------------------
D_DIMS = (64, 128, 256, 512)


def init_params(key, num_c, d_dims=D_DIMS, dtype=jnp.float32):
    dims_in = (num_c,) + d_dims
    dims_out = d_dims + (1,)
    params = {}
    for i, (ci, co) in enumerate(zip(dims_in, dims_out)):
        key, sub = jax.random.split(key)
        params[f"w{i}"] = (0.02 * jax.random.normal(sub, (co, ci, 4, 4))).astype(dtype)
        params[f"b{i}"] = jnp.zeros((co,), dtype)
    return params


def discriminator_forward(x_nchw, params):
    """Input x: (B, C, H, W) (PyTorch NCHW). Output: (B, 1)."""
    x = jnp.transpose(x_nchw, (0, 2, 3, 1))              # NCHW -> NHWC
    # Conv(num_c, 64, 4, s=2, p=1) + LeakyReLU(0.2)   (fused)
    x = conv2d_lrelu(x, params["w0"], params["b0"], stride=2, pad=1)
    # 3x [Conv(.., 4, s=2, p=1) + InstanceNorm + LeakyReLU(0.2)]   (fully fused)
    for i in (1, 2, 3):
        x = conv2d_in_lrelu(x, params[f"w{i}"], params[f"b{i}"], stride=2, pad=1)
    # Conv(512, 1, 4, s=1, p=1) + full-extent avg pool + view(B, -1)   (fused)
    return conv2d_final_gap(x, params["w4"], params["b4"], pad=1)


# ---------------------------------------------------------------------------
# Pure-JAX reference (correctness sanity check)
# ---------------------------------------------------------------------------
def reference_forward(x_nchw, params):
    x = jnp.transpose(x_nchw, (0, 2, 3, 1))

    def conv(x, w, b, stride):
        w_hwio = jnp.transpose(w, (2, 3, 1, 0))
        y = jax.lax.conv_general_dilated(
            x, w_hwio, (stride, stride), [(1, 1), (1, 1)],
            dimension_numbers=("NHWC", "HWIO", "NHWC"),
            precision=jax.lax.Precision.HIGHEST)
        return y + b

    x = conv(x, params["w0"], params["b0"], 2)
    x = jnp.where(x > 0, x, 0.2 * x)
    for i in (1, 2, 3):
        x = conv(x, params[f"w{i}"], params[f"b{i}"], 2)
        m = jnp.mean(x, axis=(1, 2), keepdims=True)
        v = jnp.mean((x - m) ** 2, axis=(1, 2), keepdims=True)
        x = (x - m) * jax.lax.rsqrt(v + 1e-5)
        x = jnp.where(x > 0, x, 0.2 * x)
    x = conv(x, params["w4"], params["b4"], 1)
    return jnp.mean(x, axis=(1, 2))  # (B, 1)


if __name__ == "__main__":
    key = jax.random.PRNGKey(0)
    k_x, k_p = jax.random.split(key)

    B, C, H, W = 2, 3, 64, 64            # small but valid (final spatial 3x3)
    x = jax.random.normal(k_x, (B, C, H, W), dtype=jnp.float32)
    params = init_params(k_p, num_c=C)

    out = jax.jit(discriminator_forward)(x, params)
    out = jax.block_until_ready(out)
    assert out.shape == (B, 1), out.shape

    ref = jax.block_until_ready(jax.jit(reference_forward)(x, params))
    assert jnp.allclose(out, ref, atol=5e-2, rtol=5e-2), (
        f"max abs diff {jnp.max(jnp.abs(out - ref))}")

    print("KERNEL_OK")
</pallas_src>

<mosaic_0001>
module attributes {stable_mosaic.version = 11 : i64} {
  func.func @_mm_bias_act_kernel(%arg0: i32, %arg1: i32, %arg2: i32, %arg3: memref<512x48xbf16, #tpu.memory_space<vmem>>, %arg4: memref<48x64xbf16, #tpu.memory_space<vmem>>, %arg5: memref<1x64xf32, #tpu.memory_space<vmem>>, %arg6: memref<512x64xbf16, #tpu.memory_space<vmem>>, %arg7: memref<512x64xf32, #tpu.memory_space<vmem>>) attributes {dimension_semantics = [#tpu.dimension_semantics<parallel>, #tpu.dimension_semantics<parallel>, #tpu.dimension_semantics<arbitrary>], iteration_bounds = array<i64: 4, 1, 1>, scalar_prefetch = 0 : i64, scratch_operands = 1 : i64, tpu.core_type = #tpu.core_type<tc>, window_params = [{transform_indices = @transform_0, window_bounds = array<i64: 512, 48>}, {transform_indices = @transform_1, window_bounds = array<i64: 48, 64>}, {transform_indices = @transform_2, window_bounds = array<i64: 1, 64>}, {transform_indices = @transform_3, window_bounds = array<i64: 512, 64>}]} {
    %c0_i32 = arith.constant 0 : i32
    %0 = arith.cmpi eq, %arg2, %c0_i32 : i32
    %1 = arith.extui %0 : i1 to i32
    %c0_i32_0 = arith.constant 0 : i32
    %2 = arith.cmpi ne, %1, %c0_i32_0 : i32
    scf.if %2 {
      %cst_10 = arith.constant 0.000000e+00 : f32
      %12 = vector.broadcast %cst_10 : f32 to vector<512x64xf32>
      %c0_11 = arith.constant 0 : index
      %c0_12 = arith.constant 0 : index
      %13 = vector.load %arg7[%c0_11, %c0_12] : memref<512x64xf32, #tpu.memory_space<vmem>>, vector<512x64xf32>
      tpu.vector_store %arg7[%c0_11, %c0_12], %12 {strides = array<i32>} : memref<512x64xf32, #tpu.memory_space<vmem>>, vector<512x64xf32>,
    } else {
    }
    %c0 = arith.constant 0 : index
    %c0_1 = arith.constant 0 : index
    %3 = vector.load %arg7[%c0, %c0_1] : memref<512x64xf32, #tpu.memory_space<vmem>>, vector<512x64xf32>
    %c0_2 = arith.constant 0 : index
    %c0_3 = arith.constant 0 : index
    %4 = vector.load %arg3[%c0_2, %c0_3] : memref<512x48xbf16, #tpu.memory_space<vmem>>, vector<512x48xbf16>
    %c0_4 = arith.constant 0 : index
    %c0_5 = arith.constant 0 : index
    %5 = vector.load %arg4[%c0_4, %c0_5] : memref<48x64xbf16, #tpu.memory_space<vmem>>, vector<48x64xbf16>
    %cst = arith.constant dense<0.000000e+00> : vector<512x64xf32>
    %6 = tpu.matmul %4, %5, %cst {dimension_numbers = #tpu.dot_dimension_numbers<[1], [0], [0], [1], [0, 0, 1, 1], [], []>} : vector<512x48xbf16>, vector<48x64xbf16>, vector<512x64xf32> -> vector<512x64xf32>
    %7 = arith.addf %3, %6 : vector<512x64xf32>
    %c0_6 = arith.constant 0 : index
    %c0_7 = arith.constant 0 : index
    %8 = vector.load %arg7[%c0_6, %c0_7] : memref<512x64xf32, #tpu.memory_space<vmem>>, vector<512x64xf32>
    tpu.vector_store %arg7[%c0_6, %c0_7], %7 {strides = array<i32>} : memref<512x64xf32, #tpu.memory_space<vmem>>, vector<512x64xf32>,
    %c0_i32_8 = arith.constant 0 : i32
    %9 = arith.cmpi eq, %arg2, %c0_i32_8 : i32
    %10 = arith.extui %9 : i1 to i32
    %c0_i32_9 = arith.constant 0 : i32
    %11 = arith.cmpi ne, %10, %c0_i32_9 : i32
    scf.if %11 {
      %c0_10 = arith.constant 0 : index
      %c0_11 = arith.constant 0 : index
      %12 = vector.load %arg7[%c0_10, %c0_11] : memref<512x64xf32, #tpu.memory_space<vmem>>, vector<512x64xf32>
      %c0_12 = arith.constant 0 : index
      %c0_13 = arith.constant 0 : index
      %13 = vector.load %arg5[%c0_12, %c0_13] : memref<1x64xf32, #tpu.memory_space<vmem>>, vector<1x64xf32>
      %14 = vector.broadcast %13 : vector<1x64xf32> to vector<512x64xf32>
      %15 = arith.addf %12, %14 : vector<512x64xf32>
      %cst_14 = arith.constant 0.000000e+00 : f32
      %16 = vector.broadcast %cst_14 : f32 to vector<512x64xf32>
      %17 = arith.cmpf ogt, %15, %16 : vector<512x64xf32>
      %cst_15 = arith.constant 2.000000e-01 : f32
      %18 = vector.broadcast %cst_15 : f32 to vector<512x64xf32>
      %19 = arith.mulf %18, %15 : vector<512x64xf32>
      %20 = arith.select %17, %15, %19 : vector<512x64xi1>, vector<512x64xf32>
      %21 = arith.truncf %20 : vector<512x64xf32> to vector<512x64xbf16>
      %c0_16 = arith.constant 0 : index
      %c0_17 = arith.constant 0 : index
      %22 = vector.load %arg6[%c0_16, %c0_17] : memref<512x64xbf16, #tpu.memory_space<vmem>>, vector<512x64xbf16>
      tpu.vector_store %arg6[%c0_16, %c0_17], %21 {strides = array<i32>} : memref<512x64xbf16, #tpu.memory_space<vmem>>, vector<512x64xbf16>,
    } else {
    }
    return
  }
  func.func @transform_0(%arg0: i32, %arg1: i32, %arg2: i32) -> (i32, i32) {
    %c0_i32 = arith.constant 0 : i32
    return %arg0, %arg2 : i32, i32
  }
  func.func @transform_1(%arg0: i32, %arg1: i32, %arg2: i32) -> (i32, i32) {
    %c0_i32 = arith.constant 0 : i32
    return %arg2, %arg1 : i32, i32
  }
  func.func @transform_2(%arg0: i32, %arg1: i32, %arg2: i32) -> (i32, i32) {
    %c0_i32 = arith.constant 0 : i32
    %c0_i32_0 = arith.constant 0 : i32
    return %c0_i32, %arg1 : i32, i32
  }
  func.func @transform_3(%arg0: i32, %arg1: i32, %arg2: i32) -> (i32, i32) {
    %c0_i32 = arith.constant 0 : i32
    return %arg0, %arg1 : i32, i32
  }
}

module attributes {stable_mosaic.version = 11 : i64} {
  func.func @_mm_bias_in_lrelu_kernel(%arg0: i32, %arg1: i32, %arg2: i32, %arg3: memref<256x512xbf16, #tpu.memory_space<vmem>>, %arg4: memref<512x128xbf16, #tpu.memory_space<vmem>>, %arg5: memref<1x128xf32, #tpu.memory_space<vmem>>, %arg6: memref<256x128xbf16, #tpu.memory_space<vmem>>, %arg7: memref<256x128xf32, #tpu.memory_space<vmem>>) attributes {dimension_semantics = [#tpu.dimension_semantics<parallel>, #tpu.dimension_semantics<parallel>, #tpu.dimension_semantics<arbitrary>], iteration_bounds = array<i64: 2, 1, 2>, scalar_prefetch = 0 : i64, scratch_operands = 1 : i64, tpu.core_type = #tpu.core_type<tc>, window_params = [{transform_indices = @transform_0, window_bounds = array<i64: 256, 512>}, {transform_indices = @transform_1, window_bounds = array<i64: 512, 128>}, {transform_indices = @transform_2, window_bounds = array<i64: 1, 128>}, {transform_indices = @transform_3, window_bounds = array<i64: 256, 128>}]} {
    %c0_i32 = arith.constant 0 : i32
    %0 = arith.cmpi eq, %arg2, %c0_i32 : i32
    %1 = arith.extui %0 : i1 to i32
    %c0_i32_0 = arith.constant 0 : i32
    %2 = arith.cmpi ne, %1, %c0_i32_0 : i32
    scf.if %2 {
      %cst_9 = arith.constant 0.000000e+00 : f32
      %12 = vector.broadcast %cst_9 : f32 to vector<256x128xf32>
      %c0_10 = arith.constant 0 : index
      %c0_11 = arith.constant 0 : index
      %13 = vector.load %arg7[%c0_10, %c0_11] : memref<256x128xf32, #tpu.memory_space<vmem>>, vector<256x128xf32>
      tpu.vector_store %arg7[%c0_10, %c0_11], %12 {strides = array<i32>} : memref<256x128xf32, #tpu.memory_space<vmem>>, vector<256x128xf32>,
    } else {
    }
    %c0 = arith.constant 0 : index
    %c0_1 = arith.constant 0 : index
    %3 = vector.load %arg7[%c0, %c0_1] : memref<256x128xf32, #tpu.memory_space<vmem>>, vector<256x128xf32>
    %c0_2 = arith.constant 0 : index
    %c0_3 = arith.constant 0 : index
    %4 = vector.load %arg3[%c0_2, %c0_3] : memref<256x512xbf16, #tpu.memory_space<vmem>>, vector<256x512xbf16>
    %c0_4 = arith.constant 0 : index
    %c0_5 = arith.constant 0 : index
    %5 = vector.load %arg4[%c0_4, %c0_5] : memref<512x128xbf16, #tpu.memory_space<vmem>>, vector<512x128xbf16>
    %cst = arith.constant dense<0.000000e+00> : vector<256x128xf32>
    %6 = tpu.matmul %4, %5, %cst {dimension_numbers = #tpu.dot_dimension_numbers<[1], [0], [0], [1], [0, 0, 1, 1], [], []>} : vector<256x512xbf16>, vector<512x128xbf16>, vector<256x128xf32> -> vector<256x128xf32>
    %7 = arith.addf %3, %6 : vector<256x128xf32>
    %c0_6 = arith.constant 0 : index
    %c0_7 = arith.constant 0 : index
    %8 = vector.load %arg7[%c0_6, %c0_7] : memref<256x128xf32, #tpu.memory_space<vmem>>, vector<256x128xf32>
    tpu.vector_store %arg7[%c0_6, %c0_7], %7 {strides = array<i32>} : memref<256x128xf32, #tpu.memory_space<vmem>>, vector<256x128xf32>,
    %c1_i32 = arith.constant 1 : i32
    %9 = arith.cmpi eq, %arg2, %c1_i32 : i32
    %10 = arith.extui %9 : i1 to i32
    %c0_i32_8 = arith.constant 0 : i32
    %11 = arith.cmpi ne, %10, %c0_i32_8 : i32
    scf.if %11 {
      %c0_9 = arith.constant 0 : index
      %c0_10 = arith.constant 0 : index
      %12 = vector.load %arg7[%c0_9, %c0_10] : memref<256x128xf32, #tpu.memory_space<vmem>>, vector<256x128xf32>
      %c0_11 = arith.constant 0 : index
      %c0_12 = arith.constant 0 : index
      %13 = vector.load %arg5[%c0_11, %c0_12] : memref<1x128xf32, #tpu.memory_space<vmem>>, vector<1x128xf32>
      %14 = vector.broadcast %13 : vector<1x128xf32> to vector<256x128xf32>
      %15 = arith.addf %12, %14 : vector<256x128xf32>
      %cst_13 = arith.constant dense<0.000000e+00> : vector<128xf32>
      %16 = vector.multi_reduction <add>, %15, %cst_13 [0] : vector<256x128xf32> to vector<128xf32>
      %17 = vector.shape_cast %16 : vector<128xf32> to vector<1x128xf32>
      %cst_14 = arith.constant 2.560000e+02 : f32
      %18 = vector.broadcast %cst_14 : f32 to vector<1x128xf32>
      %19 = arith.divf %17, %18 : vector<1x128xf32>
      %20 = vector.broadcast %19 : vector<1x128xf32> to vector<256x128xf32>
      %21 = arith.subf %15, %20 : vector<256x128xf32>
      %22 = arith.mulf %21, %21 : vector<256x128xf32>
      %cst_15 = arith.constant dense<0.000000e+00> : vector<128xf32>
      %23 = vector.multi_reduction <add>, %22, %cst_15 [0] : vector<256x128xf32> to vector<128xf32>
      %24 = vector.shape_cast %23 : vector<128xf32> to vector<1x128xf32>
      %cst_16 = arith.constant 2.560000e+02 : f32
      %25 = vector.broadcast %cst_16 : f32 to vector<1x128xf32>
      %26 = arith.divf %24, %25 : vector<1x128xf32>
      %27 = vector.broadcast %19 : vector<1x128xf32> to vector<256x128xf32>
      %28 = arith.subf %15, %27 : vector<256x128xf32>
      %cst_17 = arith.constant 9.99999974E-6 : f32
      %29 = vector.broadcast %cst_17 : f32 to vector<1x128xf32>
      %30 = arith.addf %26, %29 : vector<1x128xf32>
      %31 = math.rsqrt %30 : vector<1x128xf32>
      %32 = vector.broadcast %31 : vector<1x128xf32> to vector<256x128xf32>
      %33 = arith.mulf %28, %32 : vector<256x128xf32>
      %cst_18 = arith.constant 0.000000e+00 : f32
      %34 = vector.broadcast %cst_18 : f32 to vector<256x128xf32>
      %35 = arith.cmpf ogt, %33, %34 : vector<256x128xf32>
      %cst_19 = arith.constant 2.000000e-01 : f32
      %36 = vector.broadcast %cst_19 : f32 to vector<256x128xf32>
      %37 = arith.mulf %36, %33 : vector<256x128xf32>
      %38 = arith.select %35, %33, %37 : vector<256x128xi1>, vector<256x128xf32>
      %39 = arith.truncf %38 : vector<256x128xf32> to vector<256x128xbf16>
      %c0_20 = arith.constant 0 : index
      %c0_21 = arith.constant 0 : index
      %40 = vector.load %arg6[%c0_20, %c0_21] : memref<256x128xbf16, #tpu.memory_space<vmem>>, vector<256x128xbf16>
      tpu.vector_store %arg6[%c0_20, %c0_21], %39 {strides = array<i32>} : memref<256x128xbf16, #tpu.memory_space<vmem>>, vector<256x128xbf16>,
    } else {
    }
    return
  }
  func.func @transform_0(%arg0: i32, %arg1: i32, %arg2: i32) -> (i32, i32) {
    %c0_i32 = arith.constant 0 : i32
    return %arg0, %arg2 : i32, i32
  }
  func.func @transform_1(%arg0: i32, %arg1: i32, %arg2: i32) -> (i32, i32) {
    %c0_i32 = arith.constant 0 : i32
    return %arg2, %arg1 : i32, i32
  }
  func.func @transform_2(%arg0: i32, %arg1: i32, %arg2: i32) -> (i32, i32) {
    %c0_i32 = arith.constant 0 : i32
    %c0_i32_0 = arith.constant 0 : i32
    return %c0_i32, %arg1 : i32, i32
  }
  func.func @transform_3(%arg0: i32, %arg1: i32, %arg2: i32) -> (i32, i32) {
    %c0_i32 = arith.constant 0 : i32
    return %arg0, %arg1 : i32, i32
  }
}

module attributes {stable_mosaic.version = 11 : i64} {
  func.func @_mm_bias_in_lrelu_kernel(%arg0: i32, %arg1: i32, %arg2: i32, %arg3: memref<64x512xbf16, #tpu.memory_space<vmem>>, %arg4: memref<512x256xbf16, #tpu.memory_space<vmem>>, %arg5: memref<1x256xf32, #tpu.memory_space<vmem>>, %arg6: memref<64x256xbf16, #tpu.memory_space<vmem>>, %arg7: memref<64x256xf32, #tpu.memory_space<vmem>>) attributes {dimension_semantics = [#tpu.dimension_semantics<parallel>, #tpu.dimension_semantics<parallel>, #tpu.dimension_semantics<arbitrary>], iteration_bounds = array<i64: 2, 1, 4>, scalar_prefetch = 0 : i64, scratch_operands = 1 : i64, tpu.core_type = #tpu.core_type<tc>, window_params = [{transform_indices = @transform_0, window_bounds = array<i64: 64, 512>}, {transform_indices = @transform_1, window_bounds = array<i64: 512, 256>}, {transform_indices = @transform_2, window_bounds = array<i64: 1, 256>}, {transform_indices = @transform_3, window_bounds = array<i64: 64, 256>}]} {
    %c0_i32 = arith.constant 0 : i32
    %0 = arith.cmpi eq, %arg2, %c0_i32 : i32
    %1 = arith.extui %0 : i1 to i32
    %c0_i32_0 = arith.constant 0 : i32
    %2 = arith.cmpi ne, %1, %c0_i32_0 : i32
    scf.if %2 {
      %cst_9 = arith.constant 0.000000e+00 : f32
      %12 = vector.broadcast %cst_9 : f32 to vector<64x256xf32>
      %c0_10 = arith.constant 0 : index
      %c0_11 = arith.constant 0 : index
      %13 = vector.load %arg7[%c0_10, %c0_11] : memref<64x256xf32, #tpu.memory_space<vmem>>, vector<64x256xf32>
      tpu.vector_store %arg7[%c0_10, %c0_11], %12 {strides = array<i32>} : memref<64x256xf32, #tpu.memory_space<vmem>>, vector<64x256xf32>,
    } else {
    }
    %c0 = arith.constant 0 : index
    %c0_1 = arith.constant 0 : index
    %3 = vector.load %arg7[%c0, %c0_1] : memref<64x256xf32, #tpu.memory_space<vmem>>, vector<64x256xf32>
    %c0_2 = arith.constant 0 : index
    %c0_3 = arith.constant 0 : index
    %4 = vector.load %arg3[%c0_2, %c0_3] : memref<64x512xbf16, #tpu.memory_space<vmem>>, vector<64x512xbf16>
    %c0_4 = arith.constant 0 : index
    %c0_5 = arith.constant 0 : index
    %5 = vector.load %arg4[%c0_4, %c0_5] : memref<512x256xbf16, #tpu.memory_space<vmem>>, vector<512x256xbf16>
    %cst = arith.constant dense<0.000000e+00> : vector<64x256xf32>
    %6 = tpu.matmul %4, %5, %cst {dimension_numbers = #tpu.dot_dimension_numbers<[1], [0], [0], [1], [0, 0, 1, 1], [], []>} : vector<64x512xbf16>, vector<512x256xbf16>, vector<64x256xf32> -> vector<64x256xf32>
    %7 = arith.addf %3, %6 : vector<64x256xf32>
    %c0_6 = arith.constant 0 : index
    %c0_7 = arith.constant 0 : index
    %8 = vector.load %arg7[%c0_6, %c0_7] : memref<64x256xf32, #tpu.memory_space<vmem>>, vector<64x256xf32>
    tpu.vector_store %arg7[%c0_6, %c0_7], %7 {strides = array<i32>} : memref<64x256xf32, #tpu.memory_space<vmem>>, vector<64x256xf32>,
    %c3_i32 = arith.constant 3 : i32
    %9 = arith.cmpi eq, %arg2, %c3_i32 : i32
    %10 = arith.extui %9 : i1 to i32
    %c0_i32_8 = arith.constant 0 : i32
    %11 = arith.cmpi ne, %10, %c0_i32_8 : i32
    scf.if %11 {
      %c0_9 = arith.constant 0 : index
      %c0_10 = arith.constant 0 : index
      %12 = vector.load %arg7[%c0_9, %c0_10] : memref<64x256xf32, #tpu.memory_space<vmem>>, vector<64x256xf32>
      %c0_11 = arith.constant 0 : index
      %c0_12 = arith.constant 0 : index
      %13 = vector.load %arg5[%c0_11, %c0_12] : memref<1x256xf32, #tpu.memory_space<vmem>>, vector<1x256xf32>
      %14 = vector.broadcast %13 : vector<1x256xf32> to vector<64x256xf32>
      %15 = arith.addf %12, %14 : vector<64x256xf32>
      %cst_13 = arith.constant dense<0.000000e+00> : vector<256xf32>
      %16 = vector.multi_reduction <add>, %15, %cst_13 [0] : vector<64x256xf32> to vector<256xf32>
      %17 = vector.shape_cast %16 : vector<256xf32> to vector<1x256xf32>
      %cst_14 = arith.constant 6.400000e+01 : f32
      %18 = vector.broadcast %cst_14 : f32 to vector<1x256xf32>
      %19 = arith.divf %17, %18 : vector<1x256xf32>
      %20 = vector.broadcast %19 : vector<1x256xf32> to vector<64x256xf32>
      %21 = arith.subf %15, %20 : vector<64x256xf32>
      %22 = arith.mulf %21, %21 : vector<64x256xf32>
      %cst_15 = arith.constant dense<0.000000e+00> : vector<256xf32>
      %23 = vector.multi_reduction <add>, %22, %cst_15 [0] : vector<64x256xf32> to vector<256xf32>
      %24 = vector.shape_cast %23 : vector<256xf32> to vector<1x256xf32>
      %cst_16 = arith.constant 6.400000e+01 : f32
      %25 = vector.broadcast %cst_16 : f32 to vector<1x256xf32>
      %26 = arith.divf %24, %25 : vector<1x256xf32>
      %27 = vector.broadcast %19 : vector<1x256xf32> to vector<64x256xf32>
      %28 = arith.subf %15, %27 : vector<64x256xf32>
      %cst_17 = arith.constant 9.99999974E-6 : f32
      %29 = vector.broadcast %cst_17 : f32 to vector<1x256xf32>
      %30 = arith.addf %26, %29 : vector<1x256xf32>
      %31 = math.rsqrt %30 : vector<1x256xf32>
      %32 = vector.broadcast %31 : vector<1x256xf32> to vector<64x256xf32>
      %33 = arith.mulf %28, %32 : vector<64x256xf32>
      %cst_18 = arith.constant 0.000000e+00 : f32
      %34 = vector.broadcast %cst_18 : f32 to vector<64x256xf32>
      %35 = arith.cmpf ogt, %33, %34 : vector<64x256xf32>
      %cst_19 = arith.constant 2.000000e-01 : f32
      %36 = vector.broadcast %cst_19 : f32 to vector<64x256xf32>
      %37 = arith.mulf %36, %33 : vector<64x256xf32>
      %38 = arith.select %35, %33, %37 : vector<64x256xi1>, vector<64x256xf32>
      %39 = arith.truncf %38 : vector<64x256xf32> to vector<64x256xbf16>
      %c0_20 = arith.constant 0 : index
      %c0_21 = arith.constant 0 : index
      %40 = vector.load %arg6[%c0_20, %c0_21] : memref<64x256xbf16, #tpu.memory_space<vmem>>, vector<64x256xbf16>
      tpu.vector_store %arg6[%c0_20, %c0_21], %39 {strides = array<i32>} : memref<64x256xbf16, #tpu.memory_space<vmem>>, vector<64x256xbf16>,
    } else {
    }
    return
  }
  func.func @transform_0(%arg0: i32, %arg1: i32, %arg2: i32) -> (i32, i32) {
    %c0_i32 = arith.constant 0 : i32
    return %arg0, %arg2 : i32, i32
  }
  func.func @transform_1(%arg0: i32, %arg1: i32, %arg2: i32) -> (i32, i32) {
    %c0_i32 = arith.constant 0 : i32
    return %arg2, %arg1 : i32, i32
  }
  func.func @transform_2(%arg0: i32, %arg1: i32, %arg2: i32) -> (i32, i32) {
    %c0_i32 = arith.constant 0 : i32
    %c0_i32_0 = arith.constant 0 : i32
    return %c0_i32, %arg1 : i32, i32
  }
  func.func @transform_3(%arg0: i32, %arg1: i32, %arg2: i32) -> (i32, i32) {
    %c0_i32 = arith.constant 0 : i32
    return %arg0, %arg1 : i32, i32
  }
}

module attributes {stable_mosaic.version = 11 : i64} {
  func.func @_mm_bias_in_lrelu_kernel(%arg0: i32, %arg1: i32, %arg2: i32, %arg3: memref<16x512xbf16, #tpu.memory_space<vmem>>, %arg4: memref<512x256xbf16, #tpu.memory_space<vmem>>, %arg5: memref<1x256xf32, #tpu.memory_space<vmem>>, %arg6: memref<16x256xbf16, #tpu.memory_space<vmem>>, %arg7: memref<16x256xf32, #tpu.memory_space<vmem>>) attributes {dimension_semantics = [#tpu.dimension_semantics<parallel>, #tpu.dimension_semantics<parallel>, #tpu.dimension_semantics<arbitrary>], iteration_bounds = array<i64: 2, 2, 8>, scalar_prefetch = 0 : i64, scratch_operands = 1 : i64, tpu.core_type = #tpu.core_type<tc>, window_params = [{transform_indices = @transform_0, window_bounds = array<i64: 16, 512>}, {transform_indices = @transform_1, window_bounds = array<i64: 512, 256>}, {transform_indices = @transform_2, window_bounds = array<i64: 1, 256>}, {transform_indices = @transform_3, window_bounds = array<i64: 16, 256>}]} {
    %c0_i32 = arith.constant 0 : i32
    %0 = arith.cmpi eq, %arg2, %c0_i32 : i32
    %1 = arith.extui %0 : i1 to i32
    %c0_i32_0 = arith.constant 0 : i32
    %2 = arith.cmpi ne, %1, %c0_i32_0 : i32
    scf.if %2 {
      %cst_9 = arith.constant 0.000000e+00 : f32
      %12 = vector.broadcast %cst_9 : f32 to vector<16x256xf32>
      %c0_10 = arith.constant 0 : index
      %c0_11 = arith.constant 0 : index
      %13 = vector.load %arg7[%c0_10, %c0_11] : memref<16x256xf32, #tpu.memory_space<vmem>>, vector<16x256xf32>
      tpu.vector_store %arg7[%c0_10, %c0_11], %12 {strides = array<i32>} : memref<16x256xf32, #tpu.memory_space<vmem>>, vector<16x256xf32>,
    } else {
    }
    %c0 = arith.constant 0 : index
    %c0_1 = arith.constant 0 : index
    %3 = vector.load %arg7[%c0, %c0_1] : memref<16x256xf32, #tpu.memory_space<vmem>>, vector<16x256xf32>
    %c0_2 = arith.constant 0 : index
    %c0_3 = arith.constant 0 : index
    %4 = vector.load %arg3[%c0_2, %c0_3] : memref<16x512xbf16, #tpu.memory_space<vmem>>, vector<16x512xbf16>
    %c0_4 = arith.constant 0 : index
    %c0_5 = arith.constant 0 : index
    %5 = vector.load %arg4[%c0_4, %c0_5] : memref<512x256xbf16, #tpu.memory_space<vmem>>, vector<512x256xbf16>
    %cst = arith.constant dense<0.000000e+00> : vector<16x256xf32>
    %6 = tpu.matmul %4, %5, %cst {dimension_numbers = #tpu.dot_dimension_numbers<[1], [0], [0], [1], [0, 0, 1, 1], [], []>} : vector<16x512xbf16>, vector<512x256xbf16>, vector<16x256xf32> -> vector<16x256xf32>
    %7 = arith.addf %3, %6 : vector<16x256xf32>
    %c0_6 = arith.constant 0 : index
    %c0_7 = arith.constant 0 : index
    %8 = vector.load %arg7[%c0_6, %c0_7] : memref<16x256xf32, #tpu.memory_space<vmem>>, vector<16x256xf32>
    tpu.vector_store %arg7[%c0_6, %c0_7], %7 {strides = array<i32>} : memref<16x256xf32, #tpu.memory_space<vmem>>, vector<16x256xf32>,
    %c7_i32 = arith.constant 7 : i32
    %9 = arith.cmpi eq, %arg2, %c7_i32 : i32
    %10 = arith.extui %9 : i1 to i32
    %c0_i32_8 = arith.constant 0 : i32
    %11 = arith.cmpi ne, %10, %c0_i32_8 : i32
    scf.if %11 {
      %c0_9 = arith.constant 0 : index
      %c0_10 = arith.constant 0 : index
      %12 = vector.load %arg7[%c0_9, %c0_10] : memref<16x256xf32, #tpu.memory_space<vmem>>, vector<16x256xf32>
      %c0_11 = arith.constant 0 : index
      %c0_12 = arith.constant 0 : index
      %13 = vector.load %arg5[%c0_11, %c0_12] : memref<1x256xf32, #tpu.memory_space<vmem>>, vector<1x256xf32>
      %14 = vector.broadcast %13 : vector<1x256xf32> to vector<16x256xf32>
      %15 = arith.addf %12, %14 : vector<16x256xf32>
      %cst_13 = arith.constant dense<0.000000e+00> : vector<256xf32>
      %16 = vector.multi_reduction <add>, %15, %cst_13 [0] : vector<16x256xf32> to vector<256xf32>
      %17 = vector.shape_cast %16 : vector<256xf32> to vector<1x256xf32>
      %cst_14 = arith.constant 1.600000e+01 : f32
      %18 = vector.broadcast %cst_14 : f32 to vector<1x256xf32>
      %19 = arith.divf %17, %18 : vector<1x256xf32>
      %20 = vector.broadcast %19 : vector<1x256xf32> to vector<16x256xf32>
      %21 = arith.subf %15, %20 : vector<16x256xf32>
      %22 = arith.mulf %21, %21 : vector<16x256xf32>
      %cst_15 = arith.constant dense<0.000000e+00> : vector<256xf32>
      %23 = vector.multi_reduction <add>, %22, %cst_15 [0] : vector<16x256xf32> to vector<256xf32>
      %24 = vector.shape_cast %23 : vector<256xf32> to vector<1x256xf32>
      %cst_16 = arith.constant 1.600000e+01 : f32
      %25 = vector.broadcast %cst_16 : f32 to vector<1x256xf32>
      %26 = arith.divf %24, %25 : vector<1x256xf32>
      %27 = vector.broadcast %19 : vector<1x256xf32> to vector<16x256xf32>
      %28 = arith.subf %15, %27 : vector<16x256xf32>
      %cst_17 = arith.constant 9.99999974E-6 : f32
      %29 = vector.broadcast %cst_17 : f32 to vector<1x256xf32>
      %30 = arith.addf %26, %29 : vector<1x256xf32>
      %31 = math.rsqrt %30 : vector<1x256xf32>
      %32 = vector.broadcast %31 : vector<1x256xf32> to vector<16x256xf32>
      %33 = arith.mulf %28, %32 : vector<16x256xf32>
      %cst_18 = arith.constant 0.000000e+00 : f32
      %34 = vector.broadcast %cst_18 : f32 to vector<16x256xf32>
      %35 = arith.cmpf ogt, %33, %34 : vector<16x256xf32>
      %cst_19 = arith.constant 2.000000e-01 : f32
      %36 = vector.broadcast %cst_19 : f32 to vector<16x256xf32>
      %37 = arith.mulf %36, %33 : vector<16x256xf32>
      %38 = arith.select %35, %33, %37 : vector<16x256xi1>, vector<16x256xf32>
      %39 = arith.truncf %38 : vector<16x256xf32> to vector<16x256xbf16>
      %c0_20 = arith.constant 0 : index
      %c0_21 = arith.constant 0 : index
      %40 = vector.load %arg6[%c0_20, %c0_21] : memref<16x256xbf16, #tpu.memory_space<vmem>>, vector<16x256xbf16>
      tpu.vector_store %arg6[%c0_20, %c0_21], %39 {strides = array<i32>} : memref<16x256xbf16, #tpu.memory_space<vmem>>, vector<16x256xbf16>,
    } else {
    }
    return
  }
  func.func @transform_0(%arg0: i32, %arg1: i32, %arg2: i32) -> (i32, i32) {
    %c0_i32 = arith.constant 0 : i32
    return %arg0, %arg2 : i32, i32
  }
  func.func @transform_1(%arg0: i32, %arg1: i32, %arg2: i32) -> (i32, i32) {
    %c0_i32 = arith.constant 0 : i32
    return %arg2, %arg1 : i32, i32
  }
  func.func @transform_2(%arg0: i32, %arg1: i32, %arg2: i32) -> (i32, i32) {
    %c0_i32 = arith.constant 0 : i32
    %c0_i32_0 = arith.constant 0 : i32
    return %c0_i32, %arg1 : i32, i32
  }
  func.func @transform_3(%arg0: i32, %arg1: i32, %arg2: i32) -> (i32, i32) {
    %c0_i32 = arith.constant 0 : i32
    return %arg0, %arg1 : i32, i32
  }
}

module attributes {stable_mosaic.version = 11 : i64} {
  func.func @_final_conv_gap_kernel(%arg0: memref<2x9x8192xbf16, #tpu.memory_space<vmem>>, %arg1: memref<1x8192xbf16, #tpu.memory_space<vmem>>, %arg2: memref<1x1xf32, #tpu.memory_space<vmem>>, %arg3: memref<2x1xf32, #tpu.memory_space<vmem>>) attributes {dimension_semantics = [], scalar_prefetch = 0 : i64, scratch_operands = 0 : i64, tpu.core_type = #tpu.core_type<tc>} {
    %c0 = arith.constant 0 : index
    %c0_0 = arith.constant 0 : index
    %c0_1 = arith.constant 0 : index
    %0 = vector.load %arg0[%c0, %c0_0, %c0_1] : memref<2x9x8192xbf16, #tpu.memory_space<vmem>>, vector<2x9x8192xbf16>
    %1 = arith.extf %0 : vector<2x9x8192xbf16> to vector<2x9x8192xf32>
    %c0_2 = arith.constant 0 : index
    %c0_3 = arith.constant 0 : index
    %2 = vector.load %arg1[%c0_2, %c0_3] : memref<1x8192xbf16, #tpu.memory_space<vmem>>, vector<1x8192xbf16>
    %3 = arith.extf %2 : vector<1x8192xbf16> to vector<1x8192xf32>
    %4 = vector.shape_cast %3 : vector<1x8192xf32> to vector<1x1x8192xf32>
    %5 = vector.broadcast %4 : vector<1x1x8192xf32> to vector<2x9x8192xf32>
    %6 = arith.mulf %1, %5 : vector<2x9x8192xf32>
    %cst = arith.constant dense<0.000000e+00> : vector<2x9xf32>
    %7 = vector.multi_reduction <add>, %6, %cst [2] : vector<2x9x8192xf32> to vector<2x9xf32>
    %cst_4 = arith.constant dense<0.000000e+00> : vector<2xf32>
    %8 = vector.multi_reduction <add>, %7, %cst_4 [1] : vector<2x9xf32> to vector<2xf32>
    %9 = vector.shape_cast %8 : vector<2xf32> to vector<2x1xf32>
    %cst_5 = arith.constant 9.000000e+00 : f32
    %10 = vector.broadcast %cst_5 : f32 to vector<2x1xf32>
    %11 = arith.divf %9, %10 : vector<2x1xf32>
    %c0_6 = arith.constant 0 : index
    %c0_7 = arith.constant 0 : index
    %12 = vector.load %arg2[%c0_6, %c0_7] : memref<1x1xf32, #tpu.memory_space<vmem>>, vector<1x1xf32>
    %13 = vector.broadcast %12 : vector<1x1xf32> to vector<2x1xf32>
    %14 = arith.addf %11, %13 : vector<2x1xf32>
    %c0_8 = arith.constant 0 : index
    %c0_9 = arith.constant 0 : index
    %15 = vector.load %arg3[%c0_8, %c0_9] : memref<2x1xf32, #tpu.memory_space<vmem>>, vector<2x1xf32>
    tpu.vector_store %arg3[%c0_8, %c0_9], %14 {strides = array<i32>} : memref<2x1xf32, #tpu.memory_space<vmem>>, vector<2x1xf32>,
    return
  }
}

</mosaic_0001>

<llo_original>
// kernel: discriminator_forward.5
$region0: #{discriminator_forward.5}
  #allocation0 [shape = 'u32[]', space=smem, size = 0x4, offset = 0x4, fixed_abs, tag = 'smem constant byte address 0x4 - core index']
  #allocation1 [shape = 'u32[144,128]{1,0:T(1,128)}', space=vmem, size = 0x12000, scoped, tag = 'internal scratch']
  #allocation2 [shape = 'f32[512,64]{1,0:T(8,128)}', space=vmem, size = 0x40000, scoped, tag = 'scratch operand']
  %s0 = inlined_call_operand.vmem [shape: bf16[2048,48], index: 0, kind: input, shape index: {}]
  %s1 = inlined_call_operand.vmem [shape: bf16[48,64], index: 1, kind: input, shape index: {}]
  %s2 = inlined_call_operand.vmem [shape: f32[1,64], index: 2, kind: input, shape index: {}]
  %s3 = inlined_call_operand.vmem [shape: bf16[2048,64], index: 3, kind: output, shape index: {}]
  %s4 = sld [smem:[#allocation0]]
  $region53: #{discriminator_forward.5} parent=0
    _
  %s6 = ssub.s32 1, %s4
  %s7 = scalar_select 0, %s6, %s4
  loop: start=0, step=1, limit=6
  $region2: #{discriminator_forward.5} parent=0 // loop_pre_header
    _
  $region3: #{discriminator_forward.5} parent=0 // loop_header
    %s9 = sphi 0, %s13
    %p10 = scmp.ge.s32.totalorder %s9, 6
    %s16 = sphi 0, %s35
    %s17 = sphi 0, %s31
    %s18 = sphi 0, %s27
    %s19 = sphi 0, %s16
    %s20 = sphi 0, %s17
    %s21 = sphi 0, %s18
    %s22 = sphi 0, %s19
    %s23 = sphi 0, %s20
    %s24 = sphi 0, %s21
    %s40 = sphi 0, %s42
    %s43 = sphi 0, %s40
    %s44 = sphi 0, %s43
    %s60 = sphi 0, %s44
    %s68 = sphi 0, %s70
    %s71 = sphi 0, %s68
    %s72 = sphi 0, %s71
    %s88 = sphi 0, %s72
    %s94 = sphi 0, %s96
    %s97 = sphi 0, %s94
    %s98 = sphi 0, %s97
    %s114 = sphi 0, %s98
    %s122 = sphi 0, %s124
    %s125 = sphi 0, %s122
    %s126 = sphi 0, %s125
    %s142 = sphi 0, %s126
  $region4: #{discriminator_forward.5} parent=0 // loop_header_branch
    %12 = sbr.rel (%p10) target = $region8
  $region5: #{discriminator_forward.5} parent=0 // loop_body
    %s14 = ssub.s32 %s9, 1
    %s15 = ssub.s32 %s9, 2
    %s25 = sadd.s32 1, %s18
    %p26 = scmp.ge.s32.totalorder %s25, 1
    %s27 = scalar_select %p26, 0, %s25
    %s28 = sadd.s32 1, %s17
    %s29 = scalar_select %p26, %s28, %s17
    %p30 = scmp.ge.s32.totalorder %s29, 1
    %s31 = scalar_select %p30, 0, %s29
    %s32 = sadd.s32 1, %s16
    %s33 = scalar_select %p30, %s32, %s16
    %p34 = scmp.ge.s32.totalorder %s33, 4
    %s35 = scalar_select %p34, 0, %s33
    %s36 = ssub.s32 %s16, %s35
    %s37 = ssub.s32 %s18, %s27
    %s38 = sor.u32 %s36, %s37
    %p39 = scmp.eq.s32.totalorder %s38, 0
    %s41 = sadd.s32 %s40, 1
    %s42 = scalar_select %p39, %s40, %s41
    %p45 = pneg %p39
    %p46 = scmp.eq.s32.totalorder %s9, 3
    %p47 = por %p45, %p46
    %p48 = scmp.ne.s32.totalorder %s40, %s43
    %p49 = scmp.eq.s32.totalorder %s9, 0
    %p50 = por %p48, %p49
    %p51 = scmp.ne.s32.totalorder %s40, %s43
    %p52 = scmp.eq.s32.totalorder %s14, 3
    %p53 = por %p51, %p52
    %p54 = scmp.ne.s32.totalorder %s43, %s44
    %p55 = scmp.eq.s32.totalorder %s14, 0
    %p56 = por %p54, %p55
    %p57 = scmp.ne.s32.totalorder %s43, %s44
    %p58 = scmp.eq.s32.totalorder %s15, 3
    %p59 = por %p57, %p58
    %p61 = scmp.ne.s32.totalorder %s44, %s60
    %p62 = scmp.eq.s32.totalorder %s15, 0
    %p63 = por %p61, %p62
    %s64 = ssub.s32 %s18, %s27
    %s65 = ssub.s32 %s17, %s31
    %s66 = sor.u32 %s64, %s65
    %p67 = scmp.eq.s32.totalorder %s66, 0
    %s69 = sadd.s32 %s68, 1
    %s70 = scalar_select %p67, %s68, %s69
    %p73 = pneg %p67
    %p74 = scmp.eq.s32.totalorder %s9, 3
    %p75 = por %p73, %p74
    %p76 = scmp.ne.s32.totalorder %s68, %s71
    %p77 = scmp.eq.s32.totalorder %s9, 0
    %p78 = por %p76, %p77
    %p79 = scmp.ne.s32.totalorder %s68, %s71
    %p80 = scmp.eq.s32.totalorder %s14, 3
    %p81 = por %p79, %p80
    %p82 = scmp.ne.s32.totalorder %s71, %s72
    %p83 = scmp.eq.s32.totalorder %s14, 0
    %p84 = por %p82, %p83
    %p85 = scmp.ne.s32.totalorder %s71, %s72
    %p86 = scmp.eq.s32.totalorder %s15, 3
    %p87 = por %p85, %p86
    %p89 = scmp.ne.s32.totalorder %s72, %s88
    %p90 = scmp.eq.s32.totalorder %s15, 0
    %p91 = por %p89, %p90
    %s92 = ssub.s32 %s17, %s31
    %p93 = scmp.eq.s32.totalorder %s92, 0
    %s95 = sadd.s32 %s94, 1
    %s96 = scalar_select %p93, %s94, %s95
    %p99 = pneg %p93
    %p100 = scmp.eq.s32.totalorder %s9, 3
    %p101 = por %p99, %p100
    %p102 = scmp.ne.s32.totalorder %s94, %s97
    %p103 = scmp.eq.s32.totalorder %s9, 0
    %p104 = por %p102, %p103
    %p105 = scmp.ne.s32.totalorder %s94, %s97
    %p106 = scmp.eq.s32.totalorder %s14, 3
    %p107 = por %p105, %p106
    %p108 = scmp.ne.s32.totalorder %s97, %s98
    %p109 = scmp.eq.s32.totalorder %s14, 0
    %p110 = por %p108, %p109
    %p111 = scmp.ne.s32.totalorder %s97, %s98
    %p112 = scmp.eq.s32.totalorder %s15, 3
    %p113 = por %p111, %p112
    %p115 = scmp.ne.s32.totalorder %s98, %s114
    %p116 = scmp.eq.s32.totalorder %s15, 0
    %p117 = por %p115, %p116
    %s118 = ssub.s32 %s16, %s35
    %s119 = ssub.s32 %s17, %s31
    %s120 = sor.u32 %s118, %s119
    %p121 = scmp.eq.s32.totalorder %s120, 0
    %s123 = sadd.s32 %s122, 1
    %s124 = scalar_select %p121, %s122, %s123
    %p127 = pneg %p121
    %p128 = scmp.eq.s32.totalorder %s9, 3
    %p129 = por %p127, %p128
    %p130 = scmp.ne.s32.totalorder %s122, %s125
    %p131 = scmp.eq.s32.totalorder %s9, 0
    %p132 = por %p130, %p131
    %p133 = scmp.ne.s32.totalorder %s122, %s125
    %p134 = scmp.eq.s32.totalorder %s14, 3
    %p135 = por %p133, %p134
    %p136 = scmp.ne.s32.totalorder %s125, %s126
    %p137 = scmp.eq.s32.totalorder %s14, 0
    %p138 = por %p136, %p137
    %p139 = scmp.ne.s32.totalorder %s125, %s126
    %p140 = scmp.eq.s32.totalorder %s15, 3
    %p141 = por %p139, %p140
    %p143 = scmp.ne.s32.totalorder %s126, %s142
    %p144 = scmp.eq.s32.totalorder %s15, 0
    %p145 = por %p143, %p144
    %p146 = scmp.le.s32.totalorder 1, %s9
    %p147 = scmp.lt.s32.totalorder %s9, 5
    %p148 = pnand %p146, %p147
    %p149 = pneg %p148
    // Predicated region
    $region9: #{discriminator_forward.5} parent=5 // pred_check
      _
    $region10: #{discriminator_forward.5} parent=5 // pred_check_branch
      %151 = sbr.rel (%p148) target = $region12
    $region11: #{discriminator_forward.5} parent=5 // pred_region
      %s152 = ssub.s32 %s9, 1
      // Predicated region
      $region13: #{discriminator_forward.5} parent=11 // pred_check
        %p153 = pneg %p84
      $region14: #{discriminator_forward.5} parent=11 // pred_check_branch
        %155 = sbr.rel (%p153) target = $region16
      $region15: #{discriminator_forward.5} parent=11 // pred_region
        %s156 = smul.u32 6, %s21
        %p157 = scmp.lt.s32.totalorder %s156, 5
        %s158 = scalar_select %p157, %s156, 5
        %p159 = scmp.lt.s32.totalorder %s20, 0
        %s160 = scalar_select %p159, %s20, 0
        %s161 = sadd.s32 %s160, %s158
        %s162 = smul.addr %s161, 4
        %s163 = scalar_lea.vmem %s1, %s162
        %s164 = smul.u32 6, %s21
      $region16: #{discriminator_forward.5} parent=11 // pred_fallthru
        _
      // Predicated region
      $region17: #{discriminator_forward.5} parent=11 // pred_check
        %p165 = pneg %p110
      $region18: #{discriminator_forward.5} parent=11 // pred_check_branch
        %167 = sbr.rel (%p165) target = $region20
      $region19: #{discriminator_forward.5} parent=11 // pred_region
        %p168 = scmp.lt.s32.totalorder %s20, 0
        %s169 = scalar_select %p168, %s20, 0
        %s170 = scalar_lea.vmem %s2, %s169
      $region20: #{discriminator_forward.5} parent=11 // pred_fallthru
        _
    $region12: #{discriminator_forward.5} parent=5 // pred_fallthru
      _
    %p171 = scmp.lt.s32.totalorder %s9, 4
    // Predicated region
    $region21: #{discriminator_forward.5} parent=5 // pred_check
      %p172 = pneg %p171
    $region22: #{discriminator_forward.5} parent=5 // pred_check_branch
      %174 = sbr.rel (%p172) target = $region24
    $region23: #{discriminator_forward.5} parent=5 // pred_region
      // Predicated region
      $region25: #{discriminator_forward.5} parent=23 // pred_check
        %p175 = pneg %p50
      $region26: #{discriminator_forward.5} parent=23 // pred_check_branch
        %177 = sbr.rel (%p175) target = $region28
      $region27: #{discriminator_forward.5} parent=23 // pred_region
        %s178 = smul.u32 64, %s16
        %p179 = scmp.lt.s32.totalorder %s178, 255
        %s180 = scalar_select %p179, %s178, 255
        %p181 = scmp.lt.s32.totalorder %s18, 0
        %s182 = scalar_select %p181, %s18, 0
        %s183 = sadd.s32 %s182, %s180
        %s184 = smul.addr %s183, 4
        %s185 = scalar_lea.vmem %s0, %s184
        %s186 = smul.u32 64, %s16
      $region28: #{discriminator_forward.5} parent=23 // pred_fallthru
        _
    $region24: #{discriminator_forward.5} parent=5 // pred_fallthru
      _
    %p187 = scmp.le.s32.totalorder 1, %s9
    %p188 = scmp.lt.s32.totalorder %s9, 5
    %p189 = pnand %p187, %p188
    %p190 = pneg %p189
    // Predicated region
    $region29: #{discriminator_forward.5} parent=5 // pred_check
      _
    $region30: #{discriminator_forward.5} parent=5 // pred_check_branch
      %192 = sbr.rel (%p189) target = $region32
    $region31: #{discriminator_forward.5} parent=5 // pred_region
      %s193 = ssub.s32 %s9, 1
      %s194 = smul.u32 64, %s19
      %p195 = scmp.lt.s32.totalorder %s194, 255
      %s196 = scalar_select %p195, %s194, 255
      %p197 = scmp.lt.s32.totalorder %s21, 0
      %s198 = scalar_select %p197, %s21, 0
      %s199 = sadd.s32 %s198, %s196
      %s200 = smul.addr %s199, 4
      %s201 = scalar_lea.vmem %s0, %s200
      %p202 = pneg %p56
      %p203 = pneg %p53
      %s204 = smul.u32 6, %s21
      %p205 = scmp.lt.s32.totalorder %s204, 5
      %s206 = scalar_select %p205, %s204, 5
      %p207 = scmp.lt.s32.totalorder %s20, 0
      %s208 = scalar_select %p207, %s20, 0
      %s209 = sadd.s32 %s208, %s206
      %s210 = smul.addr %s209, 4
      %s211 = scalar_lea.vmem %s1, %s210
      %p212 = pneg %p84
      %p213 = pneg %p81
      %p214 = scmp.lt.s32.totalorder %s20, 0
      %s215 = scalar_select %p214, %s20, 0
      %s216 = scalar_lea.vmem %s2, %s215
      %p217 = pneg %p110
      %p218 = pneg %p107
      %p219 = pneg %p138
      %p220 = pneg %p135
      %s221 = smul.u32 64, %s19
      %p222 = scmp.lt.s32.totalorder %s221, 255
      %s223 = scalar_select %p222, %s221, 255
      %p224 = scmp.lt.s32.totalorder %s20, 0
      %s225 = scalar_select %p224, %s20, 0
      %s226 = sadd.s32 %s225, %s223
      %s227 = smul.addr %s226, 4
      %s228 = scalar_lea.vmem %s3, %s227
      %s229 = smul.u32 64, %s19
      %p230 = scmp.lt.s32.totalorder %s229, 255
      %s231 = scalar_select %p230, %s229, 255
      %p232 = scmp.lt.s32.totalorder %s21, 0
      %s233 = scalar_select %p232, %s21, 0
      %s234 = sadd.s32 %s233, %s231
      %s235 = smul.addr %s234, 4
      %s236 = scalar_lea.vmem %s0, %s235
      %s237 = smul.u32 64, %s19
      %s238 = smul.u32 6, %s21
      %p239 = scmp.lt.s32.totalorder %s238, 5
      %s240 = scalar_select %p239, %s238, 5
      %p241 = scmp.lt.s32.totalorder %s20, 0
      %s242 = scalar_select %p241, %s20, 0
      %s243 = sadd.s32 %s242, %s240
      %s244 = smul.addr %s243, 4
      %s245 = scalar_lea.vmem %s1, %s244
      %s246 = smul.u32 6, %s21
      %p247 = scmp.lt.s32.totalorder %s20, 0
      %s248 = scalar_select %p247, %s20, 0
      %s249 = scalar_lea.vmem %s2, %s248
      %s250 = smul.u32 64, %s19
      %p251 = scmp.lt.s32.totalorder %s250, 255
      %s252 = scalar_select %p251, %s250, 255
      %p253 = scmp.lt.s32.totalorder %s20, 0
      %s254 = scalar_select %p253, %s20, 0
      %s255 = sadd.s32 %s254, %s252
      %s256 = smul.addr %s255, 4
      %s257 = scalar_lea.vmem %s3, %s256
      %s258 = smul.u32 64, %s19
      %p260 = scmp.eq.s32.totalorder %s21, 0
      // Predicated region
      $region33: #{discriminator_forward.5} parent=31 // pred_check
        %p261 = pneg %p260
      $region34: #{discriminator_forward.5} parent=31 // pred_check_branch
        %263 = sbr.rel (%p261) target = $region36
      $region35: #{discriminator_forward.5} parent=31 // pred_region
        %vm264 = vcmask 523264
        %265 = vst.msk [vmem:[#allocation2] sm:$0xff] %vm264, 0.0
        %266 = vst.msk [vmem:[#allocation2 + $0x8] sm:$0xff] %vm264, 0.0
        %267 = vst.msk [vmem:[#allocation2 + $0x10] sm:$0xff] %vm264, 0.0
        %268 = vst.msk [vmem:[#allocation2 + $0x18] sm:$0xff] %vm264, 0.0
        %269 = vst.msk [vmem:[#allocation2 + $0x20] sm:$0xff] %vm264, 0.0
        %270 = vst.msk [vmem:[#allocation2 + $0x28] sm:$0xff] %vm264, 0.0
        %271 = vst.msk [vmem:[#allocation2 + $0x30] sm:$0xff] %vm264, 0.0
        %272 = vst.msk [vmem:[#allocation2 + $0x38] sm:$0xff] %vm264, 0.0
        %273 = vst.msk [vmem:[#allocation2 + $0x40] sm:$0xff] %vm264, 0.0
        %274 = vst.msk [vmem:[#allocation2 + $0x48] sm:$0xff] %vm264, 0.0
        %275 = vst.msk [vmem:[#allocation2 + $0x50] sm:$0xff] %vm264, 0.0
        %276 = vst.msk [vmem:[#allocation2 + $0x58] sm:$0xff] %vm264, 0.0
        %277 = vst.msk [vmem:[#allocation2 + $0x60] sm:$0xff] %vm264, 0.0
        %278 = vst.msk [vmem:[#allocation2 + $0x68] sm:$0xff] %vm264, 0.0
        %279 = vst.msk [vmem:[#allocation2 + $0x70] sm:$0xff] %vm264, 0.0
        %280 = vst.msk [vmem:[#allocation2 + $0x78] sm:$0xff] %vm264, 0.0
        %281 = vst.msk [vmem:[#allocation2 + $0x80] sm:$0xff] %vm264, 0.0
        %282 = vst.msk [vmem:[#allocation2 + $0x88] sm:$0xff] %vm264, 0.0
        %283 = vst.msk [vmem:[#allocation2 + $0x90] sm:$0xff] %vm264, 0.0
        %284 = vst.msk [vmem:[#allocation2 + $0x98] sm:$0xff] %vm264, 0.0
        %285 = vst.msk [vmem:[#allocation2 + $0xa0] sm:$0xff] %vm264, 0.0
        %286 = vst.msk [vmem:[#allocation2 + $0xa8] sm:$0xff] %vm264, 0.0
        %287 = vst.msk [vmem:[#allocation2 + $0xb0] sm:$0xff] %vm264, 0.0
        %288 = vst.msk [vmem:[#allocation2 + $0xb8] sm:$0xff] %vm264, 0.0
        %289 = vst.msk [vmem:[#allocation2 + $0xc0] sm:$0xff] %vm264, 0.0
        %290 = vst.msk [vmem:[#allocation2 + $0xc8] sm:$0xff] %vm264, 0.0
        %291 = vst.msk [vmem:[#allocation2 + $0xd0] sm:$0xff] %vm264, 0.0
        %292 = vst.msk [vmem:[#allocation2 + $0xd8] sm:$0xff] %vm264, 0.0
        %293 = vst.msk [vmem:[#allocation2 + $0xe0] sm:$0xff] %vm264, 0.0
        %294 = vst.msk [vmem:[#allocation2 + $0xe8] sm:$0xff] %vm264, 0.0
        %295 = vst.msk [vmem:[#allocation2 + $0xf0] sm:$0xff] %vm264, 0.0
        %296 = vst.msk [vmem:[#allocation2 + $0xf8] sm:$0xff] %vm264, 0.0
        %297 = vst.msk [vmem:[#allocation2 + $0x100] sm:$0xff] %vm264, 0.0
        %298 = vst.msk [vmem:[#allocation2 + $0x108] sm:$0xff] %vm264, 0.0
        %299 = vst.msk [vmem:[#allocation2 + $0x110] sm:$0xff] %vm264, 0.0
        %300 = vst.msk [vmem:[#allocation2 + $0x118] sm:$0xff] %vm264, 0.0
        %301 = vst.msk [vmem:[#allocation2 + $0x120] sm:$0xff] %vm264, 0.0
        %302 = vst.msk [vmem:[#allocation2 + $0x128] sm:$0xff] %vm264, 0.0
        %303 = vst.msk [vmem:[#allocation2 + $0x130] sm:$0xff] %vm264, 0.0
        %304 = vst.msk [vmem:[#allocation2 + $0x138] sm:$0xff] %vm264, 0.0
        %305 = vst.msk [vmem:[#allocation2 + $0x140] sm:$0xff] %vm264, 0.0
        %306 = vst.msk [vmem:[#allocation2 + $0x148] sm:$0xff] %vm264, 0.0
        %307 = vst.msk [vmem:[#allocation2 + $0x150] sm:$0xff] %vm264, 0.0
        %308 = vst.msk [vmem:[#allocation2 + $0x158] sm:$0xff] %vm264, 0.0
        %309 = vst.msk [vmem:[#allocation2 + $0x160] sm:$0xff] %vm264, 0.0
        %310 = vst.msk [vmem:[#allocation2 + $0x168] sm:$0xff] %vm264, 0.0
        %311 = vst.msk [vmem:[#allocation2 + $0x170] sm:$0xff] %vm264, 0.0
        %312 = vst.msk [vmem:[#allocation2 + $0x178] sm:$0xff] %vm264, 0.0
        %313 = vst.msk [vmem:[#allocation2 + $0x180] sm:$0xff] %vm264, 0.0
        %314 = vst.msk [vmem:[#allocation2 + $0x188] sm:$0xff] %vm264, 0.0
        %315 = vst.msk [vmem:[#allocation2 + $0x190] sm:$0xff] %vm264, 0.0
        %316 = vst.msk [vmem:[#allocation2 + $0x198] sm:$0xff] %vm264, 0.0
        %317 = vst.msk [vmem:[#allocation2 + $0x1a0] sm:$0xff] %vm264, 0.0
        %318 = vst.msk [vmem:[#allocation2 + $0x1a8] sm:$0xff] %vm264, 0.0
        %319 = vst.msk [vmem:[#allocation2 + $0x1b0] sm:$0xff] %vm264, 0.0
        %320 = vst.msk [vmem:[#allocation2 + $0x1b8] sm:$0xff] %vm264, 0.0
        %321 = vst.msk [vmem:[#allocation2 + $0x1c0] sm:$0xff] %vm264, 0.0
        %322 = vst.msk [vmem:[#allocation2 + $0x1c8] sm:$0xff] %vm264, 0.0
        %323 = vst.msk [vmem:[#allocation2 + $0x1d0] sm:$0xff] %vm264, 0.0
        %324 = vst.msk [vmem:[#allocation2 + $0x1d8] sm:$0xff] %vm264, 0.0
        %325 = vst.msk [vmem:[#allocation2 + $0x1e0] sm:$0xff] %vm264, 0.0
        %326 = vst.msk [vmem:[#allocation2 + $0x1e8] sm:$0xff] %vm264, 0.0
        %327 = vst.msk [vmem:[#allocation2 + $0x1f0] sm:$0xff] %vm264, 0.0
        %328 = vst.msk [vmem:[#allocation2 + $0x1f8] sm:$0xff] %vm264, 0.0
      $region36: #{discriminator_forward.5} parent=31 // pred_fallthru
        _
      %v329 = vld [vmem:[#allocation2] sm:$0xff]
      %v330 = vld [vmem:[#allocation2 + $0x8] sm:$0xff]
      %v331 = vld [vmem:[#allocation2 + $0x10] sm:$0xff]
      %v332 = vld [vmem:[#allocation2 + $0x18] sm:$0xff]
      %v333 = vld [vmem:[#allocation2 + $0x20] sm:$0xff]
      %v334 = vld [vmem:[#allocation2 + $0x28] sm:$0xff]
      %v335 = vld [vmem:[#allocation2 + $0x30] sm:$0xff]
      %v336 = vld [vmem:[#allocation2 + $0x38] sm:$0xff]
      %v337 = vld [vmem:[#allocation2 + $0x40] sm:$0xff]
      %v338 = vld [vmem:[#allocation2 + $0x48] sm:$0xff]
      %v339 = vld [vmem:[#allocation2 + $0x50] sm:$0xff]
      %v340 = vld [vmem:[#allocation2 + $0x58] sm:$0xff]
      %v341 = vld [vmem:[#allocation2 + $0x60] sm:$0xff]
      %v342 = vld [vmem:[#allocation2 + $0x68] sm:$0xff]
      %v343 = vld [vmem:[#allocation2 + $0x70] sm:$0xff]
      %v344 = vld [vmem:[#allocation2 + $0x78] sm:$0xff]
      %v345 = vld [vmem:[#allocation2 + $0x80] sm:$0xff]
      %v346 = vld [vmem:[#allocation2 + $0x88] sm:$0xff]
      %v347 = vld [vmem:[#allocation2 + $0x90] sm:$0xff]
      %v348 = vld [vmem:[#allocation2 + $0x98] sm:$0xff]
      %v349 = vld [vmem:[#allocation2 + $0xa0] sm:$0xff]
      %v350 = vld [vmem:[#allocation2 + $0xa8] sm:$0xff]
      %v351 = vld [vmem:[#allocation2 + $0xb0] sm:$0xff]
      %v352 = vld [vmem:[#allocation2 + $0xb8] sm:$0xff]
      %v353 = vld [vmem:[#allocation2 + $0xc0] sm:$0xff]
      %v354 = vld [vmem:[#allocation2 + $0xc8] sm:$0xff]
      %v355 = vld [vmem:[#allocation2 + $0xd0] sm:$0xff]
      %v356 = vld [vmem:[#allocation2 + $0xd8] sm:$0xff]
      %v357 = vld [vmem:[#allocation2 + $0xe0] sm:$0xff]
      %v358 = vld [vmem:[#allocation2 + $0xe8] sm:$0xff]
      %v359 = vld [vmem:[#allocation2 + $0xf0] sm:$0xff]
      %v360 = vld [vmem:[#allocation2 + $0xf8] sm:$0xff]
      %v361 = vld [vmem:[#allocation2 + $0x100] sm:$0xff]
      %v362 = vld [vmem:[#allocation2 + $0x108] sm:$0xff]
      %v363 = vld [vmem:[#allocation2 + $0x110] sm:$0xff]
      %v364 = vld [vmem:[#allocation2 + $0x118] sm:$0xff]
      %v365 = vld [vmem:[#allocation2 + $0x120] sm:$0xff]
      %v366 = vld [vmem:[#allocation2 + $0x128] sm:$0xff]
      %v367 = vld [vmem:[#allocation2 + $0x130] sm:$0xff]
      %v368 = vld [vmem:[#allocation2 + $0x138] sm:$0xff]
      %v369 = vld [vmem:[#allocation2 + $0x140] sm:$0xff]
      %v370 = vld [vmem:[#allocation2 + $0x148] sm:$0xff]
      %v371 = vld [vmem:[#allocation2 + $0x150] sm:$0xff]
      %v372 = vld [vmem:[#allocation2 + $0x158] sm:$0xff]
      %v373 = vld [vmem:[#allocation2 + $0x160] sm:$0xff]
      %v374 = vld [vmem:[#allocation2 + $0x168] sm:$0xff]
      %v375 = vld [vmem:[#allocation2 + $0x170] sm:$0xff]
      %v376 = vld [vmem:[#allocation2 + $0x178] sm:$0xff]
      %v377 = vld [vmem:[#allocation2 + $0x180] sm:$0xff]
      %v378 = vld [vmem:[#allocation2 + $0x188] sm:$0xff]
      %v379 = vld [vmem:[#allocation2 + $0x190] sm:$0xff]
      %v380 = vld [vmem:[#allocation2 + $0x198] sm:$0xff]
      %v381 = vld [vmem:[#allocation2 + $0x1a0] sm:$0xff]
      %v382 = vld [vmem:[#allocation2 + $0x1a8] sm:$0xff]
      %v383 = vld [vmem:[#allocation2 + $0x1b0] sm:$0xff]
      %v384 = vld [vmem:[#allocation2 + $0x1b8] sm:$0xff]
      %v385 = vld [vmem:[#allocation2 + $0x1c0] sm:$0xff]
      %v386 = vld [vmem:[#allocation2 + $0x1c8] sm:$0xff]
      %v387 = vld [vmem:[#allocation2 + $0x1d0] sm:$0xff]
      %v388 = vld [vmem:[#allocation2 + $0x1d8] sm:$0xff]
      %v389 = vld [vmem:[#allocation2 + $0x1e0] sm:$0xff]
      %v390 = vld [vmem:[#allocation2 + $0x1e8] sm:$0xff]
      %v391 = vld [vmem:[#allocation2 + $0x1f0] sm:$0xff]
      %v392 = vld [vmem:[#allocation2 + $0x1f8] sm:$0xff]
      %v393 = vld [vmem:[%s236] sm:$0xf]
      %v394 = vld [vmem:[%s236 + $0x4] sm:$0xf]
      %v395 = vld [vmem:[%s236 + $0x8] sm:$0xf]
      %v396 = vld [vmem:[%s236 + $0xc] sm:$0xf]
      %v397 = vld [vmem:[%s236 + $0x10] sm:$0xf]
      %v398 = vld [vmem:[%s236 + $0x14] sm:$0xf]
      %v399 = vld [vmem:[%s236 + $0x18] sm:$0xf]
      %v400 = vld [vmem:[%s236 + $0x1c] sm:$0xf]
      %v401 = vld [vmem:[%s236 + $0x20] sm:$0xf]
      %v402 = vld [vmem:[%s236 + $0x24] sm:$0xf]
      %v403 = vld [vmem:[%s236 + $0x28] sm:$0xf]
      %v404 = vld [vmem:[%s236 + $0x2c] sm:$0xf]
      %v405 = vld [vmem:[%s236 + $0x30] sm:$0xf]
      %v406 = vld [vmem:[%s236 + $0x34] sm:$0xf]
      %v407 = vld [vmem:[%s236 + $0x38] sm:$0xf]
      %v408 = vld [vmem:[%s236 + $0x3c] sm:$0xf]
      %v409 = vld [vmem:[%s236 + $0x40] sm:$0xf]
      %v410 = vld [vmem:[%s236 + $0x44] sm:$0xf]
      %v411 = vld [vmem:[%s236 + $0x48] sm:$0xf]
      %v412 = vld [vmem:[%s236 + $0x4c] sm:$0xf]
      %v413 = vld [vmem:[%s236 + $0x50] sm:$0xf]
      %v414 = vld [vmem:[%s236 + $0x54] sm:$0xf]
      %v415 = vld [vmem:[%s236 + $0x58] sm:$0xf]
      %v416 = vld [vmem:[%s236 + $0x5c] sm:$0xf]
      %v417 = vld [vmem:[%s236 + $0x60] sm:$0xf]
      %v418 = vld [vmem:[%s236 + $0x64] sm:$0xf]
      %v419 = vld [vmem:[%s236 + $0x68] sm:$0xf]
      %v420 = vld [vmem:[%s236 + $0x6c] sm:$0xf]
      %v421 = vld [vmem:[%s236 + $0x70] sm:$0xf]
      %v422 = vld [vmem:[%s236 + $0x74] sm:$0xf]
      %v423 = vld [vmem:[%s236 + $0x78] sm:$0xf]
      %v424 = vld [vmem:[%s236 + $0x7c] sm:$0xf]
      %v425 = vld [vmem:[%s236 + $0x80] sm:$0xf]
      %v426 = vld [vmem:[%s236 + $0x84] sm:$0xf]
      %v427 = vld [vmem:[%s236 + $0x88] sm:$0xf]
      %v428 = vld [vmem:[%s236 + $0x8c] sm:$0xf]
      %v429 = vld [vmem:[%s236 + $0x90] sm:$0xf]
      %v430 = vld [vmem:[%s236 + $0x94] sm:$0xf]
      %v431 = vld [vmem:[%s236 + $0x98] sm:$0xf]
      %v432 = vld [vmem:[%s236 + $0x9c] sm:$0xf]
      %v433 = vld [vmem:[%s236 + $0xa0] sm:$0xf]
      %v434 = vld [vmem:[%s236 + $0xa4] sm:$0xf]
      %v435 = vld [vmem:[%s236 + $0xa8] sm:$0xf]
      %v436 = vld [vmem:[%s236 + $0xac] sm:$0xf]
      %v437 = vld [vmem:[%s236 + $0xb0] sm:$0xf]
      %v438 = vld [vmem:[%s236 + $0xb4] sm:$0xf]
      %v439 = vld [vmem:[%s236 + $0xb8] sm:$0xf]
      %v440 = vld [vmem:[%s236 + $0xbc] sm:$0xf]
      %v441 = vld [vmem:[%s236 + $0xc0] sm:$0xf]
      %v442 = vld [vmem:[%s236 + $0xc4] sm:$0xf]
      %v443 = vld [vmem:[%s236 + $0xc8] sm:$0xf]
      %v444 = vld [vmem:[%s236 + $0xcc] sm:$0xf]
      %v445 = vld [vmem:[%s236 + $0xd0] sm:$0xf]
      %v446 = vld [vmem:[%s236 + $0xd4] sm:$0xf]
      %v447 = vld [vmem:[%s236 + $0xd8] sm:$0xf]
      %v448 = vld [vmem:[%s236 + $0xdc] sm:$0xf]
      %v449 = vld [vmem:[%s236 + $0xe0] sm:$0xf]
      %v450 = vld [vmem:[%s236 + $0xe4] sm:$0xf]
      %v451 = vld [vmem:[%s236 + $0xe8] sm:$0xf]
      %v452 = vld [vmem:[%s236 + $0xec] sm:$0xf]
      %v453 = vld [vmem:[%s236 + $0xf0] sm:$0xf]
      %v454 = vld [vmem:[%s236 + $0xf4] sm:$0xf]
      %v455 = vld [vmem:[%s236 + $0xf8] sm:$0xf]
      %v456 = vld [vmem:[%s236 + $0xfc] sm:$0xf]
      %v457 = vld [vmem:[%s245] sm:$0xf]
      %v458 = vld [vmem:[%s245 + $0x4] sm:$0xf]
      %v459 = vld [vmem:[%s245 + $0x8] sm:$0xf]
      %v460 = vld [vmem:[%s245 + $0xc] sm:$0xf]
      %v461 = vld [vmem:[%s245 + $0x10] sm:$0xf]
      %v462 = vld [vmem:[%s245 + $0x14] sm:$0xf]
      %v527 = vunpack.c.l.b16 %v393
      %v528 = vunpack.c.l.b16 %v394
      %v529 = vunpack.c.l.b16 %v395
      %v530 = vunpack.c.l.b16 %v396
      %v531 = vunpack.c.l.b16 %v397
      %v532 = vunpack.c.l.b16 %v398
      %v533 = vunpack.c.l.b16 %v399
      %v534 = vunpack.c.l.b16 %v400
      %v535 = vunpack.c.l.b16 %v401
      %v536 = vunpack.c.l.b16 %v402
      %v537 = vunpack.c.l.b16 %v403
      %v538 = vunpack.c.l.b16 %v404
      %v539 = vunpack.c.l.b16 %v405
      %v540 = vunpack.c.l.b16 %v406
      %v541 = vunpack.c.l.b16 %v407
      %v542 = vunpack.c.l.b16 %v408
      %v543 = vunpack.c.l.b16 %v409
      %v544 = vunpack.c.l.b16 %v410
      %v545 = vunpack.c.l.b16 %v411
      %v546 = vunpack.c.l.b16 %v412
      %v547 = vunpack.c.l.b16 %v413
      %v548 = vunpack.c.l.b16 %v414
      %v549 = vunpack.c.l.b16 %v415
      %v550 = vunpack.c.l.b16 %v416
      %v551 = vunpack.c.l.b16 %v417
      %v552 = vunpack.c.l.b16 %v418
      %v553 = vunpack.c.l.b16 %v419
      %v554 = vunpack.c.l.b16 %v420
      %v555 = vunpack.c.l.b16 %v421
      %v556 = vunpack.c.l.b16 %v422
      %v557 = vunpack.c.l.b16 %v423
      %v558 = vunpack.c.l.b16 %v424
      %v559 = vunpack.c.l.b16 %v425
      %v560 = vunpack.c.l.b16 %v426
      %v561 = vunpack.c.l.b16 %v427
      %v562 = vunpack.c.l.b16 %v428
      %v563 = vunpack.c.l.b16 %v429
      %v564 = vunpack.c.l.b16 %v430
      %v565 = vunpack.c.l.b16 %v431
      %v566 = vunpack.c.l.b16 %v432
      %v567 = vunpack.c.l.b16 %v433
      %v568 = vunpack.c.l.b16 %v434
      %v569 = vunpack.c.l.b16 %v435
      %v570 = vunpack.c.l.b16 %v436
      %v571 = vunpack.c.l.b16 %v437
      %v572 = vunpack.c.l.b16 %v438
      %v573 = vunpack.c.l.b16 %v439
      %v574 = vunpack.c.l.b16 %v440
      %v575 = vunpack.c.l.b16 %v441
      %v576 = vunpack.c.l.b16 %v442
      %v577 = vunpack.c.l.b16 %v443
      %v578 = vunpack.c.l.b16 %v444
      %v579 = vunpack.c.l.b16 %v445
      %v580 = vunpack.c.l.b16 %v446
      %v581 = vunpack.c.l.b16 %v447
      %v582 = vunpack.c.l.b16 %v448
      %v583 = vunpack.c.l.b16 %v449
      %v584 = vunpack.c.l.b16 %v450
      %v585 = vunpack.c.l.b16 %v451
      %v586 = vunpack.c.l.b16 %v452
      %v587 = vunpack.c.l.b16 %v453
      %v588 = vunpack.c.l.b16 %v454
      %v589 = vunpack.c.l.b16 %v455
      %v590 = vunpack.c.l.b16 %v456
      %v591 = vpack.c.b16 %v528, %v527
      %v592 = vpack.c.b16 %v530, %v529
      %v593 = vpack.c.b16 %v532, %v531
      %v594 = vpack.c.b16 %v534, %v533
      %v595 = vpack.c.b16 %v536, %v535
      %v596 = vpack.c.b16 %v538, %v537
      %v597 = vpack.c.b16 %v540, %v539
      %v598 = vpack.c.b16 %v542, %v541
      %v599 = vpack.c.b16 %v544, %v543
      %v600 = vpack.c.b16 %v546, %v545
      %v601 = vpack.c.b16 %v548, %v547
      %v602 = vpack.c.b16 %v550, %v549
      %v603 = vpack.c.b16 %v552, %v551
      %v604 = vpack.c.b16 %v554, %v553
      %v605 = vpack.c.b16 %v556, %v555
      %v606 = vpack.c.b16 %v558, %v557
      %v607 = vpack.c.b16 %v560, %v559
      %v608 = vpack.c.b16 %v562, %v561
      %v609 = vpack.c.b16 %v564, %v563
      %v610 = vpack.c.b16 %v566, %v565
      %v611 = vpack.c.b16 %v568, %v567
      %v612 = vpack.c.b16 %v570, %v569
      %v613 = vpack.c.b16 %v572, %v571
      %v614 = vpack.c.b16 %v574, %v573
      %v615 = vpack.c.b16 %v576, %v575
      %v616 = vpack.c.b16 %v578, %v577
      %v617 = vpack.c.b16 %v580, %v579
      %v618 = vpack.c.b16 %v582, %v581
      %v619 = vpack.c.b16 %v584, %v583
      %v620 = vpack.c.b16 %v586, %v585
      %v621 = vpack.c.b16 %v588, %v587
      %v622 = vpack.c.b16 %v590, %v589
      %v629 = vunpack.c.l.b16 %v457
      %v630 = vunpack.c.l.b16 %v458
      %v631 = vunpack.c.l.b16 %v459
      %v632 = vunpack.c.l.b16 %v460
      %v633 = vunpack.c.l.b16 %v461
      %v634 = vunpack.c.l.b16 %v462
      %v635 = vpack.c.b16 %v630, %v629
      %v636 = vpack.c.b16 %v632, %v631
      %v637 = vpack.c.b16 %v634, %v633
      %vm641 = vcmask 392192
      %v643 = vsel %vm641, %v591, 0
      %v646 = vsel %vm641, %v592, 0
      %v649 = vsel %vm641, %v593, 0
      %v652 = vsel %vm641, %v594, 0
      %v655 = vsel %vm641, %v595, 0
      %v658 = vsel %vm641, %v596, 0
      %v661 = vsel %vm641, %v597, 0
      %v664 = vsel %vm641, %v598, 0
      %v667 = vsel %vm641, %v599, 0
      %v670 = vsel %vm641, %v600, 0
      %v673 = vsel %vm641, %v601, 0
      %v676 = vsel %vm641, %v602, 0
      %v679 = vsel %vm641, %v603, 0
      %v682 = vsel %vm641, %v604, 0
      %v685 = vsel %vm641, %v605, 0
      %v688 = vsel %vm641, %v606, 0
      %v691 = vsel %vm641, %v607, 0
      %v694 = vsel %vm641, %v608, 0
      %v697 = vsel %vm641, %v609, 0
      %v700 = vsel %vm641, %v610, 0
      %v703 = vsel %vm641, %v611, 0
      %v706 = vsel %vm641, %v612, 0
      %v709 = vsel %vm641, %v613, 0
      %v712 = vsel %vm641, %v614, 0
      %v715 = vsel %vm641, %v615, 0
      %v718 = vsel %vm641, %v616, 0
      %v721 = vsel %vm641, %v617, 0
      %v724 = vsel %vm641, %v618, 0
      %v727 = vsel %vm641, %v619, 0
      %v730 = vsel %vm641, %v620, 0
      %v733 = vsel %vm641, %v621, 0
      %v736 = vsel %vm641, %v622, 0
      %738 = vmatprep.subr.bf16.mxu0 0
      %739 = vmatpush1.bf16.msra.mxu0 0
      %740 = vmatprep.subr.bf16.mxu0 0
      %741 = vmatpush1.bf16.msra.mxu0 0
      %742 = vmatprep.subr.bf16.mxu0 0
      %743 = vmatpush1.bf16.msra.mxu0 0
      %744 = vmatprep.subr.bf16.mxu0 0
      %745 = vmatpush1.bf16.msra.mxu0 0
      %746 = vmatprep.subr.bf16.mxu0 0
      %747 = vmatpush1.bf16.msra.mxu0 0
      %748 = vmatprep.subr.bf16.mxu0 0
      %749 = vmatpush1.bf16.msra.mxu0 %v637
      %750 = vmatprep.subr.bf16.mxu0 0
      %751 = vmatpush1.bf16.msra.mxu0 %v636
      %752 = vmatprep.subr.bf16.mxu0 0
      %753 = vmatpush1.bf16.msra.mxu0 %v635
      %754 = vmatprep.subr.bf16.mxu0 0
      %755 = vmatpush2.bf16.msra.mxu0 0
      %756 = vmatprep.subr.bf16.mxu0 0
      %757 = vmatpush2.bf16.msra.mxu0 0
      %758 = vmatprep.subr.bf16.mxu0 0
      %759 = vmatpush2.bf16.msra.mxu0 0
      %760 = vmatprep.subr.bf16.mxu0 0
      %761 = vmatpush2.bf16.msra.mxu0 0
      %762 = vmatprep.subr.bf16.mxu0 0
      %763 = vmatpush2.bf16.msra.mxu0 0
      %764 = vmatprep.subr.bf16.mxu0 0
      %765 = vmatpush2.bf16.msra.mxu0 0
      %766 = vmatprep.subr.bf16.mxu0 0
      %767 = vmatpush2.bf16.msra.mxu0 0
      %768 = vmatprep.subr.bf16.mxu0 0
      %769 = vmatpush2.bf16.msra.mxu0 0
      %770 = vmatprep.mubr.bf16.mxu0 0
      %771 = vmatmul.mubr.bf16.gmra.mxu0 %v643
      %v772 = vpop.f32.mrf.mxu0
      %v773 = vadd.f32 0.0, %v772
      %v774 = vpop.f32.mrf.mxu0
      %v775 = vpop.f32.mrf.mxu0
      %v776 = vadd.f32 0.0, %v775
      %v777 = vpop.f32.mrf.mxu0
      %778 = vmatprep.mubr.bf16.mxu0 0
      %779 = vmatmul.mubr.bf16.gmra.mxu0 %v646
      %v780 = vpop.f32.mrf.mxu0
      %v781 = vadd.f32 0.0, %v780
      %v782 = vpop.f32.mrf.mxu0
      %v783 = vpop.f32.mrf.mxu0
      %v784 = vadd.f32 0.0, %v783
      %v785 = vpop.f32.mrf.mxu0
      %786 = vmatprep.mubr.bf16.mxu0 0
      %787 = vmatmul.mubr.bf16.gmra.mxu0 %v649
      %v788 = vpop.f32.mrf.mxu0
      %v789 = vadd.f32 0.0, %v788
      %v790 = vpop.f32.mrf.mxu0
      %v791 = vpop.f32.mrf.mxu0
      %v792 = vadd.f32 0.0, %v791
      %v793 = vpop.f32.mrf.mxu0
      %794 = vmatprep.mubr.bf16.mxu0 0
      %795 = vmatmul.mubr.bf16.gmra.mxu0 %v652
      %v796 = vpop.f32.mrf.mxu0
      %v797 = vadd.f32 0.0, %v796
      %v798 = vpop.f32.mrf.mxu0
      %v799 = vpop.f32.mrf.mxu0
      %v800 = vadd.f32 0.0, %v799
      %v801 = vpop.f32.mrf.mxu0
      %802 = vmatprep.mubr.bf16.mxu0 0
      %803 = vmatmul.mubr.bf16.gmra.mxu0 %v655
      %v804 = vpop.f32.mrf.mxu0
      %v805 = vadd.f32 0.0, %v804
      %v806 = vpop.f32.mrf.mxu0
      %v807 = vpop.f32.mrf.mxu0
      %v808 = vadd.f32 0.0, %v807
      %v809 = vpop.f32.mrf.mxu0
      %810 = vmatprep.mubr.bf16.mxu0 0
      %811 = vmatmul.mubr.bf16.gmra.mxu0 %v658
      %v812 = vpop.f32.mrf.mxu0
      %v813 = vadd.f32 0.0, %v812
      %v814 = vpop.f32.mrf.mxu0
      %v815 = vpop.f32.mrf.mxu0
      %v816 = vadd.f32 0.0, %v815
      %v817 = vpop.f32.mrf.mxu0
      %818 = vmatprep.mubr.bf16.mxu0 0
      %819 = vmatmul.mubr.bf16.gmra.mxu0 %v661
      %v820 = vpop.f32.mrf.mxu0
      %v821 = vadd.f32 0.0, %v820
      %v822 = vpop.f32.mrf.mxu0
      %v823 = vpop.f32.mrf.mxu0
      %v824 = vadd.f32 0.0, %v823
      %v825 = vpop.f32.mrf.mxu0
      %826 = vmatprep.mubr.bf16.mxu0 0
      %827 = vmatmul.mubr.bf16.gmra.mxu0 %v664
      %v828 = vpop.f32.mrf.mxu0
      %v829 = vadd.f32 0.0, %v828
      %v830 = vpop.f32.mrf.mxu0
      %v831 = vpop.f32.mrf.mxu0
      %v832 = vadd.f32 0.0, %v831
      %v833 = vpop.f32.mrf.mxu0
      %834 = vmatprep.mubr.bf16.mxu0 0
      %835 = vmatmul.mubr.bf16.gmra.mxu0 %v667
      %v836 = vpop.f32.mrf.mxu0
      %v837 = vadd.f32 0.0, %v836
      %v838 = vpop.f32.mrf.mxu0
      %v839 = vpop.f32.mrf.mxu0
      %v840 = vadd.f32 0.0, %v839
      %v841 = vpop.f32.mrf.mxu0
      %842 = vmatprep.mubr.bf16.mxu0 0
      %843 = vmatmul.mubr.bf16.gmra.mxu0 %v670
      %v844 = vpop.f32.mrf.mxu0
      %v845 = vadd.f32 0.0, %v844
      %v846 = vpop.f32.mrf.mxu0
      %v847 = vpop.f32.mrf.mxu0
      %v848 = vadd.f32 0.0, %v847
      %v849 = vpop.f32.mrf.mxu0
      %850 = vmatprep.mubr.bf16.mxu0 0
      %851 = vmatmul.mubr.bf16.gmra.mxu0 %v673
      %v852 = vpop.f32.mrf.mxu0
      %v853 = vadd.f32 0.0, %v852
      %v854 = vpop.f32.mrf.mxu0
      %v855 = vpop.f32.mrf.mxu0
      %v856 = vadd.f32 0.0, %v855
      %v857 = vpop.f32.mrf.mxu0
      %858 = vmatprep.mubr.bf16.mxu0 0
      %859 = vmatmul.mubr.bf16.gmra.mxu0 %v676
      %v860 = vpop.f32.mrf.mxu0
      %v861 = vadd.f32 0.0, %v860
      %v862 = vpop.f32.mrf.mxu0
      %v863 = vpop.f32.mrf.mxu0
      %v864 = vadd.f32 0.0, %v863
      %v865 = vpop.f32.mrf.mxu0
      %866 = vmatprep.mubr.bf16.mxu0 0
      %867 = vmatmul.mubr.bf16.gmra.mxu0 %v679
      %v868 = vpop.f32.mrf.mxu0
      %v869 = vadd.f32 0.0, %v868
      %v870 = vpop.f32.mrf.mxu0
      %v871 = vpop.f32.mrf.mxu0
      %v872 = vadd.f32 0.0, %v871
      %v873 = vpop.f32.mrf.mxu0
      %874 = vmatprep.mubr.bf16.mxu0 0
      %875 = vmatmul.mubr.bf16.gmra.mxu0 %v682
      %v876 = vpop.f32.mrf.mxu0
      %v877 = vadd.f32 0.0, %v876
      %v878 = vpop.f32.mrf.mxu0
      %v879 = vpop.f32.mrf.mxu0
      %v880 = vadd.f32 0.0, %v879
      %v881 = vpop.f32.mrf.mxu0
      %882 = vmatprep.mubr.bf16.mxu0 0
      %883 = vmatmul.mubr.bf16.gmra.mxu0 %v685
      %v884 = vpop.f32.mrf.mxu0
      %v885 = vadd.f32 0.0, %v884
      %v886 = vpop.f32.mrf.mxu0
      %v887 = vpop.f32.mrf.mxu0
      %v888 = vadd.f32 0.0, %v887
      %v889 = vpop.f32.mrf.mxu0
      %890 = vmatprep.mubr.bf16.mxu0 0
      %891 = vmatmul.mubr.bf16.gmra.mxu0 %v688
      %v892 = vpop.f32.mrf.mxu0
      %v893 = vadd.f32 0.0, %v892
      %v894 = vpop.f32.mrf.mxu0
      %v895 = vpop.f32.mrf.mxu0
      %v896 = vadd.f32 0.0, %v895
      %v897 = vpop.f32.mrf.mxu0
      %898 = vmatprep.mubr.bf16.mxu0 0
      %899 = vmatmul.mubr.bf16.gmra.mxu0 %v691
      %v900 = vpop.f32.mrf.mxu0
      %v901 = vadd.f32 0.0, %v900
      %v902 = vpop.f32.mrf.mxu0
      %v903 = vpop.f32.mrf.mxu0
      %v904 = vadd.f32 0.0, %v903
      %v905 = vpop.f32.mrf.mxu0
      %906 = vmatprep.mubr.bf16.mxu0 0
      %907 = vmatmul.mubr.bf16.gmra.mxu0 %v694
      %v908 = vpop.f32.mrf.mxu0
      %v909 = vadd.f32 0.0, %v908
      %v910 = vpop.f32.mrf.mxu0
      %v911 = vpop.f32.mrf.mxu0
      %v912 = vadd.f32 0.0, %v911
      %v913 = vpop.f32.mrf.mxu0
      %914 = vmatprep.mubr.bf16.mxu0 0
      %915 = vmatmul.mubr.bf16.gmra.mxu0 %v697
      %v916 = vpop.f32.mrf.mxu0
      %v917 = vadd.f32 0.0, %v916
      %v918 = vpop.f32.mrf.mxu0
      %v919 = vpop.f32.mrf.mxu0
      %v920 = vadd.f32 0.0, %v919
      %v921 = vpop.f32.mrf.mxu0
      %922 = vmatprep.mubr.bf16.mxu0 0
      %923 = vmatmul.mubr.bf16.gmra.mxu0 %v700
      %v924 = vpop.f32.mrf.mxu0
      %v925 = vadd.f32 0.0, %v924
      %v926 = vpop.f32.mrf.mxu0
      %v927 = vpop.f32.mrf.mxu0
      %v928 = vadd.f32 0.0, %v927
      %v929 = vpop.f32.mrf.mxu0
      %930 = vmatprep.mubr.bf16.mxu0 0
      %931 = vmatmul.mubr.bf16.gmra.mxu0 %v703
      %v932 = vpop.f32.mrf.mxu0
      %v933 = vadd.f32 0.0, %v932
      %v934 = vpop.f32.mrf.mxu0
      %v935 = vpop.f32.mrf.mxu0
      %v936 = vadd.f32 0.0, %v935
      %v937 = vpop.f32.mrf.mxu0
      %938 = vmatprep.mubr.bf16.mxu0 0
      %939 = vmatmul.mubr.bf16.gmra.mxu0 %v706
      %v940 = vpop.f32.mrf.mxu0
      %v941 = vadd.f32 0.0, %v940
      %v942 = vpop.f32.mrf.mxu0
      %v943 = vpop.f32.mrf.mxu0
      %v944 = vadd.f32 0.0, %v943
      %v945 = vpop.f32.mrf.mxu0
      %946 = vmatprep.mubr.bf16.mxu0 0
      %947 = vmatmul.mubr.bf16.gmra.mxu0 %v709
      %v948 = vpop.f32.mrf.mxu0
      %v949 = vadd.f32 0.0, %v948
      %v950 = vpop.f32.mrf.mxu0
      %v951 = vpop.f32.mrf.mxu0
      %v952 = vadd.f32 0.0, %v951
      %v953 = vpop.f32.mrf.mxu0
      %954 = vmatprep.mubr.bf16.mxu0 0
      %955 = vmatmul.mubr.bf16.gmra.mxu0 %v712
      %v956 = vpop.f32.mrf.mxu0
      %v957 = vadd.f32 0.0, %v956
      %v958 = vpop.f32.mrf.mxu0
      %v959 = vpop.f32.mrf.mxu0
      %v960 = vadd.f32 0.0, %v959
      %v961 = vpop.f32.mrf.mxu0
      %962 = vmatprep.mubr.bf16.mxu0 0
      %963 = vmatmul.mubr.bf16.gmra.mxu0 %v715
      %v964 = vpop.f32.mrf.mxu0
      %v965 = vadd.f32 0.0, %v964
      %v966 = vpop.f32.mrf.mxu0
      %v967 = vpop.f32.mrf.mxu0
      %v968 = vadd.f32 0.0, %v967
      %v969 = vpop.f32.mrf.mxu0
      %970 = vmatprep.mubr.bf16.mxu0 0
      %971 = vmatmul.mubr.bf16.gmra.mxu0 %v718
      %v972 = vpop.f32.mrf.mxu0
      %v973 = vadd.f32 0.0, %v972
      %v974 = vpop.f32.mrf.mxu0
      %v975 = vpop.f32.mrf.mxu0
      %v976 = vadd.f32 0.0, %v975
      %v977 = vpop.f32.mrf.mxu0
      %978 = vmatprep.mubr.bf16.mxu0 0
      %979 = vmatmul.mubr.bf16.gmra.mxu0 %v721
      %v980 = vpop.f32.mrf.mxu0
      %v981 = vadd.f32 0.0, %v980
      %v982 = vpop.f32.mrf.mxu0
      %v983 = vpop.f32.mrf.mxu0
      %v984 = vadd.f32 0.0, %v983
      %v985 = vpop.f32.mrf.mxu0
      %986 = vmatprep.mubr.bf16.mxu0 0
      %987 = vmatmul.mubr.bf16.gmra.mxu0 %v724
      %v988 = vpop.f32.mrf.mxu0
      %v989 = vadd.f32 0.0, %v988
      %v990 = vpop.f32.mrf.mxu0
      %v991 = vpop.f32.mrf.mxu0
      %v992 = vadd.f32 0.0, %v991
      %v993 = vpop.f32.mrf.mxu0
      %994 = vmatprep.mubr.bf16.mxu0 0
      %995 = vmatmul.mubr.bf16.gmra.mxu0 %v727
      %v996 = vpop.f32.mrf.mxu0
      %v997 = vadd.f32 0.0, %v996
      %v998 = vpop.f32.mrf.mxu0
      %v999 = vpop.f32.mrf.mxu0
      %v1000 = vadd.f32 0.0, %v999
      %v1001 = vpop.f32.mrf.mxu0
      %1002 = vmatprep.mubr.bf16.mxu0 0
      %1003 = vmatmul.mubr.bf16.gmra.mxu0 %v730
      %v1004 = vpop.f32.mrf.mxu0
      %v1005 = vadd.f32 0.0, %v1004
      %v1006 = vpop.f32.mrf.mxu0
      %v1007 = vpop.f32.mrf.mxu0
      %v1008 = vadd.f32 0.0, %v1007
      %v1009 = vpop.f32.mrf.mxu0
      %1010 = vmatprep.mubr.bf16.mxu0 0
      %1011 = vmatmul.mubr.bf16.gmra.mxu0 %v733
      %v1012 = vpop.f32.mrf.mxu0
      %v1013 = vadd.f32 0.0, %v1012
      %v1014 = vpop.f32.mrf.mxu0
      %v1015 = vpop.f32.mrf.mxu0
      %v1016 = vadd.f32 0.0, %v1015
      %v1017 = vpop.f32.mrf.mxu0
      %1018 = vmatprep.mubr.bf16.mxu0 0
      %1019 = vmatmul.mubr.bf16.gmra.mxu0 %v736
      %v1020 = vpop.f32.mrf.mxu0
      %v1021 = vadd.f32 0.0, %v1020
      %v1022 = vpop.f32.mrf.mxu0
      %v1023 = vpop.f32.mrf.mxu0
      %v1024 = vadd.f32 0.0, %v1023
      %v1025 = vpop.f32.mrf.mxu0
      %1026 = vdwg.mxu0
      %v1027 = vadd.f32 %v329, %v773
      %v1028 = vadd.f32 %v330, %v776
      %v1029 = vadd.f32 %v331, %v781
      %v1030 = vadd.f32 %v332, %v784
      %v1031 = vadd.f32 %v333, %v789
      %v1032 = vadd.f32 %v334, %v792
      %v1033 = vadd.f32 %v335, %v797
      %v1034 = vadd.f32 %v336, %v800
      %v1035 = vadd.f32 %v337, %v805
      %v1036 = vadd.f32 %v338, %v808
      %v1037 = vadd.f32 %v339, %v813
      %v1038 = vadd.f32 %v340, %v816
      %v1039 = vadd.f32 %v341, %v821
      %v1040 = vadd.f32 %v342, %v824
      %v1041 = vadd.f32 %v343, %v829
      %v1042 = vadd.f32 %v344, %v832
      %v1043 = vadd.f32 %v345, %v837
      %v1044 = vadd.f32 %v346, %v840
      %v1045 = vadd.f32 %v347, %v845
      %v1046 = vadd.f32 %v348, %v848
      %v1047 = vadd.f32 %v349, %v853
      %v1048 = vadd.f32 %v350, %v856
      %v1049 = vadd.f32 %v351, %v861
      %v1050 = vadd.f32 %v352, %v864
      %v1051 = vadd.f32 %v353, %v869
      %v1052 = vadd.f32 %v354, %v872
      %v1053 = vadd.f32 %v355, %v877
      %v1054 = vadd.f32 %v356, %v880
      %v1055 = vadd.f32 %v357, %v885
      %v1056 = vadd.f32 %v358, %v888
      %v1057 = vadd.f32 %v359, %v893
      %v1058 = vadd.f32 %v360, %v896
      %v1059 = vadd.f32 %v361, %v901
      %v1060 = vadd.f32 %v362, %v904
      %v1061 = vadd.f32 %v363, %v909
      %v1062 = vadd.f32 %v364, %v912
      %v1063 = vadd.f32 %v365, %v917
      %v1064 = vadd.f32 %v366, %v920
      %v1065 = vadd.f32 %v367, %v925
      %v1066 = vadd.f32 %v368, %v928
      %v1067 = vadd.f32 %v369, %v933
      %v1068 = vadd.f32 %v370, %v936
      %v1069 = vadd.f32 %v371, %v941
      %v1070 = vadd.f32 %v372, %v944
      %v1071 = vadd.f32 %v373, %v949
      %v1072 = vadd.f32 %v374, %v952
      %v1073 = vadd.f32 %v375, %v957
      %v1074 = vadd.f32 %v376, %v960
      %v1075 = vadd.f32 %v377, %v965
      %v1076 = vadd.f32 %v378, %v968
      %v1077 = vadd.f32 %v379, %v973
      %v1078 = vadd.f32 %v380, %v976
      %v1079 = vadd.f32 %v381, %v981
      %v1080 = vadd.f32 %v382, %v984
      %v1081 = vadd.f32 %v383, %v989
      %v1082 = vadd.f32 %v384, %v992
      %v1083 = vadd.f32 %v385, %v997
      %v1084 = vadd.f32 %v386, %v1000
      %v1085 = vadd.f32 %v387, %v1005
      %v1086 = vadd.f32 %v388, %v1008
      %v1087 = vadd.f32 %v389, %v1013
      %v1088 = vadd.f32 %v390, %v1016
      %v1089 = vadd.f32 %v391, %v1021
      %v1090 = vadd.f32 %v392, %v1024
      %vm1091 = vcmask 523264
      %1092 = vst.msk [vmem:[#allocation2] sm:$0xff] %vm1091, %v1027
      %1093 = vst.msk [vmem:[#allocation2 + $0x8] sm:$0xff] %vm1091, %v1028
      %1094 = vst.msk [vmem:[#allocation2 + $0x10] sm:$0xff] %vm1091, %v1029
      %1095 = vst.msk [vmem:[#allocation2 + $0x18] sm:$0xff] %vm1091, %v1030
      %1096 = vst.msk [vmem:[#allocation2 + $0x20] sm:$0xff] %vm1091, %v1031
      %1097 = vst.msk [vmem:[#allocation2 + $0x28] sm:$0xff] %vm1091, %v1032
      %1098 = vst.msk [vmem:[#allocation2 + $0x30] sm:$0xff] %vm1091, %v1033
      %1099 = vst.msk [vmem:[#allocation2 + $0x38] sm:$0xff] %vm1091, %v1034
      %1100 = vst.msk [vmem:[#allocation2 + $0x40] sm:$0xff] %vm1091, %v1035
      %1101 = vst.msk [vmem:[#allocation2 + $0x48] sm:$0xff] %vm1091, %v1036
      %1102 = vst.msk [vmem:[#allocation2 + $0x50] sm:$0xff] %vm1091, %v1037
      %1103 = vst.msk [vmem:[#allocation2 + $0x58] sm:$0xff] %vm1091, %v1038
      %1104 = vst.msk [vmem:[#allocation2 + $0x60] sm:$0xff] %vm1091, %v1039
      %1105 = vst.msk [vmem:[#allocation2 + $0x68] sm:$0xff] %vm1091, %v1040
      %1106 = vst.msk [vmem:[#allocation2 + $0x70] sm:$0xff] %vm1091, %v1041
      %1107 = vst.msk [vmem:[#allocation2 + $0x78] sm:$0xff] %vm1091, %v1042
      %1108 = vst.msk [vmem:[#allocation2 + $0x80] sm:$0xff] %vm1091, %v1043
      %1109 = vst.msk [vmem:[#allocation2 + $0x88] sm:$0xff] %vm1091, %v1044
      %1110 = vst.msk [vmem:[#allocation2 + $0x90] sm:$0xff] %vm1091, %v1045
      %1111 = vst.msk [vmem:[#allocation2 + $0x98] sm:$0xff] %vm1091, %v1046
      %1112 = vst.msk [vmem:[#allocation2 + $0xa0] sm:$0xff] %vm1091, %v1047
      %1113 = vst.msk [vmem:[#allocation2 + $0xa8] sm:$0xff] %vm1091, %v1048
      %1114 = vst.msk [vmem:[#allocation2 + $0xb0] sm:$0xff] %vm1091, %v1049
      %1115 = vst.msk [vmem:[#allocation2 + $0xb8] sm:$0xff] %vm1091, %v1050
      %1116 = vst.msk [vmem:[#allocation2 + $0xc0] sm:$0xff] %vm1091, %v1051
      %1117 = vst.msk [vmem:[#allocation2 + $0xc8] sm:$0xff] %vm1091, %v1052
      %1118 = vst.msk [vmem:[#allocation2 + $0xd0] sm:$0xff] %vm1091, %v1053
      %1119 = vst.msk [vmem:[#allocation2 + $0xd8] sm:$0xff] %vm1091, %v1054
      %1120 = vst.msk [vmem:[#allocation2 + $0xe0] sm:$0xff] %vm1091, %v1055
      %1121 = vst.msk [vmem:[#allocation2 + $0xe8] sm:$0xff] %vm1091, %v1056
      %1122 = vst.msk [vmem:[#allocation2 + $0xf0] sm:$0xff] %vm1091, %v1057
      %1123 = vst.msk [vmem:[#allocation2 + $0xf8] sm:$0xff] %vm1091, %v1058
      %1124 = vst.msk [vmem:[#allocation2 + $0x100] sm:$0xff] %vm1091, %v1059
      %1125 = vst.msk [vmem:[#allocation2 + $0x108] sm:$0xff] %vm1091, %v1060
      %1126 = vst.msk [vmem:[#allocation2 + $0x110] sm:$0xff] %vm1091, %v1061
      %1127 = vst.msk [vmem:[#allocation2 + $0x118] sm:$0xff] %vm1091, %v1062
      %1128 = vst.msk [vmem:[#allocation2 + $0x120] sm:$0xff] %vm1091, %v1063
      %1129 = vst.msk [vmem:[#allocation2 + $0x128] sm:$0xff] %vm1091, %v1064
      %1130 = vst.msk [vmem:[#allocation2 + $0x130] sm:$0xff] %vm1091, %v1065
      %1131 = vst.msk [vmem:[#allocation2 + $0x138] sm:$0xff] %vm1091, %v1066
      %1132 = vst.msk [vmem:[#allocation2 + $0x140] sm:$0xff] %vm1091, %v1067
      %1133 = vst.msk [vmem:[#allocation2 + $0x148] sm:$0xff] %vm1091, %v1068
      %1134 = vst.msk [vmem:[#allocation2 + $0x150] sm:$0xff] %vm1091, %v1069
      %1135 = vst.msk [vmem:[#allocation2 + $0x158] sm:$0xff] %vm1091, %v1070
      %1136 = vst.msk [vmem:[#allocation2 + $0x160] sm:$0xff] %vm1091, %v1071
      %1137 = vst.msk [vmem:[#allocation2 + $0x168] sm:$0xff] %vm1091, %v1072
      %1138 = vst.msk [vmem:[#allocation2 + $0x170] sm:$0xff] %vm1091, %v1073
      %1139 = vst.msk [vmem:[#allocation2 + $0x178] sm:$0xff] %vm1091, %v1074
      %1140 = vst.msk [vmem:[#allocation2 + $0x180] sm:$0xff] %vm1091, %v1075
      %1141 = vst.msk [vmem:[#allocation2 + $0x188] sm:$0xff] %vm1091, %v1076
      %1142 = vst.msk [vmem:[#allocation2 + $0x190] sm:$0xff] %vm1091, %v1077
      %1143 = vst.msk [vmem:[#allocation2 + $0x198] sm:$0xff] %vm1091, %v1078
      %1144 = vst.msk [vmem:[#allocation2 + $0x1a0] sm:$0xff] %vm1091, %v1079
      %1145 = vst.msk [vmem:[#allocation2 + $0x1a8] sm:$0xff] %vm1091, %v1080
      %1146 = vst.msk [vmem:[#allocation2 + $0x1b0] sm:$0xff] %vm1091, %v1081
      %1147 = vst.msk [vmem:[#allocation2 + $0x1b8] sm:$0xff] %vm1091, %v1082
      %1148 = vst.msk [vmem:[#allocation2 + $0x1c0] sm:$0xff] %vm1091, %v1083
      %1149 = vst.msk [vmem:[#allocation2 + $0x1c8] sm:$0xff] %vm1091, %v1084
      %1150 = vst.msk [vmem:[#allocation2 + $0x1d0] sm:$0xff] %vm1091, %v1085
      %1151 = vst.msk [vmem:[#allocation2 + $0x1d8] sm:$0xff] %vm1091, %v1086
      %1152 = vst.msk [vmem:[#allocation2 + $0x1e0] sm:$0xff] %vm1091, %v1087
      %1153 = vst.msk [vmem:[#allocation2 + $0x1e8] sm:$0xff] %vm1091, %v1088
      %1154 = vst.msk [vmem:[#allocation2 + $0x1f0] sm:$0xff] %vm1091, %v1089
      %1155 = vst.msk [vmem:[#allocation2 + $0x1f8] sm:$0xff] %vm1091, %v1090
      // Predicated region
      $region37: #{discriminator_forward.5} parent=31 // pred_check
        %p1156 = pneg %p260
      $region38: #{discriminator_forward.5} parent=31 // pred_check_branch
        %1158 = sbr.rel (%p1156) target = $region40
      $region39: #{discriminator_forward.5} parent=31 // pred_region
        %v1159 = vld [vmem:[#allocation2] sm:$0xff]
        %v1160 = vld [vmem:[#allocation2 + $0x8] sm:$0xff]
        %v1161 = vld [vmem:[#allocation2 + $0x10] sm:$0xff]
        %v1162 = vld [vmem:[#allocation2 + $0x18] sm:$0xff]
        %v1163 = vld [vmem:[#allocation2 + $0x20] sm:$0xff]
        %v1164 = vld [vmem:[#allocation2 + $0x28] sm:$0xff]
        %v1165 = vld [vmem:[#allocation2 + $0x30] sm:$0xff]
        %v1166 = vld [vmem:[#allocation2 + $0x38] sm:$0xff]
        %v1167 = vld [vmem:[#allocation2 + $0x40] sm:$0xff]
        %v1168 = vld [vmem:[#allocation2 + $0x48] sm:$0xff]
        %v1169 = vld [vmem:[#allocation2 + $0x50] sm:$0xff]
        %v1170 = vld [vmem:[#allocation2 + $0x58] sm:$0xff]
        %v1171 = vld [vmem:[#allocation2 + $0x60] sm:$0xff]
        %v1172 = vld [vmem:[#allocation2 + $0x68] sm:$0xff]
        %v1173 = vld [vmem:[#allocation2 + $0x70] sm:$0xff]
        %v1174 = vld [vmem:[#allocation2 + $0x78] sm:$0xff]
        %v1175 = vld [vmem:[#allocation2 + $0x80] sm:$0xff]
        %v1176 = vld [vmem:[#allocation2 + $0x88] sm:$0xff]
        %v1177 = vld [vmem:[#allocation2 + $0x90] sm:$0xff]
        %v1178 = vld [vmem:[#allocation2 + $0x98] sm:$0xff]
        %v1179 = vld [vmem:[#allocation2 + $0xa0] sm:$0xff]
        %v1180 = vld [vmem:[#allocation2 + $0xa8] sm:$0xff]
        %v1181 = vld [vmem:[#allocation2 + $0xb0] sm:$0xff]
        %v1182 = vld [vmem:[#allocation2 + $0xb8] sm:$0xff]
        %v1183 = vld [vmem:[#allocation2 + $0xc0] sm:$0xff]
        %v1184 = vld [vmem:[#allocation2 + $0xc8] sm:$0xff]
        %v1185 = vld [vmem:[#allocation2 + $0xd0] sm:$0xff]
        %v1186 = vld [vmem:[#allocation2 + $0xd8] sm:$0xff]
        %v1187 = vld [vmem:[#allocation2 + $0xe0] sm:$0xff]
        %v1188 = vld [vmem:[#allocation2 + $0xe8] sm:$0xff]
        %v1189 = vld [vmem:[#allocation2 + $0xf0] sm:$0xff]
        %v1190 = vld [vmem:[#allocation2 + $0xf8] sm:$0xff]
        %v1191 = vld [vmem:[#allocation2 + $0x100] sm:$0xff]
        %v1192 = vld [vmem:[#allocation2 + $0x108] sm:$0xff]
        %v1193 = vld [vmem:[#allocation2 + $0x110] sm:$0xff]
        %v1194 = vld [vmem:[#allocation2 + $0x118] sm:$0xff]
        %v1195 = vld [vmem:[#allocation2 + $0x120] sm:$0xff]
        %v1196 = vld [vmem:[#allocation2 + $0x128] sm:$0xff]
        %v1197 = vld [vmem:[#allocation2 + $0x130] sm:$0xff]
        %v1198 = vld [vmem:[#allocation2 + $0x138] sm:$0xff]
        %v1199 = vld [vmem:[#allocation2 + $0x140] sm:$0xff]
        %v1200 = vld [vmem:[#allocation2 + $0x148] sm:$0xff]
        %v1201 = vld [vmem:[#allocation2 + $0x150] sm:$0xff]
        %v1202 = vld [vmem:[#allocation2 + $0x158] sm:$0xff]
        %v1203 = vld [vmem:[#allocation2 + $0x160] sm:$0xff]
        %v1204 = vld [vmem:[#allocation2 + $0x168] sm:$0xff]
        %v1205 = vld [vmem:[#allocation2 + $0x170] sm:$0xff]
        %v1206 = vld [vmem:[#allocation2 + $0x178] sm:$0xff]
        %v1207 = vld [vmem:[#allocation2 + $0x180] sm:$0xff]
        %v1208 = vld [vmem:[#allocation2 + $0x188] sm:$0xff]
        %v1209 = vld [vmem:[#allocation2 + $0x190] sm:$0xff]
        %v1210 = vld [vmem:[#allocation2 + $0x198] sm:$0xff]
        %v1211 = vld [vmem:[#allocation2 + $0x1a0] sm:$0xff]
        %v1212 = vld [vmem:[#allocation2 + $0x1a8] sm:$0xff]
        %v1213 = vld [vmem:[#allocation2 + $0x1b0] sm:$0xff]
        %v1214 = vld [vmem:[#allocation2 + $0x1b8] sm:$0xff]
        %v1215 = vld [vmem:[#allocation2 + $0x1c0] sm:$0xff]
        %v1216 = vld [vmem:[#allocation2 + $0x1c8] sm:$0xff]
        %v1217 = vld [vmem:[#allocation2 + $0x1d0] sm:$0xff]
        %v1218 = vld [vmem:[#allocation2 + $0x1d8] sm:$0xff]
        %v1219 = vld [vmem:[#allocation2 + $0x1e0] sm:$0xff]
        %v1220 = vld [vmem:[#allocation2 + $0x1e8] sm:$0xff]
        %v1221 = vld [vmem:[#allocation2 + $0x1f0] sm:$0xff]
        %v1222 = vld [vmem:[#allocation2 + $0x1f8] sm:$0xff]
        %v1223 = vld [vmem:[%s249] sm:$0x1]
        %v1225 = vlaneseq
        %v1226 = vshrl.u32 %v1225, 7
        %v1227 = vsub.s32 0, %v1226
        %v1228 = vrot.slane %v1223, %v1227
        %v1230 = vadd.f32 %v1159, %v1228
        %v1231 = vadd.f32 %v1160, %v1228
        %v1232 = vadd.f32 %v1161, %v1228
        %v1233 = vadd.f32 %v1162, %v1228
        %v1234 = vadd.f32 %v1163, %v1228
        %v1235 = vadd.f32 %v1164, %v1228
        %v1236 = vadd.f32 %v1165, %v1228
        %v1237 = vadd.f32 %v1166, %v1228
        %v1238 = vadd.f32 %v1167, %v1228
        %v1239 = vadd.f32 %v1168, %v1228
        %v1240 = vadd.f32 %v1169, %v1228
        %v1241 = vadd.f32 %v1170, %v1228
        %v1242 = vadd.f32 %v1171, %v1228
        %v1243 = vadd.f32 %v1172, %v1228
        %v1244 = vadd.f32 %v1173, %v1228
        %v1245 = vadd.f32 %v1174, %v1228
        %v1246 = vadd.f32 %v1175, %v1228
        %v1247 = vadd.f32 %v1176, %v1228
        %v1248 = vadd.f32 %v1177, %v1228
        %v1249 = vadd.f32 %v1178, %v1228
        %v1250 = vadd.f32 %v1179, %v1228
        %v1251 = vadd.f32 %v1180, %v1228
        %v1252 = vadd.f32 %v1181, %v1228
        %v1253 = vadd.f32 %v1182, %v1228
        %v1254 = vadd.f32 %v1183, %v1228
        %v1255 = vadd.f32 %v1184, %v1228
        %v1256 = vadd.f32 %v1185, %v1228
        %v1257 = vadd.f32 %v1186, %v1228
        %v1258 = vadd.f32 %v1187, %v1228
        %v1259 = vadd.f32 %v1188, %v1228
        %v1260 = vadd.f32 %v1189, %v1228
        %v1261 = vadd.f32 %v1190, %v1228
        %v1262 = vadd.f32 %v1191, %v1228
        %v1263 = vadd.f32 %v1192, %v1228
        %v1264 = vadd.f32 %v1193, %v1228
        %v1265 = vadd.f32 %v1194, %v1228
        %v1266 = vadd.f32 %v1195, %v1228
        %v1267 = vadd.f32 %v1196, %v1228
        %v1268 = vadd.f32 %v1197, %v1228
        %v1269 = vadd.f32 %v1198, %v1228
        %v1270 = vadd.f32 %v1199, %v1228
        %v1271 = vadd.f32 %v1200, %v1228
        %v1272 = vadd.f32 %v1201, %v1228
        %v1273 = vadd.f32 %v1202, %v1228
        %v1274 = vadd.f32 %v1203, %v1228
        %v1275 = vadd.f32 %v1204, %v1228
        %v1276 = vadd.f32 %v1205, %v1228
        %v1277 = vadd.f32 %v1206, %v1228
        %v1278 = vadd.f32 %v1207, %v1228
        %v1279 = vadd.f32 %v1208, %v1228
        %v1280 = vadd.f32 %v1209, %v1228
        %v1281 = vadd.f32 %v1210, %v1228
        %v1282 = vadd.f32 %v1211, %v1228
        %v1283 = vadd.f32 %v1212, %v1228
        %v1284 = vadd.f32 %v1213, %v1228
        %v1285 = vadd.f32 %v1214, %v1228
        %v1286 = vadd.f32 %v1215, %v1228
        %v1287 = vadd.f32 %v1216, %v1228
        %v1288 = vadd.f32 %v1217, %v1228
        %v1289 = vadd.f32 %v1218, %v1228
        %v1290 = vadd.f32 %v1219, %v1228
        %v1291 = vadd.f32 %v1220, %v1228
        %v1292 = vadd.f32 %v1221, %v1228
        %v1293 = vadd.f32 %v1222, %v1228
        %vm1294 = vcmp.gt.f32.partialorder %v1230, 0.0
        %vm1295 = vcmp.gt.f32.partialorder %v1231, 0.0
        %vm1296 = vcmp.gt.f32.partialorder %v1232, 0.0
        %vm1297 = vcmp.gt.f32.partialorder %v1233, 0.0
        %vm1298 = vcmp.gt.f32.partialorder %v1234, 0.0
        %vm1299 = vcmp.gt.f32.partialorder %v1235, 0.0
        %vm1300 = vcmp.gt.f32.partialorder %v1236, 0.0
        %vm1301 = vcmp.gt.f32.partialorder %v1237, 0.0
        %vm1302 = vcmp.gt.f32.partialorder %v1238, 0.0
        %vm1303 = vcmp.gt.f32.partialorder %v1239, 0.0
        %vm1304 = vcmp.gt.f32.partialorder %v1240, 0.0
        %vm1305 = vcmp.gt.f32.partialorder %v1241, 0.0
        %vm1306 = vcmp.gt.f32.partialorder %v1242, 0.0
        %vm1307 = vcmp.gt.f32.partialorder %v1243, 0.0
        %vm1308 = vcmp.gt.f32.partialorder %v1244, 0.0
        %vm1309 = vcmp.gt.f32.partialorder %v1245, 0.0
        %vm1310 = vcmp.gt.f32.partialorder %v1246, 0.0
        %vm1311 = vcmp.gt.f32.partialorder %v1247, 0.0
        %vm1312 = vcmp.gt.f32.partialorder %v1248, 0.0
        %vm1313 = vcmp.gt.f32.partialorder %v1249, 0.0
        %vm1314 = vcmp.gt.f32.partialorder %v1250, 0.0
        %vm1315 = vcmp.gt.f32.partialorder %v1251, 0.0
        %vm1316 = vcmp.gt.f32.partialorder %v1252, 0.0
        %vm1317 = vcmp.gt.f32.partialorder %v1253, 0.0
        %vm1318 = vcmp.gt.f32.partialorder %v1254, 0.0
        %vm1319 = vcmp.gt.f32.partialorder %v1255, 0.0
        %vm1320 = vcmp.gt.f32.partialorder %v1256, 0.0
        %vm1321 = vcmp.gt.f32.partialorder %v1257, 0.0
        %vm1322 = vcmp.gt.f32.partialorder %v1258, 0.0
        %vm1323 = vcmp.gt.f32.partialorder %v1259, 0.0
        %vm1324 = vcmp.gt.f32.partialorder %v1260, 0.0
        %vm1325 = vcmp.gt.f32.partialorder %v1261, 0.0
        %vm1326 = vcmp.gt.f32.partialorder %v1262, 0.0
        %vm1327 = vcmp.gt.f32.partialorder %v1263, 0.0
        %vm1328 = vcmp.gt.f32.partialorder %v1264, 0.0
        %vm1329 = vcmp.gt.f32.partialorder %v1265, 0.0
        %vm1330 = vcmp.gt.f32.partialorder %v1266, 0.0
        %vm1331 = vcmp.gt.f32.partialorder %v1267, 0.0
        %vm1332 = vcmp.gt.f32.partialorder %v1268, 0.0
        %vm1333 = vcmp.gt.f32.partialorder %v1269, 0.0
        %vm1334 = vcmp.gt.f32.partialorder %v1270, 0.0
        %vm1335 = vcmp.gt.f32.partialorder %v1271, 0.0
        %vm1336 = vcmp.gt.f32.partialorder %v1272, 0.0
        %vm1337 = vcmp.gt.f32.partialorder %v1273, 0.0
        %vm1338 = vcmp.gt.f32.partialorder %v1274, 0.0
        %vm1339 = vcmp.gt.f32.partialorder %v1275, 0.0
        %vm1340 = vcmp.gt.f32.partialorder %v1276, 0.0
        %vm1341 = vcmp.gt.f32.partialorder %v1277, 0.0
        %vm1342 = vcmp.gt.f32.partialorder %v1278, 0.0
        %vm1343 = vcmp.gt.f32.partialorder %v1279, 0.0
        %vm1344 = vcmp.gt.f32.partialorder %v1280, 0.0
        %vm1345 = vcmp.gt.f32.partialorder %v1281, 0.0
        %vm1346 = vcmp.gt.f32.partialorder %v1282, 0.0
        %vm1347 = vcmp.gt.f32.partialorder %v1283, 0.0
        %vm1348 = vcmp.gt.f32.partialorder %v1284, 0.0
        %vm1349 = vcmp.gt.f32.partialorder %v1285, 0.0
        %vm1350 = vcmp.gt.f32.partialorder %v1286, 0.0
        %vm1351 = vcmp.gt.f32.partialorder %v1287, 0.0
        %vm1352 = vcmp.gt.f32.partialorder %v1288, 0.0
        %vm1353 = vcmp.gt.f32.partialorder %v1289, 0.0
        %vm1354 = vcmp.gt.f32.partialorder %v1290, 0.0
        %vm1355 = vcmp.gt.f32.partialorder %v1291, 0.0
        %vm1356 = vcmp.gt.f32.partialorder %v1292, 0.0
        %vm1357 = vcmp.gt.f32.partialorder %v1293, 0.0
        %v1358 = vmul.f32 %v1230, 0.2
        %v1359 = vmul.f32 %v1231, 0.2
        %v1360 = vmul.f32 %v1232, 0.2
        %v1361 = vmul.f32 %v1233, 0.2
        %v1362 = vmul.f32 %v1234, 0.2
        %v1363 = vmul.f32 %v1235, 0.2
        %v1364 = vmul.f32 %v1236, 0.2
        %v1365 = vmul.f32 %v1237, 0.2
        %v1366 = vmul.f32 %v1238, 0.2
        %v1367 = vmul.f32 %v1239, 0.2
        %v1368 = vmul.f32 %v1240, 0.2
        %v1369 = vmul.f32 %v1241, 0.2
        %v1370 = vmul.f32 %v1242, 0.2
        %v1371 = vmul.f32 %v1243, 0.2
        %v1372 = vmul.f32 %v1244, 0.2
        %v1373 = vmul.f32 %v1245, 0.2
        %v1374 = vmul.f32 %v1246, 0.2
        %v1375 = vmul.f32 %v1247, 0.2
        %v1376 = vmul.f32 %v1248, 0.2
        %v1377 = vmul.f32 %v1249, 0.2
        %v1378 = vmul.f32 %v1250, 0.2
        %v1379 = vmul.f32 %v1251, 0.2
        %v1380 = vmul.f32 %v1252, 0.2
        %v1381 = vmul.f32 %v1253, 0.2
        %v1382 = vmul.f32 %v1254, 0.2
        %v1383 = vmul.f32 %v1255, 0.2
        %v1384 = vmul.f32 %v1256, 0.2
        %v1385 = vmul.f32 %v1257, 0.2
        %v1386 = vmul.f32 %v1258, 0.2
        %v1387 = vmul.f32 %v1259, 0.2
        %v1388 = vmul.f32 %v1260, 0.2
        %v1389 = vmul.f32 %v1261, 0.2
        %v1390 = vmul.f32 %v1262, 0.2
        %v1391 = vmul.f32 %v1263, 0.2
        %v1392 = vmul.f32 %v1264, 0.2
        %v1393 = vmul.f32 %v1265, 0.2
        %v1394 = vmul.f32 %v1266, 0.2
        %v1395 = vmul.f32 %v1267, 0.2
        %v1396 = vmul.f32 %v1268, 0.2
        %v1397 = vmul.f32 %v1269, 0.2
        %v1398 = vmul.f32 %v1270, 0.2
        %v1399 = vmul.f32 %v1271, 0.2
        %v1400 = vmul.f32 %v1272, 0.2
        %v1401 = vmul.f32 %v1273, 0.2
        %v1402 = vmul.f32 %v1274, 0.2
        %v1403 = vmul.f32 %v1275, 0.2
        %v1404 = vmul.f32 %v1276, 0.2
        %v1405 = vmul.f32 %v1277, 0.2
        %v1406 = vmul.f32 %v1278, 0.2
        %v1407 = vmul.f32 %v1279, 0.2
        %v1408 = vmul.f32 %v1280, 0.2
        %v1409 = vmul.f32 %v1281, 0.2
        %v1410 = vmul.f32 %v1282, 0.2
        %v1411 = vmul.f32 %v1283, 0.2
        %v1412 = vmul.f32 %v1284, 0.2
        %v1413 = vmul.f32 %v1285, 0.2
        %v1414 = vmul.f32 %v1286, 0.2
        %v1415 = vmul.f32 %v1287, 0.2
        %v1416 = vmul.f32 %v1288, 0.2
        %v1417 = vmul.f32 %v1289, 0.2
        %v1418 = vmul.f32 %v1290, 0.2
        %v1419 = vmul.f32 %v1291, 0.2
        %v1420 = vmul.f32 %v1292, 0.2
        %v1421 = vmul.f32 %v1293, 0.2
        %v1422 = vsel %vm1294, %v1230, %v1358
        %v1423 = vsel %vm1295, %v1231, %v1359
        %v1424 = vsel %vm1296, %v1232, %v1360
        %v1425 = vsel %vm1297, %v1233, %v1361
        %v1426 = vsel %vm1298, %v1234, %v1362
        %v1427 = vsel %vm1299, %v1235, %v1363
        %v1428 = vsel %vm1300, %v1236, %v1364
        %v1429 = vsel %vm1301, %v1237, %v1365
        %v1430 = vsel %vm1302, %v1238, %v1366
        %v1431 = vsel %vm1303, %v1239, %v1367
        %v1432 = vsel %vm1304, %v1240, %v1368
        %v1433 = vsel %vm1305, %v1241, %v1369
        %v1434 = vsel %vm1306, %v1242, %v1370
        %v1435 = vsel %vm1307, %v1243, %v1371
        %v1436 = vsel %vm1308, %v1244, %v1372
        %v1437 = vsel %vm1309, %v1245, %v1373
        %v1438 = vsel %vm1310, %v1246, %v1374
        %v1439 = vsel %vm1311, %v1247, %v1375
        %v1440 = vsel %vm1312, %v1248, %v1376
        %v1441 = vsel %vm1313, %v1249, %v1377
        %v1442 = vsel %vm1314, %v1250, %v1378
        %v1443 = vsel %vm1315, %v1251, %v1379
        %v1444 = vsel %vm1316, %v1252, %v1380
        %v1445 = vsel %vm1317, %v1253, %v1381
        %v1446 = vsel %vm1318, %v1254, %v1382
        %v1447 = vsel %vm1319, %v1255, %v1383
        %v1448 = vsel %vm1320, %v1256, %v1384
        %v1449 = vsel %vm1321, %v1257, %v1385
        %v1450 = vsel %vm1322, %v1258, %v1386
        %v1451 = vsel %vm1323, %v1259, %v1387
        %v1452 = vsel %vm1324, %v1260, %v1388
        %v1453 = vsel %vm1325, %v1261, %v1389
        %v1454 = vsel %vm1326, %v1262, %v1390
        %v1455 = vsel %vm1327, %v1263, %v1391
        %v1456 = vsel %vm1328, %v1264, %v1392
        %v1457 = vsel %vm1329, %v1265, %v1393
        %v1458 = vsel %vm1330, %v1266, %v1394
        %v1459 = vsel %vm1331, %v1267, %v1395
        %v1460 = vsel %vm1332, %v1268, %v1396
        %v1461 = vsel %vm1333, %v1269, %v1397
        %v1462 = vsel %vm1334, %v1270, %v1398
        %v1463 = vsel %vm1335, %v1271, %v1399
        %v1464 = vsel %vm1336, %v1272, %v1400
        %v1465 = vsel %vm1337, %v1273, %v1401
        %v1466 = vsel %vm1338, %v1274, %v1402
        %v1467 = vsel %vm1339, %v1275, %v1403
        %v1468 = vsel %vm1340, %v1276, %v1404
        %v1469 = vsel %vm1341, %v1277, %v1405
        %v1470 = vsel %vm1342, %v1278, %v1406
        %v1471 = vsel %vm1343, %v1279, %v1407
        %v1472 = vsel %vm1344, %v1280, %v1408
        %v1473 = vsel %vm1345, %v1281, %v1409
        %v1474 = vsel %vm1346, %v1282, %v1410
        %v1475 = vsel %vm1347, %v1283, %v1411
        %v1476 = vsel %vm1348, %v1284, %v1412
        %v1477 = vsel %vm1349, %v1285, %v1413
        %v1478 = vsel %vm1350, %v1286, %v1414
        %v1479 = vsel %vm1351, %v1287, %v1415
        %v1480 = vsel %vm1352, %v1288, %v1416
        %v1481 = vsel %vm1353, %v1289, %v1417
        %v1482 = vsel %vm1354, %v1290, %v1418
        %v1483 = vsel %vm1355, %v1291, %v1419
        %v1484 = vsel %vm1356, %v1292, %v1420
        %v1485 = vsel %vm1357, %v1293, %v1421
        %v1486 = vpack.c.bf16 %v1423, %v1422
        %v1487 = vpack.c.bf16 %v1425, %v1424
        %v1488 = vpack.c.bf16 %v1427, %v1426
        %v1489 = vpack.c.bf16 %v1429, %v1428
        %v1490 = vpack.c.bf16 %v1431, %v1430
        %v1491 = vpack.c.bf16 %v1433, %v1432
        %v1492 = vpack.c.bf16 %v1435, %v1434
        %v1493 = vpack.c.bf16 %v1437, %v1436
        %v1494 = vpack.c.bf16 %v1439, %v1438
        %v1495 = vpack.c.bf16 %v1441, %v1440
        %v1496 = vpack.c.bf16 %v1443, %v1442
        %v1497 = vpack.c.bf16 %v1445, %v1444
        %v1498 = vpack.c.bf16 %v1447, %v1446
        %v1499 = vpack.c.bf16 %v1449, %v1448
        %v1500 = vpack.c.bf16 %v1451, %v1450
        %v1501 = vpack.c.bf16 %v1453, %v1452
        %v1502 = vpack.c.bf16 %v1455, %v1454
        %v1503 = vpack.c.bf16 %v1457, %v1456
        %v1504 = vpack.c.bf16 %v1459, %v1458
        %v1505 = vpack.c.bf16 %v1461, %v1460
        %v1506 = vpack.c.bf16 %v1463, %v1462
        %v1507 = vpack.c.bf16 %v1465, %v1464
        %v1508 = vpack.c.bf16 %v1467, %v1466
        %v1509 = vpack.c.bf16 %v1469, %v1468
        %v1510 = vpack.c.bf16 %v1471, %v1470
        %v1511 = vpack.c.bf16 %v1473, %v1472
        %v1512 = vpack.c.bf16 %v1475, %v1474
        %v1513 = vpack.c.bf16 %v1477, %v1476
        %v1514 = vpack.c.bf16 %v1479, %v1478
        %v1515 = vpack.c.bf16 %v1481, %v1480
        %v1516 = vpack.c.bf16 %v1483, %v1482
        %v1517 = vpack.c.bf16 %v1485, %v1484
        %v1550 = vunpack.c.l.b16 %v1486
        %v1551 = vunpack.c.h.b16 %v1486
        %v1552 = vunpack.c.l.b16 %v1487
        %v1553 = vunpack.c.h.b16 %v1487
        %v1554 = vunpack.c.l.b16 %v1488
        %v1555 = vunpack.c.h.b16 %v1488
        %v1556 = vunpack.c.l.b16 %v1489
        %v1557 = vunpack.c.h.b16 %v1489
        %v1558 = vunpack.c.l.b16 %v1490
        %v1559 = vunpack.c.h.b16 %v1490
        %v1560 = vunpack.c.l.b16 %v1491
        %v1561 = vunpack.c.h.b16 %v1491
        %v1562 = vunpack.c.l.b16 %v1492
        %v1563 = vunpack.c.h.b16 %v1492
        %v1564 = vunpack.c.l.b16 %v1493
        %v1565 = vunpack.c.h.b16 %v1493
        %v1566 = vunpack.c.l.b16 %v1494
        %v1567 = vunpack.c.h.b16 %v1494
        %v1568 = vunpack.c.l.b16 %v1495
        %v1569 = vunpack.c.h.b16 %v1495
        %v1570 = vunpack.c.l.b16 %v1496
        %v1571 = vunpack.c.h.b16 %v1496
        %v1572 = vunpack.c.l.b16 %v1497
        %v1573 = vunpack.c.h.b16 %v1497
        %v1574 = vunpack.c.l.b16 %v1498
        %v1575 = vunpack.c.h.b16 %v1498
        %v1576 = vunpack.c.l.b16 %v1499
        %v1577 = vunpack.c.h.b16 %v1499
        %v1578 = vunpack.c.l.b16 %v1500
        %v1579 = vunpack.c.h.b16 %v1500
        %v1580 = vunpack.c.l.b16 %v1501
        %v1581 = vunpack.c.h.b16 %v1501
        %v1582 = vunpack.c.l.b16 %v1502
        %v1583 = vunpack.c.h.b16 %v1502
        %v1584 = vunpack.c.l.b16 %v1503
        %v1585 = vunpack.c.h.b16 %v1503
        %v1586 = vunpack.c.l.b16 %v1504
        %v1587 = vunpack.c.h.b16 %v1504
        %v1588 = vunpack.c.l.b16 %v1505
        %v1589 = vunpack.c.h.b16 %v1505
        %v1590 = vunpack.c.l.b16 %v1506
        %v1591 = vunpack.c.h.b16 %v1506
        %v1592 = vunpack.c.l.b16 %v1507
        %v1593 = vunpack.c.h.b16 %v1507
        %v1594 = vunpack.c.l.b16 %v1508
        %v1595 = vunpack.c.h.b16 %v1508
        %v1596 = vunpack.c.l.b16 %v1509
        %v1597 = vunpack.c.h.b16 %v1509
        %v1598 = vunpack.c.l.b16 %v1510
        %v1599 = vunpack.c.h.b16 %v1510
        %v1600 = vunpack.c.l.b16 %v1511
        %v1601 = vunpack.c.h.b16 %v1511
        %v1602 = vunpack.c.l.b16 %v1512
        %v1603 = vunpack.c.h.b16 %v1512
        %v1604 = vunpack.c.l.b16 %v1513
        %v1605 = vunpack.c.h.b16 %v1513
        %v1606 = vunpack.c.l.b16 %v1514
        %v1607 = vunpack.c.h.b16 %v1514
        %v1608 = vunpack.c.l.b16 %v1515
        %v1609 = vunpack.c.h.b16 %v1515
        %v1610 = vunpack.c.l.b16 %v1516
        %v1611 = vunpack.c.h.b16 %v1516
        %v1612 = vunpack.c.l.b16 %v1517
        %v1613 = vunpack.c.h.b16 %v1517
        %v1614 = vpack.c.b16 %v1550, %v1550
        %v1615 = vpack.c.b16 %v1551, %v1551
        %v1616 = vpack.c.b16 %v1552, %v1552
        %v1617 = vpack.c.b16 %v1553, %v1553
        %v1618 = vpack.c.b16 %v1554, %v1554
        %v1619 = vpack.c.b16 %v1555, %v1555
        %v1620 = vpack.c.b16 %v1556, %v1556
        %v1621 = vpack.c.b16 %v1557, %v1557
        %v1622 = vpack.c.b16 %v1558, %v1558
        %v1623 = vpack.c.b16 %v1559, %v1559
        %v1624 = vpack.c.b16 %v1560, %v1560
        %v1625 = vpack.c.b16 %v1561, %v1561
        %v1626 = vpack.c.b16 %v1562, %v1562
        %v1627 = vpack.c.b16 %v1563, %v1563
        %v1628 = vpack.c.b16 %v1564, %v1564
        %v1629 = vpack.c.b16 %v1565, %v1565
        %v1630 = vpack.c.b16 %v1566, %v1566
        %v1631 = vpack.c.b16 %v1567, %v1567
        %v1632 = vpack.c.b16 %v1568, %v1568
        %v1633 = vpack.c.b16 %v1569, %v1569
        %v1634 = vpack.c.b16 %v1570, %v1570
        %v1635 = vpack.c.b16 %v1571, %v1571
        %v1636 = vpack.c.b16 %v1572, %v1572
        %v1637 = vpack.c.b16 %v1573, %v1573
        %v1638 = vpack.c.b16 %v1574, %v1574
        %v1639 = vpack.c.b16 %v1575, %v1575
        %v1640 = vpack.c.b16 %v1576, %v1576
        %v1641 = vpack.c.b16 %v1577, %v1577
        %v1642 = vpack.c.b16 %v1578, %v1578
        %v1643 = vpack.c.b16 %v1579, %v1579
        %v1644 = vpack.c.b16 %v1580, %v1580
        %v1645 = vpack.c.b16 %v1581, %v1581
        %v1646 = vpack.c.b16 %v1582, %v1582
        %v1647 = vpack.c.b16 %v1583, %v1583
        %v1648 = vpack.c.b16 %v1584, %v1584
        %v1649 = vpack.c.b16 %v1585, %v1585
        %v1650 = vpack.c.b16 %v1586, %v1586
        %v1651 = vpack.c.b16 %v1587, %v1587
        %v1652 = vpack.c.b16 %v1588, %v1588
        %v1653 = vpack.c.b16 %v1589, %v1589
        %v1654 = vpack.c.b16 %v1590, %v1590
        %v1655 = vpack.c.b16 %v1591, %v1591
        %v1656 = vpack.c.b16 %v1592, %v1592
        %v1657 = vpack.c.b16 %v1593, %v1593
        %v1658 = vpack.c.b16 %v1594, %v1594
        %v1659 = vpack.c.b16 %v1595, %v1595
        %v1660 = vpack.c.b16 %v1596, %v1596
        %v1661 = vpack.c.b16 %v1597, %v1597
        %v1662 = vpack.c.b16 %v1598, %v1598
        %v1663 = vpack.c.b16 %v1599, %v1599
        %v1664 = vpack.c.b16 %v1600, %v1600
        %v1665 = vpack.c.b16 %v1601, %v1601
        %v1666 = vpack.c.b16 %v1602, %v1602
        %v1667 = vpack.c.b16 %v1603, %v1603
        %v1668 = vpack.c.b16 %v1604, %v1604
        %v1669 = vpack.c.b16 %v1605, %v1605
        %v1670 = vpack.c.b16 %v1606, %v1606
        %v1671 = vpack.c.b16 %v1607, %v1607
        %v1672 = vpack.c.b16 %v1608, %v1608
        %v1673 = vpack.c.b16 %v1609, %v1609
        %v1674 = vpack.c.b16 %v1610, %v1610
        %v1675 = vpack.c.b16 %v1611, %v1611
        %v1676 = vpack.c.b16 %v1612, %v1612
        %v1677 = vpack.c.b16 %v1613, %v1613
        %vm1742 = vcmask 519168
        %1743 = vst.msk [vmem:[%s257] sm:$0xf] %vm1742, %v1614
        %1744 = vst.msk [vmem:[%s257 + $0x4] sm:$0xf] %vm1742, %v1615
        %1745 = vst.msk [vmem:[%s257 + $0x8] sm:$0xf] %vm1742, %v1616
        %1746 = vst.msk [vmem:[%s257 + $0xc] sm:$0xf] %vm1742, %v1617
        %1747 = vst.msk [vmem:[%s257 + $0x10] sm:$0xf] %vm1742, %v1618
        %1748 = vst.msk [vmem:[%s257 + $0x14] sm:$0xf] %vm1742, %v1619
        %1749 = vst.msk [vmem:[%s257 + $0x18] sm:$0xf] %vm1742, %v1620
        %1750 = vst.msk [vmem:[%s257 + $0x1c] sm:$0xf] %vm1742, %v1621
        %1751 = vst.msk [vmem:[%s257 + $0x20] sm:$0xf] %vm1742, %v1622
        %1752 = vst.msk [vmem:[%s257 + $0x24] sm:$0xf] %vm1742, %v1623
        %1753 = vst.msk [vmem:[%s257 + $0x28] sm:$0xf] %vm1742, %v1624
        %1754 = vst.msk [vmem:[%s257 + $0x2c] sm:$0xf] %vm1742, %v1625
        %1755 = vst.msk [vmem:[%s257 + $0x30] sm:$0xf] %vm1742, %v1626
        %1756 = vst.msk [vmem:[%s257 + $0x34] sm:$0xf] %vm1742, %v1627
        %1757 = vst.msk [vmem:[%s257 + $0x38] sm:$0xf] %vm1742, %v1628
        %1758 = vst.msk [vmem:[%s257 + $0x3c] sm:$0xf] %vm1742, %v1629
        %1759 = vst.msk [vmem:[%s257 + $0x40] sm:$0xf] %vm1742, %v1630
        %1760 = vst.msk [vmem:[%s257 + $0x44] sm:$0xf] %vm1742, %v1631
        %1761 = vst.msk [vmem:[%s257 + $0x48] sm:$0xf] %vm1742, %v1632
        %1762 = vst.msk [vmem:[%s257 + $0x4c] sm:$0xf] %vm1742, %v1633
        %1763 = vst.msk [vmem:[%s257 + $0x50] sm:$0xf] %vm1742, %v1634
        %1764 = vst.msk [vmem:[%s257 + $0x54] sm:$0xf] %vm1742, %v1635
        %1765 = vst.msk [vmem:[%s257 + $0x58] sm:$0xf] %vm1742, %v1636
        %1766 = vst.msk [vmem:[%s257 + $0x5c] sm:$0xf] %vm1742, %v1637
        %1767 = vst.msk [vmem:[%s257 + $0x60] sm:$0xf] %vm1742, %v1638
        %1768 = vst.msk [vmem:[%s257 + $0x64] sm:$0xf] %vm1742, %v1639
        %1769 = vst.msk [vmem:[%s257 + $0x68] sm:$0xf] %vm1742, %v1640
        %1770 = vst.msk [vmem:[%s257 + $0x6c] sm:$0xf] %vm1742, %v1641
        %1771 = vst.msk [vmem:[%s257 + $0x70] sm:$0xf] %vm1742, %v1642
        %1772 = vst.msk [vmem:[%s257 + $0x74] sm:$0xf] %vm1742, %v1643
        %1773 = vst.msk [vmem:[%s257 + $0x78] sm:$0xf] %vm1742, %v1644
        %1774 = vst.msk [vmem:[%s257 + $0x7c] sm:$0xf] %vm1742, %v1645
        %1775 = vst.msk [vmem:[%s257 + $0x80] sm:$0xf] %vm1742, %v1646
        %1776 = vst.msk [vmem:[%s257 + $0x84] sm:$0xf] %vm1742, %v1647
        %1777 = vst.msk [vmem:[%s257 + $0x88] sm:$0xf] %vm1742, %v1648
        %1778 = vst.msk [vmem:[%s257 + $0x8c] sm:$0xf] %vm1742, %v1649
        %1779 = vst.msk [vmem:[%s257 + $0x90] sm:$0xf] %vm1742, %v1650
        %1780 = vst.msk [vmem:[%s257 + $0x94] sm:$0xf] %vm1742, %v1651
        %1781 = vst.msk [vmem:[%s257 + $0x98] sm:$0xf] %vm1742, %v1652
        %1782 = vst.msk [vmem:[%s257 + $0x9c] sm:$0xf] %vm1742, %v1653
        %1783 = vst.msk [vmem:[%s257 + $0xa0] sm:$0xf] %vm1742, %v1654
        %1784 = vst.msk [vmem:[%s257 + $0xa4] sm:$0xf] %vm1742, %v1655
        %1785 = vst.msk [vmem:[%s257 + $0xa8] sm:$0xf] %vm1742, %v1656
        %1786 = vst.msk [vmem:[%s257 + $0xac] sm:$0xf] %vm1742, %v1657
        %1787 = vst.msk [vmem:[%s257 + $0xb0] sm:$0xf] %vm1742, %v1658
        %1788 = vst.msk [vmem:[%s257 + $0xb4] sm:$0xf] %vm1742, %v1659
        %1789 = vst.msk [vmem:[%s257 + $0xb8] sm:$0xf] %vm1742, %v1660
        %1790 = vst.msk [vmem:[%s257 + $0xbc] sm:$0xf] %vm1742, %v1661
        %1791 = vst.msk [vmem:[%s257 + $0xc0] sm:$0xf] %vm1742, %v1662
        %1792 = vst.msk [vmem:[%s257 + $0xc4] sm:$0xf] %vm1742, %v1663
        %1793 = vst.msk [vmem:[%s257 + $0xc8] sm:$0xf] %vm1742, %v1664
        %1794 = vst.msk [vmem:[%s257 + $0xcc] sm:$0xf] %vm1742, %v1665
        %1795 = vst.msk [vmem:[%s257 + $0xd0] sm:$0xf] %vm1742, %v1666
        %1796 = vst.msk [vmem:[%s257 + $0xd4] sm:$0xf] %vm1742, %v1667
        %1797 = vst.msk [vmem:[%s257 + $0xd8] sm:$0xf] %vm1742, %v1668
        %1798 = vst.msk [vmem:[%s257 + $0xdc] sm:$0xf] %vm1742, %v1669
        %1799 = vst.msk [vmem:[%s257 + $0xe0] sm:$0xf] %vm1742, %v1670
        %1800 = vst.msk [vmem:[%s257 + $0xe4] sm:$0xf] %vm1742, %v1671
        %1801 = vst.msk [vmem:[%s257 + $0xe8] sm:$0xf] %vm1742, %v1672
        %1802 = vst.msk [vmem:[%s257 + $0xec] sm:$0xf] %vm1742, %v1673
        %1803 = vst.msk [vmem:[%s257 + $0xf0] sm:$0xf] %vm1742, %v1674
        %1804 = vst.msk [vmem:[%s257 + $0xf4] sm:$0xf] %vm1742, %v1675
        %1805 = vst.msk [vmem:[%s257 + $0xf8] sm:$0xf] %vm1742, %v1676
        %1806 = vst.msk [vmem:[%s257 + $0xfc] sm:$0xf] %vm1742, %v1677
      $region40: #{discriminator_forward.5} parent=31 // pred_fallthru
        _
      %s1807 = smul.u32 64, %s19
      %p1808 = scmp.lt.s32.totalorder %s1807, 255
      %s1809 = scalar_select %p1808, %s1807, 255
      %p1810 = scmp.lt.s32.totalorder %s20, 0
      %s1811 = scalar_select %p1810, %s20, 0
      %s1812 = sadd.s32 %s1811, %s1809
      %s1813 = smul.addr %s1812, 4
      %s1814 = scalar_lea.vmem %s3, %s1813
      // Predicated region
      $region41: #{discriminator_forward.5} parent=31 // pred_check
        %p1815 = pneg %p135
      $region42: #{discriminator_forward.5} parent=31 // pred_check_branch
        %1817 = sbr.rel (%p1815) target = $region44
      $region43: #{discriminator_forward.5} parent=31 // pred_region
        %s1818 = smul.u32 64, %s19
      $region44: #{discriminator_forward.5} parent=31 // pred_fallthru
        _
    $region32: #{discriminator_forward.5} parent=5 // pred_fallthru
      _
    %p1819 = scmp.le.s32.totalorder 2, %s9
    // Predicated region
    $region45: #{discriminator_forward.5} parent=5 // pred_check
      %p1820 = pneg %p1819
    $region46: #{discriminator_forward.5} parent=5 // pred_check_branch
      %1822 = sbr.rel (%p1820) target = $region48
    $region47: #{discriminator_forward.5} parent=5 // pred_region
      %s1823 = ssub.s32 %s9, 2
      // Predicated region
      $region49: #{discriminator_forward.5} parent=47 // pred_check
        %p1824 = pneg %p141
      $region50: #{discriminator_forward.5} parent=47 // pred_check_branch
        %1826 = sbr.rel (%p1824) target = $region52
      $region51: #{discriminator_forward.5} parent=47 // pred_region
        %s1827 = smul.u32 64, %s22
        %p1828 = scmp.lt.s32.totalorder %s1827, 255
        %s1829 = scalar_select %p1828, %s1827, 255
        %p1830 = scmp.lt.s32.totalorder %s23, 0
        %s1831 = scalar_select %p1830, %s23, 0
        %s1832 = sadd.s32 %s1831, %s1829
        %s1833 = smul.addr %s1832, 4
        %s1834 = scalar_lea.vmem %s3, %s1833
      $region52: #{discriminator_forward.5} parent=47 // pred_fallthru
        _
    $region48: #{discriminator_forward.5} parent=5 // pred_fallthru
      _
  $region6: #{discriminator_forward.5} parent=0 // loop_footer
    %s13 = sadd.s32 1, %s9
  $region7: #{discriminator_forward.5} parent=0 // loop_footer_branch
    %8 = sbr.rel target = $region3
  $region8: #{discriminator_forward.5} parent=0 // loop_exit
    _

// kernel: discriminator_forward.6
$region0: #{discriminator_forward.6}
  #allocation0 [shape = 'u32[]', space=smem, size = 0x4, offset = 0x4, fixed_abs, tag = 'smem constant byte address 0x4 - core index']
  #allocation1 [shape = 'u32[144,128]{1,0:T(1,128)}', space=vmem, size = 0x12000, scoped, tag = 'internal scratch']
  #allocation2 [shape = 'f32[256,128]{1,0:T(8,128)}', space=vmem, size = 0x20000, scoped, tag = 'scratch operand']
  %s0 = inlined_call_operand.vmem [shape: bf16[512,1024], index: 0, kind: input, shape index: {}]
  %s1 = inlined_call_operand.vmem [shape: bf16[1024,128], index: 1, kind: input, shape index: {}]
  %s2 = inlined_call_operand.vmem [shape: f32[1,128], index: 2, kind: input, shape index: {}]
  %s3 = inlined_call_operand.vmem [shape: bf16[512,128], index: 3, kind: output, shape index: {}]
  %s4 = sld [smem:[#allocation0]]
  $region76: #{discriminator_forward.6} parent=0
    _
  %s6 = ssub.s32 1, %s4
  %s7 = scalar_select 0, %s6, %s4
  $region1: #{discriminator_forward.6} parent=0
    #allocation3 [shape = 'u8[524288]{0}', space=vmem, size = 0x80000, scoped, tag = 'input window, operand 0']
    loop: start=0, step=1, limit=6
    $region2: #{discriminator_forward.6} parent=1 // loop_pre_header
      _
    $region3: #{discriminator_forward.6} parent=1 // loop_header
      %s9 = sphi 0, %s13
      %p10 = scmp.ge.s32.totalorder %s9, 6
      %s16 = sphi 0, %s35
      %s17 = sphi 0, %s31
      %s18 = sphi 0, %s27
      %s19 = sphi 0, %s16
      %s20 = sphi 0, %s17
      %s21 = sphi 0, %s18
      %s22 = sphi 0, %s19
      %s23 = sphi 0, %s20
      %s24 = sphi 0, %s21
      %s40 = sphi 0, %s42
      %s43 = sphi 0, %s40
      %s44 = sphi 0, %s43
      %s60 = sphi 0, %s44
      %s68 = sphi 0, %s70
      %s71 = sphi 0, %s68
      %s72 = sphi 0, %s71
      %s88 = sphi 0, %s72
      %s94 = sphi 0, %s96
      %s97 = sphi 0, %s94
      %s98 = sphi 0, %s97
      %s114 = sphi 0, %s98
      %s122 = sphi 0, %s124
      %s125 = sphi 0, %s122
      %s126 = sphi 0, %s125
      %s142 = sphi 0, %s126
    $region4: #{discriminator_forward.6} parent=1 // loop_header_branch
      %12 = sbr.rel (%p10) target = $region8
    $region5: #{discriminator_forward.6} parent=1 // loop_body
      %s14 = ssub.s32 %s9, 1
      %s15 = ssub.s32 %s9, 2
      %s25 = sadd.s32 1, %s18
      %p26 = scmp.ge.s32.totalorder %s25, 2
      %s27 = scalar_select %p26, 0, %s25
      %s28 = sadd.s32 1, %s17
      %s29 = scalar_select %p26, %s28, %s17
      %p30 = scmp.ge.s32.totalorder %s29, 1
      %s31 = scalar_select %p30, 0, %s29
      %s32 = sadd.s32 1, %s16
      %s33 = scalar_select %p30, %s32, %s16
      %p34 = scmp.ge.s32.totalorder %s33, 2
      %s35 = scalar_select %p34, 0, %s33
      %s36 = ssub.s32 %s16, %s35
      %s37 = ssub.s32 %s18, %s27
      %s38 = sor.u32 %s36, %s37
      %p39 = scmp.eq.s32.totalorder %s38, 0
      %s41 = sadd.s32 %s40, 1
      %s42 = scalar_select %p39, %s40, %s41
      %p45 = pneg %p39
      %p46 = scmp.eq.s32.totalorder %s9, 3
      %p47 = por %p45, %p46
      %p48 = scmp.ne.s32.totalorder %s40, %s43
      %p49 = scmp.eq.s32.totalorder %s9, 0
      %p50 = por %p48, %p49
      %p51 = scmp.ne.s32.totalorder %s40, %s43
      %p52 = scmp.eq.s32.totalorder %s14, 3
      %p53 = por %p51, %p52
      %p54 = scmp.ne.s32.totalorder %s43, %s44
      %p55 = scmp.eq.s32.totalorder %s14, 0
      %p56 = por %p54, %p55
      %p57 = scmp.ne.s32.totalorder %s43, %s44
      %p58 = scmp.eq.s32.totalorder %s15, 3
      %p59 = por %p57, %p58
      %p61 = scmp.ne.s32.totalorder %s44, %s60
      %p62 = scmp.eq.s32.totalorder %s15, 0
      %p63 = por %p61, %p62
      %s64 = ssub.s32 %s18, %s27
      %s65 = ssub.s32 %s17, %s31
      %s66 = sor.u32 %s64, %s65
      %p67 = scmp.eq.s32.totalorder %s66, 0
      %s69 = sadd.s32 %s68, 1
      %s70 = scalar_select %p67, %s68, %s69
      %p73 = pneg %p67
      %p74 = scmp.eq.s32.totalorder %s9, 3
      %p75 = por %p73, %p74
      %p76 = scmp.ne.s32.totalorder %s68, %s71
      %p77 = scmp.eq.s32.totalorder %s9, 0
      %p78 = por %p76, %p77
      %p79 = scmp.ne.s32.totalorder %s68, %s71
      %p80 = scmp.eq.s32.totalorder %s14, 3
      %p81 = por %p79, %p80
      %p82 = scmp.ne.s32.totalorder %s71, %s72
      %p83 = scmp.eq.s32.totalorder %s14, 0
      %p84 = por %p82, %p83
      %p85 = scmp.ne.s32.totalorder %s71, %s72
      %p86 = scmp.eq.s32.totalorder %s15, 3
      %p87 = por %p85, %p86
      %p89 = scmp.ne.s32.totalorder %s72, %s88
      %p90 = scmp.eq.s32.totalorder %s15, 0
      %p91 = por %p89, %p90
      %s92 = ssub.s32 %s17, %s31
      %p93 = scmp.eq.s32.totalorder %s92, 0
      %s95 = sadd.s32 %s94, 1
      %s96 = scalar_select %p93, %s94, %s95
      %p99 = pneg %p93
      %p100 = scmp.eq.s32.totalorder %s9, 3
      %p101 = por %p99, %p100
      %p102 = scmp.ne.s32.totalorder %s94, %s97
      %p103 = scmp.eq.s32.totalorder %s9, 0
      %p104 = por %p102, %p103
      %p105 = scmp.ne.s32.totalorder %s94, %s97
      %p106 = scmp.eq.s32.totalorder %s14, 3
      %p107 = por %p105, %p106
      %p108 = scmp.ne.s32.totalorder %s97, %s98
      %p109 = scmp.eq.s32.totalorder %s14, 0
      %p110 = por %p108, %p109
      %p111 = scmp.ne.s32.totalorder %s97, %s98
      %p112 = scmp.eq.s32.totalorder %s15, 3
      %p113 = por %p111, %p112
      %p115 = scmp.ne.s32.totalorder %s98, %s114
      %p116 = scmp.eq.s32.totalorder %s15, 0
      %p117 = por %p115, %p116
      %s118 = ssub.s32 %s16, %s35
      %s119 = ssub.s32 %s17, %s31
      %s120 = sor.u32 %s118, %s119
      %p121 = scmp.eq.s32.totalorder %s120, 0
      %s123 = sadd.s32 %s122, 1
      %s124 = scalar_select %p121, %s122, %s123
      %p127 = pneg %p121
      %p128 = scmp.eq.s32.totalorder %s9, 3
      %p129 = por %p127, %p128
      %p130 = scmp.ne.s32.totalorder %s122, %s125
      %p131 = scmp.eq.s32.totalorder %s9, 0
      %p132 = por %p130, %p131
      %p133 = scmp.ne.s32.totalorder %s122, %s125
      %p134 = scmp.eq.s32.totalorder %s14, 3
      %p135 = por %p133, %p134
      %p136 = scmp.ne.s32.totalorder %s125, %s126
      %p137 = scmp.eq.s32.totalorder %s14, 0
      %p138 = por %p136, %p137
      %p139 = scmp.ne.s32.totalorder %s125, %s126
      %p140 = scmp.eq.s32.totalorder %s15, 3
      %p141 = por %p139, %p140
      %p143 = scmp.ne.s32.totalorder %s126, %s142
      %p144 = scmp.eq.s32.totalorder %s15, 0
      %p145 = por %p143, %p144
      %p146 = scmp.le.s32.totalorder 1, %s9
      %p147 = scmp.lt.s32.totalorder %s9, 5
      %p148 = pnand %p146, %p147
      %p149 = pneg %p148
      // Predicated region
      $region9: #{discriminator_forward.6} parent=5 // pred_check
        _
      $region10: #{discriminator_forward.6} parent=5 // pred_check_branch
        %151 = sbr.rel (%p148) target = $region12
      $region11: #{discriminator_forward.6} parent=5 // pred_region
        %s152 = ssub.s32 %s9, 1
        // Predicated region
        $region13: #{discriminator_forward.6} parent=11 // pred_check
          %p153 = pneg %p110
        $region14: #{discriminator_forward.6} parent=11 // pred_check_branch
          %155 = sbr.rel (%p153) target = $region16
        $region15: #{discriminator_forward.6} parent=11 // pred_region
          %p156 = scmp.lt.s32.totalorder %s20, 0
          %s157 = scalar_select %p156, %s20, 0
          %s158 = scalar_lea.vmem %s2, %s157
        $region16: #{discriminator_forward.6} parent=11 // pred_fallthru
          _
      $region12: #{discriminator_forward.6} parent=5 // pred_fallthru
        _
      %p159 = scmp.lt.s32.totalorder %s9, 4
      // Predicated region
      $region17: #{discriminator_forward.6} parent=5 // pred_check
        %p160 = pneg %p159
      $region18: #{discriminator_forward.6} parent=5 // pred_check_branch
        %162 = sbr.rel (%p160) target = $region20
      $region19: #{discriminator_forward.6} parent=5 // pred_region
        // Predicated region
        $region21: #{discriminator_forward.6} parent=19 // pred_check
          %p163 = pneg %p50
        $region22: #{discriminator_forward.6} parent=19 // pred_check_branch
          %165 = sbr.rel (%p163) target = $region24
        $region23: #{discriminator_forward.6} parent=19 // pred_region
          %s166 = sand.u32 %s40, 1
          %s167 = sand.u32 %s40, 1
          %s168 = smul.addr %s167, 512
          %s169 = scalar_lea.vmem [#allocation3], %s168
          %s170 = smul.u32 32, %s16
          %s171 = smul.u32 4, %s18
          %s172 = smul.addr %s170, 8
          %s173 = sadd.s32 %s171, %s172
          %s174 = smul.addr %s173, 4
          %s175 = scalar_lea.vmem %s0, %s174
          // Predicated region
          $region25: #{discriminator_forward.6} parent=23 // pred_check
            _
          $region26: #{discriminator_forward.6} parent=23 // pred_check_branch
            %177 = sbr.rel (0) target = $region28
          $region27: #{discriminator_forward.6} parent=23 // pred_region
            // Predicated region
            $region29: #{discriminator_forward.6} parent=27 // pred_check
              _
            $region30: #{discriminator_forward.6} parent=27 // pred_check_branch
              %179 = sbr.rel (0) target = $region32
            $region31: #{discriminator_forward.6} parent=27 // pred_region
              loop: start=0, step=1, limit=1
              $region33: #{discriminator_forward.6} parent=31 // loop_pre_header
                _
              $region34: #{discriminator_forward.6} parent=31 // loop_header
                %s181 = sphi 0, %s185
                %p182 = scmp.ge.s32.totalorder %s181, 1
                %s186 = sphi %s175, %s175
                %s187 = sphi %s169, %s169
              $region35: #{discriminator_forward.6} parent=31 // loop_header_branch
                %184 = sbr.rel (%p182) target = $region39
              $region36: #{discriminator_forward.6} parent=31 // loop_body
                %v188 = vld [vmem:[%s186] sm:$0xff]
                %189 = vst [vmem:[%s187] sm:$0xff] %v188
                %v190 = vld [vmem:[%s186 + $0x8] sm:$0xff]
                %191 = vst [vmem:[%s187 + $0x8] sm:$0xff] %v190
                %v192 = vld [vmem:[%s186 + $0x20] sm:$0xff]
                %193 = vst [vmem:[%s187 + $0x10] sm:$0xff] %v192
                %v194 = vld [vmem:[%s186 + $0x28] sm:$0xff]
                %195 = vst [vmem:[%s187 + $0x18] sm:$0xff] %v194
                %v196 = vld [vmem:[%s186 + $0x40] sm:$0xff]
                %197 = vst [vmem:[%s187 + $0x20] sm:$0xff] %v196
                %v198 = vld [vmem:[%s186 + $0x48] sm:$0xff]
                %199 = vst [vmem:[%s187 + $0x28] sm:$0xff] %v198
                %v200 = vld [vmem:[%s186 + $0x60] sm:$0xff]
                %201 = vst [vmem:[%s187 + $0x30] sm:$0xff] %v200
                %v202 = vld [vmem:[%s186 + $0x68] sm:$0xff]
                %203 = vst [vmem:[%s187 + $0x38] sm:$0xff] %v202
                %v204 = vld [vmem:[%s186 + $0x80] sm:$0xff]
                %205 = vst [vmem:[%s187 + $0x40] sm:$0xff] %v204
                %v206 = vld [vmem:[%s186 + $0x88] sm:$0xff]
                %207 = vst [vmem:[%s187 + $0x48] sm:$0xff] %v206
                %v208 = vld [vmem:[%s186 + $0xa0] sm:$0xff]
                %209 = vst [vmem:[%s187 + $0x50] sm:$0xff] %v208
                %v210 = vld [vmem:[%s186 + $0xa8] sm:$0xff]
                %211 = vst [vmem:[%s187 + $0x58] sm:$0xff] %v210
                %v212 = vld [vmem:[%s186 + $0xc0] sm:$0xff]
                %213 = vst [vmem:[%s187 + $0x60] sm:$0xff] %v212
                %v214 = vld [vmem:[%s186 + $0xc8] sm:$0xff]
                %215 = vst [vmem:[%s187 + $0x68] sm:$0xff] %v214
                %v216 = vld [vmem:[%s186 + $0xe0] sm:$0xff]
                %217 = vst [vmem:[%s187 + $0x70] sm:$0xff] %v216
                %v218 = vld [vmem:[%s186 + $0xe8] sm:$0xff]
                %219 = vst [vmem:[%s187 + $0x78] sm:$0xff] %v218
                %v220 = vld [vmem:[%s186 + $0x100] sm:$0xff]
                %221 = vst [vmem:[%s187 + $0x80] sm:$0xff] %v220
                %v222 = vld [vmem:[%s186 + $0x108] sm:$0xff]
                %223 = vst [vmem:[%s187 + $0x88] sm:$0xff] %v222
                %v224 = vld [vmem:[%s186 + $0x120] sm:$0xff]
                %225 = vst [vmem:[%s187 + $0x90] sm:$0xff] %v224
                %v226 = vld [vmem:[%s186 + $0x128] sm:$0xff]
                %227 = vst [vmem:[%s187 + $0x98] sm:$0xff] %v226
                %v228 = vld [vmem:[%s186 + $0x140] sm:$0xff]
                %229 = vst [vmem:[%s187 + $0xa0] sm:$0xff] %v228
                %v230 = vld [vmem:[%s186 + $0x148] sm:$0xff]
                %231 = vst [vmem:[%s187 + $0xa8] sm:$0xff] %v230
                %v232 = vld [vmem:[%s186 + $0x160] sm:$0xff]
                %233 = vst [vmem:[%s187 + $0xb0] sm:$0xff] %v232
                %v234 = vld [vmem:[%s186 + $0x168] sm:$0xff]
                %235 = vst [vmem:[%s187 + $0xb8] sm:$0xff] %v234
                %v236 = vld [vmem:[%s186 + $0x180] sm:$0xff]
                %237 = vst [vmem:[%s187 + $0xc0] sm:$0xff] %v236
                %v238 = vld [vmem:[%s186 + $0x188] sm:$0xff]
                %239 = vst [vmem:[%s187 + $0xc8] sm:$0xff] %v238
                %v240 = vld [vmem:[%s186 + $0x1a0] sm:$0xff]
                %241 = vst [vmem:[%s187 + $0xd0] sm:$0xff] %v240
                %v242 = vld [vmem:[%s186 + $0x1a8] sm:$0xff]
                %243 = vst [vmem:[%s187 + $0xd8] sm:$0xff] %v242
                %v244 = vld [vmem:[%s186 + $0x1c0] sm:$0xff]
                %245 = vst [vmem:[%s187 + $0xe0] sm:$0xff] %v244
                %v246 = vld [vmem:[%s186 + $0x1c8] sm:$0xff]
                %247 = vst [vmem:[%s187 + $0xe8] sm:$0xff] %v246
                %v248 = vld [vmem:[%s186 + $0x1e0] sm:$0xff]
                %249 = vst [vmem:[%s187 + $0xf0] sm:$0xff] %v248
                %v250 = vld [vmem:[%s186 + $0x1e8] sm:$0xff]
                %251 = vst [vmem:[%s187 + $0xf8] sm:$0xff] %v250
                %v252 = vld [vmem:[%s186 + $0x200] sm:$0xff]
                %253 = vst [vmem:[%s187 + $0x100] sm:$0xff] %v252
                %v254 = vld [vmem:[%s186 + $0x208] sm:$0xff]
                %255 = vst [vmem:[%s187 + $0x108] sm:$0xff] %v254
                %v256 = vld [vmem:[%s186 + $0x220] sm:$0xff]
                %257 = vst [vmem:[%s187 + $0x110] sm:$0xff] %v256
                %v258 = vld [vmem:[%s186 + $0x228] sm:$0xff]
                %259 = vst [vmem:[%s187 + $0x118] sm:$0xff] %v258
                %v260 = vld [vmem:[%s186 + $0x240] sm:$0xff]
                %261 = vst [vmem:[%s187 + $0x120] sm:$0xff] %v260
                %v262 = vld [vmem:[%s186 + $0x248] sm:$0xff]
                %263 = vst [vmem:[%s187 + $0x128] sm:$0xff] %v262
                %v264 = vld [vmem:[%s186 + $0x260] sm:$0xff]
                %265 = vst [vmem:[%s187 + $0x130] sm:$0xff] %v264
                %v266 = vld [vmem:[%s186 + $0x268] sm:$0xff]
                %267 = vst [vmem:[%s187 + $0x138] sm:$0xff] %v266
                %v268 = vld [vmem:[%s186 + $0x280] sm:$0xff]
                %269 = vst [vmem:[%s187 + $0x140] sm:$0xff] %v268
                %v270 = vld [vmem:[%s186 + $0x288] sm:$0xff]
                %271 = vst [vmem:[%s187 + $0x148] sm:$0xff] %v270
                %v272 = vld [vmem:[%s186 + $0x2a0] sm:$0xff]
                %273 = vst [vmem:[%s187 + $0x150] sm:$0xff] %v272
                %v274 = vld [vmem:[%s186 + $0x2a8] sm:$0xff]
                %275 = vst [vmem:[%s187 + $0x158] sm:$0xff] %v274
                %v276 = vld [vmem:[%s186 + $0x2c0] sm:$0xff]
                %277 = vst [vmem:[%s187 + $0x160] sm:$0xff] %v276
                %v278 = vld [vmem:[%s186 + $0x2c8] sm:$0xff]
                %279 = vst [vmem:[%s187 + $0x168] sm:$0xff] %v278
                %v280 = vld [vmem:[%s186 + $0x2e0] sm:$0xff]
                %281 = vst [vmem:[%s187 + $0x170] sm:$0xff] %v280
                %v282 = vld [vmem:[%s186 + $0x2e8] sm:$0xff]
                %283 = vst [vmem:[%s187 + $0x178] sm:$0xff] %v282
                %v284 = vld [vmem:[%s186 + $0x300] sm:$0xff]
                %285 = vst [vmem:[%s187 + $0x180] sm:$0xff] %v284
                %v286 = vld [vmem:[%s186 + $0x308] sm:$0xff]
                %287 = vst [vmem:[%s187 + $0x188] sm:$0xff] %v286
                %v288 = vld [vmem:[%s186 + $0x320] sm:$0xff]
                %289 = vst [vmem:[%s187 + $0x190] sm:$0xff] %v288
                %v290 = vld [vmem:[%s186 + $0x328] sm:$0xff]
                %291 = vst [vmem:[%s187 + $0x198] sm:$0xff] %v290
                %v292 = vld [vmem:[%s186 + $0x340] sm:$0xff]
                %293 = vst [vmem:[%s187 + $0x1a0] sm:$0xff] %v292
                %v294 = vld [vmem:[%s186 + $0x348] sm:$0xff]
                %295 = vst [vmem:[%s187 + $0x1a8] sm:$0xff] %v294
                %v296 = vld [vmem:[%s186 + $0x360] sm:$0xff]
                %297 = vst [vmem:[%s187 + $0x1b0] sm:$0xff] %v296
                %v298 = vld [vmem:[%s186 + $0x368] sm:$0xff]
                %299 = vst [vmem:[%s187 + $0x1b8] sm:$0xff] %v298
                %v300 = vld [vmem:[%s186 + $0x380] sm:$0xff]
                %301 = vst [vmem:[%s187 + $0x1c0] sm:$0xff] %v300
                %v302 = vld [vmem:[%s186 + $0x388] sm:$0xff]
                %303 = vst [vmem:[%s187 + $0x1c8] sm:$0xff] %v302
                %v304 = vld [vmem:[%s186 + $0x3a0] sm:$0xff]
                %305 = vst [vmem:[%s187 + $0x1d0] sm:$0xff] %v304
                %v306 = vld [vmem:[%s186 + $0x3a8] sm:$0xff]
                %307 = vst [vmem:[%s187 + $0x1d8] sm:$0xff] %v306
                %v308 = vld [vmem:[%s186 + $0x3c0] sm:$0xff]
                %309 = vst [vmem:[%s187 + $0x1e0] sm:$0xff] %v308
                %v310 = vld [vmem:[%s186 + $0x3c8] sm:$0xff]
                %311 = vst [vmem:[%s187 + $0x1e8] sm:$0xff] %v310
                %v312 = vld [vmem:[%s186 + $0x3e0] sm:$0xff]
                %313 = vst [vmem:[%s187 + $0x1f0] sm:$0xff] %v312
                %v314 = vld [vmem:[%s186 + $0x3e8] sm:$0xff]
                %315 = vst [vmem:[%s187 + $0x1f8] sm:$0xff] %v314
              $region37: #{discriminator_forward.6} parent=31 // loop_footer
                %s185 = sadd.s32 1, %s181
              $region38: #{discriminator_forward.6} parent=31 // loop_footer_branch
                %180 = sbr.rel target = $region34
              $region39: #{discriminator_forward.6} parent=31 // loop_exit
                _
            $region32: #{discriminator_forward.6} parent=27 // pred_fallthru
              _
            // Predicated region
            $region40: #{discriminator_forward.6} parent=27 // pred_check
              _
            $region41: #{discriminator_forward.6} parent=27 // pred_check_branch
              %317 = sbr.rel target = $region43
            $region42: #{discriminator_forward.6} parent=27 // pred_region
              _
            $region43: #{discriminator_forward.6} parent=27 // pred_fallthru
              _
          $region28: #{discriminator_forward.6} parent=23 // pred_fallthru
            _
          %318 = vnop
        $region24: #{discriminator_forward.6} parent=19 // pred_fallthru
          _
        // Predicated region
        $region44: #{discriminator_forward.6} parent=19 // pred_check
          %p319 = pneg %p78
        $region45: #{discriminator_forward.6} parent=19 // pred_check_branch
          %321 = sbr.rel (%p319) target = $region47
        $region46: #{discriminator_forward.6} parent=19 // pred_region
          %s322 = smul.u32 64, %s18
          %p323 = scmp.lt.s32.totalorder %s322, 127
          %s324 = scalar_select %p323, %s322, 127
          %p325 = scmp.lt.s32.totalorder %s17, 0
          %s326 = scalar_select %p325, %s17, 0
          %s327 = sadd.s32 %s326, %s324
          %s328 = smul.addr %s327, 4
          %s329 = scalar_lea.vmem %s1, %s328
          %s330 = smul.u32 64, %s18
        $region47: #{discriminator_forward.6} parent=19 // pred_fallthru
          _
      $region20: #{discriminator_forward.6} parent=5 // pred_fallthru
        _
      %p331 = scmp.le.s32.totalorder 1, %s9
      %p332 = scmp.lt.s32.totalorder %s9, 5
      %p333 = pnand %p331, %p332
      %p334 = pneg %p333
      // Predicated region
      $region48: #{discriminator_forward.6} parent=5 // pred_check
        _
      $region49: #{discriminator_forward.6} parent=5 // pred_check_branch
        %336 = sbr.rel (%p333) target = $region51
      $region50: #{discriminator_forward.6} parent=5 // pred_region
        %s337 = ssub.s32 %s9, 1
        %s338 = sand.u32 %s43, 1
        %s339 = sand.u32 %s43, 1
        %s340 = smul.addr %s339, 512
        %s341 = scalar_lea.vmem [#allocation3], %s340
        // Predicated region
        $region52: #{discriminator_forward.6} parent=50 // pred_check
          %p342 = pneg %p56
        $region53: #{discriminator_forward.6} parent=50 // pred_check_branch
          %344 = sbr.rel (%p342) target = $region55
        $region54: #{discriminator_forward.6} parent=50 // pred_region
          _
        $region55: #{discriminator_forward.6} parent=50 // pred_fallthru
          _
        %s345 = sand.u32 %s43, 1
        %s346 = sand.u32 %s43, 1
        %s347 = smul.addr %s346, 512
        %s348 = scalar_lea.vmem [#allocation3], %s347
        %p349 = pneg %p56
        %p350 = pneg %p53
        %s351 = smul.u32 64, %s21
        %p352 = scmp.lt.s32.totalorder %s351, 127
        %s353 = scalar_select %p352, %s351, 127
        %p354 = scmp.lt.s32.totalorder %s20, 0
        %s355 = scalar_select %p354, %s20, 0
        %s356 = sadd.s32 %s355, %s353
        %s357 = smul.addr %s356, 4
        %s358 = scalar_lea.vmem %s1, %s357
        %p359 = pneg %p84
        %p360 = pneg %p81
        %p361 = scmp.lt.s32.totalorder %s20, 0
        %s362 = scalar_select %p361, %s20, 0
        %s363 = scalar_lea.vmem %s2, %s362
        %p364 = pneg %p110
        %p365 = pneg %p107
        %p366 = pneg %p138
        %p367 = pneg %p135
        %s368 = smul.u32 32, %s19
        %p369 = scmp.lt.s32.totalorder %s368, 63
        %s370 = scalar_select %p369, %s368, 63
        %p371 = scmp.lt.s32.totalorder %s20, 0
        %s372 = scalar_select %p371, %s20, 0
        %s373 = sadd.s32 %s372, %s370
        %s374 = smul.addr %s373, 4
        %s375 = scalar_lea.vmem %s3, %s374
        %s376 = smul.u32 32, %s19
        %s377 = smul.u32 4, %s21
        %s378 = smul.u32 64, %s21
        %p379 = scmp.lt.s32.totalorder %s378, 127
        %s380 = scalar_select %p379, %s378, 127
        %p381 = scmp.lt.s32.totalorder %s20, 0
        %s382 = scalar_select %p381, %s20, 0
        %s383 = sadd.s32 %s382, %s380
        %s384 = smul.addr %s383, 4
        %s385 = scalar_lea.vmem %s1, %s384
        %s386 = smul.u32 64, %s21
        %p387 = scmp.lt.s32.totalorder %s20, 0
        %s388 = scalar_select %p387, %s20, 0
        %s389 = scalar_lea.vmem %s2, %s388
        %s390 = smul.u32 32, %s19
        %p391 = scmp.lt.s32.totalorder %s390, 63
        %s392 = scalar_select %p391, %s390, 63
        %p393 = scmp.lt.s32.totalorder %s20, 0
        %s394 = scalar_select %p393, %s20, 0
        %s395 = sadd.s32 %s394, %s392
        %s396 = smul.addr %s395, 4
        %s397 = scalar_lea.vmem %s3, %s396
        %s398 = smul.u32 32, %s19
        %p400 = scmp.eq.s32.totalorder %s21, 0
        // Predicated region
        $region56: #{discriminator_forward.6} parent=50 // pred_check
          %p401 = pneg %p400
        $region57: #{discriminator_forward.6} parent=50 // pred_check_branch
          %403 = sbr.rel (%p401) target = $region59
        $region58: #{discriminator_forward.6} parent=50 // pred_region
          %404 = vst [vmem:[#allocation2] sm:$0xff] 0.0
          %405 = vst [vmem:[#allocation2 + $0x8] sm:$0xff] 0.0
          %406 = vst [vmem:[#allocation2 + $0x10] sm:$0xff] 0.0
          %407 = vst [vmem:[#allocation2 + $0x18] sm:$0xff] 0.0
          %408 = vst [vmem:[#allocation2 + $0x20] sm:$0xff] 0.0
          %409 = vst [vmem:[#allocation2 + $0x28] sm:$0xff] 0.0
          %410 = vst [vmem:[#allocation2 + $0x30] sm:$0xff] 0.0
          %411 = vst [vmem:[#allocation2 + $0x38] sm:$0xff] 0.0
          %412 = vst [vmem:[#allocation2 + $0x40] sm:$0xff] 0.0
          %413 = vst [vmem:[#allocation2 + $0x48] sm:$0xff] 0.0
          %414 = vst [vmem:[#allocation2 + $0x50] sm:$0xff] 0.0
          %415 = vst [vmem:[#allocation2 + $0x58] sm:$0xff] 0.0
          %416 = vst [vmem:[#allocation2 + $0x60] sm:$0xff] 0.0
          %417 = vst [vmem:[#allocation2 + $0x68] sm:$0xff] 0.0
          %418 = vst [vmem:[#allocation2 + $0x70] sm:$0xff] 0.0
          %419 = vst [vmem:[#allocation2 + $0x78] sm:$0xff] 0.0
          %420 = vst [vmem:[#allocation2 + $0x80] sm:$0xff] 0.0
          %421 = vst [vmem:[#allocation2 + $0x88] sm:$0xff] 0.0
          %422 = vst [vmem:[#allocation2 + $0x90] sm:$0xff] 0.0
          %423 = vst [vmem:[#allocation2 + $0x98] sm:$0xff] 0.0
          %424 = vst [vmem:[#allocation2 + $0xa0] sm:$0xff] 0.0
          %425 = vst [vmem:[#allocation2 + $0xa8] sm:$0xff] 0.0
          %426 = vst [vmem:[#allocation2 + $0xb0] sm:$0xff] 0.0
          %427 = vst [vmem:[#allocation2 + $0xb8] sm:$0xff] 0.0
          %428 = vst [vmem:[#allocation2 + $0xc0] sm:$0xff] 0.0
          %429 = vst [vmem:[#allocation2 + $0xc8] sm:$0xff] 0.0
          %430 = vst [vmem:[#allocation2 + $0xd0] sm:$0xff] 0.0
          %431 = vst [vmem:[#allocation2 + $0xd8] sm:$0xff] 0.0
          %432 = vst [vmem:[#allocation2 + $0xe0] sm:$0xff] 0.0
          %433 = vst [vmem:[#allocation2 + $0xe8] sm:$0xff] 0.0
          %434 = vst [vmem:[#allocation2 + $0xf0] sm:$0xff] 0.0
          %435 = vst [vmem:[#allocation2 + $0xf8] sm:$0xff] 0.0
        $region59: #{discriminator_forward.6} parent=50 // pred_fallthru
          _
        %v436 = vld [vmem:[#allocation2] sm:$0xff]
        %v437 = vld [vmem:[#allocation2 + $0x8] sm:$0xff]
        %v438 = vld [vmem:[#allocation2 + $0x10] sm:$0xff]
        %v439 = vld [vmem:[#allocation2 + $0x18] sm:$0xff]
        %v440 = vld [vmem:[#allocation2 + $0x20] sm:$0xff]
        %v441 = vld [vmem:[#allocation2 + $0x28] sm:$0xff]
        %v442 = vld [vmem:[#allocation2 + $0x30] sm:$0xff]
        %v443 = vld [vmem:[#allocation2 + $0x38] sm:$0xff]
        %v444 = vld [vmem:[#allocation2 + $0x40] sm:$0xff]
        %v445 = vld [vmem:[#allocation2 + $0x48] sm:$0xff]
        %v446 = vld [vmem:[#allocation2 + $0x50] sm:$0xff]
        %v447 = vld [vmem:[#allocation2 + $0x58] sm:$0xff]
        %v448 = vld [vmem:[#allocation2 + $0x60] sm:$0xff]
        %v449 = vld [vmem:[#allocation2 + $0x68] sm:$0xff]
        %v450 = vld [vmem:[#allocation2 + $0x70] sm:$0xff]
        %v451 = vld [vmem:[#allocation2 + $0x78] sm:$0xff]
        %v452 = vld [vmem:[#allocation2 + $0x80] sm:$0xff]
        %v453 = vld [vmem:[#allocation2 + $0x88] sm:$0xff]
        %v454 = vld [vmem:[#allocation2 + $0x90] sm:$0xff]
        %v455 = vld [vmem:[#allocation2 + $0x98] sm:$0xff]
        %v456 = vld [vmem:[#allocation2 + $0xa0] sm:$0xff]
        %v457 = vld [vmem:[#allocation2 + $0xa8] sm:$0xff]
        %v458 = vld [vmem:[#allocation2 + $0xb0] sm:$0xff]
        %v459 = vld [vmem:[#allocation2 + $0xb8] sm:$0xff]
        %v460 = vld [vmem:[#allocation2 + $0xc0] sm:$0xff]
        %v461 = vld [vmem:[#allocation2 + $0xc8] sm:$0xff]
        %v462 = vld [vmem:[#allocation2 + $0xd0] sm:$0xff]
        %v463 = vld [vmem:[#allocation2 + $0xd8] sm:$0xff]
        %v464 = vld [vmem:[#allocation2 + $0xe0] sm:$0xff]
        %v465 = vld [vmem:[#allocation2 + $0xe8] sm:$0xff]
        %v466 = vld [vmem:[#allocation2 + $0xf0] sm:$0xff]
        %v467 = vld [vmem:[#allocation2 + $0xf8] sm:$0xff]
        %v468 = vld [vmem:[%s341] sm:$0xff]
        %v469 = vld [vmem:[%s341 + $0x8] sm:$0xff]
        %v470 = vld [vmem:[%s341 + $0x10] sm:$0xff]
        %v471 = vld [vmem:[%s341 + $0x18] sm:$0xff]
        %v472 = vld [vmem:[%s341 + $0x20] sm:$0xff]
        %v473 = vld [vmem:[%s341 + $0x28] sm:$0xff]
        %v474 = vld [vmem:[%s341 + $0x30] sm:$0xff]
        %v475 = vld [vmem:[%s341 + $0x38] sm:$0xff]
        %v476 = vld [vmem:[%s341 + $0x40] sm:$0xff]
        %v477 = vld [vmem:[%s341 + $0x48] sm:$0xff]
        %v478 = vld [vmem:[%s341 + $0x50] sm:$0xff]
        %v479 = vld [vmem:[%s341 + $0x58] sm:$0xff]
        %v480 = vld [vmem:[%s341 + $0x60] sm:$0xff]
        %v481 = vld [vmem:[%s341 + $0x68] sm:$0xff]
        %v482 = vld [vmem:[%s341 + $0x70] sm:$0xff]
        %v483 = vld [vmem:[%s341 + $0x78] sm:$0xff]
        %v484 = vld [vmem:[%s341 + $0x80] sm:$0xff]
        %v485 = vld [vmem:[%s341 + $0x88] sm:$0xff]
        %v486 = vld [vmem:[%s341 + $0x90] sm:$0xff]
        %v487 = vld [vmem:[%s341 + $0x98] sm:$0xff]
        %v488 = vld [vmem:[%s341 + $0xa0] sm:$0xff]
        %v489 = vld [vmem:[%s341 + $0xa8] sm:$0xff]
        %v490 = vld [vmem:[%s341 + $0xb0] sm:$0xff]
        %v491 = vld [vmem:[%s341 + $0xb8] sm:$0xff]
        %v492 = vld [vmem:[%s341 + $0xc0] sm:$0xff]
        %v493 = vld [vmem:[%s341 + $0xc8] sm:$0xff]
        %v494 = vld [vmem:[%s341 + $0xd0] sm:$0xff]
        %v495 = vld [vmem:[%s341 + $0xd8] sm:$0xff]
        %v496 = vld [vmem:[%s341 + $0xe0] sm:$0xff]
        %v497 = vld [vmem:[%s341 + $0xe8] sm:$0xff]
        %v498 = vld [vmem:[%s341 + $0xf0] sm:$0xff]
        %v499 = vld [vmem:[%s341 + $0xf8] sm:$0xff]
        %v500 = vld [vmem:[%s341 + $0x100] sm:$0xff]
        %v501 = vld [vmem:[%s341 + $0x108] sm:$0xff]
        %v502 = vld [vmem:[%s341 + $0x110] sm:$0xff]
        %v503 = vld [vmem:[%s341 + $0x118] sm:$0xff]
        %v504 = vld [vmem:[%s341 + $0x120] sm:$0xff]
        %v505 = vld [vmem:[%s341 + $0x128] sm:$0xff]
        %v506 = vld [vmem:[%s341 + $0x130] sm:$0xff]
        %v507 = vld [vmem:[%s341 + $0x138] sm:$0xff]
        %v508 = vld [vmem:[%s341 + $0x140] sm:$0xff]
        %v509 = vld [vmem:[%s341 + $0x148] sm:$0xff]
        %v510 = vld [vmem:[%s341 + $0x150] sm:$0xff]
        %v511 = vld [vmem:[%s341 + $0x158] sm:$0xff]
        %v512 = vld [vmem:[%s341 + $0x160] sm:$0xff]
        %v513 = vld [vmem:[%s341 + $0x168] sm:$0xff]
        %v514 = vld [vmem:[%s341 + $0x170] sm:$0xff]
        %v515 = vld [vmem:[%s341 + $0x178] sm:$0xff]
        %v516 = vld [vmem:[%s341 + $0x180] sm:$0xff]
        %v517 = vld [vmem:[%s341 + $0x188] sm:$0xff]
        %v518 = vld [vmem:[%s341 + $0x190] sm:$0xff]
        %v519 = vld [vmem:[%s341 + $0x198] sm:$0xff]
        %v520 = vld [vmem:[%s341 + $0x1a0] sm:$0xff]
        %v521 = vld [vmem:[%s341 + $0x1a8] sm:$0xff]
        %v522 = vld [vmem:[%s341 + $0x1b0] sm:$0xff]
        %v523 = vld [vmem:[%s341 + $0x1b8] sm:$0xff]
        %v524 = vld [vmem:[%s341 + $0x1c0] sm:$0xff]
        %v525 = vld [vmem:[%s341 + $0x1c8] sm:$0xff]
        %v526 = vld [vmem:[%s341 + $0x1d0] sm:$0xff]
        %v527 = vld [vmem:[%s341 + $0x1d8] sm:$0xff]
        %v528 = vld [vmem:[%s341 + $0x1e0] sm:$0xff]
        %v529 = vld [vmem:[%s341 + $0x1e8] sm:$0xff]
        %v530 = vld [vmem:[%s341 + $0x1f0] sm:$0xff]
        %v531 = vld [vmem:[%s341 + $0x1f8] sm:$0xff]
        %v532 = vld [vmem:[%s385] sm:$0xf]
        %v533 = vld [vmem:[%s385 + $0x4] sm:$0xf]
        %v534 = vld [vmem:[%s385 + $0x8] sm:$0xf]
        %v535 = vld [vmem:[%s385 + $0xc] sm:$0xf]
        %v536 = vld [vmem:[%s385 + $0x10] sm:$0xf]
        %v537 = vld [vmem:[%s385 + $0x14] sm:$0xf]
        %v538 = vld [vmem:[%s385 + $0x18] sm:$0xf]
        %v539 = vld [vmem:[%s385 + $0x1c] sm:$0xf]
        %v540 = vld [vmem:[%s385 + $0x20] sm:$0xf]
        %v541 = vld [vmem:[%s385 + $0x24] sm:$0xf]
        %v542 = vld [vmem:[%s385 + $0x28] sm:$0xf]
        %v543 = vld [vmem:[%s385 + $0x2c] sm:$0xf]
        %v544 = vld [vmem:[%s385 + $0x30] sm:$0xf]
        %v545 = vld [vmem:[%s385 + $0x34] sm:$0xf]
        %v546 = vld [vmem:[%s385 + $0x38] sm:$0xf]
        %v547 = vld [vmem:[%s385 + $0x3c] sm:$0xf]
        %v548 = vld [vmem:[%s385 + $0x40] sm:$0xf]
        %v549 = vld [vmem:[%s385 + $0x44] sm:$0xf]
        %v550 = vld [vmem:[%s385 + $0x48] sm:$0xf]
        %v551 = vld [vmem:[%s385 + $0x4c] sm:$0xf]
        %v552 = vld [vmem:[%s385 + $0x50] sm:$0xf]
        %v553 = vld [vmem:[%s385 + $0x54] sm:$0xf]
        %v554 = vld [vmem:[%s385 + $0x58] sm:$0xf]
        %v555 = vld [vmem:[%s385 + $0x5c] sm:$0xf]
        %v556 = vld [vmem:[%s385 + $0x60] sm:$0xf]
        %v557 = vld [vmem:[%s385 + $0x64] sm:$0xf]
        %v558 = vld [vmem:[%s385 + $0x68] sm:$0xf]
        %v559 = vld [vmem:[%s385 + $0x6c] sm:$0xf]
        %v560 = vld [vmem:[%s385 + $0x70] sm:$0xf]
        %v561 = vld [vmem:[%s385 + $0x74] sm:$0xf]
        %v562 = vld [vmem:[%s385 + $0x78] sm:$0xf]
        %v563 = vld [vmem:[%s385 + $0x7c] sm:$0xf]
        %v564 = vld [vmem:[%s385 + $0x80] sm:$0xf]
        %v565 = vld [vmem:[%s385 + $0x84] sm:$0xf]
        %v566 = vld [vmem:[%s385 + $0x88] sm:$0xf]
        %v567 = vld [vmem:[%s385 + $0x8c] sm:$0xf]
        %v568 = vld [vmem:[%s385 + $0x90] sm:$0xf]
        %v569 = vld [vmem:[%s385 + $0x94] sm:$0xf]
        %v570 = vld [vmem:[%s385 + $0x98] sm:$0xf]
        %v571 = vld [vmem:[%s385 + $0x9c] sm:$0xf]
        %v572 = vld [vmem:[%s385 + $0xa0] sm:$0xf]
        %v573 = vld [vmem:[%s385 + $0xa4] sm:$0xf]
        %v574 = vld [vmem:[%s385 + $0xa8] sm:$0xf]
        %v575 = vld [vmem:[%s385 + $0xac] sm:$0xf]
        %v576 = vld [vmem:[%s385 + $0xb0] sm:$0xf]
        %v577 = vld [vmem:[%s385 + $0xb4] sm:$0xf]
        %v578 = vld [vmem:[%s385 + $0xb8] sm:$0xf]
        %v579 = vld [vmem:[%s385 + $0xbc] sm:$0xf]
        %v580 = vld [vmem:[%s385 + $0xc0] sm:$0xf]
        %v581 = vld [vmem:[%s385 + $0xc4] sm:$0xf]
        %v582 = vld [vmem:[%s385 + $0xc8] sm:$0xf]
        %v583 = vld [vmem:[%s385 + $0xcc] sm:$0xf]
        %v584 = vld [vmem:[%s385 + $0xd0] sm:$0xf]
        %v585 = vld [vmem:[%s385 + $0xd4] sm:$0xf]
        %v586 = vld [vmem:[%s385 + $0xd8] sm:$0xf]
        %v587 = vld [vmem:[%s385 + $0xdc] sm:$0xf]
        %v588 = vld [vmem:[%s385 + $0xe0] sm:$0xf]
        %v589 = vld [vmem:[%s385 + $0xe4] sm:$0xf]
        %v590 = vld [vmem:[%s385 + $0xe8] sm:$0xf]
        %v591 = vld [vmem:[%s385 + $0xec] sm:$0xf]
        %v592 = vld [vmem:[%s385 + $0xf0] sm:$0xf]
        %v593 = vld [vmem:[%s385 + $0xf4] sm:$0xf]
        %v594 = vld [vmem:[%s385 + $0xf8] sm:$0xf]
        %v595 = vld [vmem:[%s385 + $0xfc] sm:$0xf]
        %v660 = vunpack.c.l.b16 %v468
        %v661 = vunpack.c.h.b16 %v468
        %v662 = vunpack.c.l.b16 %v469
        %v663 = vunpack.c.h.b16 %v469
        %v664 = vunpack.c.l.b16 %v470
        %v665 = vunpack.c.h.b16 %v470
        %v666 = vunpack.c.l.b16 %v471
        %v667 = vunpack.c.h.b16 %v471
        %v668 = vunpack.c.l.b16 %v472
        %v669 = vunpack.c.h.b16 %v472
        %v670 = vunpack.c.l.b16 %v473
        %v671 = vunpack.c.h.b16 %v473
        %v672 = vunpack.c.l.b16 %v474
        %v673 = vunpack.c.h.b16 %v474
        %v674 = vunpack.c.l.b16 %v475
        %v675 = vunpack.c.h.b16 %v475
        %v676 = vunpack.c.l.b16 %v476
        %v677 = vunpack.c.h.b16 %v476
        %v678 = vunpack.c.l.b16 %v477
        %v679 = vunpack.c.h.b16 %v477
        %v680 = vunpack.c.l.b16 %v478
        %v681 = vunpack.c.h.b16 %v478
        %v682 = vunpack.c.l.b16 %v479
        %v683 = vunpack.c.h.b16 %v479
        %v684 = vunpack.c.l.b16 %v480
        %v685 = vunpack.c.h.b16 %v480
        %v686 = vunpack.c.l.b16 %v481
        %v687 = vunpack.c.h.b16 %v481
        %v688 = vunpack.c.l.b16 %v482
        %v689 = vunpack.c.h.b16 %v482
        %v690 = vunpack.c.l.b16 %v483
        %v691 = vunpack.c.h.b16 %v483
        %v692 = vunpack.c.l.b16 %v484
        %v693 = vunpack.c.h.b16 %v484
        %v694 = vunpack.c.l.b16 %v485
        %v695 = vunpack.c.h.b16 %v485
        %v696 = vunpack.c.l.b16 %v486
        %v697 = vunpack.c.h.b16 %v486
        %v698 = vunpack.c.l.b16 %v487
        %v699 = vunpack.c.h.b16 %v487
        %v700 = vunpack.c.l.b16 %v488
        %v701 = vunpack.c.h.b16 %v488
        %v702 = vunpack.c.l.b16 %v489
        %v703 = vunpack.c.h.b16 %v489
        %v704 = vunpack.c.l.b16 %v490
        %v705 = vunpack.c.h.b16 %v490
        %v706 = vunpack.c.l.b16 %v491
        %v707 = vunpack.c.h.b16 %v491
        %v708 = vunpack.c.l.b16 %v492
        %v709 = vunpack.c.h.b16 %v492
        %v710 = vunpack.c.l.b16 %v493
        %v711 = vunpack.c.h.b16 %v493
        %v712 = vunpack.c.l.b16 %v494
        %v713 = vunpack.c.h.b16 %v494
        %v714 = vunpack.c.l.b16 %v495
        %v715 = vunpack.c.h.b16 %v495
        %v716 = vunpack.c.l.b16 %v496
        %v717 = vunpack.c.h.b16 %v496
        %v718 = vunpack.c.l.b16 %v497
        %v719 = vunpack.c.h.b16 %v497
        %v720 = vunpack.c.l.b16 %v498
        %v721 = vunpack.c.h.b16 %v498
        %v722 = vunpack.c.l.b16 %v499
        %v723 = vunpack.c.h.b16 %v499
        %v724 = vunpack.c.l.b16 %v500
        %v725 = vunpack.c.h.b16 %v500
        %v726 = vunpack.c.l.b16 %v501
        %v727 = vunpack.c.h.b16 %v501
        %v728 = vunpack.c.l.b16 %v502
        %v729 = vunpack.c.h.b16 %v502
        %v730 = vunpack.c.l.b16 %v503
        %v731 = vunpack.c.h.b16 %v503
        %v732 = vunpack.c.l.b16 %v504
        %v733 = vunpack.c.h.b16 %v504
        %v734 = vunpack.c.l.b16 %v505
        %v735 = vunpack.c.h.b16 %v505
        %v736 = vunpack.c.l.b16 %v506
        %v737 = vunpack.c.h.b16 %v506
        %v738 = vunpack.c.l.b16 %v507
        %v739 = vunpack.c.h.b16 %v507
        %v740 = vunpack.c.l.b16 %v508
        %v741 = vunpack.c.h.b16 %v508
        %v742 = vunpack.c.l.b16 %v509
        %v743 = vunpack.c.h.b16 %v509
        %v744 = vunpack.c.l.b16 %v510
        %v745 = vunpack.c.h.b16 %v510
        %v746 = vunpack.c.l.b16 %v511
        %v747 = vunpack.c.h.b16 %v511
        %v748 = vunpack.c.l.b16 %v512
        %v749 = vunpack.c.h.b16 %v512
        %v750 = vunpack.c.l.b16 %v513
        %v751 = vunpack.c.h.b16 %v513
        %v752 = vunpack.c.l.b16 %v514
        %v753 = vunpack.c.h.b16 %v514
        %v754 = vunpack.c.l.b16 %v515
        %v755 = vunpack.c.h.b16 %v515
        %v756 = vunpack.c.l.b16 %v516
        %v757 = vunpack.c.h.b16 %v516
        %v758 = vunpack.c.l.b16 %v517
        %v759 = vunpack.c.h.b16 %v517
        %v760 = vunpack.c.l.b16 %v518
        %v761 = vunpack.c.h.b16 %v518
        %v762 = vunpack.c.l.b16 %v519
        %v763 = vunpack.c.h.b16 %v519
        %v764 = vunpack.c.l.b16 %v520
        %v765 = vunpack.c.h.b16 %v520
        %v766 = vunpack.c.l.b16 %v521
        %v767 = vunpack.c.h.b16 %v521
        %v768 = vunpack.c.l.b16 %v522
        %v769 = vunpack.c.h.b16 %v522
        %v770 = vunpack.c.l.b16 %v523
        %v771 = vunpack.c.h.b16 %v523
        %v772 = vunpack.c.l.b16 %v524
        %v773 = vunpack.c.h.b16 %v524
        %v774 = vunpack.c.l.b16 %v525
        %v775 = vunpack.c.h.b16 %v525
        %v776 = vunpack.c.l.b16 %v526
        %v777 = vunpack.c.h.b16 %v526
        %v778 = vunpack.c.l.b16 %v527
        %v779 = vunpack.c.h.b16 %v527
        %v780 = vunpack.c.l.b16 %v528
        %v781 = vunpack.c.h.b16 %v528
        %v782 = vunpack.c.l.b16 %v529
        %v783 = vunpack.c.h.b16 %v529
        %v784 = vunpack.c.l.b16 %v530
        %v785 = vunpack.c.h.b16 %v530
        %v786 = vunpack.c.l.b16 %v531
        %v787 = vunpack.c.h.b16 %v531
        %v788 = vpack.c.b16 %v664, %v660
        %v789 = vpack.c.b16 %v665, %v661
        %v790 = vpack.c.b16 %v666, %v662
        %v791 = vpack.c.b16 %v667, %v663
        %v792 = vpack.c.b16 %v672, %v668
        %v793 = vpack.c.b16 %v673, %v669
        %v794 = vpack.c.b16 %v674, %v670
        %v795 = vpack.c.b16 %v675, %v671
        %v796 = vpack.c.b16 %v680, %v676
        %v797 = vpack.c.b16 %v681, %v677
        %v798 = vpack.c.b16 %v682, %v678
        %v799 = vpack.c.b16 %v683, %v679
        %v800 = vpack.c.b16 %v688, %v684
        %v801 = vpack.c.b16 %v689, %v685
        %v802 = vpack.c.b16 %v690, %v686
        %v803 = vpack.c.b16 %v691, %v687
        %v804 = vpack.c.b16 %v696, %v692
        %v805 = vpack.c.b16 %v697, %v693
        %v806 = vpack.c.b16 %v698, %v694
        %v807 = vpack.c.b16 %v699, %v695
        %v808 = vpack.c.b16 %v704, %v700
        %v809 = vpack.c.b16 %v705, %v701
        %v810 = vpack.c.b16 %v706, %v702
        %v811 = vpack.c.b16 %v707, %v703
        %v812 = vpack.c.b16 %v712, %v708
        %v813 = vpack.c.b16 %v713, %v709
        %v814 = vpack.c.b16 %v714, %v710
        %v815 = vpack.c.b16 %v715, %v711
        %v816 = vpack.c.b16 %v720, %v716
        %v817 = vpack.c.b16 %v721, %v717
        %v818 = vpack.c.b16 %v722, %v718
        %v819 = vpack.c.b16 %v723, %v719
        %v820 = vpack.c.b16 %v728, %v724
        %v821 = vpack.c.b16 %v729, %v725
        %v822 = vpack.c.b16 %v730, %v726
        %v823 = vpack.c.b16 %v731, %v727
        %v824 = vpack.c.b16 %v736, %v732
        %v825 = vpack.c.b16 %v737, %v733
        %v826 = vpack.c.b16 %v738, %v734
        %v827 = vpack.c.b16 %v739, %v735
        %v828 = vpack.c.b16 %v744, %v740
        %v829 = vpack.c.b16 %v745, %v741
        %v830 = vpack.c.b16 %v746, %v742
        %v831 = vpack.c.b16 %v747, %v743
        %v832 = vpack.c.b16 %v752, %v748
        %v833 = vpack.c.b16 %v753, %v749
        %v834 = vpack.c.b16 %v754, %v750
        %v835 = vpack.c.b16 %v755, %v751
        %v836 = vpack.c.b16 %v760, %v756
        %v837 = vpack.c.b16 %v761, %v757
        %v838 = vpack.c.b16 %v762, %v758
        %v839 = vpack.c.b16 %v763, %v759
        %v840 = vpack.c.b16 %v768, %v764
        %v841 = vpack.c.b16 %v769, %v765
        %v842 = vpack.c.b16 %v770, %v766
        %v843 = vpack.c.b16 %v771, %v767
        %v844 = vpack.c.b16 %v776, %v772
        %v845 = vpack.c.b16 %v777, %v773
        %v846 = vpack.c.b16 %v778, %v774
        %v847 = vpack.c.b16 %v779, %v775
        %v848 = vpack.c.b16 %v784, %v780
        %v849 = vpack.c.b16 %v785, %v781
        %v850 = vpack.c.b16 %v786, %v782
        %v851 = vpack.c.b16 %v787, %v783
        %v980 = vunpack.c.l.b16 %v532
        %v981 = vunpack.c.l.b16 %v533
        %v982 = vunpack.c.l.b16 %v534
        %v983 = vunpack.c.l.b16 %v535
        %v984 = vunpack.c.l.b16 %v536
        %v985 = vunpack.c.l.b16 %v537
        %v986 = vunpack.c.l.b16 %v538
        %v987 = vunpack.c.l.b16 %v539
        %v988 = vunpack.c.l.b16 %v540
        %v989 = vunpack.c.l.b16 %v541
        %v990 = vunpack.c.l.b16 %v542
        %v991 = vunpack.c.l.b16 %v543
        %v992 = vunpack.c.l.b16 %v544
        %v993 = vunpack.c.l.b16 %v545
        %v994 = vunpack.c.l.b16 %v546
        %v995 = vunpack.c.l.b16 %v547
        %v996 = vunpack.c.l.b16 %v548
        %v997 = vunpack.c.l.b16 %v549
        %v998 = vunpack.c.l.b16 %v550
        %v999 = vunpack.c.l.b16 %v551
        %v1000 = vunpack.c.l.b16 %v552
        %v1001 = vunpack.c.l.b16 %v553
        %v1002 = vunpack.c.l.b16 %v554
        %v1003 = vunpack.c.l.b16 %v555
        %v1004 = vunpack.c.l.b16 %v556
        %v1005 = vunpack.c.l.b16 %v557
        %v1006 = vunpack.c.l.b16 %v558
        %v1007 = vunpack.c.l.b16 %v559
        %v1008 = vunpack.c.l.b16 %v560
        %v1009 = vunpack.c.l.b16 %v561
        %v1010 = vunpack.c.l.b16 %v562
        %v1011 = vunpack.c.l.b16 %v563
        %v1012 = vunpack.c.l.b16 %v564
        %v1013 = vunpack.c.l.b16 %v565
        %v1014 = vunpack.c.l.b16 %v566
        %v1015 = vunpack.c.l.b16 %v567
        %v1016 = vunpack.c.l.b16 %v568
        %v1017 = vunpack.c.l.b16 %v569
        %v1018 = vunpack.c.l.b16 %v570
        %v1019 = vunpack.c.l.b16 %v571
        %v1020 = vunpack.c.l.b16 %v572
        %v1021 = vunpack.c.l.b16 %v573
        %v1022 = vunpack.c.l.b16 %v574
        %v1023 = vunpack.c.l.b16 %v575
        %v1024 = vunpack.c.l.b16 %v576
        %v1025 = vunpack.c.l.b16 %v577
        %v1026 = vunpack.c.l.b16 %v578
        %v1027 = vunpack.c.l.b16 %v579
        %v1028 = vunpack.c.l.b16 %v580
        %v1029 = vunpack.c.l.b16 %v581
        %v1030 = vunpack.c.l.b16 %v582
        %v1031 = vunpack.c.l.b16 %v583
        %v1032 = vunpack.c.l.b16 %v584
        %v1033 = vunpack.c.l.b16 %v585
        %v1034 = vunpack.c.l.b16 %v586
        %v1035 = vunpack.c.l.b16 %v587
        %v1036 = vunpack.c.l.b16 %v588
        %v1037 = vunpack.c.l.b16 %v589
        %v1038 = vunpack.c.l.b16 %v590
        %v1039 = vunpack.c.l.b16 %v591
        %v1040 = vunpack.c.l.b16 %v592
        %v1041 = vunpack.c.l.b16 %v593
        %v1042 = vunpack.c.l.b16 %v594
        %v1043 = vunpack.c.l.b16 %v595
        %v1044 = vpack.c.b16 %v981, %v980
        %v1045 = vpack.c.b16 %v983, %v982
        %v1046 = vpack.c.b16 %v985, %v984
        %v1047 = vpack.c.b16 %v987, %v986
        %v1048 = vpack.c.b16 %v989, %v988
        %v1049 = vpack.c.b16 %v991, %v990
        %v1050 = vpack.c.b16 %v993, %v992
        %v1051 = vpack.c.b16 %v995, %v994
        %v1052 = vpack.c.b16 %v997, %v996
        %v1053 = vpack.c.b16 %v999, %v998
        %v1054 = vpack.c.b16 %v1001, %v1000
        %v1055 = vpack.c.b16 %v1003, %v1002
        %v1056 = vpack.c.b16 %v1005, %v1004
        %v1057 = vpack.c.b16 %v1007, %v1006
        %v1058 = vpack.c.b16 %v1009, %v1008
        %v1059 = vpack.c.b16 %v1011, %v1010
        %v1060 = vpack.c.b16 %v1013, %v1012
        %v1061 = vpack.c.b16 %v1015, %v1014
        %v1062 = vpack.c.b16 %v1017, %v1016
        %v1063 = vpack.c.b16 %v1019, %v1018
        %v1064 = vpack.c.b16 %v1021, %v1020
        %v1065 = vpack.c.b16 %v1023, %v1022
        %v1066 = vpack.c.b16 %v1025, %v1024
        %v1067 = vpack.c.b16 %v1027, %v1026
        %v1068 = vpack.c.b16 %v1029, %v1028
        %v1069 = vpack.c.b16 %v1031, %v1030
        %v1070 = vpack.c.b16 %v1033, %v1032
        %v1071 = vpack.c.b16 %v1035, %v1034
        %v1072 = vpack.c.b16 %v1037, %v1036
        %v1073 = vpack.c.b16 %v1039, %v1038
        %v1074 = vpack.c.b16 %v1041, %v1040
        %v1075 = vpack.c.b16 %v1043, %v1042
        %1108 = vmatprep.subr.bf16.mxu0 0
        %1109 = vmatpush1.bf16.msra.mxu0 %v1051
        %1110 = vmatprep.subr.bf16.mxu0 0
        %1111 = vmatpush1.bf16.msra.mxu0 %v1050
        %1112 = vmatprep.subr.bf16.mxu0 0
        %1113 = vmatpush1.bf16.msra.mxu0 %v1049
        %1114 = vmatprep.subr.bf16.mxu0 0
        %1115 = vmatpush1.bf16.msra.mxu0 %v1048
        %1116 = vmatprep.subr.bf16.mxu0 0
        %1117 = vmatpush1.bf16.msra.mxu0 %v1047
        %1118 = vmatprep.subr.bf16.mxu0 0
        %1119 = vmatpush1.bf16.msra.mxu0 %v1046
        %1120 = vmatprep.subr.bf16.mxu0 0
        %1121 = vmatpush1.bf16.msra.mxu0 %v1045
        %1122 = vmatprep.subr.bf16.mxu0 0
        %1123 = vmatpush1.bf16.msra.mxu0 %v1044
        %1124 = vmatprep.subr.bf16.mxu0 0
        %1125 = vmatpush2.bf16.msra.mxu0 %v1059
        %1126 = vmatprep.subr.bf16.mxu0 0
        %1127 = vmatpush2.bf16.msra.mxu0 %v1058
        %1128 = vmatprep.subr.bf16.mxu0 0
        %1129 = vmatpush2.bf16.msra.mxu0 %v1057
        %1130 = vmatprep.subr.bf16.mxu0 0
        %1131 = vmatpush2.bf16.msra.mxu0 %v1056
        %1132 = vmatprep.subr.bf16.mxu0 0
        %1133 = vmatpush2.bf16.msra.mxu0 %v1055
        %1134 = vmatprep.subr.bf16.mxu0 0
        %1135 = vmatpush2.bf16.msra.mxu0 %v1054
        %1136 = vmatprep.subr.bf16.mxu0 0
        %1137 = vmatpush2.bf16.msra.mxu0 %v1053
        %1138 = vmatprep.subr.bf16.mxu0 0
        %1139 = vmatpush2.bf16.msra.mxu0 %v1052
        %1140 = vmatprep.mubr.bf16.mxu0 %v789
        %1141 = vmatmul.mubr.bf16.gmra.mxu0 %v788
        %v1142 = vpop.f32.mrf.mxu0
        %v1143 = vadd.f32 0.0, %v1142
        %v1144 = vpop.f32.mrf.mxu0
        %v1145 = vpop.f32.mrf.mxu0
        %v1146 = vadd.f32 0.0, %v1145
        %v1147 = vpop.f32.mrf.mxu0
        %1148 = vmatprep.mubr.bf16.mxu0 %v793
        %1149 = vmatmul.mubr.bf16.gmra.mxu0 %v792
        %v1150 = vpop.f32.mrf.mxu0
        %v1151 = vadd.f32 0.0, %v1150
        %v1152 = vpop.f32.mrf.mxu0
        %v1153 = vpop.f32.mrf.mxu0
        %v1154 = vadd.f32 0.0, %v1153
        %v1155 = vpop.f32.mrf.mxu0
        %1156 = vmatprep.mubr.bf16.mxu0 %v797
        %1157 = vmatmul.mubr.bf16.gmra.mxu0 %v796
        %v1158 = vpop.f32.mrf.mxu0
        %v1159 = vadd.f32 0.0, %v1158
        %v1160 = vpop.f32.mrf.mxu0
        %v1161 = vpop.f32.mrf.mxu0
        %v1162 = vadd.f32 0.0, %v1161
        %v1163 = vpop.f32.mrf.mxu0
        %1164 = vmatprep.mubr.bf16.mxu0 %v801
        %1165 = vmatmul.mubr.bf16.gmra.mxu0 %v800
        %v1166 = vpop.f32.mrf.mxu0
        %v1167 = vadd.f32 0.0, %v1166
        %v1168 = vpop.f32.mrf.mxu0
        %v1169 = vpop.f32.mrf.mxu0
        %v1170 = vadd.f32 0.0, %v1169
        %v1171 = vpop.f32.mrf.mxu0
        %1172 = vmatprep.mubr.bf16.mxu0 %v805
        %1173 = vmatmul.mubr.bf16.gmra.mxu0 %v804
        %v1174 = vpop.f32.mrf.mxu0
        %v1175 = vadd.f32 0.0, %v1174
        %v1176 = vpop.f32.mrf.mxu0
        %v1177 = vpop.f32.mrf.mxu0
        %v1178 = vadd.f32 0.0, %v1177
        %v1179 = vpop.f32.mrf.mxu0
        %1180 = vmatprep.mubr.bf16.mxu0 %v809
        %1181 = vmatmul.mubr.bf16.gmra.mxu0 %v808
        %v1182 = vpop.f32.mrf.mxu0
        %v1183 = vadd.f32 0.0, %v1182
        %v1184 = vpop.f32.mrf.mxu0
        %v1185 = vpop.f32.mrf.mxu0
        %v1186 = vadd.f32 0.0, %v1185
        %v1187 = vpop.f32.mrf.mxu0
        %1188 = vmatprep.mubr.bf16.mxu0 %v813
        %1189 = vmatmul.mubr.bf16.gmra.mxu0 %v812
        %v1190 = vpop.f32.mrf.mxu0
        %v1191 = vadd.f32 0.0, %v1190
        %v1192 = vpop.f32.mrf.mxu0
        %v1193 = vpop.f32.mrf.mxu0
        %v1194 = vadd.f32 0.0, %v1193
        %v1195 = vpop.f32.mrf.mxu0
        %1196 = vmatprep.mubr.bf16.mxu0 %v817
        %1197 = vmatmul.mubr.bf16.gmra.mxu0 %v816
        %v1198 = vpop.f32.mrf.mxu0
        %v1199 = vadd.f32 0.0, %v1198
        %v1200 = vpop.f32.mrf.mxu0
        %v1201 = vpop.f32.mrf.mxu0
        %v1202 = vadd.f32 0.0, %v1201
        %v1203 = vpop.f32.mrf.mxu0
        %1204 = vmatprep.mubr.bf16.mxu0 %v821
        %1205 = vmatmul.mubr.bf16.gmra.mxu0 %v820
        %v1206 = vpop.f32.mrf.mxu0
        %v1207 = vadd.f32 0.0, %v1206
        %v1208 = vpop.f32.mrf.mxu0
        %v1209 = vpop.f32.mrf.mxu0
        %v1210 = vadd.f32 0.0, %v1209
        %v1211 = vpop.f32.mrf.mxu0
        %1212 = vmatprep.mubr.bf16.mxu0 %v825
        %1213 = vmatmul.mubr.bf16.gmra.mxu0 %v824
        %v1214 = vpop.f32.mrf.mxu0
        %v1215 = vadd.f32 0.0, %v1214
        %v1216 = vpop.f32.mrf.mxu0
        %v1217 = vpop.f32.mrf.mxu0
        %v1218 = vadd.f32 0.0, %v1217
        %v1219 = vpop.f32.mrf.mxu0
        %1220 = vmatprep.mubr.bf16.mxu0 %v829
        %1221 = vmatmul.mubr.bf16.gmra.mxu0 %v828
        %v1222 = vpop.f32.mrf.mxu0
        %v1223 = vadd.f32 0.0, %v1222
        %v1224 = vpop.f32.mrf.mxu0
        %v1225 = vpop.f32.mrf.mxu0
        %v1226 = vadd.f32 0.0, %v1225
        %v1227 = vpop.f32.mrf.mxu0
        %1228 = vmatprep.mubr.bf16.mxu0 %v833
        %1229 = vmatmul.mubr.bf16.gmra.mxu0 %v832
        %v1230 = vpop.f32.mrf.mxu0
        %v1231 = vadd.f32 0.0, %v1230
        %v1232 = vpop.f32.mrf.mxu0
        %v1233 = vpop.f32.mrf.mxu0
        %v1234 = vadd.f32 0.0, %v1233
        %v1235 = vpop.f32.mrf.mxu0
        %1236 = vmatprep.mubr.bf16.mxu0 %v837
        %1237 = vmatmul.mubr.bf16.gmra.mxu0 %v836
        %v1238 = vpop.f32.mrf.mxu0
        %v1239 = vadd.f32 0.0, %v1238
        %v1240 = vpop.f32.mrf.mxu0
        %v1241 = vpop.f32.mrf.mxu0
        %v1242 = vadd.f32 0.0, %v1241
        %v1243 = vpop.f32.mrf.mxu0
        %1244 = vmatprep.mubr.bf16.mxu0 %v841
        %1245 = vmatmul.mubr.bf16.gmra.mxu0 %v840
        %v1246 = vpop.f32.mrf.mxu0
        %v1247 = vadd.f32 0.0, %v1246
        %v1248 = vpop.f32.mrf.mxu0
        %v1249 = vpop.f32.mrf.mxu0
        %v1250 = vadd.f32 0.0, %v1249
        %v1251 = vpop.f32.mrf.mxu0
        %1252 = vmatprep.mubr.bf16.mxu0 %v845
        %1253 = vmatmul.mubr.bf16.gmra.mxu0 %v844
        %v1254 = vpop.f32.mrf.mxu0
        %v1255 = vadd.f32 0.0, %v1254
        %v1256 = vpop.f32.mrf.mxu0
        %v1257 = vpop.f32.mrf.mxu0
        %v1258 = vadd.f32 0.0, %v1257
        %v1259 = vpop.f32.mrf.mxu0
        %1260 = vmatprep.mubr.bf16.mxu0 %v849
        %1261 = vmatmul.mubr.bf16.gmra.mxu0 %v848
        %v1262 = vpop.f32.mrf.mxu0
        %v1263 = vadd.f32 0.0, %v1262
        %v1264 = vpop.f32.mrf.mxu0
        %v1265 = vpop.f32.mrf.mxu0
        %v1266 = vadd.f32 0.0, %v1265
        %v1267 = vpop.f32.mrf.mxu0
        %1268 = vdwg.mxu0
        %1269 = vmatprep.subr.bf16.mxu0 0
        %1270 = vmatpush1.bf16.msra.mxu0 %v1067
        %1271 = vmatprep.subr.bf16.mxu0 0
        %1272 = vmatpush1.bf16.msra.mxu0 %v1066
        %1273 = vmatprep.subr.bf16.mxu0 0
        %1274 = vmatpush1.bf16.msra.mxu0 %v1065
        %1275 = vmatprep.subr.bf16.mxu0 0
        %1276 = vmatpush1.bf16.msra.mxu0 %v1064
        %1277 = vmatprep.subr.bf16.mxu0 0
        %1278 = vmatpush1.bf16.msra.mxu0 %v1063
        %1279 = vmatprep.subr.bf16.mxu0 0
        %1280 = vmatpush1.bf16.msra.mxu0 %v1062
        %1281 = vmatprep.subr.bf16.mxu0 0
        %1282 = vmatpush1.bf16.msra.mxu0 %v1061
        %1283 = vmatprep.subr.bf16.mxu0 0
        %1284 = vmatpush1.bf16.msra.mxu0 %v1060
        %1285 = vmatprep.subr.bf16.mxu0 0
        %1286 = vmatpush2.bf16.msra.mxu0 %v1075
        %1287 = vmatprep.subr.bf16.mxu0 0
        %1288 = vmatpush2.bf16.msra.mxu0 %v1074
        %1289 = vmatprep.subr.bf16.mxu0 0
        %1290 = vmatpush2.bf16.msra.mxu0 %v1073
        %1291 = vmatprep.subr.bf16.mxu0 0
        %1292 = vmatpush2.bf16.msra.mxu0 %v1072
        %1293 = vmatprep.subr.bf16.mxu0 0
        %1294 = vmatpush2.bf16.msra.mxu0 %v1071
        %1295 = vmatprep.subr.bf16.mxu0 0
        %1296 = vmatpush2.bf16.msra.mxu0 %v1070
        %1297 = vmatprep.subr.bf16.mxu0 0
        %1298 = vmatpush2.bf16.msra.mxu0 %v1069
        %1299 = vmatprep.subr.bf16.mxu0 0
        %1300 = vmatpush2.bf16.msra.mxu0 %v1068
        %1301 = vmatprep.mubr.bf16.mxu0 %v791
        %1302 = vmatmul.mubr.bf16.gmra.mxu0 %v790
        %v1303 = vpop.f32.mrf.mxu0
        %v1304 = vadd.f32 %v1143, %v1303
        %v1305 = vpop.f32.mrf.mxu0
        %v1306 = vpop.f32.mrf.mxu0
        %v1307 = vadd.f32 %v1146, %v1306
        %v1308 = vpop.f32.mrf.mxu0
        %1309 = vmatprep.mubr.bf16.mxu0 %v795
        %1310 = vmatmul.mubr.bf16.gmra.mxu0 %v794
        %v1311 = vpop.f32.mrf.mxu0
        %v1312 = vadd.f32 %v1151, %v1311
        %v1313 = vpop.f32.mrf.mxu0
        %v1314 = vpop.f32.mrf.mxu0
        %v1315 = vadd.f32 %v1154, %v1314
        %v1316 = vpop.f32.mrf.mxu0
        %1317 = vmatprep.mubr.bf16.mxu0 %v799
        %1318 = vmatmul.mubr.bf16.gmra.mxu0 %v798
        %v1319 = vpop.f32.mrf.mxu0
        %v1320 = vadd.f32 %v1159, %v1319
        %v1321 = vpop.f32.mrf.mxu0
        %v1322 = vpop.f32.mrf.mxu0
        %v1323 = vadd.f32 %v1162, %v1322
        %v1324 = vpop.f32.mrf.mxu0
        %1325 = vmatprep.mubr.bf16.mxu0 %v803
        %1326 = vmatmul.mubr.bf16.gmra.mxu0 %v802
        %v1327 = vpop.f32.mrf.mxu0
        %v1328 = vadd.f32 %v1167, %v1327
        %v1329 = vpop.f32.mrf.mxu0
        %v1330 = vpop.f32.mrf.mxu0
        %v1331 = vadd.f32 %v1170, %v1330
        %v1332 = vpop.f32.mrf.mxu0
        %1333 = vmatprep.mubr.bf16.mxu0 %v807
        %1334 = vmatmul.mubr.bf16.gmra.mxu0 %v806
        %v1335 = vpop.f32.mrf.mxu0
        %v1336 = vadd.f32 %v1175, %v1335
        %v1337 = vpop.f32.mrf.mxu0
        %v1338 = vpop.f32.mrf.mxu0
        %v1339 = vadd.f32 %v1178, %v1338
        %v1340 = vpop.f32.mrf.mxu0
        %1341 = vmatprep.mubr.bf16.mxu0 %v811
        %1342 = vmatmul.mubr.bf16.gmra.mxu0 %v810
        %v1343 = vpop.f32.mrf.mxu0
        %v1344 = vadd.f32 %v1183, %v1343
        %v1345 = vpop.f32.mrf.mxu0
        %v1346 = vpop.f32.mrf.mxu0
        %v1347 = vadd.f32 %v1186, %v1346
        %v1348 = vpop.f32.mrf.mxu0
        %1349 = vmatprep.mubr.bf16.mxu0 %v815
        %1350 = vmatmul.mubr.bf16.gmra.mxu0 %v814
        %v1351 = vpop.f32.mrf.mxu0
        %v1352 = vadd.f32 %v1191, %v1351
        %v1353 = vpop.f32.mrf.mxu0
        %v1354 = vpop.f32.mrf.mxu0
        %v1355 = vadd.f32 %v1194, %v1354
        %v1356 = vpop.f32.mrf.mxu0
        %1357 = vmatprep.mubr.bf16.mxu0 %v819
        %1358 = vmatmul.mubr.bf16.gmra.mxu0 %v818
        %v1359 = vpop.f32.mrf.mxu0
        %v1360 = vadd.f32 %v1199, %v1359
        %v1361 = vpop.f32.mrf.mxu0
        %v1362 = vpop.f32.mrf.mxu0
        %v1363 = vadd.f32 %v1202, %v1362
        %v1364 = vpop.f32.mrf.mxu0
        %1365 = vmatprep.mubr.bf16.mxu0 %v823
        %1366 = vmatmul.mubr.bf16.gmra.mxu0 %v822
        %v1367 = vpop.f32.mrf.mxu0
        %v1368 = vadd.f32 %v1207, %v1367
        %v1369 = vpop.f32.mrf.mxu0
        %v1370 = vpop.f32.mrf.mxu0
        %v1371 = vadd.f32 %v1210, %v1370
        %v1372 = vpop.f32.mrf.mxu0
        %1373 = vmatprep.mubr.bf16.mxu0 %v827
        %1374 = vmatmul.mubr.bf16.gmra.mxu0 %v826
        %v1375 = vpop.f32.mrf.mxu0
        %v1376 = vadd.f32 %v1215, %v1375
        %v1377 = vpop.f32.mrf.mxu0
        %v1378 = vpop.f32.mrf.mxu0
        %v1379 = vadd.f32 %v1218, %v1378
        %v1380 = vpop.f32.mrf.mxu0
        %1381 = vmatprep.mubr.bf16.mxu0 %v831
        %1382 = vmatmul.mubr.bf16.gmra.mxu0 %v830
        %v1383 = vpop.f32.mrf.mxu0
        %v1384 = vadd.f32 %v1223, %v1383
        %v1385 = vpop.f32.mrf.mxu0
        %v1386 = vpop.f32.mrf.mxu0
        %v1387 = vadd.f32 %v1226, %v1386
        %v1388 = vpop.f32.mrf.mxu0
        %1389 = vmatprep.mubr.bf16.mxu0 %v835
        %1390 = vmatmul.mubr.bf16.gmra.mxu0 %v834
        %v1391 = vpop.f32.mrf.mxu0
        %v1392 = vadd.f32 %v1231, %v1391
        %v1393 = vpop.f32.mrf.mxu0
        %v1394 = vpop.f32.mrf.mxu0
        %v1395 = vadd.f32 %v1234, %v1394
        %v1396 = vpop.f32.mrf.mxu0
        %1397 = vmatprep.mubr.bf16.mxu0 %v839
        %1398 = vmatmul.mubr.bf16.gmra.mxu0 %v838
        %v1399 = vpop.f32.mrf.mxu0
        %v1400 = vadd.f32 %v1239, %v1399
        %v1401 = vpop.f32.mrf.mxu0
        %v1402 = vpop.f32.mrf.mxu0
        %v1403 = vadd.f32 %v1242, %v1402
        %v1404 = vpop.f32.mrf.mxu0
        %1405 = vmatprep.mubr.bf16.mxu0 %v843
        %1406 = vmatmul.mubr.bf16.gmra.mxu0 %v842
        %v1407 = vpop.f32.mrf.mxu0
        %v1408 = vadd.f32 %v1247, %v1407
        %v1409 = vpop.f32.mrf.mxu0
        %v1410 = vpop.f32.mrf.mxu0
        %v1411 = vadd.f32 %v1250, %v1410
        %v1412 = vpop.f32.mrf.mxu0
        %1413 = vmatprep.mubr.bf16.mxu0 %v847
        %1414 = vmatmul.mubr.bf16.gmra.mxu0 %v846
        %v1415 = vpop.f32.mrf.mxu0
        %v1416 = vadd.f32 %v1255, %v1415
        %v1417 = vpop.f32.mrf.mxu0
        %v1418 = vpop.f32.mrf.mxu0
        %v1419 = vadd.f32 %v1258, %v1418
        %v1420 = vpop.f32.mrf.mxu0
        %1421 = vmatprep.mubr.bf16.mxu0 %v851
        %1422 = vmatmul.mubr.bf16.gmra.mxu0 %v850
        %v1423 = vpop.f32.mrf.mxu0
        %v1424 = vadd.f32 %v1263, %v1423
        %v1425 = vpop.f32.mrf.mxu0
        %v1426 = vpop.f32.mrf.mxu0
        %v1427 = vadd.f32 %v1266, %v1426
        %v1428 = vpop.f32.mrf.mxu0
        %1429 = vdwg.mxu0
        %v1430 = vadd.f32 %v436, %v1304
        %v1431 = vadd.f32 %v437, %v1307
        %v1432 = vadd.f32 %v438, %v1312
        %v1433 = vadd.f32 %v439, %v1315
        %v1434 = vadd.f32 %v440, %v1320
        %v1435 = vadd.f32 %v441, %v1323
        %v1436 = vadd.f32 %v442, %v1328
        %v1437 = vadd.f32 %v443, %v1331
        %v1438 = vadd.f32 %v444, %v1336
        %v1439 = vadd.f32 %v445, %v1339
        %v1440 = vadd.f32 %v446, %v1344
        %v1441 = vadd.f32 %v447, %v1347
        %v1442 = vadd.f32 %v448, %v1352
        %v1443 = vadd.f32 %v449, %v1355
        %v1444 = vadd.f32 %v450, %v1360
        %v1445 = vadd.f32 %v451, %v1363
        %v1446 = vadd.f32 %v452, %v1368
        %v1447 = vadd.f32 %v453, %v1371
        %v1448 = vadd.f32 %v454, %v1376
        %v1449 = vadd.f32 %v455, %v1379
        %v1450 = vadd.f32 %v456, %v1384
        %v1451 = vadd.f32 %v457, %v1387
        %v1452 = vadd.f32 %v458, %v1392
        %v1453 = vadd.f32 %v459, %v1395
        %v1454 = vadd.f32 %v460, %v1400
        %v1455 = vadd.f32 %v461, %v1403
        %v1456 = vadd.f32 %v462, %v1408
        %v1457 = vadd.f32 %v463, %v1411
        %v1458 = vadd.f32 %v464, %v1416
        %v1459 = vadd.f32 %v465, %v1419
        %v1460 = vadd.f32 %v466, %v1424
        %v1461 = vadd.f32 %v467, %v1427
        %1462 = vst [vmem:[#allocation2] sm:$0xff] %v1430
        %1463 = vst [vmem:[#allocation2 + $0x8] sm:$0xff] %v1431
        %1464 = vst [vmem:[#allocation2 + $0x10] sm:$0xff] %v1432
        %1465 = vst [vmem:[#allocation2 + $0x18] sm:$0xff] %v1433
        %1466 = vst [vmem:[#allocation2 + $0x20] sm:$0xff] %v1434
        %1467 = vst [vmem:[#allocation2 + $0x28] sm:$0xff] %v1435
        %1468 = vst [vmem:[#allocation2 + $0x30] sm:$0xff] %v1436
        %1469 = vst [vmem:[#allocation2 + $0x38] sm:$0xff] %v1437
        %1470 = vst [vmem:[#allocation2 + $0x40] sm:$0xff] %v1438
        %1471 = vst [vmem:[#allocation2 + $0x48] sm:$0xff] %v1439
        %1472 = vst [vmem:[#allocation2 + $0x50] sm:$0xff] %v1440
        %1473 = vst [vmem:[#allocation2 + $0x58] sm:$0xff] %v1441
        %1474 = vst [vmem:[#allocation2 + $0x60] sm:$0xff] %v1442
        %1475 = vst [vmem:[#allocation2 + $0x68] sm:$0xff] %v1443
        %1476 = vst [vmem:[#allocation2 + $0x70] sm:$0xff] %v1444
        %1477 = vst [vmem:[#allocation2 + $0x78] sm:$0xff] %v1445
        %1478 = vst [vmem:[#allocation2 + $0x80] sm:$0xff] %v1446
        %1479 = vst [vmem:[#allocation2 + $0x88] sm:$0xff] %v1447
        %1480 = vst [vmem:[#allocation2 + $0x90] sm:$0xff] %v1448
        %1481 = vst [vmem:[#allocation2 + $0x98] sm:$0xff] %v1449
        %1482 = vst [vmem:[#allocation2 + $0xa0] sm:$0xff] %v1450
        %1483 = vst [vmem:[#allocation2 + $0xa8] sm:$0xff] %v1451
        %1484 = vst [vmem:[#allocation2 + $0xb0] sm:$0xff] %v1452
        %1485 = vst [vmem:[#allocation2 + $0xb8] sm:$0xff] %v1453
        %1486 = vst [vmem:[#allocation2 + $0xc0] sm:$0xff] %v1454
        %1487 = vst [vmem:[#allocation2 + $0xc8] sm:$0xff] %v1455
        %1488 = vst [vmem:[#allocation2 + $0xd0] sm:$0xff] %v1456
        %1489 = vst [vmem:[#allocation2 + $0xd8] sm:$0xff] %v1457
        %1490 = vst [vmem:[#allocation2 + $0xe0] sm:$0xff] %v1458
        %1491 = vst [vmem:[#allocation2 + $0xe8] sm:$0xff] %v1459
        %1492 = vst [vmem:[#allocation2 + $0xf0] sm:$0xff] %v1460
        %1493 = vst [vmem:[#allocation2 + $0xf8] sm:$0xff] %v1461
        %p1494 = scmp.eq.s32.totalorder %s21, 1
        // Predicated region
        $region60: #{discriminator_forward.6} parent=50 // pred_check
          %p1495 = pneg %p1494
        $region61: #{discriminator_forward.6} parent=50 // pred_check_branch
          %1497 = sbr.rel (%p1495) target = $region63
        $region62: #{discriminator_forward.6} parent=50 // pred_region
          %v1498 = vld [vmem:[#allocation2] sm:$0xff]
          %v1499 = vld [vmem:[#allocation2 + $0x8] sm:$0xff]
          %v1500 = vld [vmem:[#allocation2 + $0x10] sm:$0xff]
          %v1501 = vld [vmem:[#allocation2 + $0x18] sm:$0xff]
          %v1502 = vld [vmem:[#allocation2 + $0x20] sm:$0xff]
          %v1503 = vld [vmem:[#allocation2 + $0x28] sm:$0xff]
          %v1504 = vld [vmem:[#allocation2 + $0x30] sm:$0xff]
          %v1505 = vld [vmem:[#allocation2 + $0x38] sm:$0xff]
          %v1506 = vld [vmem:[#allocation2 + $0x40] sm:$0xff]
          %v1507 = vld [vmem:[#allocation2 + $0x48] sm:$0xff]
          %v1508 = vld [vmem:[#allocation2 + $0x50] sm:$0xff]
          %v1509 = vld [vmem:[#allocation2 + $0x58] sm:$0xff]
          %v1510 = vld [vmem:[#allocation2 + $0x60] sm:$0xff]
          %v1511 = vld [vmem:[#allocation2 + $0x68] sm:$0xff]
          %v1512 = vld [vmem:[#allocation2 + $0x70] sm:$0xff]
          %v1513 = vld [vmem:[#allocation2 + $0x78] sm:$0xff]
          %v1514 = vld [vmem:[#allocation2 + $0x80] sm:$0xff]
          %v1515 = vld [vmem:[#allocation2 + $0x88] sm:$0xff]
          %v1516 = vld [vmem:[#allocation2 + $0x90] sm:$0xff]
          %v1517 = vld [vmem:[#allocation2 + $0x98] sm:$0xff]
          %v1518 = vld [vmem:[#allocation2 + $0xa0] sm:$0xff]
          %v1519 = vld [vmem:[#allocation2 + $0xa8] sm:$0xff]
          %v1520 = vld [vmem:[#allocation2 + $0xb0] sm:$0xff]
          %v1521 = vld [vmem:[#allocation2 + $0xb8] sm:$0xff]
          %v1522 = vld [vmem:[#allocation2 + $0xc0] sm:$0xff]
          %v1523 = vld [vmem:[#allocation2 + $0xc8] sm:$0xff]
          %v1524 = vld [vmem:[#allocation2 + $0xd0] sm:$0xff]
          %v1525 = vld [vmem:[#allocation2 + $0xd8] sm:$0xff]
          %v1526 = vld [vmem:[#allocation2 + $0xe0] sm:$0xff]
          %v1527 = vld [vmem:[#allocation2 + $0xe8] sm:$0xff]
          %v1528 = vld [vmem:[#allocation2 + $0xf0] sm:$0xff]
          %v1529 = vld [vmem:[#allocation2 + $0xf8] sm:$0xff]
          %v1530 = vld [vmem:[%s389] sm:$0x1]
          %v1532 = vlaneseq
          %v1533 = vshrl.u32 %v1532, 7
          %v1534 = vsub.s32 0, %v1533
          %v1535 = vrot.slane %v1530, %v1534
          %v1537 = vadd.f32 %v1498, %v1535
          %v1538 = vadd.f32 %v1499, %v1535
          %v1539 = vadd.f32 %v1500, %v1535
          %v1540 = vadd.f32 %v1501, %v1535
          %v1541 = vadd.f32 %v1502, %v1535
          %v1542 = vadd.f32 %v1503, %v1535
          %v1543 = vadd.f32 %v1504, %v1535
          %v1544 = vadd.f32 %v1505, %v1535
          %v1545 = vadd.f32 %v1506, %v1535
          %v1546 = vadd.f32 %v1507, %v1535
          %v1547 = vadd.f32 %v1508, %v1535
          %v1548 = vadd.f32 %v1509, %v1535
          %v1549 = vadd.f32 %v1510, %v1535
          %v1550 = vadd.f32 %v1511, %v1535
          %v1551 = vadd.f32 %v1512, %v1535
          %v1552 = vadd.f32 %v1513, %v1535
          %v1553 = vadd.f32 %v1514, %v1535
          %v1554 = vadd.f32 %v1515, %v1535
          %v1555 = vadd.f32 %v1516, %v1535
          %v1556 = vadd.f32 %v1517, %v1535
          %v1557 = vadd.f32 %v1518, %v1535
          %v1558 = vadd.f32 %v1519, %v1535
          %v1559 = vadd.f32 %v1520, %v1535
          %v1560 = vadd.f32 %v1521, %v1535
          %v1561 = vadd.f32 %v1522, %v1535
          %v1562 = vadd.f32 %v1523, %v1535
          %v1563 = vadd.f32 %v1524, %v1535
          %v1564 = vadd.f32 %v1525, %v1535
          %v1565 = vadd.f32 %v1526, %v1535
          %v1566 = vadd.f32 %v1527, %v1535
          %v1567 = vadd.f32 %v1528, %v1535
          %v1568 = vadd.f32 %v1529, %v1535
          %v1569 = vadd.f32 %v1537, %v1538
          %v1570 = vadd.f32 %v1569, %v1539
          %v1571 = vadd.f32 %v1570, %v1540
          %v1572 = vadd.f32 %v1571, %v1541
          %v1573 = vadd.f32 %v1572, %v1542
          %v1574 = vadd.f32 %v1573, %v1543
          %v1575 = vadd.f32 %v1574, %v1544
          %v1576 = vadd.f32 %v1575, %v1545
          %v1577 = vadd.f32 %v1576, %v1546
          %v1578 = vadd.f32 %v1577, %v1547
          %v1579 = vadd.f32 %v1578, %v1548
          %v1580 = vadd.f32 %v1579, %v1549
          %v1581 = vadd.f32 %v1580, %v1550
          %v1582 = vadd.f32 %v1581, %v1551
          %v1583 = vadd.f32 %v1582, %v1552
          %v1584 = vadd.f32 %v1583, %v1553
          %v1585 = vadd.f32 %v1584, %v1554
          %v1586 = vadd.f32 %v1585, %v1555
          %v1587 = vadd.f32 %v1586, %v1556
          %v1588 = vadd.f32 %v1587, %v1557
          %v1589 = vadd.f32 %v1588, %v1558
          %v1590 = vadd.f32 %v1589, %v1559
          %v1591 = vadd.f32 %v1590, %v1560
          %v1592 = vadd.f32 %v1591, %v1561
          %v1593 = vadd.f32 %v1592, %v1562
          %v1594 = vadd.f32 %v1593, %v1563
          %v1595 = vadd.f32 %v1594, %v1564
          %v1596 = vadd.f32 %v1595, %v1565
          %v1597 = vadd.f32 %v1596, %v1566
          %v1598 = vadd.f32 %v1597, %v1567
          %v1599 = vadd.f32 %v1598, %v1568
          %v1600 = vrot.slane %v1599, 4
          %v1601 = vadd.f32 %v1599, %v1600
          %v1602 = vrot.slane %v1601, 2
          %v1603 = vadd.f32 %v1601, %v1602
          %v1604 = vrot.slane %v1603, 1
          %v1605 = vadd.f32 %v1603, %v1604
          %v1606 = vrcp.pop 256.0
          %v1607 = vmul.f32 %v1605, %v1606
          %v1608 = vsub.f32 %v1537, %v1607
          %v1609 = vsub.f32 %v1538, %v1607
          %v1610 = vsub.f32 %v1539, %v1607
          %v1611 = vsub.f32 %v1540, %v1607
          %v1612 = vsub.f32 %v1541, %v1607
          %v1613 = vsub.f32 %v1542, %v1607
          %v1614 = vsub.f32 %v1543, %v1607
          %v1615 = vsub.f32 %v1544, %v1607
          %v1616 = vsub.f32 %v1545, %v1607
          %v1617 = vsub.f32 %v1546, %v1607
          %v1618 = vsub.f32 %v1547, %v1607
          %v1619 = vsub.f32 %v1548, %v1607
          %v1620 = vsub.f32 %v1549, %v1607
          %v1621 = vsub.f32 %v1550, %v1607
          %v1622 = vsub.f32 %v1551, %v1607
          %v1623 = vsub.f32 %v1552, %v1607
          %v1624 = vsub.f32 %v1553, %v1607
          %v1625 = vsub.f32 %v1554, %v1607
          %v1626 = vsub.f32 %v1555, %v1607
          %v1627 = vsub.f32 %v1556, %v1607
          %v1628 = vsub.f32 %v1557, %v1607
          %v1629 = vsub.f32 %v1558, %v1607
          %v1630 = vsub.f32 %v1559, %v1607
          %v1631 = vsub.f32 %v1560, %v1607
          %v1632 = vsub.f32 %v1561, %v1607
          %v1633 = vsub.f32 %v1562, %v1607
          %v1634 = vsub.f32 %v1563, %v1607
          %v1635 = vsub.f32 %v1564, %v1607
          %v1636 = vsub.f32 %v1565, %v1607
          %v1637 = vsub.f32 %v1566, %v1607
          %v1638 = vsub.f32 %v1567, %v1607
          %v1639 = vsub.f32 %v1568, %v1607
          %v1640 = vmul.f32 %v1608, %v1608
          %v1641 = vmul.f32 %v1609, %v1609
          %v1642 = vmul.f32 %v1610, %v1610
          %v1643 = vmul.f32 %v1611, %v1611
          %v1644 = vmul.f32 %v1612, %v1612
          %v1645 = vmul.f32 %v1613, %v1613
          %v1646 = vmul.f32 %v1614, %v1614
          %v1647 = vmul.f32 %v1615, %v1615
          %v1648 = vmul.f32 %v1616, %v1616
          %v1649 = vmul.f32 %v1617, %v1617
          %v1650 = vmul.f32 %v1618, %v1618
          %v1651 = vmul.f32 %v1619, %v1619
          %v1652 = vmul.f32 %v1620, %v1620
          %v1653 = vmul.f32 %v1621, %v1621
          %v1654 = vmul.f32 %v1622, %v1622
          %v1655 = vmul.f32 %v1623, %v1623
          %v1656 = vmul.f32 %v1624, %v1624
          %v1657 = vmul.f32 %v1625, %v1625
          %v1658 = vmul.f32 %v1626, %v1626
          %v1659 = vmul.f32 %v1627, %v1627
          %v1660 = vmul.f32 %v1628, %v1628
          %v1661 = vmul.f32 %v1629, %v1629
          %v1662 = vmul.f32 %v1630, %v1630
          %v1663 = vmul.f32 %v1631, %v1631
          %v1664 = vmul.f32 %v1632, %v1632
          %v1665 = vmul.f32 %v1633, %v1633
          %v1666 = vmul.f32 %v1634, %v1634
          %v1667 = vmul.f32 %v1635, %v1635
          %v1668 = vmul.f32 %v1636, %v1636
          %v1669 = vmul.f32 %v1637, %v1637
          %v1670 = vmul.f32 %v1638, %v1638
          %v1671 = vmul.f32 %v1639, %v1639
          %v1672 = vadd.f32 %v1640, %v1641
          %v1673 = vadd.f32 %v1672, %v1642
          %v1674 = vadd.f32 %v1673, %v1643
          %v1675 = vadd.f32 %v1674, %v1644
          %v1676 = vadd.f32 %v1675, %v1645
          %v1677 = vadd.f32 %v1676, %v1646
          %v1678 = vadd.f32 %v1677, %v1647
          %v1679 = vadd.f32 %v1678, %v1648
          %v1680 = vadd.f32 %v1679, %v1649
          %v1681 = vadd.f32 %v1680, %v1650
          %v1682 = vadd.f32 %v1681, %v1651
          %v1683 = vadd.f32 %v1682, %v1652
          %v1684 = vadd.f32 %v1683, %v1653
          %v1685 = vadd.f32 %v1684, %v1654
          %v1686 = vadd.f32 %v1685, %v1655
          %v1687 = vadd.f32 %v1686, %v1656
          %v1688 = vadd.f32 %v1687, %v1657
          %v1689 = vadd.f32 %v1688, %v1658
          %v1690 = vadd.f32 %v1689, %v1659
          %v1691 = vadd.f32 %v1690, %v1660
          %v1692 = vadd.f32 %v1691, %v1661
          %v1693 = vadd.f32 %v1692, %v1662
          %v1694 = vadd.f32 %v1693, %v1663
          %v1695 = vadd.f32 %v1694, %v1664
          %v1696 = vadd.f32 %v1695, %v1665
          %v1697 = vadd.f32 %v1696, %v1666
          %v1698 = vadd.f32 %v1697, %v1667
          %v1699 = vadd.f32 %v1698, %v1668
          %v1700 = vadd.f32 %v1699, %v1669
          %v1701 = vadd.f32 %v1700, %v1670
          %v1702 = vadd.f32 %v1701, %v1671
          %v1703 = vrot.slane %v1702, 4
          %v1704 = vadd.f32 %v1702, %v1703
          %v1705 = vrot.slane %v1704, 2
          %v1706 = vadd.f32 %v1704, %v1705
          %v1707 = vrot.slane %v1706, 1
          %v1708 = vadd.f32 %v1706, %v1707
          %v1709 = vmul.f32 %v1708, %v1606
          %v1710 = vadd.f32 %v1709, 1e-05
          %v1711 = vrsqrt.pop %v1710
          %v1712 = vmul.f32 %v1608, %v1711
          %v1713 = vmul.f32 %v1609, %v1711
          %v1714 = vmul.f32 %v1610, %v1711
          %v1715 = vmul.f32 %v1611, %v1711
          %v1716 = vmul.f32 %v1612, %v1711
          %v1717 = vmul.f32 %v1613, %v1711
          %v1718 = vmul.f32 %v1614, %v1711
          %v1719 = vmul.f32 %v1615, %v1711
          %v1720 = vmul.f32 %v1616, %v1711
          %v1721 = vmul.f32 %v1617, %v1711
          %v1722 = vmul.f32 %v1618, %v1711
          %v1723 = vmul.f32 %v1619, %v1711
          %v1724 = vmul.f32 %v1620, %v1711
          %v1725 = vmul.f32 %v1621, %v1711
          %v1726 = vmul.f32 %v1622, %v1711
          %v1727 = vmul.f32 %v1623, %v1711
          %v1728 = vmul.f32 %v1624, %v1711
          %v1729 = vmul.f32 %v1625, %v1711
          %v1730 = vmul.f32 %v1626, %v1711
          %v1731 = vmul.f32 %v1627, %v1711
          %v1732 = vmul.f32 %v1628, %v1711
          %v1733 = vmul.f32 %v1629, %v1711
          %v1734 = vmul.f32 %v1630, %v1711
          %v1735 = vmul.f32 %v1631, %v1711
          %v1736 = vmul.f32 %v1632, %v1711
          %v1737 = vmul.f32 %v1633, %v1711
          %v1738 = vmul.f32 %v1634, %v1711
          %v1739 = vmul.f32 %v1635, %v1711
          %v1740 = vmul.f32 %v1636, %v1711
          %v1741 = vmul.f32 %v1637, %v1711
          %v1742 = vmul.f32 %v1638, %v1711
          %v1743 = vmul.f32 %v1639, %v1711
          %vm1744 = vcmp.gt.f32.partialorder %v1712, 0.0
          %vm1745 = vcmp.gt.f32.partialorder %v1713, 0.0
          %vm1746 = vcmp.gt.f32.partialorder %v1714, 0.0
          %vm1747 = vcmp.gt.f32.partialorder %v1715, 0.0
          %vm1748 = vcmp.gt.f32.partialorder %v1716, 0.0
          %vm1749 = vcmp.gt.f32.partialorder %v1717, 0.0
          %vm1750 = vcmp.gt.f32.partialorder %v1718, 0.0
          %vm1751 = vcmp.gt.f32.partialorder %v1719, 0.0
          %vm1752 = vcmp.gt.f32.partialorder %v1720, 0.0
          %vm1753 = vcmp.gt.f32.partialorder %v1721, 0.0
          %vm1754 = vcmp.gt.f32.partialorder %v1722, 0.0
          %vm1755 = vcmp.gt.f32.partialorder %v1723, 0.0
          %vm1756 = vcmp.gt.f32.partialorder %v1724, 0.0
          %vm1757 = vcmp.gt.f32.partialorder %v1725, 0.0
          %vm1758 = vcmp.gt.f32.partialorder %v1726, 0.0
          %vm1759 = vcmp.gt.f32.partialorder %v1727, 0.0
          %vm1760 = vcmp.gt.f32.partialorder %v1728, 0.0
          %vm1761 = vcmp.gt.f32.partialorder %v1729, 0.0
          %vm1762 = vcmp.gt.f32.partialorder %v1730, 0.0
          %vm1763 = vcmp.gt.f32.partialorder %v1731, 0.0
          %vm1764 = vcmp.gt.f32.partialorder %v1732, 0.0
          %vm1765 = vcmp.gt.f32.partialorder %v1733, 0.0
          %vm1766 = vcmp.gt.f32.partialorder %v1734, 0.0
          %vm1767 = vcmp.gt.f32.partialorder %v1735, 0.0
          %vm1768 = vcmp.gt.f32.partialorder %v1736, 0.0
          %vm1769 = vcmp.gt.f32.partialorder %v1737, 0.0
          %vm1770 = vcmp.gt.f32.partialorder %v1738, 0.0
          %vm1771 = vcmp.gt.f32.partialorder %v1739, 0.0
          %vm1772 = vcmp.gt.f32.partialorder %v1740, 0.0
          %vm1773 = vcmp.gt.f32.partialorder %v1741, 0.0
          %vm1774 = vcmp.gt.f32.partialorder %v1742, 0.0
          %vm1775 = vcmp.gt.f32.partialorder %v1743, 0.0
          %v1776 = vmul.f32 %v1712, 0.2
          %v1777 = vmul.f32 %v1713, 0.2
          %v1778 = vmul.f32 %v1714, 0.2
          %v1779 = vmul.f32 %v1715, 0.2
          %v1780 = vmul.f32 %v1716, 0.2
          %v1781 = vmul.f32 %v1717, 0.2
          %v1782 = vmul.f32 %v1718, 0.2
          %v1783 = vmul.f32 %v1719, 0.2
          %v1784 = vmul.f32 %v1720, 0.2
          %v1785 = vmul.f32 %v1721, 0.2
          %v1786 = vmul.f32 %v1722, 0.2
          %v1787 = vmul.f32 %v1723, 0.2
          %v1788 = vmul.f32 %v1724, 0.2
          %v1789 = vmul.f32 %v1725, 0.2
          %v1790 = vmul.f32 %v1726, 0.2
          %v1791 = vmul.f32 %v1727, 0.2
          %v1792 = vmul.f32 %v1728, 0.2
          %v1793 = vmul.f32 %v1729, 0.2
          %v1794 = vmul.f32 %v1730, 0.2
          %v1795 = vmul.f32 %v1731, 0.2
          %v1796 = vmul.f32 %v1732, 0.2
          %v1797 = vmul.f32 %v1733, 0.2
          %v1798 = vmul.f32 %v1734, 0.2
          %v1799 = vmul.f32 %v1735, 0.2
          %v1800 = vmul.f32 %v1736, 0.2
          %v1801 = vmul.f32 %v1737, 0.2
          %v1802 = vmul.f32 %v1738, 0.2
          %v1803 = vmul.f32 %v1739, 0.2
          %v1804 = vmul.f32 %v1740, 0.2
          %v1805 = vmul.f32 %v1741, 0.2
          %v1806 = vmul.f32 %v1742, 0.2
          %v1807 = vmul.f32 %v1743, 0.2
          %v1808 = vsel %vm1744, %v1712, %v1776
          %v1809 = vsel %vm1745, %v1713, %v1777
          %v1810 = vsel %vm1746, %v1714, %v1778
          %v1811 = vsel %vm1747, %v1715, %v1779
          %v1812 = vsel %vm1748, %v1716, %v1780
          %v1813 = vsel %vm1749, %v1717, %v1781
          %v1814 = vsel %vm1750, %v1718, %v1782
          %v1815 = vsel %vm1751, %v1719, %v1783
          %v1816 = vsel %vm1752, %v1720, %v1784
          %v1817 = vsel %vm1753, %v1721, %v1785
          %v1818 = vsel %vm1754, %v1722, %v1786
          %v1819 = vsel %vm1755, %v1723, %v1787
          %v1820 = vsel %vm1756, %v1724, %v1788
          %v1821 = vsel %vm1757, %v1725, %v1789
          %v1822 = vsel %vm1758, %v1726, %v1790
          %v1823 = vsel %vm1759, %v1727, %v1791
          %v1824 = vsel %vm1760, %v1728, %v1792
          %v1825 = vsel %vm1761, %v1729, %v1793
          %v1826 = vsel %vm1762, %v1730, %v1794
          %v1827 = vsel %vm1763, %v1731, %v1795
          %v1828 = vsel %vm1764, %v1732, %v1796
          %v1829 = vsel %vm1765, %v1733, %v1797
          %v1830 = vsel %vm1766, %v1734, %v1798
          %v1831 = vsel %vm1767, %v1735, %v1799
          %v1832 = vsel %vm1768, %v1736, %v1800
          %v1833 = vsel %vm1769, %v1737, %v1801
          %v1834 = vsel %vm1770, %v1738, %v1802
          %v1835 = vsel %vm1771, %v1739, %v1803
          %v1836 = vsel %vm1772, %v1740, %v1804
          %v1837 = vsel %vm1773, %v1741, %v1805
          %v1838 = vsel %vm1774, %v1742, %v1806
          %v1839 = vsel %vm1775, %v1743, %v1807
          %v1840 = vpack.c.bf16 %v1809, %v1808
          %v1841 = vpack.c.bf16 %v1811, %v1810
          %v1842 = vpack.c.bf16 %v1813, %v1812
          %v1843 = vpack.c.bf16 %v1815, %v1814
          %v1844 = vpack.c.bf16 %v1817, %v1816
          %v1845 = vpack.c.bf16 %v1819, %v1818
          %v1846 = vpack.c.bf16 %v1821, %v1820
          %v1847 = vpack.c.bf16 %v1823, %v1822
          %v1848 = vpack.c.bf16 %v1825, %v1824
          %v1849 = vpack.c.bf16 %v1827, %v1826
          %v1850 = vpack.c.bf16 %v1829, %v1828
          %v1851 = vpack.c.bf16 %v1831, %v1830
          %v1852 = vpack.c.bf16 %v1833, %v1832
          %v1853 = vpack.c.bf16 %v1835, %v1834
          %v1854 = vpack.c.bf16 %v1837, %v1836
          %v1855 = vpack.c.bf16 %v1839, %v1838
          %v1872 = vunpack.c.l.b16 %v1840
          %v1873 = vunpack.c.h.b16 %v1840
          %v1874 = vunpack.c.l.b16 %v1841
          %v1875 = vunpack.c.h.b16 %v1841
          %v1876 = vunpack.c.l.b16 %v1842
          %v1877 = vunpack.c.h.b16 %v1842
          %v1878 = vunpack.c.l.b16 %v1843
          %v1879 = vunpack.c.h.b16 %v1843
          %v1880 = vunpack.c.l.b16 %v1844
          %v1881 = vunpack.c.h.b16 %v1844
          %v1882 = vunpack.c.l.b16 %v1845
          %v1883 = vunpack.c.h.b16 %v1845
          %v1884 = vunpack.c.l.b16 %v1846
          %v1885 = vunpack.c.h.b16 %v1846
          %v1886 = vunpack.c.l.b16 %v1847
          %v1887 = vunpack.c.h.b16 %v1847
          %v1888 = vunpack.c.l.b16 %v1848
          %v1889 = vunpack.c.h.b16 %v1848
          %v1890 = vunpack.c.l.b16 %v1849
          %v1891 = vunpack.c.h.b16 %v1849
          %v1892 = vunpack.c.l.b16 %v1850
          %v1893 = vunpack.c.h.b16 %v1850
          %v1894 = vunpack.c.l.b16 %v1851
          %v1895 = vunpack.c.h.b16 %v1851
          %v1896 = vunpack.c.l.b16 %v1852
          %v1897 = vunpack.c.h.b16 %v1852
          %v1898 = vunpack.c.l.b16 %v1853
          %v1899 = vunpack.c.h.b16 %v1853
          %v1900 = vunpack.c.l.b16 %v1854
          %v1901 = vunpack.c.h.b16 %v1854
          %v1902 = vunpack.c.l.b16 %v1855
          %v1903 = vunpack.c.h.b16 %v1855
          %v1904 = vpack.c.b16 %v1872, %v1872
          %v1905 = vpack.c.b16 %v1873, %v1873
          %v1906 = vpack.c.b16 %v1874, %v1874
          %v1907 = vpack.c.b16 %v1875, %v1875
          %v1908 = vpack.c.b16 %v1876, %v1876
          %v1909 = vpack.c.b16 %v1877, %v1877
          %v1910 = vpack.c.b16 %v1878, %v1878
          %v1911 = vpack.c.b16 %v1879, %v1879
          %v1912 = vpack.c.b16 %v1880, %v1880
          %v1913 = vpack.c.b16 %v1881, %v1881
          %v1914 = vpack.c.b16 %v1882, %v1882
          %v1915 = vpack.c.b16 %v1883, %v1883
          %v1916 = vpack.c.b16 %v1884, %v1884
          %v1917 = vpack.c.b16 %v1885, %v1885
          %v1918 = vpack.c.b16 %v1886, %v1886
          %v1919 = vpack.c.b16 %v1887, %v1887
          %v1920 = vpack.c.b16 %v1888, %v1888
          %v1921 = vpack.c.b16 %v1889, %v1889
          %v1922 = vpack.c.b16 %v1890, %v1890
          %v1923 = vpack.c.b16 %v1891, %v1891
          %v1924 = vpack.c.b16 %v1892, %v1892
          %v1925 = vpack.c.b16 %v1893, %v1893
          %v1926 = vpack.c.b16 %v1894, %v1894
          %v1927 = vpack.c.b16 %v1895, %v1895
          %v1928 = vpack.c.b16 %v1896, %v1896
          %v1929 = vpack.c.b16 %v1897, %v1897
          %v1930 = vpack.c.b16 %v1898, %v1898
          %v1931 = vpack.c.b16 %v1899, %v1899
          %v1932 = vpack.c.b16 %v1900, %v1900
          %v1933 = vpack.c.b16 %v1901, %v1901
          %v1934 = vpack.c.b16 %v1902, %v1902
          %v1935 = vpack.c.b16 %v1903, %v1903
          %1968 = vst [vmem:[%s397] sm:$0xf] %v1904
          %1969 = vst [vmem:[%s397 + $0x4] sm:$0xf] %v1905
          %1970 = vst [vmem:[%s397 + $0x8] sm:$0xf] %v1906
          %1971 = vst [vmem:[%s397 + $0xc] sm:$0xf] %v1907
          %1972 = vst [vmem:[%s397 + $0x10] sm:$0xf] %v1908
          %1973 = vst [vmem:[%s397 + $0x14] sm:$0xf] %v1909
          %1974 = vst [vmem:[%s397 + $0x18] sm:$0xf] %v1910
          %1975 = vst [vmem:[%s397 + $0x1c] sm:$0xf] %v1911
          %1976 = vst [vmem:[%s397 + $0x20] sm:$0xf] %v1912
          %1977 = vst [vmem:[%s397 + $0x24] sm:$0xf] %v1913
          %1978 = vst [vmem:[%s397 + $0x28] sm:$0xf] %v1914
          %1979 = vst [vmem:[%s397 + $0x2c] sm:$0xf] %v1915
          %1980 = vst [vmem:[%s397 + $0x30] sm:$0xf] %v1916
          %1981 = vst [vmem:[%s397 + $0x34] sm:$0xf] %v1917
          %1982 = vst [vmem:[%s397 + $0x38] sm:$0xf] %v1918
          %1983 = vst [vmem:[%s397 + $0x3c] sm:$0xf] %v1919
          %1984 = vst [vmem:[%s397 + $0x40] sm:$0xf] %v1920
          %1985 = vst [vmem:[%s397 + $0x44] sm:$0xf] %v1921
          %1986 = vst [vmem:[%s397 + $0x48] sm:$0xf] %v1922
          %1987 = vst [vmem:[%s397 + $0x4c] sm:$0xf] %v1923
          %1988 = vst [vmem:[%s397 + $0x50] sm:$0xf] %v1924
          %1989 = vst [vmem:[%s397 + $0x54] sm:$0xf] %v1925
          %1990 = vst [vmem:[%s397 + $0x58] sm:$0xf] %v1926
          %1991 = vst [vmem:[%s397 + $0x5c] sm:$0xf] %v1927
          %1992 = vst [vmem:[%s397 + $0x60] sm:$0xf] %v1928
          %1993 = vst [vmem:[%s397 + $0x64] sm:$0xf] %v1929
          %1994 = vst [vmem:[%s397 + $0x68] sm:$0xf] %v1930
          %1995 = vst [vmem:[%s397 + $0x6c] sm:$0xf] %v1931
          %1996 = vst [vmem:[%s397 + $0x70] sm:$0xf] %v1932
          %1997 = vst [vmem:[%s397 + $0x74] sm:$0xf] %v1933
          %1998 = vst [vmem:[%s397 + $0x78] sm:$0xf] %v1934
          %1999 = vst [vmem:[%s397 + $0x7c] sm:$0xf] %v1935
        $region63: #{discriminator_forward.6} parent=50 // pred_fallthru
          _
        %s2000 = smul.u32 32, %s19
        %p2001 = scmp.lt.s32.totalorder %s2000, 63
        %s2002 = scalar_select %p2001, %s2000, 63
        %p2003 = scmp.lt.s32.totalorder %s20, 0
        %s2004 = scalar_select %p2003, %s20, 0
        %s2005 = sadd.s32 %s2004, %s2002
        %s2006 = smul.addr %s2005, 4
        %s2007 = scalar_lea.vmem %s3, %s2006
        // Predicated region
        $region64: #{discriminator_forward.6} parent=50 // pred_check
          %p2008 = pneg %p135
        $region65: #{discriminator_forward.6} parent=50 // pred_check_branch
          %2010 = sbr.rel (%p2008) target = $region67
        $region66: #{discriminator_forward.6} parent=50 // pred_region
          %s2011 = smul.u32 32, %s19
        $region67: #{discriminator_forward.6} parent=50 // pred_fallthru
          _
      $region51: #{discriminator_forward.6} parent=5 // pred_fallthru
        _
      %p2012 = scmp.le.s32.totalorder 2, %s9
      // Predicated region
      $region68: #{discriminator_forward.6} parent=5 // pred_check
        %p2013 = pneg %p2012
      $region69: #{discriminator_forward.6} parent=5 // pred_check_branch
        %2015 = sbr.rel (%p2013) target = $region71
      $region70: #{discriminator_forward.6} parent=5 // pred_region
        %s2016 = ssub.s32 %s9, 2
        // Predicated region
        $region72: #{discriminator_forward.6} parent=70 // pred_check
          %p2017 = pneg %p141
        $region73: #{discriminator_forward.6} parent=70 // pred_check_branch
          %2019 = sbr.rel (%p2017) target = $region75
        $region74: #{discriminator_forward.6} parent=70 // pred_region
          %s2020 = smul.u32 32, %s22
          %p2021 = scmp.lt.s32.totalorder %s2020, 63
          %s2022 = scalar_select %p2021, %s2020, 63
          %p2023 = scmp.lt.s32.totalorder %s23, 0
          %s2024 = scalar_select %p2023, %s23, 0
          %s2025 = sadd.s32 %s2024, %s2022
          %s2026 = smul.addr %s2025, 4
          %s2027 = scalar_lea.vmem %s3, %s2026
        $region75: #{discriminator_forward.6} parent=70 // pred_fallthru
          _
      $region71: #{discriminator_forward.6} parent=5 // pred_fallthru
        _
    $region6: #{discriminator_forward.6} parent=1 // loop_footer
      %s13 = sadd.s32 1, %s9
    $region7: #{discriminator_forward.6} parent=1 // loop_footer_branch
      %8 = sbr.rel target = $region3
    $region8: #{discriminator_forward.6} parent=1 // loop_exit
      _

// kernel: discriminator_forward.7
$region0: #{discriminator_forward.7}
  #allocation0 [shape = 'u32[]', space=smem, size = 0x4, offset = 0x4, fixed_abs, tag = 'smem constant byte address 0x4 - core index']
  #allocation1 [shape = 'u32[144,128]{1,0:T(1,128)}', space=vmem, size = 0x12000, scoped, tag = 'internal scratch']
  #allocation2 [shape = 'f32[64,256]{1,0:T(8,128)}', space=vmem, size = 0x10000, scoped, tag = 'scratch operand']
  %s0 = inlined_call_operand.vmem [shape: bf16[128,2048], index: 0, kind: input, shape index: {}]
  %s1 = inlined_call_operand.vmem [shape: bf16[2048,256], index: 1, kind: input, shape index: {}]
  %s2 = inlined_call_operand.vmem [shape: f32[1,256], index: 2, kind: input, shape index: {}]
  %s3 = inlined_call_operand.vmem [shape: bf16[128,256], index: 3, kind: output, shape index: {}]
  %s4 = sld [smem:[#allocation0]]
  $region76: #{discriminator_forward.7} parent=0
    _
  %s6 = ssub.s32 1, %s4
  %s7 = scalar_select 0, %s6, %s4
  $region1: #{discriminator_forward.7} parent=0
    #allocation3 [shape = 'u8[131072]{0}', space=vmem, size = 0x20000, scoped, tag = 'input window, operand 0']
    loop: start=0, step=1, limit=10
    $region2: #{discriminator_forward.7} parent=1 // loop_pre_header
      _
    $region3: #{discriminator_forward.7} parent=1 // loop_header
      %s9 = sphi 0, %s13
      %p10 = scmp.ge.s32.totalorder %s9, 10
      %s16 = sphi 0, %s35
      %s17 = sphi 0, %s31
      %s18 = sphi 0, %s27
      %s19 = sphi 0, %s16
      %s20 = sphi 0, %s17
      %s21 = sphi 0, %s18
      %s22 = sphi 0, %s19
      %s23 = sphi 0, %s20
      %s24 = sphi 0, %s21
      %s40 = sphi 0, %s42
      %s43 = sphi 0, %s40
      %s44 = sphi 0, %s43
      %s60 = sphi 0, %s44
      %s68 = sphi 0, %s70
      %s71 = sphi 0, %s68
      %s72 = sphi 0, %s71
      %s88 = sphi 0, %s72
      %s94 = sphi 0, %s96
      %s97 = sphi 0, %s94
      %s98 = sphi 0, %s97
      %s114 = sphi 0, %s98
      %s122 = sphi 0, %s124
      %s125 = sphi 0, %s122
      %s126 = sphi 0, %s125
      %s142 = sphi 0, %s126
    $region4: #{discriminator_forward.7} parent=1 // loop_header_branch
      %12 = sbr.rel (%p10) target = $region8
    $region5: #{discriminator_forward.7} parent=1 // loop_body
      %s14 = ssub.s32 %s9, 1
      %s15 = ssub.s32 %s9, 2
      %s25 = sadd.s32 1, %s18
      %p26 = scmp.ge.s32.totalorder %s25, 4
      %s27 = scalar_select %p26, 0, %s25
      %s28 = sadd.s32 1, %s17
      %s29 = scalar_select %p26, %s28, %s17
      %p30 = scmp.ge.s32.totalorder %s29, 1
      %s31 = scalar_select %p30, 0, %s29
      %s32 = sadd.s32 1, %s16
      %s33 = scalar_select %p30, %s32, %s16
      %p34 = scmp.ge.s32.totalorder %s33, 2
      %s35 = scalar_select %p34, 0, %s33
      %s36 = ssub.s32 %s16, %s35
      %s37 = ssub.s32 %s18, %s27
      %s38 = sor.u32 %s36, %s37
      %p39 = scmp.eq.s32.totalorder %s38, 0
      %s41 = sadd.s32 %s40, 1
      %s42 = scalar_select %p39, %s40, %s41
      %p45 = pneg %p39
      %p46 = scmp.eq.s32.totalorder %s9, 7
      %p47 = por %p45, %p46
      %p48 = scmp.ne.s32.totalorder %s40, %s43
      %p49 = scmp.eq.s32.totalorder %s9, 0
      %p50 = por %p48, %p49
      %p51 = scmp.ne.s32.totalorder %s40, %s43
      %p52 = scmp.eq.s32.totalorder %s14, 7
      %p53 = por %p51, %p52
      %p54 = scmp.ne.s32.totalorder %s43, %s44
      %p55 = scmp.eq.s32.totalorder %s14, 0
      %p56 = por %p54, %p55
      %p57 = scmp.ne.s32.totalorder %s43, %s44
      %p58 = scmp.eq.s32.totalorder %s15, 7
      %p59 = por %p57, %p58
      %p61 = scmp.ne.s32.totalorder %s44, %s60
      %p62 = scmp.eq.s32.totalorder %s15, 0
      %p63 = por %p61, %p62
      %s64 = ssub.s32 %s18, %s27
      %s65 = ssub.s32 %s17, %s31
      %s66 = sor.u32 %s64, %s65
      %p67 = scmp.eq.s32.totalorder %s66, 0
      %s69 = sadd.s32 %s68, 1
      %s70 = scalar_select %p67, %s68, %s69
      %p73 = pneg %p67
      %p74 = scmp.eq.s32.totalorder %s9, 7
      %p75 = por %p73, %p74
      %p76 = scmp.ne.s32.totalorder %s68, %s71
      %p77 = scmp.eq.s32.totalorder %s9, 0
      %p78 = por %p76, %p77
      %p79 = scmp.ne.s32.totalorder %s68, %s71
      %p80 = scmp.eq.s32.totalorder %s14, 7
      %p81 = por %p79, %p80
      %p82 = scmp.ne.s32.totalorder %s71, %s72
      %p83 = scmp.eq.s32.totalorder %s14, 0
      %p84 = por %p82, %p83
      %p85 = scmp.ne.s32.totalorder %s71, %s72
      %p86 = scmp.eq.s32.totalorder %s15, 7
      %p87 = por %p85, %p86
      %p89 = scmp.ne.s32.totalorder %s72, %s88
      %p90 = scmp.eq.s32.totalorder %s15, 0
      %p91 = por %p89, %p90
      %s92 = ssub.s32 %s17, %s31
      %p93 = scmp.eq.s32.totalorder %s92, 0
      %s95 = sadd.s32 %s94, 1
      %s96 = scalar_select %p93, %s94, %s95
      %p99 = pneg %p93
      %p100 = scmp.eq.s32.totalorder %s9, 7
      %p101 = por %p99, %p100
      %p102 = scmp.ne.s32.totalorder %s94, %s97
      %p103 = scmp.eq.s32.totalorder %s9, 0
      %p104 = por %p102, %p103
      %p105 = scmp.ne.s32.totalorder %s94, %s97
      %p106 = scmp.eq.s32.totalorder %s14, 7
      %p107 = por %p105, %p106
      %p108 = scmp.ne.s32.totalorder %s97, %s98
      %p109 = scmp.eq.s32.totalorder %s14, 0
      %p110 = por %p108, %p109
      %p111 = scmp.ne.s32.totalorder %s97, %s98
      %p112 = scmp.eq.s32.totalorder %s15, 7
      %p113 = por %p111, %p112
      %p115 = scmp.ne.s32.totalorder %s98, %s114
      %p116 = scmp.eq.s32.totalorder %s15, 0
      %p117 = por %p115, %p116
      %s118 = ssub.s32 %s16, %s35
      %s119 = ssub.s32 %s17, %s31
      %s120 = sor.u32 %s118, %s119
      %p121 = scmp.eq.s32.totalorder %s120, 0
      %s123 = sadd.s32 %s122, 1
      %s124 = scalar_select %p121, %s122, %s123
      %p127 = pneg %p121
      %p128 = scmp.eq.s32.totalorder %s9, 7
      %p129 = por %p127, %p128
      %p130 = scmp.ne.s32.totalorder %s122, %s125
      %p131 = scmp.eq.s32.totalorder %s9, 0
      %p132 = por %p130, %p131
      %p133 = scmp.ne.s32.totalorder %s122, %s125
      %p134 = scmp.eq.s32.totalorder %s14, 7
      %p135 = por %p133, %p134
      %p136 = scmp.ne.s32.totalorder %s125, %s126
      %p137 = scmp.eq.s32.totalorder %s14, 0
      %p138 = por %p136, %p137
      %p139 = scmp.ne.s32.totalorder %s125, %s126
      %p140 = scmp.eq.s32.totalorder %s15, 7
      %p141 = por %p139, %p140
      %p143 = scmp.ne.s32.totalorder %s126, %s142
      %p144 = scmp.eq.s32.totalorder %s15, 0
      %p145 = por %p143, %p144
      %p146 = scmp.le.s32.totalorder 1, %s9
      %p147 = scmp.lt.s32.totalorder %s9, 9
      %p148 = pnand %p146, %p147
      %p149 = pneg %p148
      // Predicated region
      $region9: #{discriminator_forward.7} parent=5 // pred_check
        _
      $region10: #{discriminator_forward.7} parent=5 // pred_check_branch
        %151 = sbr.rel (%p148) target = $region12
      $region11: #{discriminator_forward.7} parent=5 // pred_region
        %s152 = ssub.s32 %s9, 1
        // Predicated region
        $region13: #{discriminator_forward.7} parent=11 // pred_check
          %p153 = pneg %p110
        $region14: #{discriminator_forward.7} parent=11 // pred_check_branch
          %155 = sbr.rel (%p153) target = $region16
        $region15: #{discriminator_forward.7} parent=11 // pred_region
          %s156 = smul.u32 2, %s20
          %p157 = scmp.lt.s32.totalorder %s156, 1
          %s158 = scalar_select %p157, %s156, 1
          %s159 = scalar_lea.vmem %s2, %s158
          %s160 = smul.u32 2, %s20
        $region16: #{discriminator_forward.7} parent=11 // pred_fallthru
          _
      $region12: #{discriminator_forward.7} parent=5 // pred_fallthru
        _
      %p161 = scmp.lt.s32.totalorder %s9, 8
      // Predicated region
      $region17: #{discriminator_forward.7} parent=5 // pred_check
        %p162 = pneg %p161
      $region18: #{discriminator_forward.7} parent=5 // pred_check_branch
        %164 = sbr.rel (%p162) target = $region20
      $region19: #{discriminator_forward.7} parent=5 // pred_region
        // Predicated region
        $region21: #{discriminator_forward.7} parent=19 // pred_check
          %p165 = pneg %p50
        $region22: #{discriminator_forward.7} parent=19 // pred_check_branch
          %167 = sbr.rel (%p165) target = $region24
        $region23: #{discriminator_forward.7} parent=19 // pred_region
          %s168 = sand.u32 %s40, 1
          %s169 = sand.u32 %s40, 1
          %s170 = smul.addr %s169, 128
          %s171 = scalar_lea.vmem [#allocation3], %s170
          %s172 = smul.u32 8, %s16
          %s173 = smul.u32 4, %s18
          %s174 = smul.addr %s172, 16
          %s175 = sadd.s32 %s173, %s174
          %s176 = smul.addr %s175, 4
          %s177 = scalar_lea.vmem %s0, %s176
          // Predicated region
          $region25: #{discriminator_forward.7} parent=23 // pred_check
            _
          $region26: #{discriminator_forward.7} parent=23 // pred_check_branch
            %179 = sbr.rel (0) target = $region28
          $region27: #{discriminator_forward.7} parent=23 // pred_region
            // Predicated region
            $region29: #{discriminator_forward.7} parent=27 // pred_check
              _
            $region30: #{discriminator_forward.7} parent=27 // pred_check_branch
              %181 = sbr.rel (0) target = $region32
            $region31: #{discriminator_forward.7} parent=27 // pred_region
              loop: start=0, step=1, limit=1
              $region33: #{discriminator_forward.7} parent=31 // loop_pre_header
                _
              $region34: #{discriminator_forward.7} parent=31 // loop_header
                %s183 = sphi 0, %s187
                %p184 = scmp.ge.s32.totalorder %s183, 1
                %s188 = sphi %s177, %s177
                %s189 = sphi %s171, %s171
              $region35: #{discriminator_forward.7} parent=31 // loop_header_branch
                %186 = sbr.rel (%p184) target = $region39
              $region36: #{discriminator_forward.7} parent=31 // loop_body
                %v190 = vld [vmem:[%s188] sm:$0xff]
                %191 = vst [vmem:[%s189] sm:$0xff] %v190
                %v192 = vld [vmem:[%s188 + $0x8] sm:$0xff]
                %193 = vst [vmem:[%s189 + $0x8] sm:$0xff] %v192
                %v194 = vld [vmem:[%s188 + $0x40] sm:$0xff]
                %195 = vst [vmem:[%s189 + $0x10] sm:$0xff] %v194
                %v196 = vld [vmem:[%s188 + $0x48] sm:$0xff]
                %197 = vst [vmem:[%s189 + $0x18] sm:$0xff] %v196
                %v198 = vld [vmem:[%s188 + $0x80] sm:$0xff]
                %199 = vst [vmem:[%s189 + $0x20] sm:$0xff] %v198
                %v200 = vld [vmem:[%s188 + $0x88] sm:$0xff]
                %201 = vst [vmem:[%s189 + $0x28] sm:$0xff] %v200
                %v202 = vld [vmem:[%s188 + $0xc0] sm:$0xff]
                %203 = vst [vmem:[%s189 + $0x30] sm:$0xff] %v202
                %v204 = vld [vmem:[%s188 + $0xc8] sm:$0xff]
                %205 = vst [vmem:[%s189 + $0x38] sm:$0xff] %v204
                %v206 = vld [vmem:[%s188 + $0x100] sm:$0xff]
                %207 = vst [vmem:[%s189 + $0x40] sm:$0xff] %v206
                %v208 = vld [vmem:[%s188 + $0x108] sm:$0xff]
                %209 = vst [vmem:[%s189 + $0x48] sm:$0xff] %v208
                %v210 = vld [vmem:[%s188 + $0x140] sm:$0xff]
                %211 = vst [vmem:[%s189 + $0x50] sm:$0xff] %v210
                %v212 = vld [vmem:[%s188 + $0x148] sm:$0xff]
                %213 = vst [vmem:[%s189 + $0x58] sm:$0xff] %v212
                %v214 = vld [vmem:[%s188 + $0x180] sm:$0xff]
                %215 = vst [vmem:[%s189 + $0x60] sm:$0xff] %v214
                %v216 = vld [vmem:[%s188 + $0x188] sm:$0xff]
                %217 = vst [vmem:[%s189 + $0x68] sm:$0xff] %v216
                %v218 = vld [vmem:[%s188 + $0x1c0] sm:$0xff]
                %219 = vst [vmem:[%s189 + $0x70] sm:$0xff] %v218
                %v220 = vld [vmem:[%s188 + $0x1c8] sm:$0xff]
                %221 = vst [vmem:[%s189 + $0x78] sm:$0xff] %v220
              $region37: #{discriminator_forward.7} parent=31 // loop_footer
                %s187 = sadd.s32 1, %s183
              $region38: #{discriminator_forward.7} parent=31 // loop_footer_branch
                %182 = sbr.rel target = $region34
              $region39: #{discriminator_forward.7} parent=31 // loop_exit
                _
            $region32: #{discriminator_forward.7} parent=27 // pred_fallthru
              _
            // Predicated region
            $region40: #{discriminator_forward.7} parent=27 // pred_check
              _
            $region41: #{discriminator_forward.7} parent=27 // pred_check_branch
              %223 = sbr.rel target = $region43
            $region42: #{discriminator_forward.7} parent=27 // pred_region
              _
            $region43: #{discriminator_forward.7} parent=27 // pred_fallthru
              _
          $region28: #{discriminator_forward.7} parent=23 // pred_fallthru
            _
          %224 = vnop
        $region24: #{discriminator_forward.7} parent=19 // pred_fallthru
          _
        // Predicated region
        $region44: #{discriminator_forward.7} parent=19 // pred_check
          %p225 = pneg %p78
        $region45: #{discriminator_forward.7} parent=19 // pred_check_branch
          %227 = sbr.rel (%p225) target = $region47
        $region46: #{discriminator_forward.7} parent=19 // pred_region
          %s228 = smul.u32 64, %s18
          %s229 = smul.u32 2, %s17
          %p230 = scmp.lt.s32.totalorder %s228, 255
          %s231 = scalar_select %p230, %s228, 255
          %p232 = scmp.lt.s32.totalorder %s229, 1
          %s233 = scalar_select %p232, %s229, 1
          %s234 = smul.addr %s231, 2
          %s235 = sadd.s32 %s233, %s234
          %s236 = smul.addr %s235, 4
          %s237 = scalar_lea.vmem %s1, %s236
          %s238 = smul.u32 64, %s18
          %s239 = smul.u32 2, %s17
        $region47: #{discriminator_forward.7} parent=19 // pred_fallthru
          _
      $region20: #{discriminator_forward.7} parent=5 // pred_fallthru
        _
      %p240 = scmp.le.s32.totalorder 1, %s9
      %p241 = scmp.lt.s32.totalorder %s9, 9
      %p242 = pnand %p240, %p241
      %p243 = pneg %p242
      // Predicated region
      $region48: #{discriminator_forward.7} parent=5 // pred_check
        _
      $region49: #{discriminator_forward.7} parent=5 // pred_check_branch
        %245 = sbr.rel (%p242) target = $region51
      $region50: #{discriminator_forward.7} parent=5 // pred_region
        %s246 = ssub.s32 %s9, 1
        %s247 = sand.u32 %s43, 1
        %s248 = sand.u32 %s43, 1
        %s249 = smul.addr %s248, 128
        %s250 = scalar_lea.vmem [#allocation3], %s249
        // Predicated region
        $region52: #{discriminator_forward.7} parent=50 // pred_check
          %p251 = pneg %p56
        $region53: #{discriminator_forward.7} parent=50 // pred_check_branch
          %253 = sbr.rel (%p251) target = $region55
        $region54: #{discriminator_forward.7} parent=50 // pred_region
          _
        $region55: #{discriminator_forward.7} parent=50 // pred_fallthru
          _
        %s254 = sand.u32 %s43, 1
        %s255 = sand.u32 %s43, 1
        %s256 = smul.addr %s255, 128
        %s257 = scalar_lea.vmem [#allocation3], %s256
        %p258 = pneg %p56
        %p259 = pneg %p53
        %s260 = smul.u32 64, %s21
        %s261 = smul.u32 2, %s20
        %p262 = scmp.lt.s32.totalorder %s260, 255
        %s263 = scalar_select %p262, %s260, 255
        %p264 = scmp.lt.s32.totalorder %s261, 1
        %s265 = scalar_select %p264, %s261, 1
        %s266 = smul.addr %s263, 2
        %s267 = sadd.s32 %s265, %s266
        %s268 = smul.addr %s267, 4
        %s269 = scalar_lea.vmem %s1, %s268
        %p270 = pneg %p84
        %p271 = pneg %p81
        %s272 = smul.u32 2, %s20
        %p273 = scmp.lt.s32.totalorder %s272, 1
        %s274 = scalar_select %p273, %s272, 1
        %s275 = scalar_lea.vmem %s2, %s274
        %p276 = pneg %p110
        %p277 = pneg %p107
        %p278 = pneg %p138
        %p279 = pneg %p135
        %s280 = smul.u32 8, %s19
        %s281 = smul.u32 2, %s20
        %p282 = scmp.lt.s32.totalorder %s280, 15
        %s283 = scalar_select %p282, %s280, 15
        %p284 = scmp.lt.s32.totalorder %s281, 1
        %s285 = scalar_select %p284, %s281, 1
        %s286 = smul.addr %s283, 2
        %s287 = sadd.s32 %s285, %s286
        %s288 = smul.addr %s287, 4
        %s289 = scalar_lea.vmem %s3, %s288
        %s290 = smul.u32 8, %s19
        %s291 = smul.u32 4, %s21
        %s292 = smul.u32 64, %s21
        %s293 = smul.u32 2, %s20
        %p294 = scmp.lt.s32.totalorder %s292, 255
        %s295 = scalar_select %p294, %s292, 255
        %p296 = scmp.lt.s32.totalorder %s293, 1
        %s297 = scalar_select %p296, %s293, 1
        %s298 = smul.addr %s295, 2
        %s299 = sadd.s32 %s297, %s298
        %s300 = smul.addr %s299, 4
        %s301 = scalar_lea.vmem %s1, %s300
        %s302 = smul.u32 64, %s21
        %s303 = smul.u32 2, %s20
        %s304 = smul.u32 2, %s20
        %p305 = scmp.lt.s32.totalorder %s304, 1
        %s306 = scalar_select %p305, %s304, 1
        %s307 = scalar_lea.vmem %s2, %s306
        %s308 = smul.u32 2, %s20
        %s309 = smul.u32 8, %s19
        %s310 = smul.u32 2, %s20
        %p311 = scmp.lt.s32.totalorder %s309, 15
        %s312 = scalar_select %p311, %s309, 15
        %p313 = scmp.lt.s32.totalorder %s310, 1
        %s314 = scalar_select %p313, %s310, 1
        %s315 = smul.addr %s312, 2
        %s316 = sadd.s32 %s314, %s315
        %s317 = smul.addr %s316, 4
        %s318 = scalar_lea.vmem %s3, %s317
        %s319 = smul.u32 8, %s19
        %s320 = smul.u32 2, %s20
        %p321 = scmp.eq.s32.totalorder %s21, 0
        // Predicated region
        $region56: #{discriminator_forward.7} parent=50 // pred_check
          %p322 = pneg %p321
        $region57: #{discriminator_forward.7} parent=50 // pred_check_branch
          %324 = sbr.rel (%p322) target = $region59
        $region58: #{discriminator_forward.7} parent=50 // pred_region
          %325 = vst [vmem:[#allocation2] sm:$0xff] 0.0
          %326 = vst [vmem:[#allocation2 + $0x8] sm:$0xff] 0.0
          %327 = vst [vmem:[#allocation2 + $0x10] sm:$0xff] 0.0
          %328 = vst [vmem:[#allocation2 + $0x18] sm:$0xff] 0.0
          %329 = vst [vmem:[#allocation2 + $0x20] sm:$0xff] 0.0
          %330 = vst [vmem:[#allocation2 + $0x28] sm:$0xff] 0.0
          %331 = vst [vmem:[#allocation2 + $0x30] sm:$0xff] 0.0
          %332 = vst [vmem:[#allocation2 + $0x38] sm:$0xff] 0.0
          %333 = vst [vmem:[#allocation2 + $0x40] sm:$0xff] 0.0
          %334 = vst [vmem:[#allocation2 + $0x48] sm:$0xff] 0.0
          %335 = vst [vmem:[#allocation2 + $0x50] sm:$0xff] 0.0
          %336 = vst [vmem:[#allocation2 + $0x58] sm:$0xff] 0.0
          %337 = vst [vmem:[#allocation2 + $0x60] sm:$0xff] 0.0
          %338 = vst [vmem:[#allocation2 + $0x68] sm:$0xff] 0.0
          %339 = vst [vmem:[#allocation2 + $0x70] sm:$0xff] 0.0
          %340 = vst [vmem:[#allocation2 + $0x78] sm:$0xff] 0.0
        $region59: #{discriminator_forward.7} parent=50 // pred_fallthru
          _
        %v341 = vld [vmem:[#allocation2] sm:$0xff]
        %v342 = vld [vmem:[#allocation2 + $0x8] sm:$0xff]
        %v343 = vld [vmem:[#allocation2 + $0x10] sm:$0xff]
        %v344 = vld [vmem:[#allocation2 + $0x18] sm:$0xff]
        %v345 = vld [vmem:[#allocation2 + $0x20] sm:$0xff]
        %v346 = vld [vmem:[#allocation2 + $0x28] sm:$0xff]
        %v347 = vld [vmem:[#allocation2 + $0x30] sm:$0xff]
        %v348 = vld [vmem:[#allocation2 + $0x38] sm:$0xff]
        %v349 = vld [vmem:[#allocation2 + $0x40] sm:$0xff]
        %v350 = vld [vmem:[#allocation2 + $0x48] sm:$0xff]
        %v351 = vld [vmem:[#allocation2 + $0x50] sm:$0xff]
        %v352 = vld [vmem:[#allocation2 + $0x58] sm:$0xff]
        %v353 = vld [vmem:[#allocation2 + $0x60] sm:$0xff]
        %v354 = vld [vmem:[#allocation2 + $0x68] sm:$0xff]
        %v355 = vld [vmem:[#allocation2 + $0x70] sm:$0xff]
        %v356 = vld [vmem:[#allocation2 + $0x78] sm:$0xff]
        %v357 = vld [vmem:[%s250] sm:$0xff]
        %v358 = vld [vmem:[%s250 + $0x8] sm:$0xff]
        %v359 = vld [vmem:[%s250 + $0x10] sm:$0xff]
        %v360 = vld [vmem:[%s250 + $0x18] sm:$0xff]
        %v361 = vld [vmem:[%s250 + $0x20] sm:$0xff]
        %v362 = vld [vmem:[%s250 + $0x28] sm:$0xff]
        %v363 = vld [vmem:[%s250 + $0x30] sm:$0xff]
        %v364 = vld [vmem:[%s250 + $0x38] sm:$0xff]
        %v365 = vld [vmem:[%s250 + $0x40] sm:$0xff]
        %v366 = vld [vmem:[%s250 + $0x48] sm:$0xff]
        %v367 = vld [vmem:[%s250 + $0x50] sm:$0xff]
        %v368 = vld [vmem:[%s250 + $0x58] sm:$0xff]
        %v369 = vld [vmem:[%s250 + $0x60] sm:$0xff]
        %v370 = vld [vmem:[%s250 + $0x68] sm:$0xff]
        %v371 = vld [vmem:[%s250 + $0x70] sm:$0xff]
        %v372 = vld [vmem:[%s250 + $0x78] sm:$0xff]
        %v373 = vld [vmem:[%s301] sm:$0xff]
        %v374 = vld [vmem:[%s301 + $0x8] sm:$0xff]
        %v375 = vld [vmem:[%s301 + $0x10] sm:$0xff]
        %v376 = vld [vmem:[%s301 + $0x18] sm:$0xff]
        %v377 = vld [vmem:[%s301 + $0x20] sm:$0xff]
        %v378 = vld [vmem:[%s301 + $0x28] sm:$0xff]
        %v379 = vld [vmem:[%s301 + $0x30] sm:$0xff]
        %v380 = vld [vmem:[%s301 + $0x38] sm:$0xff]
        %v381 = vld [vmem:[%s301 + $0x40] sm:$0xff]
        %v382 = vld [vmem:[%s301 + $0x48] sm:$0xff]
        %v383 = vld [vmem:[%s301 + $0x50] sm:$0xff]
        %v384 = vld [vmem:[%s301 + $0x58] sm:$0xff]
        %v385 = vld [vmem:[%s301 + $0x60] sm:$0xff]
        %v386 = vld [vmem:[%s301 + $0x68] sm:$0xff]
        %v387 = vld [vmem:[%s301 + $0x70] sm:$0xff]
        %v388 = vld [vmem:[%s301 + $0x78] sm:$0xff]
        %v389 = vld [vmem:[%s301 + $0x80] sm:$0xff]
        %v390 = vld [vmem:[%s301 + $0x88] sm:$0xff]
        %v391 = vld [vmem:[%s301 + $0x90] sm:$0xff]
        %v392 = vld [vmem:[%s301 + $0x98] sm:$0xff]
        %v393 = vld [vmem:[%s301 + $0xa0] sm:$0xff]
        %v394 = vld [vmem:[%s301 + $0xa8] sm:$0xff]
        %v395 = vld [vmem:[%s301 + $0xb0] sm:$0xff]
        %v396 = vld [vmem:[%s301 + $0xb8] sm:$0xff]
        %v397 = vld [vmem:[%s301 + $0xc0] sm:$0xff]
        %v398 = vld [vmem:[%s301 + $0xc8] sm:$0xff]
        %v399 = vld [vmem:[%s301 + $0xd0] sm:$0xff]
        %v400 = vld [vmem:[%s301 + $0xd8] sm:$0xff]
        %v401 = vld [vmem:[%s301 + $0xe0] sm:$0xff]
        %v402 = vld [vmem:[%s301 + $0xe8] sm:$0xff]
        %v403 = vld [vmem:[%s301 + $0xf0] sm:$0xff]
        %v404 = vld [vmem:[%s301 + $0xf8] sm:$0xff]
        %v405 = vld [vmem:[%s301 + $0x100] sm:$0xff]
        %v406 = vld [vmem:[%s301 + $0x108] sm:$0xff]
        %v407 = vld [vmem:[%s301 + $0x110] sm:$0xff]
        %v408 = vld [vmem:[%s301 + $0x118] sm:$0xff]
        %v409 = vld [vmem:[%s301 + $0x120] sm:$0xff]
        %v410 = vld [vmem:[%s301 + $0x128] sm:$0xff]
        %v411 = vld [vmem:[%s301 + $0x130] sm:$0xff]
        %v412 = vld [vmem:[%s301 + $0x138] sm:$0xff]
        %v413 = vld [vmem:[%s301 + $0x140] sm:$0xff]
        %v414 = vld [vmem:[%s301 + $0x148] sm:$0xff]
        %v415 = vld [vmem:[%s301 + $0x150] sm:$0xff]
        %v416 = vld [vmem:[%s301 + $0x158] sm:$0xff]
        %v417 = vld [vmem:[%s301 + $0x160] sm:$0xff]
        %v418 = vld [vmem:[%s301 + $0x168] sm:$0xff]
        %v419 = vld [vmem:[%s301 + $0x170] sm:$0xff]
        %v420 = vld [vmem:[%s301 + $0x178] sm:$0xff]
        %v421 = vld [vmem:[%s301 + $0x180] sm:$0xff]
        %v422 = vld [vmem:[%s301 + $0x188] sm:$0xff]
        %v423 = vld [vmem:[%s301 + $0x190] sm:$0xff]
        %v424 = vld [vmem:[%s301 + $0x198] sm:$0xff]
        %v425 = vld [vmem:[%s301 + $0x1a0] sm:$0xff]
        %v426 = vld [vmem:[%s301 + $0x1a8] sm:$0xff]
        %v427 = vld [vmem:[%s301 + $0x1b0] sm:$0xff]
        %v428 = vld [vmem:[%s301 + $0x1b8] sm:$0xff]
        %v429 = vld [vmem:[%s301 + $0x1c0] sm:$0xff]
        %v430 = vld [vmem:[%s301 + $0x1c8] sm:$0xff]
        %v431 = vld [vmem:[%s301 + $0x1d0] sm:$0xff]
        %v432 = vld [vmem:[%s301 + $0x1d8] sm:$0xff]
        %v433 = vld [vmem:[%s301 + $0x1e0] sm:$0xff]
        %v434 = vld [vmem:[%s301 + $0x1e8] sm:$0xff]
        %v435 = vld [vmem:[%s301 + $0x1f0] sm:$0xff]
        %v436 = vld [vmem:[%s301 + $0x1f8] sm:$0xff]
        %v453 = vunpack.c.l.b16 %v357
        %v454 = vunpack.c.h.b16 %v357
        %v455 = vunpack.c.l.b16 %v358
        %v456 = vunpack.c.h.b16 %v358
        %v457 = vunpack.c.l.b16 %v359
        %v458 = vunpack.c.h.b16 %v359
        %v459 = vunpack.c.l.b16 %v360
        %v460 = vunpack.c.h.b16 %v360
        %v461 = vunpack.c.l.b16 %v361
        %v462 = vunpack.c.h.b16 %v361
        %v463 = vunpack.c.l.b16 %v362
        %v464 = vunpack.c.h.b16 %v362
        %v465 = vunpack.c.l.b16 %v363
        %v466 = vunpack.c.h.b16 %v363
        %v467 = vunpack.c.l.b16 %v364
        %v468 = vunpack.c.h.b16 %v364
        %v469 = vunpack.c.l.b16 %v365
        %v470 = vunpack.c.h.b16 %v365
        %v471 = vunpack.c.l.b16 %v366
        %v472 = vunpack.c.h.b16 %v366
        %v473 = vunpack.c.l.b16 %v367
        %v474 = vunpack.c.h.b16 %v367
        %v475 = vunpack.c.l.b16 %v368
        %v476 = vunpack.c.h.b16 %v368
        %v477 = vunpack.c.l.b16 %v369
        %v478 = vunpack.c.h.b16 %v369
        %v479 = vunpack.c.l.b16 %v370
        %v480 = vunpack.c.h.b16 %v370
        %v481 = vunpack.c.l.b16 %v371
        %v482 = vunpack.c.h.b16 %v371
        %v483 = vunpack.c.l.b16 %v372
        %v484 = vunpack.c.h.b16 %v372
        %v485 = vpack.c.b16 %v457, %v453
        %v486 = vpack.c.b16 %v458, %v454
        %v487 = vpack.c.b16 %v459, %v455
        %v488 = vpack.c.b16 %v460, %v456
        %v489 = vpack.c.b16 %v465, %v461
        %v490 = vpack.c.b16 %v466, %v462
        %v491 = vpack.c.b16 %v467, %v463
        %v492 = vpack.c.b16 %v468, %v464
        %v493 = vpack.c.b16 %v473, %v469
        %v494 = vpack.c.b16 %v474, %v470
        %v495 = vpack.c.b16 %v475, %v471
        %v496 = vpack.c.b16 %v476, %v472
        %v497 = vpack.c.b16 %v481, %v477
        %v498 = vpack.c.b16 %v482, %v478
        %v499 = vpack.c.b16 %v483, %v479
        %v500 = vpack.c.b16 %v484, %v480
        %v581 = vunpack.c.l.b16 %v373
        %v582 = vunpack.c.h.b16 %v373
        %v583 = vunpack.c.l.b16 %v374
        %v584 = vunpack.c.h.b16 %v374
        %v585 = vunpack.c.l.b16 %v375
        %v586 = vunpack.c.h.b16 %v375
        %v587 = vunpack.c.l.b16 %v376
        %v588 = vunpack.c.h.b16 %v376
        %v589 = vunpack.c.l.b16 %v377
        %v590 = vunpack.c.h.b16 %v377
        %v591 = vunpack.c.l.b16 %v378
        %v592 = vunpack.c.h.b16 %v378
        %v593 = vunpack.c.l.b16 %v379
        %v594 = vunpack.c.h.b16 %v379
        %v595 = vunpack.c.l.b16 %v380
        %v596 = vunpack.c.h.b16 %v380
        %v597 = vunpack.c.l.b16 %v381
        %v598 = vunpack.c.h.b16 %v381
        %v599 = vunpack.c.l.b16 %v382
        %v600 = vunpack.c.h.b16 %v382
        %v601 = vunpack.c.l.b16 %v383
        %v602 = vunpack.c.h.b16 %v383
        %v603 = vunpack.c.l.b16 %v384
        %v604 = vunpack.c.h.b16 %v384
        %v605 = vunpack.c.l.b16 %v385
        %v606 = vunpack.c.h.b16 %v385
        %v607 = vunpack.c.l.b16 %v386
        %v608 = vunpack.c.h.b16 %v386
        %v609 = vunpack.c.l.b16 %v387
        %v610 = vunpack.c.h.b16 %v387
        %v611 = vunpack.c.l.b16 %v388
        %v612 = vunpack.c.h.b16 %v388
        %v613 = vunpack.c.l.b16 %v389
        %v614 = vunpack.c.h.b16 %v389
        %v615 = vunpack.c.l.b16 %v390
        %v616 = vunpack.c.h.b16 %v390
        %v617 = vunpack.c.l.b16 %v391
        %v618 = vunpack.c.h.b16 %v391
        %v619 = vunpack.c.l.b16 %v392
        %v620 = vunpack.c.h.b16 %v392
        %v621 = vunpack.c.l.b16 %v393
        %v622 = vunpack.c.h.b16 %v393
        %v623 = vunpack.c.l.b16 %v394
        %v624 = vunpack.c.h.b16 %v394
        %v625 = vunpack.c.l.b16 %v395
        %v626 = vunpack.c.h.b16 %v395
        %v627 = vunpack.c.l.b16 %v396
        %v628 = vunpack.c.h.b16 %v396
        %v629 = vunpack.c.l.b16 %v397
        %v630 = vunpack.c.h.b16 %v397
        %v631 = vunpack.c.l.b16 %v398
        %v632 = vunpack.c.h.b16 %v398
        %v633 = vunpack.c.l.b16 %v399
        %v634 = vunpack.c.h.b16 %v399
        %v635 = vunpack.c.l.b16 %v400
        %v636 = vunpack.c.h.b16 %v400
        %v637 = vunpack.c.l.b16 %v401
        %v638 = vunpack.c.h.b16 %v401
        %v639 = vunpack.c.l.b16 %v402
        %v640 = vunpack.c.h.b16 %v402
        %v641 = vunpack.c.l.b16 %v403
        %v642 = vunpack.c.h.b16 %v403
        %v643 = vunpack.c.l.b16 %v404
        %v644 = vunpack.c.h.b16 %v404
        %v645 = vunpack.c.l.b16 %v405
        %v646 = vunpack.c.h.b16 %v405
        %v647 = vunpack.c.l.b16 %v406
        %v648 = vunpack.c.h.b16 %v406
        %v649 = vunpack.c.l.b16 %v407
        %v650 = vunpack.c.h.b16 %v407
        %v651 = vunpack.c.l.b16 %v408
        %v652 = vunpack.c.h.b16 %v408
        %v653 = vunpack.c.l.b16 %v409
        %v654 = vunpack.c.h.b16 %v409
        %v655 = vunpack.c.l.b16 %v410
        %v656 = vunpack.c.h.b16 %v410
        %v657 = vunpack.c.l.b16 %v411
        %v658 = vunpack.c.h.b16 %v411
        %v659 = vunpack.c.l.b16 %v412
        %v660 = vunpack.c.h.b16 %v412
        %v661 = vunpack.c.l.b16 %v413
        %v662 = vunpack.c.h.b16 %v413
        %v663 = vunpack.c.l.b16 %v414
        %v664 = vunpack.c.h.b16 %v414
        %v665 = vunpack.c.l.b16 %v415
        %v666 = vunpack.c.h.b16 %v415
        %v667 = vunpack.c.l.b16 %v416
        %v668 = vunpack.c.h.b16 %v416
        %v669 = vunpack.c.l.b16 %v417
        %v670 = vunpack.c.h.b16 %v417
        %v671 = vunpack.c.l.b16 %v418
        %v672 = vunpack.c.h.b16 %v418
        %v673 = vunpack.c.l.b16 %v419
        %v674 = vunpack.c.h.b16 %v419
        %v675 = vunpack.c.l.b16 %v420
        %v676 = vunpack.c.h.b16 %v420
        %v677 = vunpack.c.l.b16 %v421
        %v678 = vunpack.c.h.b16 %v421
        %v679 = vunpack.c.l.b16 %v422
        %v680 = vunpack.c.h.b16 %v422
        %v681 = vunpack.c.l.b16 %v423
        %v682 = vunpack.c.h.b16 %v423
        %v683 = vunpack.c.l.b16 %v424
        %v684 = vunpack.c.h.b16 %v424
        %v685 = vunpack.c.l.b16 %v425
        %v686 = vunpack.c.h.b16 %v425
        %v687 = vunpack.c.l.b16 %v426
        %v688 = vunpack.c.h.b16 %v426
        %v689 = vunpack.c.l.b16 %v427
        %v690 = vunpack.c.h.b16 %v427
        %v691 = vunpack.c.l.b16 %v428
        %v692 = vunpack.c.h.b16 %v428
        %v693 = vunpack.c.l.b16 %v429
        %v694 = vunpack.c.h.b16 %v429
        %v695 = vunpack.c.l.b16 %v430
        %v696 = vunpack.c.h.b16 %v430
        %v697 = vunpack.c.l.b16 %v431
        %v698 = vunpack.c.h.b16 %v431
        %v699 = vunpack.c.l.b16 %v432
        %v700 = vunpack.c.h.b16 %v432
        %v701 = vunpack.c.l.b16 %v433
        %v702 = vunpack.c.h.b16 %v433
        %v703 = vunpack.c.l.b16 %v434
        %v704 = vunpack.c.h.b16 %v434
        %v705 = vunpack.c.l.b16 %v435
        %v706 = vunpack.c.h.b16 %v435
        %v707 = vunpack.c.l.b16 %v436
        %v708 = vunpack.c.h.b16 %v436
        %v709 = vpack.c.b16 %v583, %v581
        %v710 = vpack.c.b16 %v584, %v582
        %v711 = vpack.c.b16 %v587, %v585
        %v712 = vpack.c.b16 %v588, %v586
        %v713 = vpack.c.b16 %v591, %v589
        %v714 = vpack.c.b16 %v592, %v590
        %v715 = vpack.c.b16 %v595, %v593
        %v716 = vpack.c.b16 %v596, %v594
        %v717 = vpack.c.b16 %v599, %v597
        %v718 = vpack.c.b16 %v600, %v598
        %v719 = vpack.c.b16 %v603, %v601
        %v720 = vpack.c.b16 %v604, %v602
        %v721 = vpack.c.b16 %v607, %v605
        %v722 = vpack.c.b16 %v608, %v606
        %v723 = vpack.c.b16 %v611, %v609
        %v724 = vpack.c.b16 %v612, %v610
        %v725 = vpack.c.b16 %v615, %v613
        %v726 = vpack.c.b16 %v616, %v614
        %v727 = vpack.c.b16 %v619, %v617
        %v728 = vpack.c.b16 %v620, %v618
        %v729 = vpack.c.b16 %v623, %v621
        %v730 = vpack.c.b16 %v624, %v622
        %v731 = vpack.c.b16 %v627, %v625
        %v732 = vpack.c.b16 %v628, %v626
        %v733 = vpack.c.b16 %v631, %v629
        %v734 = vpack.c.b16 %v632, %v630
        %v735 = vpack.c.b16 %v635, %v633
        %v736 = vpack.c.b16 %v636, %v634
        %v737 = vpack.c.b16 %v639, %v637
        %v738 = vpack.c.b16 %v640, %v638
        %v739 = vpack.c.b16 %v643, %v641
        %v740 = vpack.c.b16 %v644, %v642
        %v741 = vpack.c.b16 %v647, %v645
        %v742 = vpack.c.b16 %v648, %v646
        %v743 = vpack.c.b16 %v651, %v649
        %v744 = vpack.c.b16 %v652, %v650
        %v745 = vpack.c.b16 %v655, %v653
        %v746 = vpack.c.b16 %v656, %v654
        %v747 = vpack.c.b16 %v659, %v657
        %v748 = vpack.c.b16 %v660, %v658
        %v749 = vpack.c.b16 %v663, %v661
        %v750 = vpack.c.b16 %v664, %v662
        %v751 = vpack.c.b16 %v667, %v665
        %v752 = vpack.c.b16 %v668, %v666
        %v753 = vpack.c.b16 %v671, %v669
        %v754 = vpack.c.b16 %v672, %v670
        %v755 = vpack.c.b16 %v675, %v673
        %v756 = vpack.c.b16 %v676, %v674
        %v757 = vpack.c.b16 %v679, %v677
        %v758 = vpack.c.b16 %v680, %v678
        %v759 = vpack.c.b16 %v683, %v681
        %v760 = vpack.c.b16 %v684, %v682
        %v761 = vpack.c.b16 %v687, %v685
        %v762 = vpack.c.b16 %v688, %v686
        %v763 = vpack.c.b16 %v691, %v689
        %v764 = vpack.c.b16 %v692, %v690
        %v765 = vpack.c.b16 %v695, %v693
        %v766 = vpack.c.b16 %v696, %v694
        %v767 = vpack.c.b16 %v699, %v697
        %v768 = vpack.c.b16 %v700, %v698
        %v769 = vpack.c.b16 %v703, %v701
        %v770 = vpack.c.b16 %v704, %v702
        %v771 = vpack.c.b16 %v707, %v705
        %v772 = vpack.c.b16 %v708, %v706
        %837 = vmatprep.subr.bf16.mxu0 %v724
        %838 = vmatpush1.bf16.msra.mxu0 %v723
        %839 = vmatprep.subr.bf16.mxu0 %v722
        %840 = vmatpush1.bf16.msra.mxu0 %v721
        %841 = vmatprep.subr.bf16.mxu0 %v720
        %842 = vmatpush1.bf16.msra.mxu0 %v719
        %843 = vmatprep.subr.bf16.mxu0 %v718
        %844 = vmatpush1.bf16.msra.mxu0 %v717
        %845 = vmatprep.subr.bf16.mxu0 %v716
        %846 = vmatpush1.bf16.msra.mxu0 %v715
        %847 = vmatprep.subr.bf16.mxu0 %v714
        %848 = vmatpush1.bf16.msra.mxu0 %v713
        %849 = vmatprep.subr.bf16.mxu0 %v712
        %850 = vmatpush1.bf16.msra.mxu0 %v711
        %851 = vmatprep.subr.bf16.mxu0 %v710
        %852 = vmatpush1.bf16.msra.mxu0 %v709
        %853 = vmatprep.subr.bf16.mxu0 %v740
        %854 = vmatpush2.bf16.msra.mxu0 %v739
        %855 = vmatprep.subr.bf16.mxu0 %v738
        %856 = vmatpush2.bf16.msra.mxu0 %v737
        %857 = vmatprep.subr.bf16.mxu0 %v736
        %858 = vmatpush2.bf16.msra.mxu0 %v735
        %859 = vmatprep.subr.bf16.mxu0 %v734
        %860 = vmatpush2.bf16.msra.mxu0 %v733
        %861 = vmatprep.subr.bf16.mxu0 %v732
        %862 = vmatpush2.bf16.msra.mxu0 %v731
        %863 = vmatprep.subr.bf16.mxu0 %v730
        %864 = vmatpush2.bf16.msra.mxu0 %v729
        %865 = vmatprep.subr.bf16.mxu0 %v728
        %866 = vmatpush2.bf16.msra.mxu0 %v727
        %867 = vmatprep.subr.bf16.mxu0 %v726
        %868 = vmatpush2.bf16.msra.mxu0 %v725
        %869 = vmatprep.mubr.bf16.mxu0 %v486
        %870 = vmatmul.mubr.bf16.gmra.mxu0 %v485
        %v871 = vpop.f32.mrf.mxu0
        %v872 = vadd.f32 0.0, %v871
        %v873 = vpop.f32.mrf.mxu0
        %v874 = vadd.f32 0.0, %v873
        %v875 = vpop.f32.mrf.mxu0
        %v876 = vadd.f32 0.0, %v875
        %v877 = vpop.f32.mrf.mxu0
        %v878 = vadd.f32 0.0, %v877
        %879 = vmatprep.mubr.bf16.mxu0 %v490
        %880 = vmatmul.mubr.bf16.gmra.mxu0 %v489
        %v881 = vpop.f32.mrf.mxu0
        %v882 = vadd.f32 0.0, %v881
        %v883 = vpop.f32.mrf.mxu0
        %v884 = vadd.f32 0.0, %v883
        %v885 = vpop.f32.mrf.mxu0
        %v886 = vadd.f32 0.0, %v885
        %v887 = vpop.f32.mrf.mxu0
        %v888 = vadd.f32 0.0, %v887
        %889 = vmatprep.mubr.bf16.mxu0 %v494
        %890 = vmatmul.mubr.bf16.gmra.mxu0 %v493
        %v891 = vpop.f32.mrf.mxu0
        %v892 = vadd.f32 0.0, %v891
        %v893 = vpop.f32.mrf.mxu0
        %v894 = vadd.f32 0.0, %v893
        %v895 = vpop.f32.mrf.mxu0
        %v896 = vadd.f32 0.0, %v895
        %v897 = vpop.f32.mrf.mxu0
        %v898 = vadd.f32 0.0, %v897
        %899 = vmatprep.mubr.bf16.mxu0 %v498
        %900 = vmatmul.mubr.bf16.gmra.mxu0 %v497
        %v901 = vpop.f32.mrf.mxu0
        %v902 = vadd.f32 0.0, %v901
        %v903 = vpop.f32.mrf.mxu0
        %v904 = vadd.f32 0.0, %v903
        %v905 = vpop.f32.mrf.mxu0
        %v906 = vadd.f32 0.0, %v905
        %v907 = vpop.f32.mrf.mxu0
        %v908 = vadd.f32 0.0, %v907
        %909 = vdwg.mxu0
        %910 = vmatprep.subr.bf16.mxu0 %v756
        %911 = vmatpush1.bf16.msra.mxu0 %v755
        %912 = vmatprep.subr.bf16.mxu0 %v754
        %913 = vmatpush1.bf16.msra.mxu0 %v753
        %914 = vmatprep.subr.bf16.mxu0 %v752
        %915 = vmatpush1.bf16.msra.mxu0 %v751
        %916 = vmatprep.subr.bf16.mxu0 %v750
        %917 = vmatpush1.bf16.msra.mxu0 %v749
        %918 = vmatprep.subr.bf16.mxu0 %v748
        %919 = vmatpush1.bf16.msra.mxu0 %v747
        %920 = vmatprep.subr.bf16.mxu0 %v746
        %921 = vmatpush1.bf16.msra.mxu0 %v745
        %922 = vmatprep.subr.bf16.mxu0 %v744
        %923 = vmatpush1.bf16.msra.mxu0 %v743
        %924 = vmatprep.subr.bf16.mxu0 %v742
        %925 = vmatpush1.bf16.msra.mxu0 %v741
        %926 = vmatprep.subr.bf16.mxu0 %v772
        %927 = vmatpush2.bf16.msra.mxu0 %v771
        %928 = vmatprep.subr.bf16.mxu0 %v770
        %929 = vmatpush2.bf16.msra.mxu0 %v769
        %930 = vmatprep.subr.bf16.mxu0 %v768
        %931 = vmatpush2.bf16.msra.mxu0 %v767
        %932 = vmatprep.subr.bf16.mxu0 %v766
        %933 = vmatpush2.bf16.msra.mxu0 %v765
        %934 = vmatprep.subr.bf16.mxu0 %v764
        %935 = vmatpush2.bf16.msra.mxu0 %v763
        %936 = vmatprep.subr.bf16.mxu0 %v762
        %937 = vmatpush2.bf16.msra.mxu0 %v761
        %938 = vmatprep.subr.bf16.mxu0 %v760
        %939 = vmatpush2.bf16.msra.mxu0 %v759
        %940 = vmatprep.subr.bf16.mxu0 %v758
        %941 = vmatpush2.bf16.msra.mxu0 %v757
        %942 = vmatprep.mubr.bf16.mxu0 %v488
        %943 = vmatmul.mubr.bf16.gmra.mxu0 %v487
        %v944 = vpop.f32.mrf.mxu0
        %v945 = vadd.f32 %v872, %v944
        %v946 = vpop.f32.mrf.mxu0
        %v947 = vadd.f32 %v874, %v946
        %v948 = vpop.f32.mrf.mxu0
        %v949 = vadd.f32 %v876, %v948
        %v950 = vpop.f32.mrf.mxu0
        %v951 = vadd.f32 %v878, %v950
        %952 = vmatprep.mubr.bf16.mxu0 %v492
        %953 = vmatmul.mubr.bf16.gmra.mxu0 %v491
        %v954 = vpop.f32.mrf.mxu0
        %v955 = vadd.f32 %v882, %v954
        %v956 = vpop.f32.mrf.mxu0
        %v957 = vadd.f32 %v884, %v956
        %v958 = vpop.f32.mrf.mxu0
        %v959 = vadd.f32 %v886, %v958
        %v960 = vpop.f32.mrf.mxu0
        %v961 = vadd.f32 %v888, %v960
        %962 = vmatprep.mubr.bf16.mxu0 %v496
        %963 = vmatmul.mubr.bf16.gmra.mxu0 %v495
        %v964 = vpop.f32.mrf.mxu0
        %v965 = vadd.f32 %v892, %v964
        %v966 = vpop.f32.mrf.mxu0
        %v967 = vadd.f32 %v894, %v966
        %v968 = vpop.f32.mrf.mxu0
        %v969 = vadd.f32 %v896, %v968
        %v970 = vpop.f32.mrf.mxu0
        %v971 = vadd.f32 %v898, %v970
        %972 = vmatprep.mubr.bf16.mxu0 %v500
        %973 = vmatmul.mubr.bf16.gmra.mxu0 %v499
        %v974 = vpop.f32.mrf.mxu0
        %v975 = vadd.f32 %v902, %v974
        %v976 = vpop.f32.mrf.mxu0
        %v977 = vadd.f32 %v904, %v976
        %v978 = vpop.f32.mrf.mxu0
        %v979 = vadd.f32 %v906, %v978
        %v980 = vpop.f32.mrf.mxu0
        %v981 = vadd.f32 %v908, %v980
        %982 = vdwg.mxu0
        %v983 = vadd.f32 %v341, %v945
        %v984 = vadd.f32 %v342, %v947
        %v985 = vadd.f32 %v343, %v949
        %v986 = vadd.f32 %v344, %v951
        %v987 = vadd.f32 %v345, %v955
        %v988 = vadd.f32 %v346, %v957
        %v989 = vadd.f32 %v347, %v959
        %v990 = vadd.f32 %v348, %v961
        %v991 = vadd.f32 %v349, %v965
        %v992 = vadd.f32 %v350, %v967
        %v993 = vadd.f32 %v351, %v969
        %v994 = vadd.f32 %v352, %v971
        %v995 = vadd.f32 %v353, %v975
        %v996 = vadd.f32 %v354, %v977
        %v997 = vadd.f32 %v355, %v979
        %v998 = vadd.f32 %v356, %v981
        %999 = vst [vmem:[#allocation2] sm:$0xff] %v983
        %1000 = vst [vmem:[#allocation2 + $0x8] sm:$0xff] %v984
        %1001 = vst [vmem:[#allocation2 + $0x10] sm:$0xff] %v985
        %1002 = vst [vmem:[#allocation2 + $0x18] sm:$0xff] %v986
        %1003 = vst [vmem:[#allocation2 + $0x20] sm:$0xff] %v987
        %1004 = vst [vmem:[#allocation2 + $0x28] sm:$0xff] %v988
        %1005 = vst [vmem:[#allocation2 + $0x30] sm:$0xff] %v989
        %1006 = vst [vmem:[#allocation2 + $0x38] sm:$0xff] %v990
        %1007 = vst [vmem:[#allocation2 + $0x40] sm:$0xff] %v991
        %1008 = vst [vmem:[#allocation2 + $0x48] sm:$0xff] %v992
        %1009 = vst [vmem:[#allocation2 + $0x50] sm:$0xff] %v993
        %1010 = vst [vmem:[#allocation2 + $0x58] sm:$0xff] %v994
        %1011 = vst [vmem:[#allocation2 + $0x60] sm:$0xff] %v995
        %1012 = vst [vmem:[#allocation2 + $0x68] sm:$0xff] %v996
        %1013 = vst [vmem:[#allocation2 + $0x70] sm:$0xff] %v997
        %1014 = vst [vmem:[#allocation2 + $0x78] sm:$0xff] %v998
        %p1015 = scmp.eq.s32.totalorder %s21, 3
        // Predicated region
        $region60: #{discriminator_forward.7} parent=50 // pred_check
          %p1016 = pneg %p1015
        $region61: #{discriminator_forward.7} parent=50 // pred_check_branch
          %1018 = sbr.rel (%p1016) target = $region63
        $region62: #{discriminator_forward.7} parent=50 // pred_region
          %v1019 = vld [vmem:[#allocation2] sm:$0xff]
          %v1020 = vld [vmem:[#allocation2 + $0x8] sm:$0xff]
          %v1021 = vld [vmem:[#allocation2 + $0x10] sm:$0xff]
          %v1022 = vld [vmem:[#allocation2 + $0x18] sm:$0xff]
          %v1023 = vld [vmem:[#allocation2 + $0x20] sm:$0xff]
          %v1024 = vld [vmem:[#allocation2 + $0x28] sm:$0xff]
          %v1025 = vld [vmem:[#allocation2 + $0x30] sm:$0xff]
          %v1026 = vld [vmem:[#allocation2 + $0x38] sm:$0xff]
          %v1027 = vld [vmem:[#allocation2 + $0x40] sm:$0xff]
          %v1028 = vld [vmem:[#allocation2 + $0x48] sm:$0xff]
          %v1029 = vld [vmem:[#allocation2 + $0x50] sm:$0xff]
          %v1030 = vld [vmem:[#allocation2 + $0x58] sm:$0xff]
          %v1031 = vld [vmem:[#allocation2 + $0x60] sm:$0xff]
          %v1032 = vld [vmem:[#allocation2 + $0x68] sm:$0xff]
          %v1033 = vld [vmem:[#allocation2 + $0x70] sm:$0xff]
          %v1034 = vld [vmem:[#allocation2 + $0x78] sm:$0xff]
          %v1035 = vld [vmem:[%s307] sm:$0x3]
          %v1037 = vlaneseq
          %v1038 = vshrl.u32 %v1037, 7
          %v1039 = vsub.s32 0, %v1038
          %v1040 = vrot.slane %v1035, %v1039
          %v1041 = vlaneseq
          %v1042 = vshrl.u32 %v1041, 7
          %v1043 = vsub.s32 1, %v1042
          %v1044 = vrot.slane %v1035, %v1043
          %v1047 = vadd.f32 %v1019, %v1040
          %v1048 = vadd.f32 %v1020, %v1044
          %v1049 = vadd.f32 %v1021, %v1040
          %v1050 = vadd.f32 %v1022, %v1044
          %v1051 = vadd.f32 %v1023, %v1040
          %v1052 = vadd.f32 %v1024, %v1044
          %v1053 = vadd.f32 %v1025, %v1040
          %v1054 = vadd.f32 %v1026, %v1044
          %v1055 = vadd.f32 %v1027, %v1040
          %v1056 = vadd.f32 %v1028, %v1044
          %v1057 = vadd.f32 %v1029, %v1040
          %v1058 = vadd.f32 %v1030, %v1044
          %v1059 = vadd.f32 %v1031, %v1040
          %v1060 = vadd.f32 %v1032, %v1044
          %v1061 = vadd.f32 %v1033, %v1040
          %v1062 = vadd.f32 %v1034, %v1044
          %v1063 = vadd.f32 %v1047, %v1049
          %v1064 = vadd.f32 %v1063, %v1051
          %v1065 = vadd.f32 %v1064, %v1053
          %v1066 = vadd.f32 %v1065, %v1055
          %v1067 = vadd.f32 %v1066, %v1057
          %v1068 = vadd.f32 %v1067, %v1059
          %v1069 = vadd.f32 %v1068, %v1061
          %v1070 = vrot.slane %v1069, 4
          %v1071 = vadd.f32 %v1069, %v1070
          %v1072 = vrot.slane %v1071, 2
          %v1073 = vadd.f32 %v1071, %v1072
          %v1074 = vrot.slane %v1073, 1
          %v1075 = vadd.f32 %v1073, %v1074
          %v1076 = vadd.f32 %v1048, %v1050
          %v1077 = vadd.f32 %v1076, %v1052
          %v1078 = vadd.f32 %v1077, %v1054
          %v1079 = vadd.f32 %v1078, %v1056
          %v1080 = vadd.f32 %v1079, %v1058
          %v1081 = vadd.f32 %v1080, %v1060
          %v1082 = vadd.f32 %v1081, %v1062
          %v1083 = vrot.slane %v1082, 4
          %v1084 = vadd.f32 %v1082, %v1083
          %v1085 = vrot.slane %v1084, 2
          %v1086 = vadd.f32 %v1084, %v1085
          %v1087 = vrot.slane %v1086, 1
          %v1088 = vadd.f32 %v1086, %v1087
          %v1089 = vrcp.pop 64.0
          %v1090 = vmul.f32 %v1075, %v1089
          %v1091 = vmul.f32 %v1088, %v1089
          %v1092 = vsub.f32 %v1047, %v1090
          %v1093 = vsub.f32 %v1048, %v1091
          %v1094 = vsub.f32 %v1049, %v1090
          %v1095 = vsub.f32 %v1050, %v1091
          %v1096 = vsub.f32 %v1051, %v1090
          %v1097 = vsub.f32 %v1052, %v1091
          %v1098 = vsub.f32 %v1053, %v1090
          %v1099 = vsub.f32 %v1054, %v1091
          %v1100 = vsub.f32 %v1055, %v1090
          %v1101 = vsub.f32 %v1056, %v1091
          %v1102 = vsub.f32 %v1057, %v1090
          %v1103 = vsub.f32 %v1058, %v1091
          %v1104 = vsub.f32 %v1059, %v1090
          %v1105 = vsub.f32 %v1060, %v1091
          %v1106 = vsub.f32 %v1061, %v1090
          %v1107 = vsub.f32 %v1062, %v1091
          %v1108 = vmul.f32 %v1092, %v1092
          %v1109 = vmul.f32 %v1093, %v1093
          %v1110 = vmul.f32 %v1094, %v1094
          %v1111 = vmul.f32 %v1095, %v1095
          %v1112 = vmul.f32 %v1096, %v1096
          %v1113 = vmul.f32 %v1097, %v1097
          %v1114 = vmul.f32 %v1098, %v1098
          %v1115 = vmul.f32 %v1099, %v1099
          %v1116 = vmul.f32 %v1100, %v1100
          %v1117 = vmul.f32 %v1101, %v1101
          %v1118 = vmul.f32 %v1102, %v1102
          %v1119 = vmul.f32 %v1103, %v1103
          %v1120 = vmul.f32 %v1104, %v1104
          %v1121 = vmul.f32 %v1105, %v1105
          %v1122 = vmul.f32 %v1106, %v1106
          %v1123 = vmul.f32 %v1107, %v1107
          %v1124 = vadd.f32 %v1108, %v1110
          %v1125 = vadd.f32 %v1124, %v1112
          %v1126 = vadd.f32 %v1125, %v1114
          %v1127 = vadd.f32 %v1126, %v1116
          %v1128 = vadd.f32 %v1127, %v1118
          %v1129 = vadd.f32 %v1128, %v1120
          %v1130 = vadd.f32 %v1129, %v1122
          %v1131 = vrot.slane %v1130, 4
          %v1132 = vadd.f32 %v1130, %v1131
          %v1133 = vrot.slane %v1132, 2
          %v1134 = vadd.f32 %v1132, %v1133
          %v1135 = vrot.slane %v1134, 1
          %v1136 = vadd.f32 %v1134, %v1135
          %v1137 = vadd.f32 %v1109, %v1111
          %v1138 = vadd.f32 %v1137, %v1113
          %v1139 = vadd.f32 %v1138, %v1115
          %v1140 = vadd.f32 %v1139, %v1117
          %v1141 = vadd.f32 %v1140, %v1119
          %v1142 = vadd.f32 %v1141, %v1121
          %v1143 = vadd.f32 %v1142, %v1123
          %v1144 = vrot.slane %v1143, 4
          %v1145 = vadd.f32 %v1143, %v1144
          %v1146 = vrot.slane %v1145, 2
          %v1147 = vadd.f32 %v1145, %v1146
          %v1148 = vrot.slane %v1147, 1
          %v1149 = vadd.f32 %v1147, %v1148
          %v1150 = vmul.f32 %v1136, %v1089
          %v1151 = vmul.f32 %v1149, %v1089
          %v1152 = vadd.f32 %v1150, 1e-05
          %v1153 = vadd.f32 %v1151, 1e-05
          %v1154 = vrsqrt.pop %v1152
          %v1155 = vrsqrt.pop %v1153
          %v1156 = vmul.f32 %v1092, %v1154
          %v1157 = vmul.f32 %v1093, %v1155
          %v1158 = vmul.f32 %v1094, %v1154
          %v1159 = vmul.f32 %v1095, %v1155
          %v1160 = vmul.f32 %v1096, %v1154
          %v1161 = vmul.f32 %v1097, %v1155
          %v1162 = vmul.f32 %v1098, %v1154
          %v1163 = vmul.f32 %v1099, %v1155
          %v1164 = vmul.f32 %v1100, %v1154
          %v1165 = vmul.f32 %v1101, %v1155
          %v1166 = vmul.f32 %v1102, %v1154
          %v1167 = vmul.f32 %v1103, %v1155
          %v1168 = vmul.f32 %v1104, %v1154
          %v1169 = vmul.f32 %v1105, %v1155
          %v1170 = vmul.f32 %v1106, %v1154
          %v1171 = vmul.f32 %v1107, %v1155
          %vm1172 = vcmp.gt.f32.partialorder %v1156, 0.0
          %vm1173 = vcmp.gt.f32.partialorder %v1157, 0.0
          %vm1174 = vcmp.gt.f32.partialorder %v1158, 0.0
          %vm1175 = vcmp.gt.f32.partialorder %v1159, 0.0
          %vm1176 = vcmp.gt.f32.partialorder %v1160, 0.0
          %vm1177 = vcmp.gt.f32.partialorder %v1161, 0.0
          %vm1178 = vcmp.gt.f32.partialorder %v1162, 0.0
          %vm1179 = vcmp.gt.f32.partialorder %v1163, 0.0
          %vm1180 = vcmp.gt.f32.partialorder %v1164, 0.0
          %vm1181 = vcmp.gt.f32.partialorder %v1165, 0.0
          %vm1182 = vcmp.gt.f32.partialorder %v1166, 0.0
          %vm1183 = vcmp.gt.f32.partialorder %v1167, 0.0
          %vm1184 = vcmp.gt.f32.partialorder %v1168, 0.0
          %vm1185 = vcmp.gt.f32.partialorder %v1169, 0.0
          %vm1186 = vcmp.gt.f32.partialorder %v1170, 0.0
          %vm1187 = vcmp.gt.f32.partialorder %v1171, 0.0
          %v1188 = vmul.f32 %v1156, 0.2
          %v1189 = vmul.f32 %v1157, 0.2
          %v1190 = vmul.f32 %v1158, 0.2
          %v1191 = vmul.f32 %v1159, 0.2
          %v1192 = vmul.f32 %v1160, 0.2
          %v1193 = vmul.f32 %v1161, 0.2
          %v1194 = vmul.f32 %v1162, 0.2
          %v1195 = vmul.f32 %v1163, 0.2
          %v1196 = vmul.f32 %v1164, 0.2
          %v1197 = vmul.f32 %v1165, 0.2
          %v1198 = vmul.f32 %v1166, 0.2
          %v1199 = vmul.f32 %v1167, 0.2
          %v1200 = vmul.f32 %v1168, 0.2
          %v1201 = vmul.f32 %v1169, 0.2
          %v1202 = vmul.f32 %v1170, 0.2
          %v1203 = vmul.f32 %v1171, 0.2
          %v1204 = vsel %vm1172, %v1156, %v1188
          %v1205 = vsel %vm1173, %v1157, %v1189
          %v1206 = vsel %vm1174, %v1158, %v1190
          %v1207 = vsel %vm1175, %v1159, %v1191
          %v1208 = vsel %vm1176, %v1160, %v1192
          %v1209 = vsel %vm1177, %v1161, %v1193
          %v1210 = vsel %vm1178, %v1162, %v1194
          %v1211 = vsel %vm1179, %v1163, %v1195
          %v1212 = vsel %vm1180, %v1164, %v1196
          %v1213 = vsel %vm1181, %v1165, %v1197
          %v1214 = vsel %vm1182, %v1166, %v1198
          %v1215 = vsel %vm1183, %v1167, %v1199
          %v1216 = vsel %vm1184, %v1168, %v1200
          %v1217 = vsel %vm1185, %v1169, %v1201
          %v1218 = vsel %vm1186, %v1170, %v1202
          %v1219 = vsel %vm1187, %v1171, %v1203
          %v1220 = vpack.c.bf16 %v1206, %v1204
          %v1221 = vpack.c.bf16 %v1207, %v1205
          %v1222 = vpack.c.bf16 %v1210, %v1208
          %v1223 = vpack.c.bf16 %v1211, %v1209
          %v1224 = vpack.c.bf16 %v1214, %v1212
          %v1225 = vpack.c.bf16 %v1215, %v1213
          %v1226 = vpack.c.bf16 %v1218, %v1216
          %v1227 = vpack.c.bf16 %v1219, %v1217
          %v1236 = vunpack.c.l.b16 %v1220
          %v1237 = vunpack.c.l.b16 %v1221
          %v1238 = vunpack.c.h.b16 %v1220
          %v1239 = vunpack.c.h.b16 %v1221
          %v1240 = vunpack.c.l.b16 %v1222
          %v1241 = vunpack.c.l.b16 %v1223
          %v1242 = vunpack.c.h.b16 %v1222
          %v1243 = vunpack.c.h.b16 %v1223
          %v1244 = vunpack.c.l.b16 %v1224
          %v1245 = vunpack.c.l.b16 %v1225
          %v1246 = vunpack.c.h.b16 %v1224
          %v1247 = vunpack.c.h.b16 %v1225
          %v1248 = vunpack.c.l.b16 %v1226
          %v1249 = vunpack.c.l.b16 %v1227
          %v1250 = vunpack.c.h.b16 %v1226
          %v1251 = vunpack.c.h.b16 %v1227
          %v1252 = vpack.c.b16 %v1237, %v1236
          %v1253 = vpack.c.b16 %v1239, %v1238
          %v1254 = vpack.c.b16 %v1241, %v1240
          %v1255 = vpack.c.b16 %v1243, %v1242
          %v1256 = vpack.c.b16 %v1245, %v1244
          %v1257 = vpack.c.b16 %v1247, %v1246
          %v1258 = vpack.c.b16 %v1249, %v1248
          %v1259 = vpack.c.b16 %v1251, %v1250
          %1268 = vst [vmem:[%s318] sm:$0xff] %v1252
          %1269 = vst [vmem:[%s318 + $0x8] sm:$0xff] %v1253
          %1270 = vst [vmem:[%s318 + $0x10] sm:$0xff] %v1254
          %1271 = vst [vmem:[%s318 + $0x18] sm:$0xff] %v1255
          %1272 = vst [vmem:[%s318 + $0x20] sm:$0xff] %v1256
          %1273 = vst [vmem:[%s318 + $0x28] sm:$0xff] %v1257
          %1274 = vst [vmem:[%s318 + $0x30] sm:$0xff] %v1258
          %1275 = vst [vmem:[%s318 + $0x38] sm:$0xff] %v1259
        $region63: #{discriminator_forward.7} parent=50 // pred_fallthru
          _
        %s1276 = smul.u32 8, %s19
        %s1277 = smul.u32 2, %s20
        %p1278 = scmp.lt.s32.totalorder %s1276, 15
        %s1279 = scalar_select %p1278, %s1276, 15
        %p1280 = scmp.lt.s32.totalorder %s1277, 1
        %s1281 = scalar_select %p1280, %s1277, 1
        %s1282 = smul.addr %s1279, 2
        %s1283 = sadd.s32 %s1281, %s1282
        %s1284 = smul.addr %s1283, 4
        %s1285 = scalar_lea.vmem %s3, %s1284
        // Predicated region
        $region64: #{discriminator_forward.7} parent=50 // pred_check
          %p1286 = pneg %p135
        $region65: #{discriminator_forward.7} parent=50 // pred_check_branch
          %1288 = sbr.rel (%p1286) target = $region67
        $region66: #{discriminator_forward.7} parent=50 // pred_region
          %s1289 = smul.u32 8, %s19
          %s1290 = smul.u32 2, %s20
        $region67: #{discriminator_forward.7} parent=50 // pred_fallthru
          _
      $region51: #{discriminator_forward.7} parent=5 // pred_fallthru
        _
      %p1291 = scmp.le.s32.totalorder 2, %s9
      // Predicated region
      $region68: #{discriminator_forward.7} parent=5 // pred_check
        %p1292 = pneg %p1291
      $region69: #{discriminator_forward.7} parent=5 // pred_check_branch
        %1294 = sbr.rel (%p1292) target = $region71
      $region70: #{discriminator_forward.7} parent=5 // pred_region
        %s1295 = ssub.s32 %s9, 2
        // Predicated region
        $region72: #{discriminator_forward.7} parent=70 // pred_check
          %p1296 = pneg %p141
        $region73: #{discriminator_forward.7} parent=70 // pred_check_branch
          %1298 = sbr.rel (%p1296) target = $region75
        $region74: #{discriminator_forward.7} parent=70 // pred_region
          %s1299 = smul.u32 8, %s22
          %s1300 = smul.u32 2, %s23
          %p1301 = scmp.lt.s32.totalorder %s1299, 15
          %s1302 = scalar_select %p1301, %s1299, 15
          %p1303 = scmp.lt.s32.totalorder %s1300, 1
          %s1304 = scalar_select %p1303, %s1300, 1
          %s1305 = smul.addr %s1302, 2
          %s1306 = sadd.s32 %s1304, %s1305
          %s1307 = smul.addr %s1306, 4
          %s1308 = scalar_lea.vmem %s3, %s1307
        $region75: #{discriminator_forward.7} parent=70 // pred_fallthru
          _
      $region71: #{discriminator_forward.7} parent=5 // pred_fallthru
        _
    $region6: #{discriminator_forward.7} parent=1 // loop_footer
      %s13 = sadd.s32 1, %s9
    $region7: #{discriminator_forward.7} parent=1 // loop_footer_branch
      %8 = sbr.rel target = $region3
    $region8: #{discriminator_forward.7} parent=1 // loop_exit
      _

// kernel: discriminator_forward.8
$region0: #{discriminator_forward.8}
  #allocation0 [shape = 'u32[]', space=smem, size = 0x4, offset = 0x4, fixed_abs, tag = 'smem constant byte address 0x4 - core index']
  #allocation1 [shape = 'u32[144,128]{1,0:T(1,128)}', space=vmem, size = 0x12000, scoped, tag = 'internal scratch']
  #allocation2 [shape = 'f32[16,256]{1,0:T(8,128)}', space=vmem, size = 0x4000, scoped, tag = 'scratch operand']
  %s0 = inlined_call_operand.vmem [shape: bf16[32,4096], index: 0, kind: input, shape index: {}]
  %s1 = inlined_call_operand.vmem [shape: bf16[4096,512], index: 1, kind: input, shape index: {}]
  %s2 = inlined_call_operand.vmem [shape: f32[1,512], index: 2, kind: input, shape index: {}]
  %s3 = inlined_call_operand.vmem [shape: bf16[32,512], index: 3, kind: output, shape index: {}]
  %s4 = sld [smem:[#allocation0]]
  $region148: #{discriminator_forward.8} parent=0
    _
  %s6 = ssub.s32 1, %s4
  %s7 = scalar_select 0, %s6, %s4
  $region1: #{discriminator_forward.8} parent=0
    #allocation3 [shape = 'u8[32768]{0}', space=vmem, size = 0x8000, scoped, tag = 'input window, operand 0']
    #allocation4 [shape = 'u8[524288]{0}', space=vmem, size = 0x80000, scoped, tag = 'input window, operand 1']
    #allocation5 [shape = 'u8[16384]{0}', space=vmem, size = 0x4000, scoped, tag = 'output window, operand 0']
    loop: start=0, step=1, limit=34
    $region2: #{discriminator_forward.8} parent=1 // loop_pre_header
      _
    $region3: #{discriminator_forward.8} parent=1 // loop_header
      %s9 = sphi 0, %s13
      %p10 = scmp.ge.s32.totalorder %s9, 34
      %s16 = sphi 0, %s35
      %s17 = sphi 0, %s31
      %s18 = sphi 0, %s27
      %s19 = sphi 0, %s16
      %s20 = sphi 0, %s17
      %s21 = sphi 0, %s18
      %s22 = sphi 0, %s19
      %s23 = sphi 0, %s20
      %s24 = sphi 0, %s21
      %s40 = sphi 0, %s42
      %s43 = sphi 0, %s40
      %s44 = sphi 0, %s43
      %s60 = sphi 0, %s44
      %s68 = sphi 0, %s70
      %s71 = sphi 0, %s68
      %s72 = sphi 0, %s71
      %s88 = sphi 0, %s72
      %s94 = sphi 0, %s96
      %s97 = sphi 0, %s94
      %s98 = sphi 0, %s97
      %s114 = sphi 0, %s98
      %s122 = sphi 0, %s124
      %s125 = sphi 0, %s122
      %s126 = sphi 0, %s125
      %s142 = sphi 0, %s126
    $region4: #{discriminator_forward.8} parent=1 // loop_header_branch
      %12 = sbr.rel (%p10) target = $region8
    $region5: #{discriminator_forward.8} parent=1 // loop_body
      %s14 = ssub.s32 %s9, 1
      %s15 = ssub.s32 %s9, 2
      %s25 = sadd.s32 1, %s18
      %p26 = scmp.ge.s32.totalorder %s25, 8
      %s27 = scalar_select %p26, 0, %s25
      %s28 = sadd.s32 1, %s17
      %s29 = scalar_select %p26, %s28, %s17
      %p30 = scmp.ge.s32.totalorder %s29, 2
      %s31 = scalar_select %p30, 0, %s29
      %s32 = sadd.s32 1, %s16
      %s33 = scalar_select %p30, %s32, %s16
      %p34 = scmp.ge.s32.totalorder %s33, 2
      %s35 = scalar_select %p34, 0, %s33
      %s36 = ssub.s32 %s16, %s35
      %s37 = ssub.s32 %s18, %s27
      %s38 = sor.u32 %s36, %s37
      %p39 = scmp.eq.s32.totalorder %s38, 0
      %s41 = sadd.s32 %s40, 1
      %s42 = scalar_select %p39, %s40, %s41
      %p45 = pneg %p39
      %p46 = scmp.eq.s32.totalorder %s9, 31
      %p47 = por %p45, %p46
      %p48 = scmp.ne.s32.totalorder %s40, %s43
      %p49 = scmp.eq.s32.totalorder %s9, 0
      %p50 = por %p48, %p49
      %p51 = scmp.ne.s32.totalorder %s40, %s43
      %p52 = scmp.eq.s32.totalorder %s14, 31
      %p53 = por %p51, %p52
      %p54 = scmp.ne.s32.totalorder %s43, %s44
      %p55 = scmp.eq.s32.totalorder %s14, 0
      %p56 = por %p54, %p55
      %p57 = scmp.ne.s32.totalorder %s43, %s44
      %p58 = scmp.eq.s32.totalorder %s15, 31
      %p59 = por %p57, %p58
      %p61 = scmp.ne.s32.totalorder %s44, %s60
      %p62 = scmp.eq.s32.totalorder %s15, 0
      %p63 = por %p61, %p62
      %s64 = ssub.s32 %s18, %s27
      %s65 = ssub.s32 %s17, %s31
      %s66 = sor.u32 %s64, %s65
      %p67 = scmp.eq.s32.totalorder %s66, 0
      %s69 = sadd.s32 %s68, 1
      %s70 = scalar_select %p67, %s68, %s69
      %p73 = pneg %p67
      %p74 = scmp.eq.s32.totalorder %s9, 31
      %p75 = por %p73, %p74
      %p76 = scmp.ne.s32.totalorder %s68, %s71
      %p77 = scmp.eq.s32.totalorder %s9, 0
      %p78 = por %p76, %p77
      %p79 = scmp.ne.s32.totalorder %s68, %s71
      %p80 = scmp.eq.s32.totalorder %s14, 31
      %p81 = por %p79, %p80
      %p82 = scmp.ne.s32.totalorder %s71, %s72
      %p83 = scmp.eq.s32.totalorder %s14, 0
      %p84 = por %p82, %p83
      %p85 = scmp.ne.s32.totalorder %s71, %s72
      %p86 = scmp.eq.s32.totalorder %s15, 31
      %p87 = por %p85, %p86
      %p89 = scmp.ne.s32.totalorder %s72, %s88
      %p90 = scmp.eq.s32.totalorder %s15, 0
      %p91 = por %p89, %p90
      %s92 = ssub.s32 %s17, %s31
      %p93 = scmp.eq.s32.totalorder %s92, 0
      %s95 = sadd.s32 %s94, 1
      %s96 = scalar_select %p93, %s94, %s95
      %p99 = pneg %p93
      %p100 = scmp.eq.s32.totalorder %s9, 31
      %p101 = por %p99, %p100
      %p102 = scmp.ne.s32.totalorder %s94, %s97
      %p103 = scmp.eq.s32.totalorder %s9, 0
      %p104 = por %p102, %p103
      %p105 = scmp.ne.s32.totalorder %s94, %s97
      %p106 = scmp.eq.s32.totalorder %s14, 31
      %p107 = por %p105, %p106
      %p108 = scmp.ne.s32.totalorder %s97, %s98
      %p109 = scmp.eq.s32.totalorder %s14, 0
      %p110 = por %p108, %p109
      %p111 = scmp.ne.s32.totalorder %s97, %s98
      %p112 = scmp.eq.s32.totalorder %s15, 31
      %p113 = por %p111, %p112
      %p115 = scmp.ne.s32.totalorder %s98, %s114
      %p116 = scmp.eq.s32.totalorder %s15, 0
      %p117 = por %p115, %p116
      %s118 = ssub.s32 %s16, %s35
      %s119 = ssub.s32 %s17, %s31
      %s120 = sor.u32 %s118, %s119
      %p121 = scmp.eq.s32.totalorder %s120, 0
      %s123 = sadd.s32 %s122, 1
      %s124 = scalar_select %p121, %s122, %s123
      %p127 = pneg %p121
      %p128 = scmp.eq.s32.totalorder %s9, 31
      %p129 = por %p127, %p128
      %p130 = scmp.ne.s32.totalorder %s122, %s125
      %p131 = scmp.eq.s32.totalorder %s9, 0
      %p132 = por %p130, %p131
      %p133 = scmp.ne.s32.totalorder %s122, %s125
      %p134 = scmp.eq.s32.totalorder %s14, 31
      %p135 = por %p133, %p134
      %p136 = scmp.ne.s32.totalorder %s125, %s126
      %p137 = scmp.eq.s32.totalorder %s14, 0
      %p138 = por %p136, %p137
      %p139 = scmp.ne.s32.totalorder %s125, %s126
      %p140 = scmp.eq.s32.totalorder %s15, 31
      %p141 = por %p139, %p140
      %p143 = scmp.ne.s32.totalorder %s126, %s142
      %p144 = scmp.eq.s32.totalorder %s15, 0
      %p145 = por %p143, %p144
      %p146 = scmp.le.s32.totalorder 1, %s9
      %p147 = scmp.lt.s32.totalorder %s9, 33
      %p148 = pnand %p146, %p147
      %p149 = pneg %p148
      // Predicated region
      $region9: #{discriminator_forward.8} parent=5 // pred_check
        _
      $region10: #{discriminator_forward.8} parent=5 // pred_check_branch
        %151 = sbr.rel (%p148) target = $region12
      $region11: #{discriminator_forward.8} parent=5 // pred_region
        %s152 = ssub.s32 %s9, 1
      $region12: #{discriminator_forward.8} parent=5 // pred_fallthru
        _
      %p153 = scmp.lt.s32.totalorder %s9, 32
      // Predicated region
      $region13: #{discriminator_forward.8} parent=5 // pred_check
        %p154 = pneg %p153
      $region14: #{discriminator_forward.8} parent=5 // pred_check_branch
        %156 = sbr.rel (%p154) target = $region16
      $region15: #{discriminator_forward.8} parent=5 // pred_region
        // Predicated region
        $region17: #{discriminator_forward.8} parent=15 // pred_check
          %p157 = pneg %p50
        $region18: #{discriminator_forward.8} parent=15 // pred_check_branch
          %159 = sbr.rel (%p157) target = $region20
        $region19: #{discriminator_forward.8} parent=15 // pred_region
          %s160 = sand.u32 %s40, 1
          %s161 = sand.u32 %s40, 1
          %s162 = smul.addr %s161, 32
          %s163 = scalar_lea.vmem [#allocation3], %s162
          %s164 = smul.u32 2, %s16
          %s165 = smul.u32 4, %s18
          %s166 = smul.addr %s164, 32
          %s167 = sadd.s32 %s165, %s166
          %s168 = smul.addr %s167, 4
          %s169 = scalar_lea.vmem %s0, %s168
          // Predicated region
          $region21: #{discriminator_forward.8} parent=19 // pred_check
            _
          $region22: #{discriminator_forward.8} parent=19 // pred_check_branch
            %171 = sbr.rel (0) target = $region24
          $region23: #{discriminator_forward.8} parent=19 // pred_region
            // Predicated region
            $region25: #{discriminator_forward.8} parent=23 // pred_check
              _
            $region26: #{discriminator_forward.8} parent=23 // pred_check_branch
              %173 = sbr.rel (0) target = $region28
            $region27: #{discriminator_forward.8} parent=23 // pred_region
              loop: start=0, step=1, limit=1
              $region29: #{discriminator_forward.8} parent=27 // loop_pre_header
                _
              $region30: #{discriminator_forward.8} parent=27 // loop_header
                %s175 = sphi 0, %s179
                %p176 = scmp.ge.s32.totalorder %s175, 1
                %s180 = sphi %s169, %s169
                %s181 = sphi %s163, %s163
              $region31: #{discriminator_forward.8} parent=27 // loop_header_branch
                %178 = sbr.rel (%p176) target = $region35
              $region32: #{discriminator_forward.8} parent=27 // loop_body
                %v182 = vld [vmem:[%s180] sm:$0xff]
                %183 = vst [vmem:[%s181] sm:$0xff] %v182
                %v184 = vld [vmem:[%s180 + $0x8] sm:$0xff]
                %185 = vst [vmem:[%s181 + $0x8] sm:$0xff] %v184
                %v186 = vld [vmem:[%s180 + $0x80] sm:$0xff]
                %187 = vst [vmem:[%s181 + $0x10] sm:$0xff] %v186
                %v188 = vld [vmem:[%s180 + $0x88] sm:$0xff]
                %189 = vst [vmem:[%s181 + $0x18] sm:$0xff] %v188
              $region33: #{discriminator_forward.8} parent=27 // loop_footer
                %s179 = sadd.s32 1, %s175
              $region34: #{discriminator_forward.8} parent=27 // loop_footer_branch
                %174 = sbr.rel target = $region30
              $region35: #{discriminator_forward.8} parent=27 // loop_exit
                _
            $region28: #{discriminator_forward.8} parent=23 // pred_fallthru
              _
            // Predicated region
            $region36: #{discriminator_forward.8} parent=23 // pred_check
              _
            $region37: #{discriminator_forward.8} parent=23 // pred_check_branch
              %191 = sbr.rel target = $region39
            $region38: #{discriminator_forward.8} parent=23 // pred_region
              _
            $region39: #{discriminator_forward.8} parent=23 // pred_fallthru
              _
          $region24: #{discriminator_forward.8} parent=19 // pred_fallthru
            _
          %192 = vnop
        $region20: #{discriminator_forward.8} parent=15 // pred_fallthru
          _
        // Predicated region
        $region40: #{discriminator_forward.8} parent=15 // pred_check
          %p193 = pneg %p78
        $region41: #{discriminator_forward.8} parent=15 // pred_check_branch
          %195 = sbr.rel (%p193) target = $region43
        $region42: #{discriminator_forward.8} parent=15 // pred_region
          %s196 = sand.u32 %s68, 1
          %s197 = sand.u32 %s68, 1
          %s198 = smul.addr %s197, 512
          %s199 = scalar_lea.vmem [#allocation4], %s198
          %s200 = smul.u32 64, %s18
          %s201 = smul.u32 2, %s17
          %s202 = smul.addr %s200, 4
          %s203 = sadd.s32 %s201, %s202
          %s204 = smul.addr %s203, 4
          %s205 = scalar_lea.vmem %s1, %s204
          // Predicated region
          $region44: #{discriminator_forward.8} parent=42 // pred_check
            _
          $region45: #{discriminator_forward.8} parent=42 // pred_check_branch
            %207 = sbr.rel (0) target = $region47
          $region46: #{discriminator_forward.8} parent=42 // pred_region
            // Predicated region
            $region48: #{discriminator_forward.8} parent=46 // pred_check
              _
            $region49: #{discriminator_forward.8} parent=46 // pred_check_branch
              %209 = sbr.rel (0) target = $region51
            $region50: #{discriminator_forward.8} parent=46 // pred_region
              // Predicated region
              $region63: #{discriminator_forward.8} parent=50 // pred_check
                _
              $region64: #{discriminator_forward.8} parent=50 // pred_check_branch
                %351 = sbr.rel (0) target = $region66
              $region65: #{discriminator_forward.8} parent=50 // pred_region
                loop: start=0, step=1, limit=1
                $region67: #{discriminator_forward.8} parent=65 // loop_pre_header
                  _
                $region68: #{discriminator_forward.8} parent=65 // loop_header
                  %s353 = sphi 0, %s357
                  %p354 = scmp.ge.s32.totalorder %s353, 1
                  %s358 = sphi %s205, %s205
                  %s359 = sphi %s199, %s199
                $region69: #{discriminator_forward.8} parent=65 // loop_header_branch
                  %356 = sbr.rel (%p354) target = $region73
                $region70: #{discriminator_forward.8} parent=65 // loop_body
                  %v360 = vld [vmem:[%s358] sm:$0xff]
                  %361 = vst [vmem:[%s359] sm:$0xff] %v360
                  %v362 = vld [vmem:[%s358 + $0x10] sm:$0xff]
                  %363 = vst [vmem:[%s359 + $0x8] sm:$0xff] %v362
                  %v364 = vld [vmem:[%s358 + $0x20] sm:$0xff]
                  %365 = vst [vmem:[%s359 + $0x10] sm:$0xff] %v364
                  %v366 = vld [vmem:[%s358 + $0x30] sm:$0xff]
                  %367 = vst [vmem:[%s359 + $0x18] sm:$0xff] %v366
                  %v368 = vld [vmem:[%s358 + $0x40] sm:$0xff]
                  %369 = vst [vmem:[%s359 + $0x20] sm:$0xff] %v368
                  %v370 = vld [vmem:[%s358 + $0x50] sm:$0xff]
                  %371 = vst [vmem:[%s359 + $0x28] sm:$0xff] %v370
                  %v372 = vld [vmem:[%s358 + $0x60] sm:$0xff]
                  %373 = vst [vmem:[%s359 + $0x30] sm:$0xff] %v372
                  %v374 = vld [vmem:[%s358 + $0x70] sm:$0xff]
                  %375 = vst [vmem:[%s359 + $0x38] sm:$0xff] %v374
                  %v376 = vld [vmem:[%s358 + $0x80] sm:$0xff]
                  %377 = vst [vmem:[%s359 + $0x40] sm:$0xff] %v376
                  %v378 = vld [vmem:[%s358 + $0x90] sm:$0xff]
                  %379 = vst [vmem:[%s359 + $0x48] sm:$0xff] %v378
                  %v380 = vld [vmem:[%s358 + $0xa0] sm:$0xff]
                  %381 = vst [vmem:[%s359 + $0x50] sm:$0xff] %v380
                  %v382 = vld [vmem:[%s358 + $0xb0] sm:$0xff]
                  %383 = vst [vmem:[%s359 + $0x58] sm:$0xff] %v382
                  %v384 = vld [vmem:[%s358 + $0xc0] sm:$0xff]
                  %385 = vst [vmem:[%s359 + $0x60] sm:$0xff] %v384
                  %v386 = vld [vmem:[%s358 + $0xd0] sm:$0xff]
                  %387 = vst [vmem:[%s359 + $0x68] sm:$0xff] %v386
                  %v388 = vld [vmem:[%s358 + $0xe0] sm:$0xff]
                  %389 = vst [vmem:[%s359 + $0x70] sm:$0xff] %v388
                  %v390 = vld [vmem:[%s358 + $0xf0] sm:$0xff]
                  %391 = vst [vmem:[%s359 + $0x78] sm:$0xff] %v390
                  %v392 = vld [vmem:[%s358 + $0x100] sm:$0xff]
                  %393 = vst [vmem:[%s359 + $0x80] sm:$0xff] %v392
                  %v394 = vld [vmem:[%s358 + $0x110] sm:$0xff]
                  %395 = vst [vmem:[%s359 + $0x88] sm:$0xff] %v394
                  %v396 = vld [vmem:[%s358 + $0x120] sm:$0xff]
                  %397 = vst [vmem:[%s359 + $0x90] sm:$0xff] %v396
                  %v398 = vld [vmem:[%s358 + $0x130] sm:$0xff]
                  %399 = vst [vmem:[%s359 + $0x98] sm:$0xff] %v398
                  %v400 = vld [vmem:[%s358 + $0x140] sm:$0xff]
                  %401 = vst [vmem:[%s359 + $0xa0] sm:$0xff] %v400
                  %v402 = vld [vmem:[%s358 + $0x150] sm:$0xff]
                  %403 = vst [vmem:[%s359 + $0xa8] sm:$0xff] %v402
                  %v404 = vld [vmem:[%s358 + $0x160] sm:$0xff]
                  %405 = vst [vmem:[%s359 + $0xb0] sm:$0xff] %v404
                  %v406 = vld [vmem:[%s358 + $0x170] sm:$0xff]
                  %407 = vst [vmem:[%s359 + $0xb8] sm:$0xff] %v406
                  %v408 = vld [vmem:[%s358 + $0x180] sm:$0xff]
                  %409 = vst [vmem:[%s359 + $0xc0] sm:$0xff] %v408
                  %v410 = vld [vmem:[%s358 + $0x190] sm:$0xff]
                  %411 = vst [vmem:[%s359 + $0xc8] sm:$0xff] %v410
                  %v412 = vld [vmem:[%s358 + $0x1a0] sm:$0xff]
                  %413 = vst [vmem:[%s359 + $0xd0] sm:$0xff] %v412
                  %v414 = vld [vmem:[%s358 + $0x1b0] sm:$0xff]
                  %415 = vst [vmem:[%s359 + $0xd8] sm:$0xff] %v414
                  %v416 = vld [vmem:[%s358 + $0x1c0] sm:$0xff]
                  %417 = vst [vmem:[%s359 + $0xe0] sm:$0xff] %v416
                  %v418 = vld [vmem:[%s358 + $0x1d0] sm:$0xff]
                  %419 = vst [vmem:[%s359 + $0xe8] sm:$0xff] %v418
                  %v420 = vld [vmem:[%s358 + $0x1e0] sm:$0xff]
                  %421 = vst [vmem:[%s359 + $0xf0] sm:$0xff] %v420
                  %v422 = vld [vmem:[%s358 + $0x1f0] sm:$0xff]
                  %423 = vst [vmem:[%s359 + $0xf8] sm:$0xff] %v422
                  %v424 = vld [vmem:[%s358 + $0x200] sm:$0xff]
                  %425 = vst [vmem:[%s359 + $0x100] sm:$0xff] %v424
                  %v426 = vld [vmem:[%s358 + $0x210] sm:$0xff]
                  %427 = vst [vmem:[%s359 + $0x108] sm:$0xff] %v426
                  %v428 = vld [vmem:[%s358 + $0x220] sm:$0xff]
                  %429 = vst [vmem:[%s359 + $0x110] sm:$0xff] %v428
                  %v430 = vld [vmem:[%s358 + $0x230] sm:$0xff]
                  %431 = vst [vmem:[%s359 + $0x118] sm:$0xff] %v430
                  %v432 = vld [vmem:[%s358 + $0x240] sm:$0xff]
                  %433 = vst [vmem:[%s359 + $0x120] sm:$0xff] %v432
                  %v434 = vld [vmem:[%s358 + $0x250] sm:$0xff]
                  %435 = vst [vmem:[%s359 + $0x128] sm:$0xff] %v434
                  %v436 = vld [vmem:[%s358 + $0x260] sm:$0xff]
                  %437 = vst [vmem:[%s359 + $0x130] sm:$0xff] %v436
                  %v438 = vld [vmem:[%s358 + $0x270] sm:$0xff]
                  %439 = vst [vmem:[%s359 + $0x138] sm:$0xff] %v438
                  %v440 = vld [vmem:[%s358 + $0x280] sm:$0xff]
                  %441 = vst [vmem:[%s359 + $0x140] sm:$0xff] %v440
                  %v442 = vld [vmem:[%s358 + $0x290] sm:$0xff]
                  %443 = vst [vmem:[%s359 + $0x148] sm:$0xff] %v442
                  %v444 = vld [vmem:[%s358 + $0x2a0] sm:$0xff]
                  %445 = vst [vmem:[%s359 + $0x150] sm:$0xff] %v444
                  %v446 = vld [vmem:[%s358 + $0x2b0] sm:$0xff]
                  %447 = vst [vmem:[%s359 + $0x158] sm:$0xff] %v446
                  %v448 = vld [vmem:[%s358 + $0x2c0] sm:$0xff]
                  %449 = vst [vmem:[%s359 + $0x160] sm:$0xff] %v448
                  %v450 = vld [vmem:[%s358 + $0x2d0] sm:$0xff]
                  %451 = vst [vmem:[%s359 + $0x168] sm:$0xff] %v450
                  %v452 = vld [vmem:[%s358 + $0x2e0] sm:$0xff]
                  %453 = vst [vmem:[%s359 + $0x170] sm:$0xff] %v452
                  %v454 = vld [vmem:[%s358 + $0x2f0] sm:$0xff]
                  %455 = vst [vmem:[%s359 + $0x178] sm:$0xff] %v454
                  %v456 = vld [vmem:[%s358 + $0x300] sm:$0xff]
                  %457 = vst [vmem:[%s359 + $0x180] sm:$0xff] %v456
                  %v458 = vld [vmem:[%s358 + $0x310] sm:$0xff]
                  %459 = vst [vmem:[%s359 + $0x188] sm:$0xff] %v458
                  %v460 = vld [vmem:[%s358 + $0x320] sm:$0xff]
                  %461 = vst [vmem:[%s359 + $0x190] sm:$0xff] %v460
                  %v462 = vld [vmem:[%s358 + $0x330] sm:$0xff]
                  %463 = vst [vmem:[%s359 + $0x198] sm:$0xff] %v462
                  %v464 = vld [vmem:[%s358 + $0x340] sm:$0xff]
                  %465 = vst [vmem:[%s359 + $0x1a0] sm:$0xff] %v464
                  %v466 = vld [vmem:[%s358 + $0x350] sm:$0xff]
                  %467 = vst [vmem:[%s359 + $0x1a8] sm:$0xff] %v466
                  %v468 = vld [vmem:[%s358 + $0x360] sm:$0xff]
                  %469 = vst [vmem:[%s359 + $0x1b0] sm:$0xff] %v468
                  %v470 = vld [vmem:[%s358 + $0x370] sm:$0xff]
                  %471 = vst [vmem:[%s359 + $0x1b8] sm:$0xff] %v470
                  %v472 = vld [vmem:[%s358 + $0x380] sm:$0xff]
                  %473 = vst [vmem:[%s359 + $0x1c0] sm:$0xff] %v472
                  %v474 = vld [vmem:[%s358 + $0x390] sm:$0xff]
                  %475 = vst [vmem:[%s359 + $0x1c8] sm:$0xff] %v474
                  %v476 = vld [vmem:[%s358 + $0x3a0] sm:$0xff]
                  %477 = vst [vmem:[%s359 + $0x1d0] sm:$0xff] %v476
                  %v478 = vld [vmem:[%s358 + $0x3b0] sm:$0xff]
                  %479 = vst [vmem:[%s359 + $0x1d8] sm:$0xff] %v478
                  %v480 = vld [vmem:[%s358 + $0x3c0] sm:$0xff]
                  %481 = vst [vmem:[%s359 + $0x1e0] sm:$0xff] %v480
                  %v482 = vld [vmem:[%s358 + $0x3d0] sm:$0xff]
                  %483 = vst [vmem:[%s359 + $0x1e8] sm:$0xff] %v482
                  %v484 = vld [vmem:[%s358 + $0x3e0] sm:$0xff]
                  %485 = vst [vmem:[%s359 + $0x1f0] sm:$0xff] %v484
                  %v486 = vld [vmem:[%s358 + $0x3f0] sm:$0xff]
                  %487 = vst [vmem:[%s359 + $0x1f8] sm:$0xff] %v486
                $region71: #{discriminator_forward.8} parent=65 // loop_footer
                  %s357 = sadd.s32 1, %s353
                $region72: #{discriminator_forward.8} parent=65 // loop_footer_branch
                  %352 = sbr.rel target = $region68
                $region73: #{discriminator_forward.8} parent=65 // loop_exit
                  _
              $region66: #{discriminator_forward.8} parent=50 // pred_fallthru
                _
              // Predicated region
              $region74: #{discriminator_forward.8} parent=50 // pred_check
                _
              $region75: #{discriminator_forward.8} parent=50 // pred_check_branch
                %489 = sbr.rel target = $region77
              $region76: #{discriminator_forward.8} parent=50 // pred_region
                _
              $region77: #{discriminator_forward.8} parent=50 // pred_fallthru
                _
            $region51: #{discriminator_forward.8} parent=46 // pred_fallthru
              _
            // Predicated region
            $region52: #{discriminator_forward.8} parent=46 // pred_check
              _
            $region53: #{discriminator_forward.8} parent=46 // pred_check_branch
              %211 = sbr.rel target = $region55
            $region54: #{discriminator_forward.8} parent=46 // pred_region
              %s213 = ssub.s32 256, 1
              loop: start=0, step=1, limit=1
              $region56: #{discriminator_forward.8} parent=54 // loop_pre_header
                _
              $region57: #{discriminator_forward.8} parent=54 // loop_header
                %s215 = sphi 0, %s219
                %p216 = scmp.ge.s32.totalorder %s215, 1
                %s220 = sphi %s205, %s205
                %s221 = sphi %s199, %s199
              $region58: #{discriminator_forward.8} parent=54 // loop_header_branch
                %218 = sbr.rel (%p216) target = $region62
              $region59: #{discriminator_forward.8} parent=54 // loop_body
                %v222 = vld [vmem:[%s220] sm:%s213]
                %223 = vst [vmem:[%s221] sm:%s213] %v222
                %v224 = vld [vmem:[%s220 + $0x10] sm:%s213]
                %225 = vst [vmem:[%s221 + $0x8] sm:%s213] %v224
                %v226 = vld [vmem:[%s220 + $0x20] sm:%s213]
                %227 = vst [vmem:[%s221 + $0x10] sm:%s213] %v226
                %v228 = vld [vmem:[%s220 + $0x30] sm:%s213]
                %229 = vst [vmem:[%s221 + $0x18] sm:%s213] %v228
                %v230 = vld [vmem:[%s220 + $0x40] sm:%s213]
                %231 = vst [vmem:[%s221 + $0x20] sm:%s213] %v230
                %v232 = vld [vmem:[%s220 + $0x50] sm:%s213]
                %233 = vst [vmem:[%s221 + $0x28] sm:%s213] %v232
                %v234 = vld [vmem:[%s220 + $0x60] sm:%s213]
                %235 = vst [vmem:[%s221 + $0x30] sm:%s213] %v234
                %v236 = vld [vmem:[%s220 + $0x70] sm:%s213]
                %237 = vst [vmem:[%s221 + $0x38] sm:%s213] %v236
                %v238 = vld [vmem:[%s220 + $0x80] sm:%s213]
                %239 = vst [vmem:[%s221 + $0x40] sm:%s213] %v238
                %v240 = vld [vmem:[%s220 + $0x90] sm:%s213]
                %241 = vst [vmem:[%s221 + $0x48] sm:%s213] %v240
                %v242 = vld [vmem:[%s220 + $0xa0] sm:%s213]
                %243 = vst [vmem:[%s221 + $0x50] sm:%s213] %v242
                %v244 = vld [vmem:[%s220 + $0xb0] sm:%s213]
                %245 = vst [vmem:[%s221 + $0x58] sm:%s213] %v244
                %v246 = vld [vmem:[%s220 + $0xc0] sm:%s213]
                %247 = vst [vmem:[%s221 + $0x60] sm:%s213] %v246
                %v248 = vld [vmem:[%s220 + $0xd0] sm:%s213]
                %249 = vst [vmem:[%s221 + $0x68] sm:%s213] %v248
                %v250 = vld [vmem:[%s220 + $0xe0] sm:%s213]
                %251 = vst [vmem:[%s221 + $0x70] sm:%s213] %v250
                %v252 = vld [vmem:[%s220 + $0xf0] sm:%s213]
                %253 = vst [vmem:[%s221 + $0x78] sm:%s213] %v252
                %v254 = vld [vmem:[%s220 + $0x100] sm:%s213]
                %255 = vst [vmem:[%s221 + $0x80] sm:%s213] %v254
                %v256 = vld [vmem:[%s220 + $0x110] sm:%s213]
                %257 = vst [vmem:[%s221 + $0x88] sm:%s213] %v256
                %v258 = vld [vmem:[%s220 + $0x120] sm:%s213]
                %259 = vst [vmem:[%s221 + $0x90] sm:%s213] %v258
                %v260 = vld [vmem:[%s220 + $0x130] sm:%s213]
                %261 = vst [vmem:[%s221 + $0x98] sm:%s213] %v260
                %v262 = vld [vmem:[%s220 + $0x140] sm:%s213]
                %263 = vst [vmem:[%s221 + $0xa0] sm:%s213] %v262
                %v264 = vld [vmem:[%s220 + $0x150] sm:%s213]
                %265 = vst [vmem:[%s221 + $0xa8] sm:%s213] %v264
                %v266 = vld [vmem:[%s220 + $0x160] sm:%s213]
                %267 = vst [vmem:[%s221 + $0xb0] sm:%s213] %v266
                %v268 = vld [vmem:[%s220 + $0x170] sm:%s213]
                %269 = vst [vmem:[%s221 + $0xb8] sm:%s213] %v268
                %v270 = vld [vmem:[%s220 + $0x180] sm:%s213]
                %271 = vst [vmem:[%s221 + $0xc0] sm:%s213] %v270
                %v272 = vld [vmem:[%s220 + $0x190] sm:%s213]
                %273 = vst [vmem:[%s221 + $0xc8] sm:%s213] %v272
                %v274 = vld [vmem:[%s220 + $0x1a0] sm:%s213]
                %275 = vst [vmem:[%s221 + $0xd0] sm:%s213] %v274
                %v276 = vld [vmem:[%s220 + $0x1b0] sm:%s213]
                %277 = vst [vmem:[%s221 + $0xd8] sm:%s213] %v276
                %v278 = vld [vmem:[%s220 + $0x1c0] sm:%s213]
                %279 = vst [vmem:[%s221 + $0xe0] sm:%s213] %v278
                %v280 = vld [vmem:[%s220 + $0x1d0] sm:%s213]
                %281 = vst [vmem:[%s221 + $0xe8] sm:%s213] %v280
                %v282 = vld [vmem:[%s220 + $0x1e0] sm:%s213]
                %283 = vst [vmem:[%s221 + $0xf0] sm:%s213] %v282
                %v284 = vld [vmem:[%s220 + $0x1f0] sm:%s213]
                %285 = vst [vmem:[%s221 + $0xf8] sm:%s213] %v284
                %v286 = vld [vmem:[%s220 + $0x200] sm:%s213]
                %287 = vst [vmem:[%s221 + $0x100] sm:%s213] %v286
                %v288 = vld [vmem:[%s220 + $0x210] sm:%s213]
                %289 = vst [vmem:[%s221 + $0x108] sm:%s213] %v288
                %v290 = vld [vmem:[%s220 + $0x220] sm:%s213]
                %291 = vst [vmem:[%s221 + $0x110] sm:%s213] %v290
                %v292 = vld [vmem:[%s220 + $0x230] sm:%s213]
                %293 = vst [vmem:[%s221 + $0x118] sm:%s213] %v292
                %v294 = vld [vmem:[%s220 + $0x240] sm:%s213]
                %295 = vst [vmem:[%s221 + $0x120] sm:%s213] %v294
                %v296 = vld [vmem:[%s220 + $0x250] sm:%s213]
                %297 = vst [vmem:[%s221 + $0x128] sm:%s213] %v296
                %v298 = vld [vmem:[%s220 + $0x260] sm:%s213]
                %299 = vst [vmem:[%s221 + $0x130] sm:%s213] %v298
                %v300 = vld [vmem:[%s220 + $0x270] sm:%s213]
                %301 = vst [vmem:[%s221 + $0x138] sm:%s213] %v300
                %v302 = vld [vmem:[%s220 + $0x280] sm:%s213]
                %303 = vst [vmem:[%s221 + $0x140] sm:%s213] %v302
                %v304 = vld [vmem:[%s220 + $0x290] sm:%s213]
                %305 = vst [vmem:[%s221 + $0x148] sm:%s213] %v304
                %v306 = vld [vmem:[%s220 + $0x2a0] sm:%s213]
                %307 = vst [vmem:[%s221 + $0x150] sm:%s213] %v306
                %v308 = vld [vmem:[%s220 + $0x2b0] sm:%s213]
                %309 = vst [vmem:[%s221 + $0x158] sm:%s213] %v308
                %v310 = vld [vmem:[%s220 + $0x2c0] sm:%s213]
                %311 = vst [vmem:[%s221 + $0x160] sm:%s213] %v310
                %v312 = vld [vmem:[%s220 + $0x2d0] sm:%s213]
                %313 = vst [vmem:[%s221 + $0x168] sm:%s213] %v312
                %v314 = vld [vmem:[%s220 + $0x2e0] sm:%s213]
                %315 = vst [vmem:[%s221 + $0x170] sm:%s213] %v314
                %v316 = vld [vmem:[%s220 + $0x2f0] sm:%s213]
                %317 = vst [vmem:[%s221 + $0x178] sm:%s213] %v316
                %v318 = vld [vmem:[%s220 + $0x300] sm:%s213]
                %319 = vst [vmem:[%s221 + $0x180] sm:%s213] %v318
                %v320 = vld [vmem:[%s220 + $0x310] sm:%s213]
                %321 = vst [vmem:[%s221 + $0x188] sm:%s213] %v320
                %v322 = vld [vmem:[%s220 + $0x320] sm:%s213]
                %323 = vst [vmem:[%s221 + $0x190] sm:%s213] %v322
                %v324 = vld [vmem:[%s220 + $0x330] sm:%s213]
                %325 = vst [vmem:[%s221 + $0x198] sm:%s213] %v324
                %v326 = vld [vmem:[%s220 + $0x340] sm:%s213]
                %327 = vst [vmem:[%s221 + $0x1a0] sm:%s213] %v326
                %v328 = vld [vmem:[%s220 + $0x350] sm:%s213]
                %329 = vst [vmem:[%s221 + $0x1a8] sm:%s213] %v328
                %v330 = vld [vmem:[%s220 + $0x360] sm:%s213]
                %331 = vst [vmem:[%s221 + $0x1b0] sm:%s213] %v330
                %v332 = vld [vmem:[%s220 + $0x370] sm:%s213]
                %333 = vst [vmem:[%s221 + $0x1b8] sm:%s213] %v332
                %v334 = vld [vmem:[%s220 + $0x380] sm:%s213]
                %335 = vst [vmem:[%s221 + $0x1c0] sm:%s213] %v334
                %v336 = vld [vmem:[%s220 + $0x390] sm:%s213]
                %337 = vst [vmem:[%s221 + $0x1c8] sm:%s213] %v336
                %v338 = vld [vmem:[%s220 + $0x3a0] sm:%s213]
                %339 = vst [vmem:[%s221 + $0x1d0] sm:%s213] %v338
                %v340 = vld [vmem:[%s220 + $0x3b0] sm:%s213]
                %341 = vst [vmem:[%s221 + $0x1d8] sm:%s213] %v340
                %v342 = vld [vmem:[%s220 + $0x3c0] sm:%s213]
                %343 = vst [vmem:[%s221 + $0x1e0] sm:%s213] %v342
                %v344 = vld [vmem:[%s220 + $0x3d0] sm:%s213]
                %345 = vst [vmem:[%s221 + $0x1e8] sm:%s213] %v344
                %v346 = vld [vmem:[%s220 + $0x3e0] sm:%s213]
                %347 = vst [vmem:[%s221 + $0x1f0] sm:%s213] %v346
                %v348 = vld [vmem:[%s220 + $0x3f0] sm:%s213]
                %349 = vst [vmem:[%s221 + $0x1f8] sm:%s213] %v348
              $region60: #{discriminator_forward.8} parent=54 // loop_footer
                %s219 = sadd.s32 1, %s215
              $region61: #{discriminator_forward.8} parent=54 // loop_footer_branch
                %214 = sbr.rel target = $region57
              $region62: #{discriminator_forward.8} parent=54 // loop_exit
                _
            $region55: #{discriminator_forward.8} parent=46 // pred_fallthru
              _
          $region47: #{discriminator_forward.8} parent=42 // pred_fallthru
            _
          %490 = vnop
        $region43: #{discriminator_forward.8} parent=15 // pred_fallthru
          _
        // Predicated region
        $region78: #{discriminator_forward.8} parent=15 // pred_check
          %p491 = pneg %p104
        $region79: #{discriminator_forward.8} parent=15 // pred_check_branch
          %493 = sbr.rel (%p491) target = $region81
        $region80: #{discriminator_forward.8} parent=15 // pred_region
          %s494 = smul.u32 2, %s17
          %p495 = scmp.lt.s32.totalorder %s494, 3
          %s496 = scalar_select %p495, %s494, 3
          %s497 = scalar_lea.vmem %s2, %s496
          %s498 = smul.u32 2, %s17
        $region81: #{discriminator_forward.8} parent=15 // pred_fallthru
          _
      $region16: #{discriminator_forward.8} parent=5 // pred_fallthru
        _
      %p499 = scmp.le.s32.totalorder 1, %s9
      %p500 = scmp.lt.s32.totalorder %s9, 33
      %p501 = pnand %p499, %p500
      %p502 = pneg %p501
      // Predicated region
      $region82: #{discriminator_forward.8} parent=5 // pred_check
        _
      $region83: #{discriminator_forward.8} parent=5 // pred_check_branch
        %504 = sbr.rel (%p501) target = $region85
      $region84: #{discriminator_forward.8} parent=5 // pred_region
        %s505 = ssub.s32 %s9, 1
        %s506 = sand.u32 %s43, 1
        %s507 = sand.u32 %s43, 1
        %s508 = smul.addr %s507, 32
        %s509 = scalar_lea.vmem [#allocation3], %s508
        // Predicated region
        $region86: #{discriminator_forward.8} parent=84 // pred_check
          %p510 = pneg %p56
        $region87: #{discriminator_forward.8} parent=84 // pred_check_branch
          %512 = sbr.rel (%p510) target = $region89
        $region88: #{discriminator_forward.8} parent=84 // pred_region
          _
        $region89: #{discriminator_forward.8} parent=84 // pred_fallthru
          _
        %s513 = sand.u32 %s71, 1
        %s514 = sand.u32 %s71, 1
        %s515 = smul.addr %s514, 512
        %s516 = scalar_lea.vmem [#allocation4], %s515
        // Predicated region
        $region90: #{discriminator_forward.8} parent=84 // pred_check
          %p517 = pneg %p84
        $region91: #{discriminator_forward.8} parent=84 // pred_check_branch
          %519 = sbr.rel (%p517) target = $region93
        $region92: #{discriminator_forward.8} parent=84 // pred_region
          _
        $region93: #{discriminator_forward.8} parent=84 // pred_fallthru
          _
        %s520 = sand.u32 %s43, 1
        %s521 = sand.u32 %s43, 1
        %s522 = smul.addr %s521, 32
        %s523 = scalar_lea.vmem [#allocation3], %s522
        %p524 = pneg %p56
        %p525 = pneg %p53
        %s526 = sand.u32 %s71, 1
        %s527 = sand.u32 %s71, 1
        %s528 = smul.addr %s527, 512
        %s529 = scalar_lea.vmem [#allocation4], %s528
        %p530 = pneg %p84
        %p531 = pneg %p81
        %s532 = smul.u32 2, %s20
        %p533 = scmp.lt.s32.totalorder %s532, 3
        %s534 = scalar_select %p533, %s532, 3
        %s535 = scalar_lea.vmem %s2, %s534
        %p536 = pneg %p110
        %p537 = pneg %p107
        %p538 = pneg %p138
        %p539 = pneg %p135
        %s540 = sand.u32 %s125, 1
        %s541 = sand.u32 %s125, 1
        %s542 = smul.addr %s541, 16
        %s543 = scalar_lea.vmem [#allocation5], %s542
        %s544 = smul.u32 2, %s19
        %s545 = smul.u32 4, %s21
        %s546 = smul.u32 64, %s21
        %s547 = smul.u32 2, %s20
        %s548 = smul.u32 2, %s20
        %p549 = scmp.lt.s32.totalorder %s548, 3
        %s550 = scalar_select %p549, %s548, 3
        %s551 = scalar_lea.vmem %s2, %s550
        %s552 = smul.u32 2, %s20
        %s553 = smul.u32 2, %s19
        %s554 = smul.u32 2, %s20
        %p555 = scmp.eq.s32.totalorder %s21, 0
        // Predicated region
        $region94: #{discriminator_forward.8} parent=84 // pred_check
          %p556 = pneg %p555
        $region95: #{discriminator_forward.8} parent=84 // pred_check_branch
          %558 = sbr.rel (%p556) target = $region97
        $region96: #{discriminator_forward.8} parent=84 // pred_region
          %559 = vst [vmem:[#allocation2] sm:$0xff] 0.0
          %560 = vst [vmem:[#allocation2 + $0x8] sm:$0xff] 0.0
          %561 = vst [vmem:[#allocation2 + $0x10] sm:$0xff] 0.0
          %562 = vst [vmem:[#allocation2 + $0x18] sm:$0xff] 0.0
        $region97: #{discriminator_forward.8} parent=84 // pred_fallthru
          _
        %v563 = vld [vmem:[#allocation2] sm:$0xff]
        %v564 = vld [vmem:[#allocation2 + $0x8] sm:$0xff]
        %v565 = vld [vmem:[#allocation2 + $0x10] sm:$0xff]
        %v566 = vld [vmem:[#allocation2 + $0x18] sm:$0xff]
        %v567 = vld [vmem:[%s509] sm:$0xff]
        %v568 = vld [vmem:[%s509 + $0x8] sm:$0xff]
        %v569 = vld [vmem:[%s509 + $0x10] sm:$0xff]
        %v570 = vld [vmem:[%s509 + $0x18] sm:$0xff]
        %v571 = vld [vmem:[%s516] sm:$0xff]
        %v572 = vld [vmem:[%s516 + $0x8] sm:$0xff]
        %v573 = vld [vmem:[%s516 + $0x10] sm:$0xff]
        %v574 = vld [vmem:[%s516 + $0x18] sm:$0xff]
        %v575 = vld [vmem:[%s516 + $0x20] sm:$0xff]
        %v576 = vld [vmem:[%s516 + $0x28] sm:$0xff]
        %v577 = vld [vmem:[%s516 + $0x30] sm:$0xff]
        %v578 = vld [vmem:[%s516 + $0x38] sm:$0xff]
        %v579 = vld [vmem:[%s516 + $0x40] sm:$0xff]
        %v580 = vld [vmem:[%s516 + $0x48] sm:$0xff]
        %v581 = vld [vmem:[%s516 + $0x50] sm:$0xff]
        %v582 = vld [vmem:[%s516 + $0x58] sm:$0xff]
        %v583 = vld [vmem:[%s516 + $0x60] sm:$0xff]
        %v584 = vld [vmem:[%s516 + $0x68] sm:$0xff]
        %v585 = vld [vmem:[%s516 + $0x70] sm:$0xff]
        %v586 = vld [vmem:[%s516 + $0x78] sm:$0xff]
        %v587 = vld [vmem:[%s516 + $0x80] sm:$0xff]
        %v588 = vld [vmem:[%s516 + $0x88] sm:$0xff]
        %v589 = vld [vmem:[%s516 + $0x90] sm:$0xff]
        %v590 = vld [vmem:[%s516 + $0x98] sm:$0xff]
        %v591 = vld [vmem:[%s516 + $0xa0] sm:$0xff]
        %v592 = vld [vmem:[%s516 + $0xa8] sm:$0xff]
        %v593 = vld [vmem:[%s516 + $0xb0] sm:$0xff]
        %v594 = vld [vmem:[%s516 + $0xb8] sm:$0xff]
        %v595 = vld [vmem:[%s516 + $0xc0] sm:$0xff]
        %v596 = vld [vmem:[%s516 + $0xc8] sm:$0xff]
        %v597 = vld [vmem:[%s516 + $0xd0] sm:$0xff]
        %v598 = vld [vmem:[%s516 + $0xd8] sm:$0xff]
        %v599 = vld [vmem:[%s516 + $0xe0] sm:$0xff]
        %v600 = vld [vmem:[%s516 + $0xe8] sm:$0xff]
        %v601 = vld [vmem:[%s516 + $0xf0] sm:$0xff]
        %v602 = vld [vmem:[%s516 + $0xf8] sm:$0xff]
        %v603 = vld [vmem:[%s516 + $0x100] sm:$0xff]
        %v604 = vld [vmem:[%s516 + $0x108] sm:$0xff]
        %v605 = vld [vmem:[%s516 + $0x110] sm:$0xff]
        %v606 = vld [vmem:[%s516 + $0x118] sm:$0xff]
        %v607 = vld [vmem:[%s516 + $0x120] sm:$0xff]
        %v608 = vld [vmem:[%s516 + $0x128] sm:$0xff]
        %v609 = vld [vmem:[%s516 + $0x130] sm:$0xff]
        %v610 = vld [vmem:[%s516 + $0x138] sm:$0xff]
        %v611 = vld [vmem:[%s516 + $0x140] sm:$0xff]
        %v612 = vld [vmem:[%s516 + $0x148] sm:$0xff]
        %v613 = vld [vmem:[%s516 + $0x150] sm:$0xff]
        %v614 = vld [vmem:[%s516 + $0x158] sm:$0xff]
        %v615 = vld [vmem:[%s516 + $0x160] sm:$0xff]
        %v616 = vld [vmem:[%s516 + $0x168] sm:$0xff]
        %v617 = vld [vmem:[%s516 + $0x170] sm:$0xff]
        %v618 = vld [vmem:[%s516 + $0x178] sm:$0xff]
        %v619 = vld [vmem:[%s516 + $0x180] sm:$0xff]
        %v620 = vld [vmem:[%s516 + $0x188] sm:$0xff]
        %v621 = vld [vmem:[%s516 + $0x190] sm:$0xff]
        %v622 = vld [vmem:[%s516 + $0x198] sm:$0xff]
        %v623 = vld [vmem:[%s516 + $0x1a0] sm:$0xff]
        %v624 = vld [vmem:[%s516 + $0x1a8] sm:$0xff]
        %v625 = vld [vmem:[%s516 + $0x1b0] sm:$0xff]
        %v626 = vld [vmem:[%s516 + $0x1b8] sm:$0xff]
        %v627 = vld [vmem:[%s516 + $0x1c0] sm:$0xff]
        %v628 = vld [vmem:[%s516 + $0x1c8] sm:$0xff]
        %v629 = vld [vmem:[%s516 + $0x1d0] sm:$0xff]
        %v630 = vld [vmem:[%s516 + $0x1d8] sm:$0xff]
        %v631 = vld [vmem:[%s516 + $0x1e0] sm:$0xff]
        %v632 = vld [vmem:[%s516 + $0x1e8] sm:$0xff]
        %v633 = vld [vmem:[%s516 + $0x1f0] sm:$0xff]
        %v634 = vld [vmem:[%s516 + $0x1f8] sm:$0xff]
        %v639 = vunpack.c.l.b16 %v567
        %v640 = vunpack.c.h.b16 %v567
        %v641 = vunpack.c.l.b16 %v568
        %v642 = vunpack.c.h.b16 %v568
        %v643 = vunpack.c.l.b16 %v569
        %v644 = vunpack.c.h.b16 %v569
        %v645 = vunpack.c.l.b16 %v570
        %v646 = vunpack.c.h.b16 %v570
        %v647 = vpack.c.b16 %v643, %v639
        %v648 = vpack.c.b16 %v644, %v640
        %v649 = vpack.c.b16 %v645, %v641
        %v650 = vpack.c.b16 %v646, %v642
        %v719 = vunpack.c.l.b16 %v571
        %v720 = vunpack.c.h.b16 %v571
        %v721 = vunpack.c.l.b16 %v572
        %v722 = vunpack.c.h.b16 %v572
        %v723 = vunpack.c.l.b16 %v573
        %v724 = vunpack.c.h.b16 %v573
        %v725 = vunpack.c.l.b16 %v574
        %v726 = vunpack.c.h.b16 %v574
        %v727 = vunpack.c.l.b16 %v575
        %v728 = vunpack.c.h.b16 %v575
        %v729 = vunpack.c.l.b16 %v576
        %v730 = vunpack.c.h.b16 %v576
        %v731 = vunpack.c.l.b16 %v577
        %v732 = vunpack.c.h.b16 %v577
        %v733 = vunpack.c.l.b16 %v578
        %v734 = vunpack.c.h.b16 %v578
        %v735 = vunpack.c.l.b16 %v579
        %v736 = vunpack.c.h.b16 %v579
        %v737 = vunpack.c.l.b16 %v580
        %v738 = vunpack.c.h.b16 %v580
        %v739 = vunpack.c.l.b16 %v581
        %v740 = vunpack.c.h.b16 %v581
        %v741 = vunpack.c.l.b16 %v582
        %v742 = vunpack.c.h.b16 %v582
        %v743 = vunpack.c.l.b16 %v583
        %v744 = vunpack.c.h.b16 %v583
        %v745 = vunpack.c.l.b16 %v584
        %v746 = vunpack.c.h.b16 %v584
        %v747 = vunpack.c.l.b16 %v585
        %v748 = vunpack.c.h.b16 %v585
        %v749 = vunpack.c.l.b16 %v586
        %v750 = vunpack.c.h.b16 %v586
        %v751 = vunpack.c.l.b16 %v587
        %v752 = vunpack.c.h.b16 %v587
        %v753 = vunpack.c.l.b16 %v588
        %v754 = vunpack.c.h.b16 %v588
        %v755 = vunpack.c.l.b16 %v589
        %v756 = vunpack.c.h.b16 %v589
        %v757 = vunpack.c.l.b16 %v590
        %v758 = vunpack.c.h.b16 %v590
        %v759 = vunpack.c.l.b16 %v591
        %v760 = vunpack.c.h.b16 %v591
        %v761 = vunpack.c.l.b16 %v592
        %v762 = vunpack.c.h.b16 %v592
        %v763 = vunpack.c.l.b16 %v593
        %v764 = vunpack.c.h.b16 %v593
        %v765 = vunpack.c.l.b16 %v594
        %v766 = vunpack.c.h.b16 %v594
        %v767 = vunpack.c.l.b16 %v595
        %v768 = vunpack.c.h.b16 %v595
        %v769 = vunpack.c.l.b16 %v596
        %v770 = vunpack.c.h.b16 %v596
        %v771 = vunpack.c.l.b16 %v597
        %v772 = vunpack.c.h.b16 %v597
        %v773 = vunpack.c.l.b16 %v598
        %v774 = vunpack.c.h.b16 %v598
        %v775 = vunpack.c.l.b16 %v599
        %v776 = vunpack.c.h.b16 %v599
        %v777 = vunpack.c.l.b16 %v600
        %v778 = vunpack.c.h.b16 %v600
        %v779 = vunpack.c.l.b16 %v601
        %v780 = vunpack.c.h.b16 %v601
        %v781 = vunpack.c.l.b16 %v602
        %v782 = vunpack.c.h.b16 %v602
        %v783 = vunpack.c.l.b16 %v603
        %v784 = vunpack.c.h.b16 %v603
        %v785 = vunpack.c.l.b16 %v604
        %v786 = vunpack.c.h.b16 %v604
        %v787 = vunpack.c.l.b16 %v605
        %v788 = vunpack.c.h.b16 %v605
        %v789 = vunpack.c.l.b16 %v606
        %v790 = vunpack.c.h.b16 %v606
        %v791 = vunpack.c.l.b16 %v607
        %v792 = vunpack.c.h.b16 %v607
        %v793 = vunpack.c.l.b16 %v608
        %v794 = vunpack.c.h.b16 %v608
        %v795 = vunpack.c.l.b16 %v609
        %v796 = vunpack.c.h.b16 %v609
        %v797 = vunpack.c.l.b16 %v610
        %v798 = vunpack.c.h.b16 %v610
        %v799 = vunpack.c.l.b16 %v611
        %v800 = vunpack.c.h.b16 %v611
        %v801 = vunpack.c.l.b16 %v612
        %v802 = vunpack.c.h.b16 %v612
        %v803 = vunpack.c.l.b16 %v613
        %v804 = vunpack.c.h.b16 %v613
        %v805 = vunpack.c.l.b16 %v614
        %v806 = vunpack.c.h.b16 %v614
        %v807 = vunpack.c.l.b16 %v615
        %v808 = vunpack.c.h.b16 %v615
        %v809 = vunpack.c.l.b16 %v616
        %v810 = vunpack.c.h.b16 %v616
        %v811 = vunpack.c.l.b16 %v617
        %v812 = vunpack.c.h.b16 %v617
        %v813 = vunpack.c.l.b16 %v618
        %v814 = vunpack.c.h.b16 %v618
        %v815 = vunpack.c.l.b16 %v619
        %v816 = vunpack.c.h.b16 %v619
        %v817 = vunpack.c.l.b16 %v620
        %v818 = vunpack.c.h.b16 %v620
        %v819 = vunpack.c.l.b16 %v621
        %v820 = vunpack.c.h.b16 %v621
        %v821 = vunpack.c.l.b16 %v622
        %v822 = vunpack.c.h.b16 %v622
        %v823 = vunpack.c.l.b16 %v623
        %v824 = vunpack.c.h.b16 %v623
        %v825 = vunpack.c.l.b16 %v624
        %v826 = vunpack.c.h.b16 %v624
        %v827 = vunpack.c.l.b16 %v625
        %v828 = vunpack.c.h.b16 %v625
        %v829 = vunpack.c.l.b16 %v626
        %v830 = vunpack.c.h.b16 %v626
        %v831 = vunpack.c.l.b16 %v627
        %v832 = vunpack.c.h.b16 %v627
        %v833 = vunpack.c.l.b16 %v628
        %v834 = vunpack.c.h.b16 %v628
        %v835 = vunpack.c.l.b16 %v629
        %v836 = vunpack.c.h.b16 %v629
        %v837 = vunpack.c.l.b16 %v630
        %v838 = vunpack.c.h.b16 %v630
        %v839 = vunpack.c.l.b16 %v631
        %v840 = vunpack.c.h.b16 %v631
        %v841 = vunpack.c.l.b16 %v632
        %v842 = vunpack.c.h.b16 %v632
        %v843 = vunpack.c.l.b16 %v633
        %v844 = vunpack.c.h.b16 %v633
        %v845 = vunpack.c.l.b16 %v634
        %v846 = vunpack.c.h.b16 %v634
        %v847 = vpack.c.b16 %v721, %v719
        %v848 = vpack.c.b16 %v722, %v720
        %v849 = vpack.c.b16 %v725, %v723
        %v850 = vpack.c.b16 %v726, %v724
        %v851 = vpack.c.b16 %v729, %v727
        %v852 = vpack.c.b16 %v730, %v728
        %v853 = vpack.c.b16 %v733, %v731
        %v854 = vpack.c.b16 %v734, %v732
        %v855 = vpack.c.b16 %v737, %v735
        %v856 = vpack.c.b16 %v738, %v736
        %v857 = vpack.c.b16 %v741, %v739
        %v858 = vpack.c.b16 %v742, %v740
        %v859 = vpack.c.b16 %v745, %v743
        %v860 = vpack.c.b16 %v746, %v744
        %v861 = vpack.c.b16 %v749, %v747
        %v862 = vpack.c.b16 %v750, %v748
        %v863 = vpack.c.b16 %v753, %v751
        %v864 = vpack.c.b16 %v754, %v752
        %v865 = vpack.c.b16 %v757, %v755
        %v866 = vpack.c.b16 %v758, %v756
        %v867 = vpack.c.b16 %v761, %v759
        %v868 = vpack.c.b16 %v762, %v760
        %v869 = vpack.c.b16 %v765, %v763
        %v870 = vpack.c.b16 %v766, %v764
        %v871 = vpack.c.b16 %v769, %v767
        %v872 = vpack.c.b16 %v770, %v768
        %v873 = vpack.c.b16 %v773, %v771
        %v874 = vpack.c.b16 %v774, %v772
        %v875 = vpack.c.b16 %v777, %v775
        %v876 = vpack.c.b16 %v778, %v776
        %v877 = vpack.c.b16 %v781, %v779
        %v878 = vpack.c.b16 %v782, %v780
        %v879 = vpack.c.b16 %v785, %v783
        %v880 = vpack.c.b16 %v786, %v784
        %v881 = vpack.c.b16 %v789, %v787
        %v882 = vpack.c.b16 %v790, %v788
        %v883 = vpack.c.b16 %v793, %v791
        %v884 = vpack.c.b16 %v794, %v792
        %v885 = vpack.c.b16 %v797, %v795
        %v886 = vpack.c.b16 %v798, %v796
        %v887 = vpack.c.b16 %v801, %v799
        %v888 = vpack.c.b16 %v802, %v800
        %v889 = vpack.c.b16 %v805, %v803
        %v890 = vpack.c.b16 %v806, %v804
        %v891 = vpack.c.b16 %v809, %v807
        %v892 = vpack.c.b16 %v810, %v808
        %v893 = vpack.c.b16 %v813, %v811
        %v894 = vpack.c.b16 %v814, %v812
        %v895 = vpack.c.b16 %v817, %v815
        %v896 = vpack.c.b16 %v818, %v816
        %v897 = vpack.c.b16 %v821, %v819
        %v898 = vpack.c.b16 %v822, %v820
        %v899 = vpack.c.b16 %v825, %v823
        %v900 = vpack.c.b16 %v826, %v824
        %v901 = vpack.c.b16 %v829, %v827
        %v902 = vpack.c.b16 %v830, %v828
        %v903 = vpack.c.b16 %v833, %v831
        %v904 = vpack.c.b16 %v834, %v832
        %v905 = vpack.c.b16 %v837, %v835
        %v906 = vpack.c.b16 %v838, %v836
        %v907 = vpack.c.b16 %v841, %v839
        %v908 = vpack.c.b16 %v842, %v840
        %v909 = vpack.c.b16 %v845, %v843
        %v910 = vpack.c.b16 %v846, %v844
        %975 = vmatprep.subr.bf16.mxu0 %v862
        %976 = vmatpush1.bf16.msra.mxu0 %v861
        %977 = vmatprep.subr.bf16.mxu0 %v860
        %978 = vmatpush1.bf16.msra.mxu0 %v859
        %979 = vmatprep.subr.bf16.mxu0 %v858
        %980 = vmatpush1.bf16.msra.mxu0 %v857
        %981 = vmatprep.subr.bf16.mxu0 %v856
        %982 = vmatpush1.bf16.msra.mxu0 %v855
        %983 = vmatprep.subr.bf16.mxu0 %v854
        %984 = vmatpush1.bf16.msra.mxu0 %v853
        %985 = vmatprep.subr.bf16.mxu0 %v852
        %986 = vmatpush1.bf16.msra.mxu0 %v851
        %987 = vmatprep.subr.bf16.mxu0 %v850
        %988 = vmatpush1.bf16.msra.mxu0 %v849
        %989 = vmatprep.subr.bf16.mxu0 %v848
        %990 = vmatpush1.bf16.msra.mxu0 %v847
        %991 = vmatprep.subr.bf16.mxu0 %v878
        %992 = vmatpush2.bf16.msra.mxu0 %v877
        %993 = vmatprep.subr.bf16.mxu0 %v876
        %994 = vmatpush2.bf16.msra.mxu0 %v875
        %995 = vmatprep.subr.bf16.mxu0 %v874
        %996 = vmatpush2.bf16.msra.mxu0 %v873
        %997 = vmatprep.subr.bf16.mxu0 %v872
        %998 = vmatpush2.bf16.msra.mxu0 %v871
        %999 = vmatprep.subr.bf16.mxu0 %v870
        %1000 = vmatpush2.bf16.msra.mxu0 %v869
        %1001 = vmatprep.subr.bf16.mxu0 %v868
        %1002 = vmatpush2.bf16.msra.mxu0 %v867
        %1003 = vmatprep.subr.bf16.mxu0 %v866
        %1004 = vmatpush2.bf16.msra.mxu0 %v865
        %1005 = vmatprep.subr.bf16.mxu0 %v864
        %1006 = vmatpush2.bf16.msra.mxu0 %v863
        %1007 = vmatprep.mubr.bf16.mxu0 %v648
        %1008 = vmatmul.mubr.bf16.gmra.mxu0 %v647
        %v1009 = vpop.f32.mrf.mxu0
        %v1010 = vadd.f32 0.0, %v1009
        %v1011 = vpop.f32.mrf.mxu0
        %v1012 = vadd.f32 0.0, %v1011
        %v1013 = vpop.f32.mrf.mxu0
        %v1014 = vadd.f32 0.0, %v1013
        %v1015 = vpop.f32.mrf.mxu0
        %v1016 = vadd.f32 0.0, %v1015
        %1017 = vdwg.mxu0
        %1018 = vmatprep.subr.bf16.mxu0 %v894
        %1019 = vmatpush1.bf16.msra.mxu0 %v893
        %1020 = vmatprep.subr.bf16.mxu0 %v892
        %1021 = vmatpush1.bf16.msra.mxu0 %v891
        %1022 = vmatprep.subr.bf16.mxu0 %v890
        %1023 = vmatpush1.bf16.msra.mxu0 %v889
        %1024 = vmatprep.subr.bf16.mxu0 %v888
        %1025 = vmatpush1.bf16.msra.mxu0 %v887
        %1026 = vmatprep.subr.bf16.mxu0 %v886
        %1027 = vmatpush1.bf16.msra.mxu0 %v885
        %1028 = vmatprep.subr.bf16.mxu0 %v884
        %1029 = vmatpush1.bf16.msra.mxu0 %v883
        %1030 = vmatprep.subr.bf16.mxu0 %v882
        %1031 = vmatpush1.bf16.msra.mxu0 %v881
        %1032 = vmatprep.subr.bf16.mxu0 %v880
        %1033 = vmatpush1.bf16.msra.mxu0 %v879
        %1034 = vmatprep.subr.bf16.mxu0 %v910
        %1035 = vmatpush2.bf16.msra.mxu0 %v909
        %1036 = vmatprep.subr.bf16.mxu0 %v908
        %1037 = vmatpush2.bf16.msra.mxu0 %v907
        %1038 = vmatprep.subr.bf16.mxu0 %v906
        %1039 = vmatpush2.bf16.msra.mxu0 %v905
        %1040 = vmatprep.subr.bf16.mxu0 %v904
        %1041 = vmatpush2.bf16.msra.mxu0 %v903
        %1042 = vmatprep.subr.bf16.mxu0 %v902
        %1043 = vmatpush2.bf16.msra.mxu0 %v901
        %1044 = vmatprep.subr.bf16.mxu0 %v900
        %1045 = vmatpush2.bf16.msra.mxu0 %v899
        %1046 = vmatprep.subr.bf16.mxu0 %v898
        %1047 = vmatpush2.bf16.msra.mxu0 %v897
        %1048 = vmatprep.subr.bf16.mxu0 %v896
        %1049 = vmatpush2.bf16.msra.mxu0 %v895
        %1050 = vmatprep.mubr.bf16.mxu0 %v650
        %1051 = vmatmul.mubr.bf16.gmra.mxu0 %v649
        %v1052 = vpop.f32.mrf.mxu0
        %v1053 = vadd.f32 %v1010, %v1052
        %v1054 = vpop.f32.mrf.mxu0
        %v1055 = vadd.f32 %v1012, %v1054
        %v1056 = vpop.f32.mrf.mxu0
        %v1057 = vadd.f32 %v1014, %v1056
        %v1058 = vpop.f32.mrf.mxu0
        %v1059 = vadd.f32 %v1016, %v1058
        %1060 = vdwg.mxu0
        %v1061 = vadd.f32 %v563, %v1053
        %v1062 = vadd.f32 %v564, %v1055
        %v1063 = vadd.f32 %v565, %v1057
        %v1064 = vadd.f32 %v566, %v1059
        %1065 = vst [vmem:[#allocation2] sm:$0xff] %v1061
        %1066 = vst [vmem:[#allocation2 + $0x8] sm:$0xff] %v1062
        %1067 = vst [vmem:[#allocation2 + $0x10] sm:$0xff] %v1063
        %1068 = vst [vmem:[#allocation2 + $0x18] sm:$0xff] %v1064
        %p1069 = scmp.eq.s32.totalorder %s21, 7
        // Predicated region
        $region98: #{discriminator_forward.8} parent=84 // pred_check
          %p1070 = pneg %p1069
        $region99: #{discriminator_forward.8} parent=84 // pred_check_branch
          %1072 = sbr.rel (%p1070) target = $region101
        $region100: #{discriminator_forward.8} parent=84 // pred_region
          %v1073 = vld [vmem:[#allocation2] sm:$0xff]
          %v1074 = vld [vmem:[#allocation2 + $0x8] sm:$0xff]
          %v1075 = vld [vmem:[#allocation2 + $0x10] sm:$0xff]
          %v1076 = vld [vmem:[#allocation2 + $0x18] sm:$0xff]
          %v1077 = vld [vmem:[%s551] sm:$0x3]
          %v1079 = vlaneseq
          %v1080 = vshrl.u32 %v1079, 7
          %v1081 = vsub.s32 0, %v1080
          %v1082 = vrot.slane %v1077, %v1081
          %v1083 = vlaneseq
          %v1084 = vshrl.u32 %v1083, 7
          %v1085 = vsub.s32 1, %v1084
          %v1086 = vrot.slane %v1077, %v1085
          %v1089 = vadd.f32 %v1073, %v1082
          %v1090 = vadd.f32 %v1074, %v1086
          %v1091 = vadd.f32 %v1075, %v1082
          %v1092 = vadd.f32 %v1076, %v1086
          %v1093 = vadd.f32 %v1089, %v1091
          %v1094 = vrot.slane %v1093, 4
          %v1095 = vadd.f32 %v1093, %v1094
          %v1096 = vrot.slane %v1095, 2
          %v1097 = vadd.f32 %v1095, %v1096
          %v1098 = vrot.slane %v1097, 1
          %v1099 = vadd.f32 %v1097, %v1098
          %v1100 = vadd.f32 %v1090, %v1092
          %v1101 = vrot.slane %v1100, 4
          %v1102 = vadd.f32 %v1100, %v1101
          %v1103 = vrot.slane %v1102, 2
          %v1104 = vadd.f32 %v1102, %v1103
          %v1105 = vrot.slane %v1104, 1
          %v1106 = vadd.f32 %v1104, %v1105
          %v1107 = vrcp.pop 16.0
          %v1108 = vmul.f32 %v1099, %v1107
          %v1109 = vmul.f32 %v1106, %v1107
          %v1110 = vsub.f32 %v1089, %v1108
          %v1111 = vsub.f32 %v1090, %v1109
          %v1112 = vsub.f32 %v1091, %v1108
          %v1113 = vsub.f32 %v1092, %v1109
          %v1114 = vmul.f32 %v1110, %v1110
          %v1115 = vmul.f32 %v1111, %v1111
          %v1116 = vmul.f32 %v1112, %v1112
          %v1117 = vmul.f32 %v1113, %v1113
          %v1118 = vadd.f32 %v1114, %v1116
          %v1119 = vrot.slane %v1118, 4
          %v1120 = vadd.f32 %v1118, %v1119
          %v1121 = vrot.slane %v1120, 2
          %v1122 = vadd.f32 %v1120, %v1121
          %v1123 = vrot.slane %v1122, 1
          %v1124 = vadd.f32 %v1122, %v1123
          %v1125 = vadd.f32 %v1115, %v1117
          %v1126 = vrot.slane %v1125, 4
          %v1127 = vadd.f32 %v1125, %v1126
          %v1128 = vrot.slane %v1127, 2
          %v1129 = vadd.f32 %v1127, %v1128
          %v1130 = vrot.slane %v1129, 1
          %v1131 = vadd.f32 %v1129, %v1130
          %v1132 = vmul.f32 %v1124, %v1107
          %v1133 = vmul.f32 %v1131, %v1107
          %v1134 = vadd.f32 %v1132, 1e-05
          %v1135 = vadd.f32 %v1133, 1e-05
          %v1136 = vrsqrt.pop %v1134
          %v1137 = vrsqrt.pop %v1135
          %v1138 = vmul.f32 %v1110, %v1136
          %v1139 = vmul.f32 %v1111, %v1137
          %v1140 = vmul.f32 %v1112, %v1136
          %v1141 = vmul.f32 %v1113, %v1137
          %vm1142 = vcmp.gt.f32.partialorder %v1138, 0.0
          %vm1143 = vcmp.gt.f32.partialorder %v1139, 0.0
          %vm1144 = vcmp.gt.f32.partialorder %v1140, 0.0
          %vm1145 = vcmp.gt.f32.partialorder %v1141, 0.0
          %v1146 = vmul.f32 %v1138, 0.2
          %v1147 = vmul.f32 %v1139, 0.2
          %v1148 = vmul.f32 %v1140, 0.2
          %v1149 = vmul.f32 %v1141, 0.2
          %v1150 = vsel %vm1142, %v1138, %v1146
          %v1151 = vsel %vm1143, %v1139, %v1147
          %v1152 = vsel %vm1144, %v1140, %v1148
          %v1153 = vsel %vm1145, %v1141, %v1149
          %v1154 = vpack.c.bf16 %v1152, %v1150
          %v1155 = vpack.c.bf16 %v1153, %v1151
          %v1158 = vunpack.c.l.b16 %v1154
          %v1159 = vunpack.c.l.b16 %v1155
          %v1160 = vunpack.c.h.b16 %v1154
          %v1161 = vunpack.c.h.b16 %v1155
          %v1162 = vpack.c.b16 %v1159, %v1158
          %v1163 = vpack.c.b16 %v1161, %v1160
          %1166 = vst [vmem:[%s543] sm:$0xff] %v1162
          %1167 = vst [vmem:[%s543 + $0x8] sm:$0xff] %v1163
        $region101: #{discriminator_forward.8} parent=84 // pred_fallthru
          _
        %s1168 = sand.u32 %s125, 1
        %s1169 = sand.u32 %s125, 1
        %s1170 = smul.addr %s1169, 16
        %s1171 = scalar_lea.vmem [#allocation5], %s1170
        // Predicated region
        $region102: #{discriminator_forward.8} parent=84 // pred_check
          %p1172 = pneg %p135
        $region103: #{discriminator_forward.8} parent=84 // pred_check_branch
          %1174 = sbr.rel (%p1172) target = $region105
        $region104: #{discriminator_forward.8} parent=84 // pred_region
          %s1175 = smul.u32 2, %s19
          %s1176 = smul.u32 2, %s20
          %s1177 = smul.addr %s1175, 4
          %s1178 = sadd.s32 %s1176, %s1177
          %s1179 = smul.addr %s1178, 4
          %s1180 = scalar_lea.vmem %s3, %s1179
          // Predicated region
          $region106: #{discriminator_forward.8} parent=104 // pred_check
            _
          $region107: #{discriminator_forward.8} parent=104 // pred_check_branch
            %1182 = sbr.rel (0) target = $region109
          $region108: #{discriminator_forward.8} parent=104 // pred_region
            // Predicated region
            $region110: #{discriminator_forward.8} parent=108 // pred_check
              _
            $region111: #{discriminator_forward.8} parent=108 // pred_check_branch
              %1184 = sbr.rel (0) target = $region113
            $region112: #{discriminator_forward.8} parent=108 // pred_region
              // Predicated region
              $region125: #{discriminator_forward.8} parent=112 // pred_check
                _
              $region126: #{discriminator_forward.8} parent=112 // pred_check_branch
                %1202 = sbr.rel (0) target = $region128
              $region127: #{discriminator_forward.8} parent=112 // pred_region
                loop: start=0, step=1, limit=1
                $region129: #{discriminator_forward.8} parent=127 // loop_pre_header
                  _
                $region130: #{discriminator_forward.8} parent=127 // loop_header
                  %s1204 = sphi 0, %s1208
                  %p1205 = scmp.ge.s32.totalorder %s1204, 1
                  %s1209 = sphi %s1171, %s1171
                  %s1210 = sphi %s1180, %s1180
                $region131: #{discriminator_forward.8} parent=127 // loop_header_branch
                  %1207 = sbr.rel (%p1205) target = $region135
                $region132: #{discriminator_forward.8} parent=127 // loop_body
                  %v1211 = vld [vmem:[%s1209] sm:$0xff]
                  %1212 = vst [vmem:[%s1210] sm:$0xff] %v1211
                  %v1213 = vld [vmem:[%s1209 + $0x8] sm:$0xff]
                  %1214 = vst [vmem:[%s1210 + $0x10] sm:$0xff] %v1213
                $region133: #{discriminator_forward.8} parent=127 // loop_footer
                  %s1208 = sadd.s32 1, %s1204
                $region134: #{discriminator_forward.8} parent=127 // loop_footer_branch
                  %1203 = sbr.rel target = $region130
                $region135: #{discriminator_forward.8} parent=127 // loop_exit
                  _
              $region128: #{discriminator_forward.8} parent=112 // pred_fallthru
                _
              // Predicated region
              $region136: #{discriminator_forward.8} parent=112 // pred_check
                _
              $region137: #{discriminator_forward.8} parent=112 // pred_check_branch
                %1216 = sbr.rel target = $region139
              $region138: #{discriminator_forward.8} parent=112 // pred_region
                _
              $region139: #{discriminator_forward.8} parent=112 // pred_fallthru
                _
            $region113: #{discriminator_forward.8} parent=108 // pred_fallthru
              _
            // Predicated region
            $region114: #{discriminator_forward.8} parent=108 // pred_check
              _
            $region115: #{discriminator_forward.8} parent=108 // pred_check_branch
              %1186 = sbr.rel target = $region117
            $region116: #{discriminator_forward.8} parent=108 // pred_region
              %s1188 = ssub.s32 256, 1
              loop: start=0, step=1, limit=1
              $region118: #{discriminator_forward.8} parent=116 // loop_pre_header
                _
              $region119: #{discriminator_forward.8} parent=116 // loop_header
                %s1190 = sphi 0, %s1194
                %p1191 = scmp.ge.s32.totalorder %s1190, 1
                %s1195 = sphi %s1171, %s1171
                %s1196 = sphi %s1180, %s1180
              $region120: #{discriminator_forward.8} parent=116 // loop_header_branch
                %1193 = sbr.rel (%p1191) target = $region124
              $region121: #{discriminator_forward.8} parent=116 // loop_body
                %v1197 = vld [vmem:[%s1195] sm:%s1188]
                %1198 = vst [vmem:[%s1196] sm:%s1188] %v1197
                %v1199 = vld [vmem:[%s1195 + $0x8] sm:%s1188]
                %1200 = vst [vmem:[%s1196 + $0x10] sm:%s1188] %v1199
              $region122: #{discriminator_forward.8} parent=116 // loop_footer
                %s1194 = sadd.s32 1, %s1190
              $region123: #{discriminator_forward.8} parent=116 // loop_footer_branch
                %1189 = sbr.rel target = $region119
              $region124: #{discriminator_forward.8} parent=116 // loop_exit
                _
            $region117: #{discriminator_forward.8} parent=108 // pred_fallthru
              _
          $region109: #{discriminator_forward.8} parent=104 // pred_fallthru
            _
          %1217 = vnop
        $region105: #{discriminator_forward.8} parent=84 // pred_fallthru
          _
      $region85: #{discriminator_forward.8} parent=5 // pred_fallthru
        _
      %p1218 = scmp.le.s32.totalorder 2, %s9
      // Predicated region
      $region140: #{discriminator_forward.8} parent=5 // pred_check
        %p1219 = pneg %p1218
      $region141: #{discriminator_forward.8} parent=5 // pred_check_branch
        %1221 = sbr.rel (%p1219) target = $region143
      $region142: #{discriminator_forward.8} parent=5 // pred_region
        %s1222 = ssub.s32 %s9, 2
        // Predicated region
        $region144: #{discriminator_forward.8} parent=142 // pred_check
          %p1223 = pneg %p141
        $region145: #{discriminator_forward.8} parent=142 // pred_check_branch
          %1225 = sbr.rel (%p1223) target = $region147
        $region146: #{discriminator_forward.8} parent=142 // pred_region
          %s1226 = sand.u32 %s126, 1
          %s1227 = sand.u32 %s126, 1
          %s1228 = smul.addr %s1227, 16
          %s1229 = scalar_lea.vmem [#allocation5], %s1228
        $region147: #{discriminator_forward.8} parent=142 // pred_fallthru
          _
      $region143: #{discriminator_forward.8} parent=5 // pred_fallthru
        _
    $region6: #{discriminator_forward.8} parent=1 // loop_footer
      %s13 = sadd.s32 1, %s9
    $region7: #{discriminator_forward.8} parent=1 // loop_footer_branch
      %8 = sbr.rel target = $region3
    $region8: #{discriminator_forward.8} parent=1 // loop_exit
      _

// kernel: discriminator_forward.9
$region0: #{discriminator_forward.9}
  #allocation0 [shape = 'u32[]', space=smem, size = 0x4, offset = 0x4, fixed_abs, tag = 'smem constant byte address 0x4 - core index']
  #allocation1 [shape = 'u32[144,128]{1,0:T(1,128)}', space=vmem, size = 0x12000, scoped, tag = 'internal scratch']
  #allocation2 [shape = 'f32[1,1]{1,0:T(1,128)S(1)}', space=vmem, size = 0x200, scoped, tag = 'scoped memory for discriminator_forward.9']
  %s0 = inlined_call_operand.vmem [shape: bf16[2,9,8192], index: 0, kind: input, shape index: {}]
  %s1 = inlined_call_operand.vmem [shape: bf16[1,8192], index: 1, kind: input, shape index: {}]
  %s2 = inlined_call_operand.<no memory space> [shape: f32[1,1], index: 2, kind: input, shape index: {}]
  %s3 = inlined_call_operand.vmem [shape: f32[2,1], index: 3, kind: output, shape index: {}]
  %s4 = sld [smem:[#allocation0]]
  $region22: #{discriminator_forward.9} parent=0
    _
  %s6 = ssub.s32 1, %s4
  %s7 = scalar_select 0, %s6, %s4
  %v8 = vstv %s2
  %9 = vst [vmem:[#allocation2] sm:$0x1] %v8
  // Predicated region
  $region2: #{discriminator_forward.9} parent=0 // pred_check
    _
  $region3: #{discriminator_forward.9} parent=0 // pred_check_branch
    %11 = sbr.rel (0) target = $region5
  $region4: #{discriminator_forward.9} parent=0 // pred_region
    _
  $region5: #{discriminator_forward.9} parent=0 // pred_fallthru
    _
  // Predicated region
  $region6: #{discriminator_forward.9} parent=0 // pred_check
    _
  $region7: #{discriminator_forward.9} parent=0 // pred_check_branch
    %13 = sbr.rel (0) target = $region9
  $region8: #{discriminator_forward.9} parent=0 // pred_region
    _
  $region9: #{discriminator_forward.9} parent=0 // pred_fallthru
    _
  // Predicated region
  $region10: #{discriminator_forward.9} parent=0 // pred_check
    _
  $region11: #{discriminator_forward.9} parent=0 // pred_check_branch
    %15 = sbr.rel (0) target = $region13
  $region12: #{discriminator_forward.9} parent=0 // pred_region
    _
  $region13: #{discriminator_forward.9} parent=0 // pred_fallthru
    _
  %v16 = vld [vmem:[%s0] sm:$0xff]
  %v17 = vld [vmem:[%s0 + $0x8] sm:$0xff]
  %v18 = vld [vmem:[%s0 + $0x10] sm:$0xff]
  %v19 = vld [vmem:[%s0 + $0x18] sm:$0xff]
  %v20 = vld [vmem:[%s0 + $0x20] sm:$0xff]
  %v21 = vld [vmem:[%s0 + $0x28] sm:$0xff]
  %v22 = vld [vmem:[%s0 + $0x30] sm:$0xff]
  %v23 = vld [vmem:[%s0 + $0x38] sm:$0xff]
  %v24 = vld [vmem:[%s0 + $0x40] sm:$0xff]
  %v25 = vld [vmem:[%s0 + $0x48] sm:$0xff]
  %v26 = vld [vmem:[%s0 + $0x50] sm:$0xff]
  %v27 = vld [vmem:[%s0 + $0x58] sm:$0xff]
  %v28 = vld [vmem:[%s0 + $0x60] sm:$0xff]
  %v29 = vld [vmem:[%s0 + $0x68] sm:$0xff]
  %v30 = vld [vmem:[%s0 + $0x70] sm:$0xff]
  %v31 = vld [vmem:[%s0 + $0x78] sm:$0xff]
  %v32 = vld [vmem:[%s0 + $0x80] sm:$0xff]
  %v33 = vld [vmem:[%s0 + $0x88] sm:$0xff]
  %v34 = vld [vmem:[%s0 + $0x90] sm:$0xff]
  %v35 = vld [vmem:[%s0 + $0x98] sm:$0xff]
  %v36 = vld [vmem:[%s0 + $0xa0] sm:$0xff]
  %v37 = vld [vmem:[%s0 + $0xa8] sm:$0xff]
  %v38 = vld [vmem:[%s0 + $0xb0] sm:$0xff]
  %v39 = vld [vmem:[%s0 + $0xb8] sm:$0xff]
  %v40 = vld [vmem:[%s0 + $0xc0] sm:$0xff]
  %v41 = vld [vmem:[%s0 + $0xc8] sm:$0xff]
  %v42 = vld [vmem:[%s0 + $0xd0] sm:$0xff]
  %v43 = vld [vmem:[%s0 + $0xd8] sm:$0xff]
  %v44 = vld [vmem:[%s0 + $0xe0] sm:$0xff]
  %v45 = vld [vmem:[%s0 + $0xe8] sm:$0xff]
  %v46 = vld [vmem:[%s0 + $0xf0] sm:$0xff]
  %v47 = vld [vmem:[%s0 + $0xf8] sm:$0xff]
  %v48 = vld [vmem:[%s0 + $0x100] sm:$0x11]
  %v49 = vld [vmem:[%s0 + $0x108] sm:$0x11]
  %v50 = vld [vmem:[%s0 + $0x110] sm:$0x11]
  %v51 = vld [vmem:[%s0 + $0x118] sm:$0x11]
  %v52 = vld [vmem:[%s0 + $0x120] sm:$0x11]
  %v53 = vld [vmem:[%s0 + $0x128] sm:$0x11]
  %v54 = vld [vmem:[%s0 + $0x130] sm:$0x11]
  %v55 = vld [vmem:[%s0 + $0x138] sm:$0x11]
  %v56 = vld [vmem:[%s0 + $0x140] sm:$0x11]
  %v57 = vld [vmem:[%s0 + $0x148] sm:$0x11]
  %v58 = vld [vmem:[%s0 + $0x150] sm:$0x11]
  %v59 = vld [vmem:[%s0 + $0x158] sm:$0x11]
  %v60 = vld [vmem:[%s0 + $0x160] sm:$0x11]
  %v61 = vld [vmem:[%s0 + $0x168] sm:$0x11]
  %v62 = vld [vmem:[%s0 + $0x170] sm:$0x11]
  %v63 = vld [vmem:[%s0 + $0x178] sm:$0x11]
  %v64 = vld [vmem:[%s0 + $0x180] sm:$0x11]
  %v65 = vld [vmem:[%s0 + $0x188] sm:$0x11]
  %v66 = vld [vmem:[%s0 + $0x190] sm:$0x11]
  %v67 = vld [vmem:[%s0 + $0x198] sm:$0x11]
  %v68 = vld [vmem:[%s0 + $0x1a0] sm:$0x11]
  %v69 = vld [vmem:[%s0 + $0x1a8] sm:$0x11]
  %v70 = vld [vmem:[%s0 + $0x1b0] sm:$0x11]
  %v71 = vld [vmem:[%s0 + $0x1b8] sm:$0x11]
  %v72 = vld [vmem:[%s0 + $0x1c0] sm:$0x11]
  %v73 = vld [vmem:[%s0 + $0x1c8] sm:$0x11]
  %v74 = vld [vmem:[%s0 + $0x1d0] sm:$0x11]
  %v75 = vld [vmem:[%s0 + $0x1d8] sm:$0x11]
  %v76 = vld [vmem:[%s0 + $0x1e0] sm:$0x11]
  %v77 = vld [vmem:[%s0 + $0x1e8] sm:$0x11]
  %v78 = vld [vmem:[%s0 + $0x1f0] sm:$0x11]
  %v79 = vld [vmem:[%s0 + $0x1f8] sm:$0x11]
  %v80 = vld [vmem:[%s0 + $0x200] sm:$0xff]
  %v81 = vld [vmem:[%s0 + $0x208] sm:$0xff]
  %v82 = vld [vmem:[%s0 + $0x210] sm:$0xff]
  %v83 = vld [vmem:[%s0 + $0x218] sm:$0xff]
  %v84 = vld [vmem:[%s0 + $0x220] sm:$0xff]
  %v85 = vld [vmem:[%s0 + $0x228] sm:$0xff]
  %v86 = vld [vmem:[%s0 + $0x230] sm:$0xff]
  %v87 = vld [vmem:[%s0 + $0x238] sm:$0xff]
  %v88 = vld [vmem:[%s0 + $0x240] sm:$0xff]
  %v89 = vld [vmem:[%s0 + $0x248] sm:$0xff]
  %v90 = vld [vmem:[%s0 + $0x250] sm:$0xff]
  %v91 = vld [vmem:[%s0 + $0x258] sm:$0xff]
  %v92 = vld [vmem:[%s0 + $0x260] sm:$0xff]
  %v93 = vld [vmem:[%s0 + $0x268] sm:$0xff]
  %v94 = vld [vmem:[%s0 + $0x270] sm:$0xff]
  %v95 = vld [vmem:[%s0 + $0x278] sm:$0xff]
  %v96 = vld [vmem:[%s0 + $0x280] sm:$0xff]
  %v97 = vld [vmem:[%s0 + $0x288] sm:$0xff]
  %v98 = vld [vmem:[%s0 + $0x290] sm:$0xff]
  %v99 = vld [vmem:[%s0 + $0x298] sm:$0xff]
  %v100 = vld [vmem:[%s0 + $0x2a0] sm:$0xff]
  %v101 = vld [vmem:[%s0 + $0x2a8] sm:$0xff]
  %v102 = vld [vmem:[%s0 + $0x2b0] sm:$0xff]
  %v103 = vld [vmem:[%s0 + $0x2b8] sm:$0xff]
  %v104 = vld [vmem:[%s0 + $0x2c0] sm:$0xff]
  %v105 = vld [vmem:[%s0 + $0x2c8] sm:$0xff]
  %v106 = vld [vmem:[%s0 + $0x2d0] sm:$0xff]
  %v107 = vld [vmem:[%s0 + $0x2d8] sm:$0xff]
  %v108 = vld [vmem:[%s0 + $0x2e0] sm:$0xff]
  %v109 = vld [vmem:[%s0 + $0x2e8] sm:$0xff]
  %v110 = vld [vmem:[%s0 + $0x2f0] sm:$0xff]
  %v111 = vld [vmem:[%s0 + $0x2f8] sm:$0xff]
  %v112 = vld [vmem:[%s0 + $0x300] sm:$0x11]
  %v113 = vld [vmem:[%s0 + $0x308] sm:$0x11]
  %v114 = vld [vmem:[%s0 + $0x310] sm:$0x11]
  %v115 = vld [vmem:[%s0 + $0x318] sm:$0x11]
  %v116 = vld [vmem:[%s0 + $0x320] sm:$0x11]
  %v117 = vld [vmem:[%s0 + $0x328] sm:$0x11]
  %v118 = vld [vmem:[%s0 + $0x330] sm:$0x11]
  %v119 = vld [vmem:[%s0 + $0x338] sm:$0x11]
  %v120 = vld [vmem:[%s0 + $0x340] sm:$0x11]
  %v121 = vld [vmem:[%s0 + $0x348] sm:$0x11]
  %v122 = vld [vmem:[%s0 + $0x350] sm:$0x11]
  %v123 = vld [vmem:[%s0 + $0x358] sm:$0x11]
  %v124 = vld [vmem:[%s0 + $0x360] sm:$0x11]
  %v125 = vld [vmem:[%s0 + $0x368] sm:$0x11]
  %v126 = vld [vmem:[%s0 + $0x370] sm:$0x11]
  %v127 = vld [vmem:[%s0 + $0x378] sm:$0x11]
  %v128 = vld [vmem:[%s0 + $0x380] sm:$0x11]
  %v129 = vld [vmem:[%s0 + $0x388] sm:$0x11]
  %v130 = vld [vmem:[%s0 + $0x390] sm:$0x11]
  %v131 = vld [vmem:[%s0 + $0x398] sm:$0x11]
  %v132 = vld [vmem:[%s0 + $0x3a0] sm:$0x11]
  %v133 = vld [vmem:[%s0 + $0x3a8] sm:$0x11]
  %v134 = vld [vmem:[%s0 + $0x3b0] sm:$0x11]
  %v135 = vld [vmem:[%s0 + $0x3b8] sm:$0x11]
  %v136 = vld [vmem:[%s0 + $0x3c0] sm:$0x11]
  %v137 = vld [vmem:[%s0 + $0x3c8] sm:$0x11]
  %v138 = vld [vmem:[%s0 + $0x3d0] sm:$0x11]
  %v139 = vld [vmem:[%s0 + $0x3d8] sm:$0x11]
  %v140 = vld [vmem:[%s0 + $0x3e0] sm:$0x11]
  %v141 = vld [vmem:[%s0 + $0x3e8] sm:$0x11]
  %v142 = vld [vmem:[%s0 + $0x3f0] sm:$0x11]
  %v143 = vld [vmem:[%s0 + $0x3f8] sm:$0x11]
  %v144 = vunpack.c.l.bf16 %v16
  %v145 = vunpack.c.h.bf16 %v16
  %v146 = vunpack.c.l.bf16 %v17
  %v147 = vunpack.c.h.bf16 %v17
  %v148 = vunpack.c.l.bf16 %v18
  %v149 = vunpack.c.h.bf16 %v18
  %v150 = vunpack.c.l.bf16 %v19
  %v151 = vunpack.c.h.bf16 %v19
  %v152 = vunpack.c.l.bf16 %v20
  %v153 = vunpack.c.h.bf16 %v20
  %v154 = vunpack.c.l.bf16 %v21
  %v155 = vunpack.c.h.bf16 %v21
  %v156 = vunpack.c.l.bf16 %v22
  %v157 = vunpack.c.h.bf16 %v22
  %v158 = vunpack.c.l.bf16 %v23
  %v159 = vunpack.c.h.bf16 %v23
  %v160 = vunpack.c.l.bf16 %v24
  %v161 = vunpack.c.h.bf16 %v24
  %v162 = vunpack.c.l.bf16 %v25
  %v163 = vunpack.c.h.bf16 %v25
  %v164 = vunpack.c.l.bf16 %v26
  %v165 = vunpack.c.h.bf16 %v26
  %v166 = vunpack.c.l.bf16 %v27
  %v167 = vunpack.c.h.bf16 %v27
  %v168 = vunpack.c.l.bf16 %v28
  %v169 = vunpack.c.h.bf16 %v28
  %v170 = vunpack.c.l.bf16 %v29
  %v171 = vunpack.c.h.bf16 %v29
  %v172 = vunpack.c.l.bf16 %v30
  %v173 = vunpack.c.h.bf16 %v30
  %v174 = vunpack.c.l.bf16 %v31
  %v175 = vunpack.c.h.bf16 %v31
  %v176 = vunpack.c.l.bf16 %v32
  %v177 = vunpack.c.h.bf16 %v32
  %v178 = vunpack.c.l.bf16 %v33
  %v179 = vunpack.c.h.bf16 %v33
  %v180 = vunpack.c.l.bf16 %v34
  %v181 = vunpack.c.h.bf16 %v34
  %v182 = vunpack.c.l.bf16 %v35
  %v183 = vunpack.c.h.bf16 %v35
  %v184 = vunpack.c.l.bf16 %v36
  %v185 = vunpack.c.h.bf16 %v36
  %v186 = vunpack.c.l.bf16 %v37
  %v187 = vunpack.c.h.bf16 %v37
  %v188 = vunpack.c.l.bf16 %v38
  %v189 = vunpack.c.h.bf16 %v38
  %v190 = vunpack.c.l.bf16 %v39
  %v191 = vunpack.c.h.bf16 %v39
  %v192 = vunpack.c.l.bf16 %v40
  %v193 = vunpack.c.h.bf16 %v40
  %v194 = vunpack.c.l.bf16 %v41
  %v195 = vunpack.c.h.bf16 %v41
  %v196 = vunpack.c.l.bf16 %v42
  %v197 = vunpack.c.h.bf16 %v42
  %v198 = vunpack.c.l.bf16 %v43
  %v199 = vunpack.c.h.bf16 %v43
  %v200 = vunpack.c.l.bf16 %v44
  %v201 = vunpack.c.h.bf16 %v44
  %v202 = vunpack.c.l.bf16 %v45
  %v203 = vunpack.c.h.bf16 %v45
  %v204 = vunpack.c.l.bf16 %v46
  %v205 = vunpack.c.h.bf16 %v46
  %v206 = vunpack.c.l.bf16 %v47
  %v207 = vunpack.c.h.bf16 %v47
  %v208 = vunpack.c.l.bf16 %v48
  %v209 = vunpack.c.h.bf16 %v48
  %v210 = vunpack.c.l.bf16 %v49
  %v211 = vunpack.c.h.bf16 %v49
  %v212 = vunpack.c.l.bf16 %v50
  %v213 = vunpack.c.h.bf16 %v50
  %v214 = vunpack.c.l.bf16 %v51
  %v215 = vunpack.c.h.bf16 %v51
  %v216 = vunpack.c.l.bf16 %v52
  %v217 = vunpack.c.h.bf16 %v52
  %v218 = vunpack.c.l.bf16 %v53
  %v219 = vunpack.c.h.bf16 %v53
  %v220 = vunpack.c.l.bf16 %v54
  %v221 = vunpack.c.h.bf16 %v54
  %v222 = vunpack.c.l.bf16 %v55
  %v223 = vunpack.c.h.bf16 %v55
  %v224 = vunpack.c.l.bf16 %v56
  %v225 = vunpack.c.h.bf16 %v56
  %v226 = vunpack.c.l.bf16 %v57
  %v227 = vunpack.c.h.bf16 %v57
  %v228 = vunpack.c.l.bf16 %v58
  %v229 = vunpack.c.h.bf16 %v58
  %v230 = vunpack.c.l.bf16 %v59
  %v231 = vunpack.c.h.bf16 %v59
  %v232 = vunpack.c.l.bf16 %v60
  %v233 = vunpack.c.h.bf16 %v60
  %v234 = vunpack.c.l.bf16 %v61
  %v235 = vunpack.c.h.bf16 %v61
  %v236 = vunpack.c.l.bf16 %v62
  %v237 = vunpack.c.h.bf16 %v62
  %v238 = vunpack.c.l.bf16 %v63
  %v239 = vunpack.c.h.bf16 %v63
  %v240 = vunpack.c.l.bf16 %v64
  %v241 = vunpack.c.h.bf16 %v64
  %v242 = vunpack.c.l.bf16 %v65
  %v243 = vunpack.c.h.bf16 %v65
  %v244 = vunpack.c.l.bf16 %v66
  %v245 = vunpack.c.h.bf16 %v66
  %v246 = vunpack.c.l.bf16 %v67
  %v247 = vunpack.c.h.bf16 %v67
  %v248 = vunpack.c.l.bf16 %v68
  %v249 = vunpack.c.h.bf16 %v68
  %v250 = vunpack.c.l.bf16 %v69
  %v251 = vunpack.c.h.bf16 %v69
  %v252 = vunpack.c.l.bf16 %v70
  %v253 = vunpack.c.h.bf16 %v70
  %v254 = vunpack.c.l.bf16 %v71
  %v255 = vunpack.c.h.bf16 %v71
  %v256 = vunpack.c.l.bf16 %v72
  %v257 = vunpack.c.h.bf16 %v72
  %v258 = vunpack.c.l.bf16 %v73
  %v259 = vunpack.c.h.bf16 %v73
  %v260 = vunpack.c.l.bf16 %v74
  %v261 = vunpack.c.h.bf16 %v74
  %v262 = vunpack.c.l.bf16 %v75
  %v263 = vunpack.c.h.bf16 %v75
  %v264 = vunpack.c.l.bf16 %v76
  %v265 = vunpack.c.h.bf16 %v76
  %v266 = vunpack.c.l.bf16 %v77
  %v267 = vunpack.c.h.bf16 %v77
  %v268 = vunpack.c.l.bf16 %v78
  %v269 = vunpack.c.h.bf16 %v78
  %v270 = vunpack.c.l.bf16 %v79
  %v271 = vunpack.c.h.bf16 %v79
  %v272 = vunpack.c.l.bf16 %v80
  %v273 = vunpack.c.h.bf16 %v80
  %v274 = vunpack.c.l.bf16 %v81
  %v275 = vunpack.c.h.bf16 %v81
  %v276 = vunpack.c.l.bf16 %v82
  %v277 = vunpack.c.h.bf16 %v82
  %v278 = vunpack.c.l.bf16 %v83
  %v279 = vunpack.c.h.bf16 %v83
  %v280 = vunpack.c.l.bf16 %v84
  %v281 = vunpack.c.h.bf16 %v84
  %v282 = vunpack.c.l.bf16 %v85
  %v283 = vunpack.c.h.bf16 %v85
  %v284 = vunpack.c.l.bf16 %v86
  %v285 = vunpack.c.h.bf16 %v86
  %v286 = vunpack.c.l.bf16 %v87
  %v287 = vunpack.c.h.bf16 %v87
  %v288 = vunpack.c.l.bf16 %v88
  %v289 = vunpack.c.h.bf16 %v88
  %v290 = vunpack.c.l.bf16 %v89
  %v291 = vunpack.c.h.bf16 %v89
  %v292 = vunpack.c.l.bf16 %v90
  %v293 = vunpack.c.h.bf16 %v90
  %v294 = vunpack.c.l.bf16 %v91
  %v295 = vunpack.c.h.bf16 %v91
  %v296 = vunpack.c.l.bf16 %v92
  %v297 = vunpack.c.h.bf16 %v92
  %v298 = vunpack.c.l.bf16 %v93
  %v299 = vunpack.c.h.bf16 %v93
  %v300 = vunpack.c.l.bf16 %v94
  %v301 = vunpack.c.h.bf16 %v94
  %v302 = vunpack.c.l.bf16 %v95
  %v303 = vunpack.c.h.bf16 %v95
  %v304 = vunpack.c.l.bf16 %v96
  %v305 = vunpack.c.h.bf16 %v96
  %v306 = vunpack.c.l.bf16 %v97
  %v307 = vunpack.c.h.bf16 %v97
  %v308 = vunpack.c.l.bf16 %v98
  %v309 = vunpack.c.h.bf16 %v98
  %v310 = vunpack.c.l.bf16 %v99
  %v311 = vunpack.c.h.bf16 %v99
  %v312 = vunpack.c.l.bf16 %v100
  %v313 = vunpack.c.h.bf16 %v100
  %v314 = vunpack.c.l.bf16 %v101
  %v315 = vunpack.c.h.bf16 %v101
  %v316 = vunpack.c.l.bf16 %v102
  %v317 = vunpack.c.h.bf16 %v102
  %v318 = vunpack.c.l.bf16 %v103
  %v319 = vunpack.c.h.bf16 %v103
  %v320 = vunpack.c.l.bf16 %v104
  %v321 = vunpack.c.h.bf16 %v104
  %v322 = vunpack.c.l.bf16 %v105
  %v323 = vunpack.c.h.bf16 %v105
  %v324 = vunpack.c.l.bf16 %v106
  %v325 = vunpack.c.h.bf16 %v106
  %v326 = vunpack.c.l.bf16 %v107
  %v327 = vunpack.c.h.bf16 %v107
  %v328 = vunpack.c.l.bf16 %v108
  %v329 = vunpack.c.h.bf16 %v108
  %v330 = vunpack.c.l.bf16 %v109
  %v331 = vunpack.c.h.bf16 %v109
  %v332 = vunpack.c.l.bf16 %v110
  %v333 = vunpack.c.h.bf16 %v110
  %v334 = vunpack.c.l.bf16 %v111
  %v335 = vunpack.c.h.bf16 %v111
  %v336 = vunpack.c.l.bf16 %v112
  %v337 = vunpack.c.h.bf16 %v112
  %v338 = vunpack.c.l.bf16 %v113
  %v339 = vunpack.c.h.bf16 %v113
  %v340 = vunpack.c.l.bf16 %v114
  %v341 = vunpack.c.h.bf16 %v114
  %v342 = vunpack.c.l.bf16 %v115
  %v343 = vunpack.c.h.bf16 %v115
  %v344 = vunpack.c.l.bf16 %v116
  %v345 = vunpack.c.h.bf16 %v116
  %v346 = vunpack.c.l.bf16 %v117
  %v347 = vunpack.c.h.bf16 %v117
  %v348 = vunpack.c.l.bf16 %v118
  %v349 = vunpack.c.h.bf16 %v118
  %v350 = vunpack.c.l.bf16 %v119
  %v351 = vunpack.c.h.bf16 %v119
  %v352 = vunpack.c.l.bf16 %v120
  %v353 = vunpack.c.h.bf16 %v120
  %v354 = vunpack.c.l.bf16 %v121
  %v355 = vunpack.c.h.bf16 %v121
  %v356 = vunpack.c.l.bf16 %v122
  %v357 = vunpack.c.h.bf16 %v122
  %v358 = vunpack.c.l.bf16 %v123
  %v359 = vunpack.c.h.bf16 %v123
  %v360 = vunpack.c.l.bf16 %v124
  %v361 = vunpack.c.h.bf16 %v124
  %v362 = vunpack.c.l.bf16 %v125
  %v363 = vunpack.c.h.bf16 %v125
  %v364 = vunpack.c.l.bf16 %v126
  %v365 = vunpack.c.h.bf16 %v126
  %v366 = vunpack.c.l.bf16 %v127
  %v367 = vunpack.c.h.bf16 %v127
  %v368 = vunpack.c.l.bf16 %v128
  %v369 = vunpack.c.h.bf16 %v128
  %v370 = vunpack.c.l.bf16 %v129
  %v371 = vunpack.c.h.bf16 %v129
  %v372 = vunpack.c.l.bf16 %v130
  %v373 = vunpack.c.h.bf16 %v130
  %v374 = vunpack.c.l.bf16 %v131
  %v375 = vunpack.c.h.bf16 %v131
  %v376 = vunpack.c.l.bf16 %v132
  %v377 = vunpack.c.h.bf16 %v132
  %v378 = vunpack.c.l.bf16 %v133
  %v379 = vunpack.c.h.bf16 %v133
  %v380 = vunpack.c.l.bf16 %v134
  %v381 = vunpack.c.h.bf16 %v134
  %v382 = vunpack.c.l.bf16 %v135
  %v383 = vunpack.c.h.bf16 %v135
  %v384 = vunpack.c.l.bf16 %v136
  %v385 = vunpack.c.h.bf16 %v136
  %v386 = vunpack.c.l.bf16 %v137
  %v387 = vunpack.c.h.bf16 %v137
  %v388 = vunpack.c.l.bf16 %v138
  %v389 = vunpack.c.h.bf16 %v138
  %v390 = vunpack.c.l.bf16 %v139
  %v391 = vunpack.c.h.bf16 %v139
  %v392 = vunpack.c.l.bf16 %v140
  %v393 = vunpack.c.h.bf16 %v140
  %v394 = vunpack.c.l.bf16 %v141
  %v395 = vunpack.c.h.bf16 %v141
  %v396 = vunpack.c.l.bf16 %v142
  %v397 = vunpack.c.h.bf16 %v142
  %v398 = vunpack.c.l.bf16 %v143
  %v399 = vunpack.c.h.bf16 %v143
  %v400 = vld [vmem:[%s1] sm:$0xff]
  %v401 = vld [vmem:[%s1 + $0x8] sm:$0xff]
  %v402 = vld [vmem:[%s1 + $0x10] sm:$0xff]
  %v403 = vld [vmem:[%s1 + $0x18] sm:$0xff]
  %v404 = vld [vmem:[%s1 + $0x20] sm:$0xff]
  %v405 = vld [vmem:[%s1 + $0x28] sm:$0xff]
  %v406 = vld [vmem:[%s1 + $0x30] sm:$0xff]
  %v407 = vld [vmem:[%s1 + $0x38] sm:$0xff]
  %v408 = vunpack.c.l.bf16 %v400
  %v409 = vunpack.c.h.bf16 %v400
  %v410 = vunpack.c.l.bf16 %v401
  %v411 = vunpack.c.h.bf16 %v401
  %v412 = vunpack.c.l.bf16 %v402
  %v413 = vunpack.c.h.bf16 %v402
  %v414 = vunpack.c.l.bf16 %v403
  %v415 = vunpack.c.h.bf16 %v403
  %v416 = vunpack.c.l.bf16 %v404
  %v417 = vunpack.c.h.bf16 %v404
  %v418 = vunpack.c.l.bf16 %v405
  %v419 = vunpack.c.h.bf16 %v405
  %v420 = vunpack.c.l.bf16 %v406
  %v421 = vunpack.c.h.bf16 %v406
  %v422 = vunpack.c.l.bf16 %v407
  %v423 = vunpack.c.h.bf16 %v407
  %v440 = vlaneseq
  %v441 = vshrl.u32 %v440, 7
  %v442 = vsub.s32 0, %v441
  %v443 = vrot.slane %v408, %v442
  %v444 = vlaneseq
  %v445 = vshrl.u32 %v444, 7
  %v446 = vsub.s32 2, %v445
  %v447 = vrot.slane %v408, %v446
  %v448 = vlaneseq
  %v449 = vshrl.u32 %v448, 7
  %v450 = vsub.s32 4, %v449
  %v451 = vrot.slane %v408, %v450
  %v452 = vlaneseq
  %v453 = vshrl.u32 %v452, 7
  %v454 = vsub.s32 6, %v453
  %v455 = vrot.slane %v408, %v454
  %v456 = vlaneseq
  %v457 = vshrl.u32 %v456, 7
  %v458 = vsub.s32 0, %v457
  %v459 = vrot.slane %v409, %v458
  %v460 = vlaneseq
  %v461 = vshrl.u32 %v460, 7
  %v462 = vsub.s32 2, %v461
  %v463 = vrot.slane %v409, %v462
  %v464 = vlaneseq
  %v465 = vshrl.u32 %v464, 7
  %v466 = vsub.s32 4, %v465
  %v467 = vrot.slane %v409, %v466
  %v468 = vlaneseq
  %v469 = vshrl.u32 %v468, 7
  %v470 = vsub.s32 6, %v469
  %v471 = vrot.slane %v409, %v470
  %v472 = vlaneseq
  %v473 = vshrl.u32 %v472, 7
  %v474 = vsub.s32 0, %v473
  %v475 = vrot.slane %v410, %v474
  %v476 = vlaneseq
  %v477 = vshrl.u32 %v476, 7
  %v478 = vsub.s32 2, %v477
  %v479 = vrot.slane %v410, %v478
  %v480 = vlaneseq
  %v481 = vshrl.u32 %v480, 7
  %v482 = vsub.s32 4, %v481
  %v483 = vrot.slane %v410, %v482
  %v484 = vlaneseq
  %v485 = vshrl.u32 %v484, 7
  %v486 = vsub.s32 6, %v485
  %v487 = vrot.slane %v410, %v486
  %v488 = vlaneseq
  %v489 = vshrl.u32 %v488, 7
  %v490 = vsub.s32 0, %v489
  %v491 = vrot.slane %v411, %v490
  %v492 = vlaneseq
  %v493 = vshrl.u32 %v492, 7
  %v494 = vsub.s32 2, %v493
  %v495 = vrot.slane %v411, %v494
  %v496 = vlaneseq
  %v497 = vshrl.u32 %v496, 7
  %v498 = vsub.s32 4, %v497
  %v499 = vrot.slane %v411, %v498
  %v500 = vlaneseq
  %v501 = vshrl.u32 %v500, 7
  %v502 = vsub.s32 6, %v501
  %v503 = vrot.slane %v411, %v502
  %v504 = vlaneseq
  %v505 = vshrl.u32 %v504, 7
  %v506 = vsub.s32 0, %v505
  %v507 = vrot.slane %v412, %v506
  %v508 = vlaneseq
  %v509 = vshrl.u32 %v508, 7
  %v510 = vsub.s32 2, %v509
  %v511 = vrot.slane %v412, %v510
  %v512 = vlaneseq
  %v513 = vshrl.u32 %v512, 7
  %v514 = vsub.s32 4, %v513
  %v515 = vrot.slane %v412, %v514
  %v516 = vlaneseq
  %v517 = vshrl.u32 %v516, 7
  %v518 = vsub.s32 6, %v517
  %v519 = vrot.slane %v412, %v518
  %v520 = vlaneseq
  %v521 = vshrl.u32 %v520, 7
  %v522 = vsub.s32 0, %v521
  %v523 = vrot.slane %v413, %v522
  %v524 = vlaneseq
  %v525 = vshrl.u32 %v524, 7
  %v526 = vsub.s32 2, %v525
  %v527 = vrot.slane %v413, %v526
  %v528 = vlaneseq
  %v529 = vshrl.u32 %v528, 7
  %v530 = vsub.s32 4, %v529
  %v531 = vrot.slane %v413, %v530
  %v532 = vlaneseq
  %v533 = vshrl.u32 %v532, 7
  %v534 = vsub.s32 6, %v533
  %v535 = vrot.slane %v413, %v534
  %v536 = vlaneseq
  %v537 = vshrl.u32 %v536, 7
  %v538 = vsub.s32 0, %v537
  %v539 = vrot.slane %v414, %v538
  %v540 = vlaneseq
  %v541 = vshrl.u32 %v540, 7
  %v542 = vsub.s32 2, %v541
  %v543 = vrot.slane %v414, %v542
  %v544 = vlaneseq
  %v545 = vshrl.u32 %v544, 7
  %v546 = vsub.s32 4, %v545
  %v547 = vrot.slane %v414, %v546
  %v548 = vlaneseq
  %v549 = vshrl.u32 %v548, 7
  %v550 = vsub.s32 6, %v549
  %v551 = vrot.slane %v414, %v550
  %v552 = vlaneseq
  %v553 = vshrl.u32 %v552, 7
  %v554 = vsub.s32 0, %v553
  %v555 = vrot.slane %v415, %v554
  %v556 = vlaneseq
  %v557 = vshrl.u32 %v556, 7
  %v558 = vsub.s32 2, %v557
  %v559 = vrot.slane %v415, %v558
  %v560 = vlaneseq
  %v561 = vshrl.u32 %v560, 7
  %v562 = vsub.s32 4, %v561
  %v563 = vrot.slane %v415, %v562
  %v564 = vlaneseq
  %v565 = vshrl.u32 %v564, 7
  %v566 = vsub.s32 6, %v565
  %v567 = vrot.slane %v415, %v566
  %v568 = vlaneseq
  %v569 = vshrl.u32 %v568, 7
  %v570 = vsub.s32 0, %v569
  %v571 = vrot.slane %v416, %v570
  %v572 = vlaneseq
  %v573 = vshrl.u32 %v572, 7
  %v574 = vsub.s32 2, %v573
  %v575 = vrot.slane %v416, %v574
  %v576 = vlaneseq
  %v577 = vshrl.u32 %v576, 7
  %v578 = vsub.s32 4, %v577
  %v579 = vrot.slane %v416, %v578
  %v580 = vlaneseq
  %v581 = vshrl.u32 %v580, 7
  %v582 = vsub.s32 6, %v581
  %v583 = vrot.slane %v416, %v582
  %v584 = vlaneseq
  %v585 = vshrl.u32 %v584, 7
  %v586 = vsub.s32 0, %v585
  %v587 = vrot.slane %v417, %v586
  %v588 = vlaneseq
  %v589 = vshrl.u32 %v588, 7
  %v590 = vsub.s32 2, %v589
  %v591 = vrot.slane %v417, %v590
  %v592 = vlaneseq
  %v593 = vshrl.u32 %v592, 7
  %v594 = vsub.s32 4, %v593
  %v595 = vrot.slane %v417, %v594
  %v596 = vlaneseq
  %v597 = vshrl.u32 %v596, 7
  %v598 = vsub.s32 6, %v597
  %v599 = vrot.slane %v417, %v598
  %v600 = vlaneseq
  %v601 = vshrl.u32 %v600, 7
  %v602 = vsub.s32 0, %v601
  %v603 = vrot.slane %v418, %v602
  %v604 = vlaneseq
  %v605 = vshrl.u32 %v604, 7
  %v606 = vsub.s32 2, %v605
  %v607 = vrot.slane %v418, %v606
  %v608 = vlaneseq
  %v609 = vshrl.u32 %v608, 7
  %v610 = vsub.s32 4, %v609
  %v611 = vrot.slane %v418, %v610
  %v612 = vlaneseq
  %v613 = vshrl.u32 %v612, 7
  %v614 = vsub.s32 6, %v613
  %v615 = vrot.slane %v418, %v614
  %v616 = vlaneseq
  %v617 = vshrl.u32 %v616, 7
  %v618 = vsub.s32 0, %v617
  %v619 = vrot.slane %v419, %v618
  %v620 = vlaneseq
  %v621 = vshrl.u32 %v620, 7
  %v622 = vsub.s32 2, %v621
  %v623 = vrot.slane %v419, %v622
  %v624 = vlaneseq
  %v625 = vshrl.u32 %v624, 7
  %v626 = vsub.s32 4, %v625
  %v627 = vrot.slane %v419, %v626
  %v628 = vlaneseq
  %v629 = vshrl.u32 %v628, 7
  %v630 = vsub.s32 6, %v629
  %v631 = vrot.slane %v419, %v630
  %v632 = vlaneseq
  %v633 = vshrl.u32 %v632, 7
  %v634 = vsub.s32 0, %v633
  %v635 = vrot.slane %v420, %v634
  %v636 = vlaneseq
  %v637 = vshrl.u32 %v636, 7
  %v638 = vsub.s32 2, %v637
  %v639 = vrot.slane %v420, %v638
  %v640 = vlaneseq
  %v641 = vshrl.u32 %v640, 7
  %v642 = vsub.s32 4, %v641
  %v643 = vrot.slane %v420, %v642
  %v644 = vlaneseq
  %v645 = vshrl.u32 %v644, 7
  %v646 = vsub.s32 6, %v645
  %v647 = vrot.slane %v420, %v646
  %v648 = vlaneseq
  %v649 = vshrl.u32 %v648, 7
  %v650 = vsub.s32 0, %v649
  %v651 = vrot.slane %v421, %v650
  %v652 = vlaneseq
  %v653 = vshrl.u32 %v652, 7
  %v654 = vsub.s32 2, %v653
  %v655 = vrot.slane %v421, %v654
  %v656 = vlaneseq
  %v657 = vshrl.u32 %v656, 7
  %v658 = vsub.s32 4, %v657
  %v659 = vrot.slane %v421, %v658
  %v660 = vlaneseq
  %v661 = vshrl.u32 %v660, 7
  %v662 = vsub.s32 6, %v661
  %v663 = vrot.slane %v421, %v662
  %v664 = vlaneseq
  %v665 = vshrl.u32 %v664, 7
  %v666 = vsub.s32 0, %v665
  %v667 = vrot.slane %v422, %v666
  %v668 = vlaneseq
  %v669 = vshrl.u32 %v668, 7
  %v670 = vsub.s32 2, %v669
  %v671 = vrot.slane %v422, %v670
  %v672 = vlaneseq
  %v673 = vshrl.u32 %v672, 7
  %v674 = vsub.s32 4, %v673
  %v675 = vrot.slane %v422, %v674
  %v676 = vlaneseq
  %v677 = vshrl.u32 %v676, 7
  %v678 = vsub.s32 6, %v677
  %v679 = vrot.slane %v422, %v678
  %v680 = vlaneseq
  %v681 = vshrl.u32 %v680, 7
  %v682 = vsub.s32 0, %v681
  %v683 = vrot.slane %v423, %v682
  %v684 = vlaneseq
  %v685 = vshrl.u32 %v684, 7
  %v686 = vsub.s32 2, %v685
  %v687 = vrot.slane %v423, %v686
  %v688 = vlaneseq
  %v689 = vshrl.u32 %v688, 7
  %v690 = vsub.s32 4, %v689
  %v691 = vrot.slane %v423, %v690
  %v692 = vlaneseq
  %v693 = vshrl.u32 %v692, 7
  %v694 = vsub.s32 6, %v693
  %v695 = vrot.slane %v423, %v694
  %v760 = vlaneseq
  %v761 = vshrl.u32 %v760, 7
  %v762 = vsub.s32 0, %v761
  %v763 = vrot.slane %v443, %v762
  %v764 = vlaneseq
  %v765 = vshrl.u32 %v764, 7
  %v766 = vsub.s32 0, %v765
  %v767 = vrot.slane %v447, %v766
  %v768 = vlaneseq
  %v769 = vshrl.u32 %v768, 7
  %v770 = vsub.s32 0, %v769
  %v771 = vrot.slane %v451, %v770
  %v772 = vlaneseq
  %v773 = vshrl.u32 %v772, 7
  %v774 = vsub.s32 0, %v773
  %v775 = vrot.slane %v455, %v774
  %v776 = vlaneseq
  %v777 = vshrl.u32 %v776, 7
  %v778 = vsub.s32 0, %v777
  %v779 = vrot.slane %v459, %v778
  %v780 = vlaneseq
  %v781 = vshrl.u32 %v780, 7
  %v782 = vsub.s32 0, %v781
  %v783 = vrot.slane %v463, %v782
  %v784 = vlaneseq
  %v785 = vshrl.u32 %v784, 7
  %v786 = vsub.s32 0, %v785
  %v787 = vrot.slane %v467, %v786
  %v788 = vlaneseq
  %v789 = vshrl.u32 %v788, 7
  %v790 = vsub.s32 0, %v789
  %v791 = vrot.slane %v471, %v790
  %v792 = vlaneseq
  %v793 = vshrl.u32 %v792, 7
  %v794 = vsub.s32 0, %v793
  %v795 = vrot.slane %v475, %v794
  %v796 = vlaneseq
  %v797 = vshrl.u32 %v796, 7
  %v798 = vsub.s32 0, %v797
  %v799 = vrot.slane %v479, %v798
  %v800 = vlaneseq
  %v801 = vshrl.u32 %v800, 7
  %v802 = vsub.s32 0, %v801
  %v803 = vrot.slane %v483, %v802
  %v804 = vlaneseq
  %v805 = vshrl.u32 %v804, 7
  %v806 = vsub.s32 0, %v805
  %v807 = vrot.slane %v487, %v806
  %v808 = vlaneseq
  %v809 = vshrl.u32 %v808, 7
  %v810 = vsub.s32 0, %v809
  %v811 = vrot.slane %v491, %v810
  %v812 = vlaneseq
  %v813 = vshrl.u32 %v812, 7
  %v814 = vsub.s32 0, %v813
  %v815 = vrot.slane %v495, %v814
  %v816 = vlaneseq
  %v817 = vshrl.u32 %v816, 7
  %v818 = vsub.s32 0, %v817
  %v819 = vrot.slane %v499, %v818
  %v820 = vlaneseq
  %v821 = vshrl.u32 %v820, 7
  %v822 = vsub.s32 0, %v821
  %v823 = vrot.slane %v503, %v822
  %v824 = vlaneseq
  %v825 = vshrl.u32 %v824, 7
  %v826 = vsub.s32 0, %v825
  %v827 = vrot.slane %v507, %v826
  %v828 = vlaneseq
  %v829 = vshrl.u32 %v828, 7
  %v830 = vsub.s32 0, %v829
  %v831 = vrot.slane %v511, %v830
  %v832 = vlaneseq
  %v833 = vshrl.u32 %v832, 7
  %v834 = vsub.s32 0, %v833
  %v835 = vrot.slane %v515, %v834
  %v836 = vlaneseq
  %v837 = vshrl.u32 %v836, 7
  %v838 = vsub.s32 0, %v837
  %v839 = vrot.slane %v519, %v838
  %v840 = vlaneseq
  %v841 = vshrl.u32 %v840, 7
  %v842 = vsub.s32 0, %v841
  %v843 = vrot.slane %v523, %v842
  %v844 = vlaneseq
  %v845 = vshrl.u32 %v844, 7
  %v846 = vsub.s32 0, %v845
  %v847 = vrot.slane %v527, %v846
  %v848 = vlaneseq
  %v849 = vshrl.u32 %v848, 7
  %v850 = vsub.s32 0, %v849
  %v851 = vrot.slane %v531, %v850
  %v852 = vlaneseq
  %v853 = vshrl.u32 %v852, 7
  %v854 = vsub.s32 0, %v853
  %v855 = vrot.slane %v535, %v854
  %v856 = vlaneseq
  %v857 = vshrl.u32 %v856, 7
  %v858 = vsub.s32 0, %v857
  %v859 = vrot.slane %v539, %v858
  %v860 = vlaneseq
  %v861 = vshrl.u32 %v860, 7
  %v862 = vsub.s32 0, %v861
  %v863 = vrot.slane %v543, %v862
  %v864 = vlaneseq
  %v865 = vshrl.u32 %v864, 7
  %v866 = vsub.s32 0, %v865
  %v867 = vrot.slane %v547, %v866
  %v868 = vlaneseq
  %v869 = vshrl.u32 %v868, 7
  %v870 = vsub.s32 0, %v869
  %v871 = vrot.slane %v551, %v870
  %v872 = vlaneseq
  %v873 = vshrl.u32 %v872, 7
  %v874 = vsub.s32 0, %v873
  %v875 = vrot.slane %v555, %v874
  %v876 = vlaneseq
  %v877 = vshrl.u32 %v876, 7
  %v878 = vsub.s32 0, %v877
  %v879 = vrot.slane %v559, %v878
  %v880 = vlaneseq
  %v881 = vshrl.u32 %v880, 7
  %v882 = vsub.s32 0, %v881
  %v883 = vrot.slane %v563, %v882
  %v884 = vlaneseq
  %v885 = vshrl.u32 %v884, 7
  %v886 = vsub.s32 0, %v885
  %v887 = vrot.slane %v567, %v886
  %v888 = vlaneseq
  %v889 = vshrl.u32 %v888, 7
  %v890 = vsub.s32 0, %v889
  %v891 = vrot.slane %v571, %v890
  %v892 = vlaneseq
  %v893 = vshrl.u32 %v892, 7
  %v894 = vsub.s32 0, %v893
  %v895 = vrot.slane %v575, %v894
  %v896 = vlaneseq
  %v897 = vshrl.u32 %v896, 7
  %v898 = vsub.s32 0, %v897
  %v899 = vrot.slane %v579, %v898
  %v900 = vlaneseq
  %v901 = vshrl.u32 %v900, 7
  %v902 = vsub.s32 0, %v901
  %v903 = vrot.slane %v583, %v902
  %v904 = vlaneseq
  %v905 = vshrl.u32 %v904, 7
  %v906 = vsub.s32 0, %v905
  %v907 = vrot.slane %v587, %v906
  %v908 = vlaneseq
  %v909 = vshrl.u32 %v908, 7
  %v910 = vsub.s32 0, %v909
  %v911 = vrot.slane %v591, %v910
  %v912 = vlaneseq
  %v913 = vshrl.u32 %v912, 7
  %v914 = vsub.s32 0, %v913
  %v915 = vrot.slane %v595, %v914
  %v916 = vlaneseq
  %v917 = vshrl.u32 %v916, 7
  %v918 = vsub.s32 0, %v917
  %v919 = vrot.slane %v599, %v918
  %v920 = vlaneseq
  %v921 = vshrl.u32 %v920, 7
  %v922 = vsub.s32 0, %v921
  %v923 = vrot.slane %v603, %v922
  %v924 = vlaneseq
  %v925 = vshrl.u32 %v924, 7
  %v926 = vsub.s32 0, %v925
  %v927 = vrot.slane %v607, %v926
  %v928 = vlaneseq
  %v929 = vshrl.u32 %v928, 7
  %v930 = vsub.s32 0, %v929
  %v931 = vrot.slane %v611, %v930
  %v932 = vlaneseq
  %v933 = vshrl.u32 %v932, 7
  %v934 = vsub.s32 0, %v933
  %v935 = vrot.slane %v615, %v934
  %v936 = vlaneseq
  %v937 = vshrl.u32 %v936, 7
  %v938 = vsub.s32 0, %v937
  %v939 = vrot.slane %v619, %v938
  %v940 = vlaneseq
  %v941 = vshrl.u32 %v940, 7
  %v942 = vsub.s32 0, %v941
  %v943 = vrot.slane %v623, %v942
  %v944 = vlaneseq
  %v945 = vshrl.u32 %v944, 7
  %v946 = vsub.s32 0, %v945
  %v947 = vrot.slane %v627, %v946
  %v948 = vlaneseq
  %v949 = vshrl.u32 %v948, 7
  %v950 = vsub.s32 0, %v949
  %v951 = vrot.slane %v631, %v950
  %v952 = vlaneseq
  %v953 = vshrl.u32 %v952, 7
  %v954 = vsub.s32 0, %v953
  %v955 = vrot.slane %v635, %v954
  %v956 = vlaneseq
  %v957 = vshrl.u32 %v956, 7
  %v958 = vsub.s32 0, %v957
  %v959 = vrot.slane %v639, %v958
  %v960 = vlaneseq
  %v961 = vshrl.u32 %v960, 7
  %v962 = vsub.s32 0, %v961
  %v963 = vrot.slane %v643, %v962
  %v964 = vlaneseq
  %v965 = vshrl.u32 %v964, 7
  %v966 = vsub.s32 0, %v965
  %v967 = vrot.slane %v647, %v966
  %v968 = vlaneseq
  %v969 = vshrl.u32 %v968, 7
  %v970 = vsub.s32 0, %v969
  %v971 = vrot.slane %v651, %v970
  %v972 = vlaneseq
  %v973 = vshrl.u32 %v972, 7
  %v974 = vsub.s32 0, %v973
  %v975 = vrot.slane %v655, %v974
  %v976 = vlaneseq
  %v977 = vshrl.u32 %v976, 7
  %v978 = vsub.s32 0, %v977
  %v979 = vrot.slane %v659, %v978
  %v980 = vlaneseq
  %v981 = vshrl.u32 %v980, 7
  %v982 = vsub.s32 0, %v981
  %v983 = vrot.slane %v663, %v982
  %v984 = vlaneseq
  %v985 = vshrl.u32 %v984, 7
  %v986 = vsub.s32 0, %v985
  %v987 = vrot.slane %v667, %v986
  %v988 = vlaneseq
  %v989 = vshrl.u32 %v988, 7
  %v990 = vsub.s32 0, %v989
  %v991 = vrot.slane %v671, %v990
  %v992 = vlaneseq
  %v993 = vshrl.u32 %v992, 7
  %v994 = vsub.s32 0, %v993
  %v995 = vrot.slane %v675, %v994
  %v996 = vlaneseq
  %v997 = vshrl.u32 %v996, 7
  %v998 = vsub.s32 0, %v997
  %v999 = vrot.slane %v679, %v998
  %v1000 = vlaneseq
  %v1001 = vshrl.u32 %v1000, 7
  %v1002 = vsub.s32 0, %v1001
  %v1003 = vrot.slane %v683, %v1002
  %v1004 = vlaneseq
  %v1005 = vshrl.u32 %v1004, 7
  %v1006 = vsub.s32 0, %v1005
  %v1007 = vrot.slane %v687, %v1006
  %v1008 = vlaneseq
  %v1009 = vshrl.u32 %v1008, 7
  %v1010 = vsub.s32 0, %v1009
  %v1011 = vrot.slane %v691, %v1010
  %v1012 = vlaneseq
  %v1013 = vshrl.u32 %v1012, 7
  %v1014 = vsub.s32 0, %v1013
  %v1015 = vrot.slane %v695, %v1014
  %v1016 = vmul.f32 %v144, %v763
  %v1017 = vmul.f32 %v145, %v767
  %v1018 = vmul.f32 %v146, %v771
  %v1019 = vmul.f32 %v147, %v775
  %v1020 = vmul.f32 %v148, %v779
  %v1021 = vmul.f32 %v149, %v783
  %v1022 = vmul.f32 %v150, %v787
  %v1023 = vmul.f32 %v151, %v791
  %v1024 = vmul.f32 %v152, %v795
  %v1025 = vmul.f32 %v153, %v799
  %v1026 = vmul.f32 %v154, %v803
  %v1027 = vmul.f32 %v155, %v807
  %v1028 = vmul.f32 %v156, %v811
  %v1029 = vmul.f32 %v157, %v815
  %v1030 = vmul.f32 %v158, %v819
  %v1031 = vmul.f32 %v159, %v823
  %v1032 = vmul.f32 %v160, %v827
  %v1033 = vmul.f32 %v161, %v831
  %v1034 = vmul.f32 %v162, %v835
  %v1035 = vmul.f32 %v163, %v839
  %v1036 = vmul.f32 %v164, %v843
  %v1037 = vmul.f32 %v165, %v847
  %v1038 = vmul.f32 %v166, %v851
  %v1039 = vmul.f32 %v167, %v855
  %v1040 = vmul.f32 %v168, %v859
  %v1041 = vmul.f32 %v169, %v863
  %v1042 = vmul.f32 %v170, %v867
  %v1043 = vmul.f32 %v171, %v871
  %v1044 = vmul.f32 %v172, %v875
  %v1045 = vmul.f32 %v173, %v879
  %v1046 = vmul.f32 %v174, %v883
  %v1047 = vmul.f32 %v175, %v887
  %v1048 = vmul.f32 %v176, %v891
  %v1049 = vmul.f32 %v177, %v895
  %v1050 = vmul.f32 %v178, %v899
  %v1051 = vmul.f32 %v179, %v903
  %v1052 = vmul.f32 %v180, %v907
  %v1053 = vmul.f32 %v181, %v911
  %v1054 = vmul.f32 %v182, %v915
  %v1055 = vmul.f32 %v183, %v919
  %v1056 = vmul.f32 %v184, %v923
  %v1057 = vmul.f32 %v185, %v927
  %v1058 = vmul.f32 %v186, %v931
  %v1059 = vmul.f32 %v187, %v935
  %v1060 = vmul.f32 %v188, %v939
  %v1061 = vmul.f32 %v189, %v943
  %v1062 = vmul.f32 %v190, %v947
  %v1063 = vmul.f32 %v191, %v951
  %v1064 = vmul.f32 %v192, %v955
  %v1065 = vmul.f32 %v193, %v959
  %v1066 = vmul.f32 %v194, %v963
  %v1067 = vmul.f32 %v195, %v967
  %v1068 = vmul.f32 %v196, %v971
  %v1069 = vmul.f32 %v197, %v975
  %v1070 = vmul.f32 %v198, %v979
  %v1071 = vmul.f32 %v199, %v983
  %v1072 = vmul.f32 %v200, %v987
  %v1073 = vmul.f32 %v201, %v991
  %v1074 = vmul.f32 %v202, %v995
  %v1075 = vmul.f32 %v203, %v999
  %v1076 = vmul.f32 %v204, %v1003
  %v1077 = vmul.f32 %v205, %v1007
  %v1078 = vmul.f32 %v206, %v1011
  %v1079 = vmul.f32 %v207, %v1015
  %v1080 = vmul.f32 %v208, %v763
  %v1081 = vmul.f32 %v209, %v767
  %v1082 = vmul.f32 %v210, %v771
  %v1083 = vmul.f32 %v211, %v775
  %v1084 = vmul.f32 %v212, %v779
  %v1085 = vmul.f32 %v213, %v783
  %v1086 = vmul.f32 %v214, %v787
  %v1087 = vmul.f32 %v215, %v791
  %v1088 = vmul.f32 %v216, %v795
  %v1089 = vmul.f32 %v217, %v799
  %v1090 = vmul.f32 %v218, %v803
  %v1091 = vmul.f32 %v219, %v807
  %v1092 = vmul.f32 %v220, %v811
  %v1093 = vmul.f32 %v221, %v815
  %v1094 = vmul.f32 %v222, %v819
  %v1095 = vmul.f32 %v223, %v823
  %v1096 = vmul.f32 %v224, %v827
  %v1097 = vmul.f32 %v225, %v831
  %v1098 = vmul.f32 %v226, %v835
  %v1099 = vmul.f32 %v227, %v839
  %v1100 = vmul.f32 %v228, %v843
  %v1101 = vmul.f32 %v229, %v847
  %v1102 = vmul.f32 %v230, %v851
  %v1103 = vmul.f32 %v231, %v855
  %v1104 = vmul.f32 %v232, %v859
  %v1105 = vmul.f32 %v233, %v863
  %v1106 = vmul.f32 %v234, %v867
  %v1107 = vmul.f32 %v235, %v871
  %v1108 = vmul.f32 %v236, %v875
  %v1109 = vmul.f32 %v237, %v879
  %v1110 = vmul.f32 %v238, %v883
  %v1111 = vmul.f32 %v239, %v887
  %v1112 = vmul.f32 %v240, %v891
  %v1113 = vmul.f32 %v241, %v895
  %v1114 = vmul.f32 %v242, %v899
  %v1115 = vmul.f32 %v243, %v903
  %v1116 = vmul.f32 %v244, %v907
  %v1117 = vmul.f32 %v245, %v911
  %v1118 = vmul.f32 %v246, %v915
  %v1119 = vmul.f32 %v247, %v919
  %v1120 = vmul.f32 %v248, %v923
  %v1121 = vmul.f32 %v249, %v927
  %v1122 = vmul.f32 %v250, %v931
  %v1123 = vmul.f32 %v251, %v935
  %v1124 = vmul.f32 %v252, %v939
  %v1125 = vmul.f32 %v253, %v943
  %v1126 = vmul.f32 %v254, %v947
  %v1127 = vmul.f32 %v255, %v951
  %v1128 = vmul.f32 %v256, %v955
  %v1129 = vmul.f32 %v257, %v959
  %v1130 = vmul.f32 %v258, %v963
  %v1131 = vmul.f32 %v259, %v967
  %v1132 = vmul.f32 %v260, %v971
  %v1133 = vmul.f32 %v261, %v975
  %v1134 = vmul.f32 %v262, %v979
  %v1135 = vmul.f32 %v263, %v983
  %v1136 = vmul.f32 %v264, %v987
  %v1137 = vmul.f32 %v265, %v991
  %v1138 = vmul.f32 %v266, %v995
  %v1139 = vmul.f32 %v267, %v999
  %v1140 = vmul.f32 %v268, %v1003
  %v1141 = vmul.f32 %v269, %v1007
  %v1142 = vmul.f32 %v270, %v1011
  %v1143 = vmul.f32 %v271, %v1015
  %v1144 = vmul.f32 %v272, %v763
  %v1145 = vmul.f32 %v273, %v767
  %v1146 = vmul.f32 %v274, %v771
  %v1147 = vmul.f32 %v275, %v775
  %v1148 = vmul.f32 %v276, %v779
  %v1149 = vmul.f32 %v277, %v783
  %v1150 = vmul.f32 %v278, %v787
  %v1151 = vmul.f32 %v279, %v791
  %v1152 = vmul.f32 %v280, %v795
  %v1153 = vmul.f32 %v281, %v799
  %v1154 = vmul.f32 %v282, %v803
  %v1155 = vmul.f32 %v283, %v807
  %v1156 = vmul.f32 %v284, %v811
  %v1157 = vmul.f32 %v285, %v815
  %v1158 = vmul.f32 %v286, %v819
  %v1159 = vmul.f32 %v287, %v823
  %v1160 = vmul.f32 %v288, %v827
  %v1161 = vmul.f32 %v289, %v831
  %v1162 = vmul.f32 %v290, %v835
  %v1163 = vmul.f32 %v291, %v839
  %v1164 = vmul.f32 %v292, %v843
  %v1165 = vmul.f32 %v293, %v847
  %v1166 = vmul.f32 %v294, %v851
  %v1167 = vmul.f32 %v295, %v855
  %v1168 = vmul.f32 %v296, %v859
  %v1169 = vmul.f32 %v297, %v863
  %v1170 = vmul.f32 %v298, %v867
  %v1171 = vmul.f32 %v299, %v871
  %v1172 = vmul.f32 %v300, %v875
  %v1173 = vmul.f32 %v301, %v879
  %v1174 = vmul.f32 %v302, %v883
  %v1175 = vmul.f32 %v303, %v887
  %v1176 = vmul.f32 %v304, %v891
  %v1177 = vmul.f32 %v305, %v895
  %v1178 = vmul.f32 %v306, %v899
  %v1179 = vmul.f32 %v307, %v903
  %v1180 = vmul.f32 %v308, %v907
  %v1181 = vmul.f32 %v309, %v911
  %v1182 = vmul.f32 %v310, %v915
  %v1183 = vmul.f32 %v311, %v919
  %v1184 = vmul.f32 %v312, %v923
  %v1185 = vmul.f32 %v313, %v927
  %v1186 = vmul.f32 %v314, %v931
  %v1187 = vmul.f32 %v315, %v935
  %v1188 = vmul.f32 %v316, %v939
  %v1189 = vmul.f32 %v317, %v943
  %v1190 = vmul.f32 %v318, %v947
  %v1191 = vmul.f32 %v319, %v951
  %v1192 = vmul.f32 %v320, %v955
  %v1193 = vmul.f32 %v321, %v959
  %v1194 = vmul.f32 %v322, %v963
  %v1195 = vmul.f32 %v323, %v967
  %v1196 = vmul.f32 %v324, %v971
  %v1197 = vmul.f32 %v325, %v975
  %v1198 = vmul.f32 %v326, %v979
  %v1199 = vmul.f32 %v327, %v983
  %v1200 = vmul.f32 %v328, %v987
  %v1201 = vmul.f32 %v329, %v991
  %v1202 = vmul.f32 %v330, %v995
  %v1203 = vmul.f32 %v331, %v999
  %v1204 = vmul.f32 %v332, %v1003
  %v1205 = vmul.f32 %v333, %v1007
  %v1206 = vmul.f32 %v334, %v1011
  %v1207 = vmul.f32 %v335, %v1015
  %v1208 = vmul.f32 %v336, %v763
  %v1209 = vmul.f32 %v337, %v767
  %v1210 = vmul.f32 %v338, %v771
  %v1211 = vmul.f32 %v339, %v775
  %v1212 = vmul.f32 %v340, %v779
  %v1213 = vmul.f32 %v341, %v783
  %v1214 = vmul.f32 %v342, %v787
  %v1215 = vmul.f32 %v343, %v791
  %v1216 = vmul.f32 %v344, %v795
  %v1217 = vmul.f32 %v345, %v799
  %v1218 = vmul.f32 %v346, %v803
  %v1219 = vmul.f32 %v347, %v807
  %v1220 = vmul.f32 %v348, %v811
  %v1221 = vmul.f32 %v349, %v815
  %v1222 = vmul.f32 %v350, %v819
  %v1223 = vmul.f32 %v351, %v823
  %v1224 = vmul.f32 %v352, %v827
  %v1225 = vmul.f32 %v353, %v831
  %v1226 = vmul.f32 %v354, %v835
  %v1227 = vmul.f32 %v355, %v839
  %v1228 = vmul.f32 %v356, %v843
  %v1229 = vmul.f32 %v357, %v847
  %v1230 = vmul.f32 %v358, %v851
  %v1231 = vmul.f32 %v359, %v855
  %v1232 = vmul.f32 %v360, %v859
  %v1233 = vmul.f32 %v361, %v863
  %v1234 = vmul.f32 %v362, %v867
  %v1235 = vmul.f32 %v363, %v871
  %v1236 = vmul.f32 %v364, %v875
  %v1237 = vmul.f32 %v365, %v879
  %v1238 = vmul.f32 %v366, %v883
  %v1239 = vmul.f32 %v367, %v887
  %v1240 = vmul.f32 %v368, %v891
  %v1241 = vmul.f32 %v369, %v895
  %v1242 = vmul.f32 %v370, %v899
  %v1243 = vmul.f32 %v371, %v903
  %v1244 = vmul.f32 %v372, %v907
  %v1245 = vmul.f32 %v373, %v911
  %v1246 = vmul.f32 %v374, %v915
  %v1247 = vmul.f32 %v375, %v919
  %v1248 = vmul.f32 %v376, %v923
  %v1249 = vmul.f32 %v377, %v927
  %v1250 = vmul.f32 %v378, %v931
  %v1251 = vmul.f32 %v379, %v935
  %v1252 = vmul.f32 %v380, %v939
  %v1253 = vmul.f32 %v381, %v943
  %v1254 = vmul.f32 %v382, %v947
  %v1255 = vmul.f32 %v383, %v951
  %v1256 = vmul.f32 %v384, %v955
  %v1257 = vmul.f32 %v385, %v959
  %v1258 = vmul.f32 %v386, %v963
  %v1259 = vmul.f32 %v387, %v967
  %v1260 = vmul.f32 %v388, %v971
  %v1261 = vmul.f32 %v389, %v975
  %v1262 = vmul.f32 %v390, %v979
  %v1263 = vmul.f32 %v391, %v983
  %v1264 = vmul.f32 %v392, %v987
  %v1265 = vmul.f32 %v393, %v991
  %v1266 = vmul.f32 %v394, %v995
  %v1267 = vmul.f32 %v395, %v999
  %v1268 = vmul.f32 %v396, %v1003
  %v1269 = vmul.f32 %v397, %v1007
  %v1270 = vmul.f32 %v398, %v1011
  %v1271 = vmul.f32 %v399, %v1015
  %v1272 = vadd.f32 %v1016, %v1017
  %v1273 = vadd.f32 %v1272, %v1018
  %v1274 = vadd.f32 %v1273, %v1019
  %v1275 = vadd.f32 %v1274, %v1020
  %v1276 = vadd.f32 %v1275, %v1021
  %v1277 = vadd.f32 %v1276, %v1022
  %v1278 = vadd.f32 %v1277, %v1023
  %v1279 = vadd.f32 %v1278, %v1024
  %v1280 = vadd.f32 %v1279, %v1025
  %v1281 = vadd.f32 %v1280, %v1026
  %v1282 = vadd.f32 %v1281, %v1027
  %v1283 = vadd.f32 %v1282, %v1028
  %v1284 = vadd.f32 %v1283, %v1029
  %v1285 = vadd.f32 %v1284, %v1030
  %v1286 = vadd.f32 %v1285, %v1031
  %v1287 = vadd.f32 %v1286, %v1032
  %v1288 = vadd.f32 %v1287, %v1033
  %v1289 = vadd.f32 %v1288, %v1034
  %v1290 = vadd.f32 %v1289, %v1035
  %v1291 = vadd.f32 %v1290, %v1036
  %v1292 = vadd.f32 %v1291, %v1037
  %v1293 = vadd.f32 %v1292, %v1038
  %v1294 = vadd.f32 %v1293, %v1039
  %v1295 = vadd.f32 %v1294, %v1040
  %v1296 = vadd.f32 %v1295, %v1041
  %v1297 = vadd.f32 %v1296, %v1042
  %v1298 = vadd.f32 %v1297, %v1043
  %v1299 = vadd.f32 %v1298, %v1044
  %v1300 = vadd.f32 %v1299, %v1045
  %v1301 = vadd.f32 %v1300, %v1046
  %v1302 = vadd.f32 %v1301, %v1047
  %v1303 = vadd.f32 %v1302, %v1048
  %v1304 = vadd.f32 %v1303, %v1049
  %v1305 = vadd.f32 %v1304, %v1050
  %v1306 = vadd.f32 %v1305, %v1051
  %v1307 = vadd.f32 %v1306, %v1052
  %v1308 = vadd.f32 %v1307, %v1053
  %v1309 = vadd.f32 %v1308, %v1054
  %v1310 = vadd.f32 %v1309, %v1055
  %v1311 = vadd.f32 %v1310, %v1056
  %v1312 = vadd.f32 %v1311, %v1057
  %v1313 = vadd.f32 %v1312, %v1058
  %v1314 = vadd.f32 %v1313, %v1059
  %v1315 = vadd.f32 %v1314, %v1060
  %v1316 = vadd.f32 %v1315, %v1061
  %v1317 = vadd.f32 %v1316, %v1062
  %v1318 = vadd.f32 %v1317, %v1063
  %v1319 = vadd.f32 %v1318, %v1064
  %v1320 = vadd.f32 %v1319, %v1065
  %v1321 = vadd.f32 %v1320, %v1066
  %v1322 = vadd.f32 %v1321, %v1067
  %v1323 = vadd.f32 %v1322, %v1068
  %v1324 = vadd.f32 %v1323, %v1069
  %v1325 = vadd.f32 %v1324, %v1070
  %v1326 = vadd.f32 %v1325, %v1071
  %v1327 = vadd.f32 %v1326, %v1072
  %v1328 = vadd.f32 %v1327, %v1073
  %v1329 = vadd.f32 %v1328, %v1074
  %v1330 = vadd.f32 %v1329, %v1075
  %v1331 = vadd.f32 %v1330, %v1076
  %v1332 = vadd.f32 %v1331, %v1077
  %v1333 = vadd.f32 %v1332, %v1078
  %v1334 = vadd.f32 %v1333, %v1079
  %1335 = vadd.xlane.f32.xlu0 %v1334
  %v1336 = vpop.xlane.xlu0 %1335
  %vm1337 = vcmask 1040384
  %v1338 = vsel %vm1337, %v1080, 0.0
  %v1339 = vsel %vm1337, %v1081, 0.0
  %v1340 = vadd.f32 %v1338, %v1339
  %v1341 = vsel %vm1337, %v1082, 0.0
  %v1342 = vadd.f32 %v1340, %v1341
  %v1343 = vsel %vm1337, %v1083, 0.0
  %v1344 = vadd.f32 %v1342, %v1343
  %v1345 = vsel %vm1337, %v1084, 0.0
  %v1346 = vadd.f32 %v1344, %v1345
  %v1347 = vsel %vm1337, %v1085, 0.0
  %v1348 = vadd.f32 %v1346, %v1347
  %v1349 = vsel %vm1337, %v1086, 0.0
  %v1350 = vadd.f32 %v1348, %v1349
  %v1351 = vsel %vm1337, %v1087, 0.0
  %v1352 = vadd.f32 %v1350, %v1351
  %v1353 = vsel %vm1337, %v1088, 0.0
  %v1354 = vadd.f32 %v1352, %v1353
  %v1355 = vsel %vm1337, %v1089, 0.0
  %v1356 = vadd.f32 %v1354, %v1355
  %v1357 = vsel %vm1337, %v1090, 0.0
  %v1358 = vadd.f32 %v1356, %v1357
  %v1359 = vsel %vm1337, %v1091, 0.0
  %v1360 = vadd.f32 %v1358, %v1359
  %v1361 = vsel %vm1337, %v1092, 0.0
  %v1362 = vadd.f32 %v1360, %v1361
  %v1363 = vsel %vm1337, %v1093, 0.0
  %v1364 = vadd.f32 %v1362, %v1363
  %v1365 = vsel %vm1337, %v1094, 0.0
  %v1366 = vadd.f32 %v1364, %v1365
  %v1367 = vsel %vm1337, %v1095, 0.0
  %v1368 = vadd.f32 %v1366, %v1367
  %v1369 = vsel %vm1337, %v1096, 0.0
  %v1370 = vadd.f32 %v1368, %v1369
  %v1371 = vsel %vm1337, %v1097, 0.0
  %v1372 = vadd.f32 %v1370, %v1371
  %v1373 = vsel %vm1337, %v1098, 0.0
  %v1374 = vadd.f32 %v1372, %v1373
  %v1375 = vsel %vm1337, %v1099, 0.0
  %v1376 = vadd.f32 %v1374, %v1375
  %v1377 = vsel %vm1337, %v1100, 0.0
  %v1378 = vadd.f32 %v1376, %v1377
  %v1379 = vsel %vm1337, %v1101, 0.0
  %v1380 = vadd.f32 %v1378, %v1379
  %v1381 = vsel %vm1337, %v1102, 0.0
  %v1382 = vadd.f32 %v1380, %v1381
  %v1383 = vsel %vm1337, %v1103, 0.0
  %v1384 = vadd.f32 %v1382, %v1383
  %v1385 = vsel %vm1337, %v1104, 0.0
  %v1386 = vadd.f32 %v1384, %v1385
  %v1387 = vsel %vm1337, %v1105, 0.0
  %v1388 = vadd.f32 %v1386, %v1387
  %v1389 = vsel %vm1337, %v1106, 0.0
  %v1390 = vadd.f32 %v1388, %v1389
  %v1391 = vsel %vm1337, %v1107, 0.0
  %v1392 = vadd.f32 %v1390, %v1391
  %v1393 = vsel %vm1337, %v1108, 0.0
  %v1394 = vadd.f32 %v1392, %v1393
  %v1395 = vsel %vm1337, %v1109, 0.0
  %v1396 = vadd.f32 %v1394, %v1395
  %v1397 = vsel %vm1337, %v1110, 0.0
  %v1398 = vadd.f32 %v1396, %v1397
  %v1399 = vsel %vm1337, %v1111, 0.0
  %v1400 = vadd.f32 %v1398, %v1399
  %v1401 = vsel %vm1337, %v1112, 0.0
  %v1402 = vadd.f32 %v1400, %v1401
  %v1403 = vsel %vm1337, %v1113, 0.0
  %v1404 = vadd.f32 %v1402, %v1403
  %v1405 = vsel %vm1337, %v1114, 0.0
  %v1406 = vadd.f32 %v1404, %v1405
  %v1407 = vsel %vm1337, %v1115, 0.0
  %v1408 = vadd.f32 %v1406, %v1407
  %v1409 = vsel %vm1337, %v1116, 0.0
  %v1410 = vadd.f32 %v1408, %v1409
  %v1411 = vsel %vm1337, %v1117, 0.0
  %v1412 = vadd.f32 %v1410, %v1411
  %v1413 = vsel %vm1337, %v1118, 0.0
  %v1414 = vadd.f32 %v1412, %v1413
  %v1415 = vsel %vm1337, %v1119, 0.0
  %v1416 = vadd.f32 %v1414, %v1415
  %v1417 = vsel %vm1337, %v1120, 0.0
  %v1418 = vadd.f32 %v1416, %v1417
  %v1419 = vsel %vm1337, %v1121, 0.0
  %v1420 = vadd.f32 %v1418, %v1419
  %v1421 = vsel %vm1337, %v1122, 0.0
  %v1422 = vadd.f32 %v1420, %v1421
  %v1423 = vsel %vm1337, %v1123, 0.0
  %v1424 = vadd.f32 %v1422, %v1423
  %v1425 = vsel %vm1337, %v1124, 0.0
  %v1426 = vadd.f32 %v1424, %v1425
  %v1427 = vsel %vm1337, %v1125, 0.0
  %v1428 = vadd.f32 %v1426, %v1427
  %v1429 = vsel %vm1337, %v1126, 0.0
  %v1430 = vadd.f32 %v1428, %v1429
  %v1431 = vsel %vm1337, %v1127, 0.0
  %v1432 = vadd.f32 %v1430, %v1431
  %v1433 = vsel %vm1337, %v1128, 0.0
  %v1434 = vadd.f32 %v1432, %v1433
  %v1435 = vsel %vm1337, %v1129, 0.0
  %v1436 = vadd.f32 %v1434, %v1435
  %v1437 = vsel %vm1337, %v1130, 0.0
  %v1438 = vadd.f32 %v1436, %v1437
  %v1439 = vsel %vm1337, %v1131, 0.0
  %v1440 = vadd.f32 %v1438, %v1439
  %v1441 = vsel %vm1337, %v1132, 0.0
  %v1442 = vadd.f32 %v1440, %v1441
  %v1443 = vsel %vm1337, %v1133, 0.0
  %v1444 = vadd.f32 %v1442, %v1443
  %v1445 = vsel %vm1337, %v1134, 0.0
  %v1446 = vadd.f32 %v1444, %v1445
  %v1447 = vsel %vm1337, %v1135, 0.0
  %v1448 = vadd.f32 %v1446, %v1447
  %v1449 = vsel %vm1337, %v1136, 0.0
  %v1450 = vadd.f32 %v1448, %v1449
  %v1451 = vsel %vm1337, %v1137, 0.0
  %v1452 = vadd.f32 %v1450, %v1451
  %v1453 = vsel %vm1337, %v1138, 0.0
  %v1454 = vadd.f32 %v1452, %v1453
  %v1455 = vsel %vm1337, %v1139, 0.0
  %v1456 = vadd.f32 %v1454, %v1455
  %v1457 = vsel %vm1337, %v1140, 0.0
  %v1458 = vadd.f32 %v1456, %v1457
  %v1459 = vsel %vm1337, %v1141, 0.0
  %v1460 = vadd.f32 %v1458, %v1459
  %v1461 = vsel %vm1337, %v1142, 0.0
  %v1462 = vadd.f32 %v1460, %v1461
  %v1463 = vsel %vm1337, %v1143, 0.0
  %v1464 = vadd.f32 %v1462, %v1463
  %1465 = vadd.xlane.f32.xlu0 %v1464
  %v1466 = vpop.xlane.xlu0 %1465
  %v1467 = vadd.f32 %v1144, %v1145
  %v1468 = vadd.f32 %v1467, %v1146
  %v1469 = vadd.f32 %v1468, %v1147
  %v1470 = vadd.f32 %v1469, %v1148
  %v1471 = vadd.f32 %v1470, %v1149
  %v1472 = vadd.f32 %v1471, %v1150
  %v1473 = vadd.f32 %v1472, %v1151
  %v1474 = vadd.f32 %v1473, %v1152
  %v1475 = vadd.f32 %v1474, %v1153
  %v1476 = vadd.f32 %v1475, %v1154
  %v1477 = vadd.f32 %v1476, %v1155
  %v1478 = vadd.f32 %v1477, %v1156
  %v1479 = vadd.f32 %v1478, %v1157
  %v1480 = vadd.f32 %v1479, %v1158
  %v1481 = vadd.f32 %v1480, %v1159
  %v1482 = vadd.f32 %v1481, %v1160
  %v1483 = vadd.f32 %v1482, %v1161
  %v1484 = vadd.f32 %v1483, %v1162
  %v1485 = vadd.f32 %v1484, %v1163
  %v1486 = vadd.f32 %v1485, %v1164
  %v1487 = vadd.f32 %v1486, %v1165
  %v1488 = vadd.f32 %v1487, %v1166
  %v1489 = vadd.f32 %v1488, %v1167
  %v1490 = vadd.f32 %v1489, %v1168
  %v1491 = vadd.f32 %v1490, %v1169
  %v1492 = vadd.f32 %v1491, %v1170
  %v1493 = vadd.f32 %v1492, %v1171
  %v1494 = vadd.f32 %v1493, %v1172
  %v1495 = vadd.f32 %v1494, %v1173
  %v1496 = vadd.f32 %v1495, %v1174
  %v1497 = vadd.f32 %v1496, %v1175
  %v1498 = vadd.f32 %v1497, %v1176
  %v1499 = vadd.f32 %v1498, %v1177
  %v1500 = vadd.f32 %v1499, %v1178
  %v1501 = vadd.f32 %v1500, %v1179
  %v1502 = vadd.f32 %v1501, %v1180
  %v1503 = vadd.f32 %v1502, %v1181
  %v1504 = vadd.f32 %v1503, %v1182
  %v1505 = vadd.f32 %v1504, %v1183
  %v1506 = vadd.f32 %v1505, %v1184
  %v1507 = vadd.f32 %v1506, %v1185
  %v1508 = vadd.f32 %v1507, %v1186
  %v1509 = vadd.f32 %v1508, %v1187
  %v1510 = vadd.f32 %v1509, %v1188
  %v1511 = vadd.f32 %v1510, %v1189
  %v1512 = vadd.f32 %v1511, %v1190
  %v1513 = vadd.f32 %v1512, %v1191
  %v1514 = vadd.f32 %v1513, %v1192
  %v1515 = vadd.f32 %v1514, %v1193
  %v1516 = vadd.f32 %v1515, %v1194
  %v1517 = vadd.f32 %v1516, %v1195
  %v1518 = vadd.f32 %v1517, %v1196
  %v1519 = vadd.f32 %v1518, %v1197
  %v1520 = vadd.f32 %v1519, %v1198
  %v1521 = vadd.f32 %v1520, %v1199
  %v1522 = vadd.f32 %v1521, %v1200
  %v1523 = vadd.f32 %v1522, %v1201
  %v1524 = vadd.f32 %v1523, %v1202
  %v1525 = vadd.f32 %v1524, %v1203
  %v1526 = vadd.f32 %v1525, %v1204
  %v1527 = vadd.f32 %v1526, %v1205
  %v1528 = vadd.f32 %v1527, %v1206
  %v1529 = vadd.f32 %v1528, %v1207
  %1530 = vadd.xlane.f32.xlu0 %v1529
  %v1531 = vpop.xlane.xlu0 %1530
  %v1532 = vsel %vm1337, %v1208, 0.0
  %v1533 = vsel %vm1337, %v1209, 0.0
  %v1534 = vadd.f32 %v1532, %v1533
  %v1535 = vsel %vm1337, %v1210, 0.0
  %v1536 = vadd.f32 %v1534, %v1535
  %v1537 = vsel %vm1337, %v1211, 0.0
  %v1538 = vadd.f32 %v1536, %v1537
  %v1539 = vsel %vm1337, %v1212, 0.0
  %v1540 = vadd.f32 %v1538, %v1539
  %v1541 = vsel %vm1337, %v1213, 0.0
  %v1542 = vadd.f32 %v1540, %v1541
  %v1543 = vsel %vm1337, %v1214, 0.0
  %v1544 = vadd.f32 %v1542, %v1543
  %v1545 = vsel %vm1337, %v1215, 0.0
  %v1546 = vadd.f32 %v1544, %v1545
  %v1547 = vsel %vm1337, %v1216, 0.0
  %v1548 = vadd.f32 %v1546, %v1547
  %v1549 = vsel %vm1337, %v1217, 0.0
  %v1550 = vadd.f32 %v1548, %v1549
  %v1551 = vsel %vm1337, %v1218, 0.0
  %v1552 = vadd.f32 %v1550, %v1551
  %v1553 = vsel %vm1337, %v1219, 0.0
  %v1554 = vadd.f32 %v1552, %v1553
  %v1555 = vsel %vm1337, %v1220, 0.0
  %v1556 = vadd.f32 %v1554, %v1555
  %v1557 = vsel %vm1337, %v1221, 0.0
  %v1558 = vadd.f32 %v1556, %v1557
  %v1559 = vsel %vm1337, %v1222, 0.0
  %v1560 = vadd.f32 %v1558, %v1559
  %v1561 = vsel %vm1337, %v1223, 0.0
  %v1562 = vadd.f32 %v1560, %v1561
  %v1563 = vsel %vm1337, %v1224, 0.0
  %v1564 = vadd.f32 %v1562, %v1563
  %v1565 = vsel %vm1337, %v1225, 0.0
  %v1566 = vadd.f32 %v1564, %v1565
  %v1567 = vsel %vm1337, %v1226, 0.0
  %v1568 = vadd.f32 %v1566, %v1567
  %v1569 = vsel %vm1337, %v1227, 0.0
  %v1570 = vadd.f32 %v1568, %v1569
  %v1571 = vsel %vm1337, %v1228, 0.0
  %v1572 = vadd.f32 %v1570, %v1571
  %v1573 = vsel %vm1337, %v1229, 0.0
  %v1574 = vadd.f32 %v1572, %v1573
  %v1575 = vsel %vm1337, %v1230, 0.0
  %v1576 = vadd.f32 %v1574, %v1575
  %v1577 = vsel %vm1337, %v1231, 0.0
  %v1578 = vadd.f32 %v1576, %v1577
  %v1579 = vsel %vm1337, %v1232, 0.0
  %v1580 = vadd.f32 %v1578, %v1579
  %v1581 = vsel %vm1337, %v1233, 0.0
  %v1582 = vadd.f32 %v1580, %v1581
  %v1583 = vsel %vm1337, %v1234, 0.0
  %v1584 = vadd.f32 %v1582, %v1583
  %v1585 = vsel %vm1337, %v1235, 0.0
  %v1586 = vadd.f32 %v1584, %v1585
  %v1587 = vsel %vm1337, %v1236, 0.0
  %v1588 = vadd.f32 %v1586, %v1587
  %v1589 = vsel %vm1337, %v1237, 0.0
  %v1590 = vadd.f32 %v1588, %v1589
  %v1591 = vsel %vm1337, %v1238, 0.0
  %v1592 = vadd.f32 %v1590, %v1591
  %v1593 = vsel %vm1337, %v1239, 0.0
  %v1594 = vadd.f32 %v1592, %v1593
  %v1595 = vsel %vm1337, %v1240, 0.0
  %v1596 = vadd.f32 %v1594, %v1595
  %v1597 = vsel %vm1337, %v1241, 0.0
  %v1598 = vadd.f32 %v1596, %v1597
  %v1599 = vsel %vm1337, %v1242, 0.0
  %v1600 = vadd.f32 %v1598, %v1599
  %v1601 = vsel %vm1337, %v1243, 0.0
  %v1602 = vadd.f32 %v1600, %v1601
  %v1603 = vsel %vm1337, %v1244, 0.0
  %v1604 = vadd.f32 %v1602, %v1603
  %v1605 = vsel %vm1337, %v1245, 0.0
  %v1606 = vadd.f32 %v1604, %v1605
  %v1607 = vsel %vm1337, %v1246, 0.0
  %v1608 = vadd.f32 %v1606, %v1607
  %v1609 = vsel %vm1337, %v1247, 0.0
  %v1610 = vadd.f32 %v1608, %v1609
  %v1611 = vsel %vm1337, %v1248, 0.0
  %v1612 = vadd.f32 %v1610, %v1611
  %v1613 = vsel %vm1337, %v1249, 0.0
  %v1614 = vadd.f32 %v1612, %v1613
  %v1615 = vsel %vm1337, %v1250, 0.0
  %v1616 = vadd.f32 %v1614, %v1615
  %v1617 = vsel %vm1337, %v1251, 0.0
  %v1618 = vadd.f32 %v1616, %v1617
  %v1619 = vsel %vm1337, %v1252, 0.0
  %v1620 = vadd.f32 %v1618, %v1619
  %v1621 = vsel %vm1337, %v1253, 0.0
  %v1622 = vadd.f32 %v1620, %v1621
  %v1623 = vsel %vm1337, %v1254, 0.0
  %v1624 = vadd.f32 %v1622, %v1623
  %v1625 = vsel %vm1337, %v1255, 0.0
  %v1626 = vadd.f32 %v1624, %v1625
  %v1627 = vsel %vm1337, %v1256, 0.0
  %v1628 = vadd.f32 %v1626, %v1627
  %v1629 = vsel %vm1337, %v1257, 0.0
  %v1630 = vadd.f32 %v1628, %v1629
  %v1631 = vsel %vm1337, %v1258, 0.0
  %v1632 = vadd.f32 %v1630, %v1631
  %v1633 = vsel %vm1337, %v1259, 0.0
  %v1634 = vadd.f32 %v1632, %v1633
  %v1635 = vsel %vm1337, %v1260, 0.0
  %v1636 = vadd.f32 %v1634, %v1635
  %v1637 = vsel %vm1337, %v1261, 0.0
  %v1638 = vadd.f32 %v1636, %v1637
  %v1639 = vsel %vm1337, %v1262, 0.0
  %v1640 = vadd.f32 %v1638, %v1639
  %v1641 = vsel %vm1337, %v1263, 0.0
  %v1642 = vadd.f32 %v1640, %v1641
  %v1643 = vsel %vm1337, %v1264, 0.0
  %v1644 = vadd.f32 %v1642, %v1643
  %v1645 = vsel %vm1337, %v1265, 0.0
  %v1646 = vadd.f32 %v1644, %v1645
  %v1647 = vsel %vm1337, %v1266, 0.0
  %v1648 = vadd.f32 %v1646, %v1647
  %v1649 = vsel %vm1337, %v1267, 0.0
  %v1650 = vadd.f32 %v1648, %v1649
  %v1651 = vsel %vm1337, %v1268, 0.0
  %v1652 = vadd.f32 %v1650, %v1651
  %v1653 = vsel %vm1337, %v1269, 0.0
  %v1654 = vadd.f32 %v1652, %v1653
  %v1655 = vsel %vm1337, %v1270, 0.0
  %v1656 = vadd.f32 %v1654, %v1655
  %v1657 = vsel %vm1337, %v1271, 0.0
  %v1658 = vadd.f32 %v1656, %v1657
  %1659 = vadd.xlane.f32.xlu0 %v1658
  %v1660 = vpop.xlane.xlu0 %1659
  %v1665 = vlaneseq
  %v1666 = vand.u32 %v1665, 127
  %v1667 = vlaneseq
  %v1668 = vshrl.u32 %v1667, 7
  %v1669 = vsub.s32 %v1666, %v1668
  %v1670 = vrot.slane %v1336, %v1669
  %v1671 = vadd.s32 %v1666, 4294967288
  %v1672 = vlaneseq
  %v1673 = vshrl.u32 %v1672, 7
  %v1674 = vsub.s32 %v1671, %v1673
  %v1675 = vrot.slane %v1466, %v1674
  %vm1676 = vcmask 130112
  %v1677 = vsel %vm1676, %v1675, %v1670
  %v1678 = vlaneseq
  %v1679 = vshrl.u32 %v1678, 7
  %v1680 = vsub.s32 %v1666, %v1679
  %v1681 = vrot.slane %v1531, %v1680
  %v1682 = vlaneseq
  %v1683 = vshrl.u32 %v1682, 7
  %v1684 = vsub.s32 %v1671, %v1683
  %v1685 = vrot.slane %v1660, %v1684
  %v1686 = vsel %vm1676, %v1685, %v1681
  %vm1687 = vcmask 1041409
  %v1688 = vsel %vm1687, %v1686, %v1677
  %vm1690 = vcmask 66560
  %v1691 = vsel %vm1690, %v1688, 0.0
  %1692 = vadd.xlane.f32.xlu0 %v1691
  %v1693 = vpop.xlane.xlu0 %1692
  %v1694 = vrcp.pop 9.0
  %v1695 = vmul.f32 %v1693, %v1694
  %v1696 = vld [vmem:[#allocation2] sm:$0x1]
  %v1698 = vlaneseq
  %v1699 = vshrl.u32 %v1698, 7
  %v1700 = vsub.s32 0, %v1699
  %v1701 = vrot.slane %v1696, %v1700
  %v1703 = vadd.f32 %v1695, %v1701
  %vm1704 = vcmask 1024
  %1705 = vst.msk [vmem:[%s3] sm:$0x3] %vm1704, %v1703
  // Predicated region
  $region14: #{discriminator_forward.9} parent=0 // pred_check
    _
  $region15: #{discriminator_forward.9} parent=0 // pred_check_branch
    %1707 = sbr.rel (0) target = $region17
  $region16: #{discriminator_forward.9} parent=0 // pred_region
    _
  $region17: #{discriminator_forward.9} parent=0 // pred_fallthru
    _
  // Predicated region
  $region18: #{discriminator_forward.9} parent=0 // pred_check
    _
  $region19: #{discriminator_forward.9} parent=0 // pred_check_branch
    %1709 = sbr.rel (0) target = $region21
  $region20: #{discriminator_forward.9} parent=0 // pred_region
    _
  $region21: #{discriminator_forward.9} parent=0 // pred_fallthru
    _

</llo_original>
